<compile_context>
chip_gen: v5e
topology: v5e:2x2
jax: 0.10.0
libtpu: 0.0.40
codegen_flags: <defaults>
</compile_context>

<pallas_src>
import functools

import jax
import jax.numpy as jnp
from jax import lax
from jax.experimental import pallas as pl
from jax.experimental.pallas import tpu as pltpu

_LN_EPS = 1e-6
_RMS_EPS = 1e-6

WEIGHT_ORDER = (
    'wq', 'bq', 'wk', 'bk', 'wv', 'bv', 'rmsq', 'rmsk',
    'waq', 'baq', 'wak', 'bak', 'wav', 'bav', 'rmsaq', 'rmsak',
    'wo', 'bo', 'wao', 'bao',
    'wf1', 'bf1', 'wf2', 'bf2', 'wfc1', 'bfc1', 'wfc2', 'bfc2',
)


def _silu(x):
    return x * (1.0 / (1.0 + jnp.exp(-x)))


def _layer_norm(x):
    mu = jnp.mean(x, axis=-1, keepdims=True)
    xc = x - mu
    var = jnp.mean(xc * xc, axis=-1, keepdims=True)
    return xc * lax.rsqrt(var + _LN_EPS)


def _rms_norm(x, w):
    var = jnp.mean(x * x, axis=-1, keepdims=True)
    return x * lax.rsqrt(var + _RMS_EPS) * w


def _gelu_tanh(x):
    c = 0.7978845608028654  # sqrt(2/pi)
    return 0.5 * x * (1.0 + jnp.tanh(c * (x + 0.044715 * x * x * x)))


def _flux_block_kernel(
    x_ref, c_ref, mod_x_ref, mod_c_ref, cos_ref, sin_ref,
    wq_ref, bq_ref, wk_ref, bk_ref, wv_ref, bv_ref, rmsq_ref, rmsk_ref,
    waq_ref, baq_ref, wak_ref, bak_ref, wav_ref, bav_ref, rmsaq_ref, rmsak_ref,
    wo_ref, bo_ref, wao_ref, bao_ref,
    wf1_ref, bf1_ref, wf2_ref, bf2_ref, wfc1_ref, bfc1_ref, wfc2_ref, bfc2_ref,
    enc_out_ref, hid_out_ref,
    qj_ref, kj_ref, vj_ref, oj_ref,
    *, num_heads, head_dim, seq_txt, seq_img):
    bf16 = jnp.bfloat16
    x = x_ref[...]          # (S_img, D) f32
    c = c_ref[...]          # (S_txt, D) f32
    mod_x = mod_x_ref[...]  # (6, D) f32 — AdaLN vectors computed in the wrapper
    mod_c = mod_c_ref[...]  # (6, D)
    cos = cos_ref[...]      # (S, Hd) half-split-permuted
    sin = sin_ref[...]      # (S, Hd)

    shift_msa, scale_msa, gate_msa = mod_x[0:1], mod_x[1:2], mod_x[2:3]
    shift_mlp, scale_mlp, gate_mlp = mod_x[3:4], mod_x[4:5], mod_x[5:6]
    c_shift_msa, c_scale_msa, c_gate_msa = mod_c[0:1], mod_c[1:2], mod_c[2:3]
    c_shift_mlp, c_scale_mlp, c_gate_mlp = mod_c[3:4], mod_c[4:5], mod_c[5:6]

    nx = _layer_norm(x) * (1.0 + scale_msa) + shift_msa        # (S_img, D)
    nc = _layer_norm(c) * (1.0 + c_scale_msa) + c_shift_msa    # (S_txt, D)
    nxb = nx.astype(bf16)
    ncb = nc.astype(bf16)

    def proj(a, w_ref, b_ref):
        return jnp.dot(a, w_ref[...], preferred_element_type=jnp.float32) + b_ref[...]

    # ---- full-width QKV projections (bf16 MXU, f32 accumulation) ----
    q_img = proj(nxb, wq_ref, bq_ref)     # (S_img, inner)
    k_img = proj(nxb, wk_ref, bk_ref)
    v_img = proj(nxb, wv_ref, bv_ref)
    q_ctx = proj(ncb, waq_ref, baq_ref)   # (S_txt, inner)
    k_ctx = proj(ncb, wak_ref, bak_ref)
    v_ctx = proj(ncb, wav_ref, bav_ref)

    rmsq_w, rmsk_w = rmsq_ref[...], rmsk_ref[...]
    rmsaq_w, rmsak_w = rmsaq_ref[...], rmsak_ref[...]

    cos_c, cos_i = cos[:seq_txt], cos[seq_txt:]
    sin_c, sin_i = sin[:seq_txt], sin[seq_txt:]

    half = head_dim // 2

    def rope(t, cs, sn):
        # half-split form (weights were permuted in the wrapper accordingly)
        t1, t2 = t[:, :half], t[:, half:]
        rot = jnp.concatenate([-t2, t1], axis=-1)
        return t * cs + rot * sn

    scale = 1.0 / (float(head_dim) ** 0.5)

    # TODO(synk): at production FLUX sizes (24 heads, S~4.6k, ffd=12288) the heads
    # should move onto a grid axis with flash-style KV / ffd tiling; the static
    # unrolled loop + full (S, S) scores are only appropriate at small sizes.
    for h in range(num_heads):
        lo, hi = h * head_dim, (h + 1) * head_dim
        # joint sequence in scratch: context tokens first, then image tokens
        qj_ref[0:seq_txt, :] = rope(_rms_norm(q_ctx[:, lo:hi], rmsaq_w), cos_c, sin_c).astype(bf16)
        qj_ref[seq_txt:, :] = rope(_rms_norm(q_img[:, lo:hi], rmsq_w), cos_i, sin_i).astype(bf16)
        kj_ref[0:seq_txt, :] = rope(_rms_norm(k_ctx[:, lo:hi], rmsak_w), cos_c, sin_c).astype(bf16)
        kj_ref[seq_txt:, :] = rope(_rms_norm(k_img[:, lo:hi], rmsk_w), cos_i, sin_i).astype(bf16)
        vj_ref[0:seq_txt, :] = v_ctx[:, lo:hi].astype(bf16)
        vj_ref[seq_txt:, :] = v_img[:, lo:hi].astype(bf16)

        q = qj_ref[...]
        k = kj_ref[...]
        v = vj_ref[...]
        s = lax.dot_general(q, k, (((1,), (1,)), ((), ())),
                            preferred_element_type=jnp.float32) * scale    # (S, S)
        s = s - jnp.max(s, axis=-1, keepdims=True)
        p = jnp.exp(s)
        p = p * pl.reciprocal(jnp.sum(p, axis=-1, keepdims=True), approx=True)
        o = jnp.dot(p.astype(bf16), v, preferred_element_type=jnp.float32)  # (S, Hd)
        oj_ref[:, lo:hi] = o.astype(bf16)

    # ---- fused output projections (single wide K=inner dot per stream) ----
    o_all = oj_ref[...]                                   # (S, inner) bf16
    img_attn = jnp.dot(o_all[seq_txt:, :], wo_ref[...],
                       preferred_element_type=jnp.float32) + bo_ref[...]
    ctx_attn = jnp.dot(o_all[0:seq_txt, :], wao_ref[...],
                       preferred_element_type=jnp.float32) + bao_ref[...]

    # ---- image stream: gated residual + modulated MLP ----
    hidden = x + gate_msa * img_attn
    nh = _layer_norm(hidden) * (1.0 + scale_mlp) + shift_mlp
    ff = _gelu_tanh(jnp.dot(nh.astype(bf16), wf1_ref[...],
                            preferred_element_type=jnp.float32) + bf1_ref[...])
    ff = jnp.dot(ff.astype(bf16), wf2_ref[...],
                 preferred_element_type=jnp.float32) + bf2_ref[...]
    hidden = hidden + gate_mlp * ff
    hid_out_ref[...] = hidden

    # ---- context stream ----
    enc = c + c_gate_msa * ctx_attn
    ne = _layer_norm(enc) * (1.0 + c_scale_mlp) + c_shift_mlp
    ffc = _gelu_tanh(jnp.dot(ne.astype(bf16), wfc1_ref[...],
                             preferred_element_type=jnp.float32) + bfc1_ref[...])
    ffc = jnp.dot(ffc.astype(bf16), wfc2_ref[...],
                  preferred_element_type=jnp.float32) + bfc2_ref[...]
    enc = enc + c_gate_mlp * ffc
    # TODO(synk): float16 clamp(-65504, 65504) omitted — outputs stay f32.
    # TODO(synk): attention_mask path (expand_flux_attention_mask + masked SDPA) not implemented.
    enc_out_ref[...] = enc


def flux_transformer_block(hidden_states, encoder_hidden_states, temb, cos, sin,
                           params, *, num_heads, head_dim,
                           single_buffer_weights=True):
    B, S_img, D = hidden_states.shape
    _, S_txt, _ = encoder_hidden_states.shape
    S = S_txt + S_img
    Hd = head_dim
    inner = num_heads * head_dim
    p = params
    f32, bf16 = jnp.float32, jnp.bfloat16

    # ---- AdaLayerNormZero linears hoisted out of the kernel (tiny M=B matmuls;
    #      keeps the huge (D, 6D) weights out of VMEM entirely). ----
    st = _silu(temb.astype(f32))
    mod_x = (st @ p['w_ada'] + p['b_ada']).reshape(B, 6, D).astype(f32)
    mod_c = (st @ p['w_ada_c'] + p['b_ada_c']).reshape(B, 6, D).astype(f32)

    # ---- interleaved RoPE -> half-split RoPE via per-head column permutation of
    #      the q/k projections (+ their biases, rms weights, cos/sin). ----
    perm = jnp.concatenate([jnp.arange(0, Hd, 2), jnp.arange(1, Hd, 2)])
    full_perm = (jnp.arange(num_heads)[:, None] * Hd + perm[None, :]).reshape(-1)

    w = dict(p)
    for wn, bn in (('wq', 'bq'), ('wk', 'bk'), ('waq', 'baq'), ('wak', 'bak')):
        w[wn] = p[wn][:, full_perm]
        w[bn] = p[bn][:, full_perm]
    for rn in ('rmsq', 'rmsk', 'rmsaq', 'rmsak'):
        w[rn] = p[rn][:, perm]
    cos_p = jnp.concatenate([cos[:, 0::2], cos[:, 1::2]], axis=-1).astype(f32)
    sin_p = jnp.concatenate([sin[:, 0::2], sin[:, 1::2]], axis=-1).astype(f32)

    def cast(name, arr):
        # matmul operands in bf16 (native MXU input, half the VMEM/DMA bytes);
        # biases / rms weights stay f32 (added/multiplied after f32 accumulation).
        return arr.astype(bf16) if name.startswith('w') else arr.astype(f32)

    weights = [cast(k, w[k]) for k in WEIGHT_ORDER]

    pm = dict(pipeline_mode=pl.Buffered(1)) if single_buffer_weights else {}

    def const_spec(shape):
        return pl.BlockSpec(shape, lambda b: (0,) * len(shape), **pm)

    in_specs = (
        pl.BlockSpec((None, S_img, D), lambda b: (b, 0, 0)),   # hidden_states
        pl.BlockSpec((None, S_txt, D), lambda b: (b, 0, 0)),   # encoder_hidden_states
        pl.BlockSpec((None, 6, D), lambda b: (b, 0, 0)),       # AdaLN vectors (image)
        pl.BlockSpec((None, 6, D), lambda b: (b, 0, 0)),       # AdaLN vectors (context)
        const_spec((S, Hd)),                                   # cos (permuted)
        const_spec((S, Hd)),                                   # sin (permuted)
    ) + tuple(const_spec(wt.shape) for wt in weights)

    out_specs = (
        pl.BlockSpec((None, S_txt, D), lambda b: (b, 0, 0)),
        pl.BlockSpec((None, S_img, D), lambda b: (b, 0, 0)),
    )

    kernel = functools.partial(
        _flux_block_kernel, num_heads=num_heads, head_dim=head_dim,
        seq_txt=S_txt, seq_img=S_img)

    enc_out, hid_out = pl.pallas_call(
        kernel,
        grid_spec=pltpu.PrefetchScalarGridSpec(
            num_scalar_prefetch=0,
            grid=(B,),
            in_specs=in_specs,
            out_specs=out_specs,
            scratch_shapes=[
                pltpu.VMEM((S, Hd), bf16),      # joint q (per head)
                pltpu.VMEM((S, Hd), bf16),      # joint k
                pltpu.VMEM((S, Hd), bf16),      # joint v
                pltpu.VMEM((S, inner), bf16),   # joint attention output (all heads)
            ]),
        out_shape=(jax.ShapeDtypeStruct((B, S_txt, D), f32),
                   jax.ShapeDtypeStruct((B, S_img, D), f32)),
        compiler_params=pltpu.CompilerParams(
            dimension_semantics=("parallel",),          # batch iterations independent
            vmem_limit_bytes=48 * 1024 * 1024),
    )(hidden_states.astype(f32), encoder_hidden_states.astype(f32),
      mod_x, mod_c, cos_p, sin_p, *weights)
    return enc_out, hid_out


# ------------------------ pure-JAX reference (for validation) ------------------------
def reference_block(hidden_states, encoder_hidden_states, temb, cos, sin, params,
                    *, num_heads, head_dim):
    p = params
    B, S_img, D = hidden_states.shape
    S_txt = encoder_hidden_states.shape[1]
    H, Hd = num_heads, head_dim

    def ln(v):
        mu = v.mean(-1, keepdims=True)
        var = ((v - mu) ** 2).mean(-1, keepdims=True)
        return (v - mu) * lax.rsqrt(var + _LN_EPS)

    def rms(v, w):
        return v * lax.rsqrt((v * v).mean(-1, keepdims=True) + _RMS_EPS) * w

    def ada_chunks(W, b):
        e = _silu(temb) @ W + b
        return jnp.split(e, 6, axis=-1)

    shift_msa, scale_msa, gate_msa, shift_mlp, scale_mlp, gate_mlp = ada_chunks(p['w_ada'], p['b_ada'])
    (c_shift_msa, c_scale_msa, c_gate_msa,
     c_shift_mlp, c_scale_mlp, c_gate_mlp) = ada_chunks(p['w_ada_c'], p['b_ada_c'])

    nx = ln(hidden_states) * (1 + scale_msa[:, None]) + shift_msa[:, None]
    nc = ln(encoder_hidden_states) * (1 + c_scale_msa[:, None]) + c_shift_msa[:, None]

    def to_heads(v):
        return v.reshape(B, -1, H, Hd).transpose(0, 2, 1, 3)

    q = rms(to_heads(nx @ p['wq'] + p['bq']), p['rmsq'])
    k = rms(to_heads(nx @ p['wk'] + p['bk']), p['rmsk'])
    v = to_heads(nx @ p['wv'] + p['bv'])
    cq = rms(to_heads(nc @ p['waq'] + p['baq']), p['rmsaq'])
    ck = rms(to_heads(nc @ p['wak'] + p['bak']), p['rmsak'])
    cv = to_heads(nc @ p['wav'] + p['bav'])

    q = jnp.concatenate([cq, q], axis=2)
    k = jnp.concatenate([ck, k], axis=2)
    v = jnp.concatenate([cv, v], axis=2)

    def rope(t):
        tr = t.reshape(*t.shape[:-1], -1, 2)
        real, imag = tr[..., 0], tr[..., 1]
        rotated = jnp.stack([-imag, real], axis=-1).reshape(t.shape)
        return t * cos[None, None] + rotated * sin[None, None]

    q, k = rope(q), rope(k)
    s = jnp.einsum('bhqd,bhkd->bhqk', q, k) / (Hd ** 0.5)
    a = jax.nn.softmax(s, axis=-1)
    o = jnp.einsum('bhqk,bhkd->bhqd', a, v)
    o = o.transpose(0, 2, 1, 3).reshape(B, S_txt + S_img, H * Hd)

    ctx_o, img_o = o[:, :S_txt], o[:, S_txt:]
    img_attn = img_o @ p['wo'] + p['bo']
    ctx_attn = ctx_o @ p['wao'] + p['bao']

    hidden = hidden_states + gate_msa[:, None] * img_attn
    nh = ln(hidden) * (1 + scale_mlp[:, None]) + shift_mlp[:, None]
    ff = _gelu_tanh(nh @ p['wf1'] + p['bf1']) @ p['wf2'] + p['bf2']
    hidden = hidden + gate_mlp[:, None] * ff

    enc = encoder_hidden_states + c_gate_msa[:, None] * ctx_attn
    ne = ln(enc) * (1 + c_scale_mlp[:, None]) + c_shift_mlp[:, None]
    ffc = _gelu_tanh(ne @ p['wfc1'] + p['bfc1']) @ p['wfc2'] + p['bfc2']
    enc = enc + c_gate_mlp[:, None] * ffc
    return enc, hidden


def init_params(key, dim, num_heads, head_dim):
    inner = num_heads * head_dim
    ffd = 4 * dim
    it = iter(jax.random.split(key, 40))

    def w(shape, scale=0.05):
        return (scale * jax.random.normal(next(it), shape)).astype(jnp.float32)

    p = {}
    p['w_ada'] = w((dim, 6 * dim));   p['b_ada'] = w((1, 6 * dim), 0.02)
    p['w_ada_c'] = w((dim, 6 * dim)); p['b_ada_c'] = w((1, 6 * dim), 0.02)
    p['wq'] = w((dim, inner)); p['bq'] = w((1, inner), 0.02)
    p['wk'] = w((dim, inner)); p['bk'] = w((1, inner), 0.02)
    p['wv'] = w((dim, inner)); p['bv'] = w((1, inner), 0.02)
    p['rmsq'] = 1.0 + w((1, head_dim), 0.1)
    p['rmsk'] = 1.0 + w((1, head_dim), 0.1)
    p['waq'] = w((dim, inner)); p['baq'] = w((1, inner), 0.02)
    p['wak'] = w((dim, inner)); p['bak'] = w((1, inner), 0.02)
    p['wav'] = w((dim, inner)); p['bav'] = w((1, inner), 0.02)
    p['rmsaq'] = 1.0 + w((1, head_dim), 0.1)
    p['rmsak'] = 1.0 + w((1, head_dim), 0.1)
    p['wo'] = w((inner, dim));  p['bo'] = w((1, dim), 0.02)
    p['wao'] = w((inner, dim)); p['bao'] = w((1, dim), 0.02)
    p['wf1'] = w((dim, ffd));  p['bf1'] = w((1, ffd), 0.02)
    p['wf2'] = w((ffd, dim));  p['bf2'] = w((1, dim), 0.02)
    p['wfc1'] = w((dim, ffd)); p['bfc1'] = w((1, ffd), 0.02)
    p['wfc2'] = w((ffd, dim)); p['bfc2'] = w((1, dim), 0.02)
    return p


if __name__ == "__main__":
    B, S_txt, S_img, D, H, Hd = 2, 8, 16, 32, 2, 16
    S = S_txt + S_img
    key = jax.random.PRNGKey(0)
    kx, kc, kt, kp = jax.random.split(key, 4)
    hidden_states = jax.random.normal(kx, (B, S_img, D), jnp.float32)
    encoder_hidden_states = jax.random.normal(kc, (B, S_txt, D), jnp.float32)
    temb = jax.random.normal(kt, (B, D), jnp.float32)

    # rotary cos/sin over the joint sequence (text tokens first), interleaved form
    pos = jnp.arange(S, dtype=jnp.float32)
    freqs = 1.0 / (10000.0 ** (jnp.arange(0, Hd, 2, dtype=jnp.float32) / Hd))
    ang = pos[:, None] * freqs[None, :]
    cos = jnp.repeat(jnp.cos(ang), 2, axis=-1)   # (S, Hd)
    sin = jnp.repeat(jnp.sin(ang), 2, axis=-1)   # (S, Hd)

    params = init_params(kp, D, H, Hd)

    try:
        enc_out, hid_out = flux_transformer_block(
            hidden_states, encoder_hidden_states, temb, cos, sin, params,
            num_heads=H, head_dim=Hd, single_buffer_weights=True)
        jax.block_until_ready((enc_out, hid_out))
    except Exception:
        # pl.Buffered(1) on resident weights is a pure VMEM optimization; fall back
        # to default double-buffered specs if this JAX/Mosaic build rejects it.
        enc_out, hid_out = flux_transformer_block(
            hidden_states, encoder_hidden_states, temb, cos, sin, params,
            num_heads=H, head_dim=Hd, single_buffer_weights=False)
        jax.block_until_ready((enc_out, hid_out))

    enc_ref, hid_ref = reference_block(
        hidden_states, encoder_hidden_states, temb, cos, sin, params,
        num_heads=H, head_dim=Hd)

    assert enc_out.shape == (B, S_txt, D) and hid_out.shape == (B, S_img, D)
    # bf16 matmul inputs inside the kernel -> slightly looser tolerance vs f32 ref
    assert jnp.allclose(enc_out, enc_ref, atol=2e-2, rtol=2e-2), \
        float(jnp.max(jnp.abs(enc_out - enc_ref)))
    assert jnp.allclose(hid_out, hid_ref, atol=2e-2, rtol=2e-2), \
        float(jnp.max(jnp.abs(hid_out - hid_ref)))
    print("KERNEL_OK")
</pallas_src>

<mosaic_0001>
module attributes {stable_mosaic.version = 11 : i64} {
  func.func @_flux_block_kernel(%arg0: i32, %arg1: memref<1x16x32xf32, #tpu.memory_space<vmem>>, %arg2: memref<1x8x32xf32, #tpu.memory_space<vmem>>, %arg3: memref<1x6x32xf32, #tpu.memory_space<vmem>>, %arg4: memref<1x6x32xf32, #tpu.memory_space<vmem>>, %arg5: memref<24x16xf32, #tpu.memory_space<vmem>>, %arg6: memref<24x16xf32, #tpu.memory_space<vmem>>, %arg7: memref<32x32xbf16, #tpu.memory_space<vmem>>, %arg8: memref<1x32xf32, #tpu.memory_space<vmem>>, %arg9: memref<32x32xbf16, #tpu.memory_space<vmem>>, %arg10: memref<1x32xf32, #tpu.memory_space<vmem>>, %arg11: memref<32x32xbf16, #tpu.memory_space<vmem>>, %arg12: memref<1x32xf32, #tpu.memory_space<vmem>>, %arg13: memref<1x16xf32, #tpu.memory_space<vmem>>, %arg14: memref<1x16xf32, #tpu.memory_space<vmem>>, %arg15: memref<32x32xbf16, #tpu.memory_space<vmem>>, %arg16: memref<1x32xf32, #tpu.memory_space<vmem>>, %arg17: memref<32x32xbf16, #tpu.memory_space<vmem>>, %arg18: memref<1x32xf32, #tpu.memory_space<vmem>>, %arg19: memref<32x32xbf16, #tpu.memory_space<vmem>>, %arg20: memref<1x32xf32, #tpu.memory_space<vmem>>, %arg21: memref<1x16xf32, #tpu.memory_space<vmem>>, %arg22: memref<1x16xf32, #tpu.memory_space<vmem>>, %arg23: memref<32x32xbf16, #tpu.memory_space<vmem>>, %arg24: memref<1x32xf32, #tpu.memory_space<vmem>>, %arg25: memref<32x32xbf16, #tpu.memory_space<vmem>>, %arg26: memref<1x32xf32, #tpu.memory_space<vmem>>, %arg27: memref<32x128xbf16, #tpu.memory_space<vmem>>, %arg28: memref<1x128xf32, #tpu.memory_space<vmem>>, %arg29: memref<128x32xbf16, #tpu.memory_space<vmem>>, %arg30: memref<1x32xf32, #tpu.memory_space<vmem>>, %arg31: memref<32x128xbf16, #tpu.memory_space<vmem>>, %arg32: memref<1x128xf32, #tpu.memory_space<vmem>>, %arg33: memref<128x32xbf16, #tpu.memory_space<vmem>>, %arg34: memref<1x32xf32, #tpu.memory_space<vmem>>, %arg35: memref<1x8x32xf32, #tpu.memory_space<vmem>>, %arg36: memref<1x16x32xf32, #tpu.memory_space<vmem>>, %arg37: memref<24x16xbf16, #tpu.memory_space<vmem>>, %arg38: memref<24x16xbf16, #tpu.memory_space<vmem>>, %arg39: memref<24x16xbf16, #tpu.memory_space<vmem>>, %arg40: memref<24x32xbf16, #tpu.memory_space<vmem>>) attributes {dimension_semantics = [#tpu.dimension_semantics<parallel>], iteration_bounds = array<i64: 2>, scalar_prefetch = 0 : i64, scratch_operands = 4 : i64, tpu.core_type = #tpu.core_type<tc>, window_params = [{transform_indices = @transform_0, window_bounds = array<i64: 1, 16, 32>}, {transform_indices = @transform_1, window_bounds = array<i64: 1, 8, 32>}, {transform_indices = @transform_2, window_bounds = array<i64: 1, 6, 32>}, {transform_indices = @transform_3, window_bounds = array<i64: 1, 6, 32>}, {pipeline_mode = #tpu.pipeline_mode<synchronous>, transform_indices = @transform_4, window_bounds = array<i64: 24, 16>}, {pipeline_mode = #tpu.pipeline_mode<synchronous>, transform_indices = @transform_5, window_bounds = array<i64: 24, 16>}, {pipeline_mode = #tpu.pipeline_mode<synchronous>, transform_indices = @transform_6, window_bounds = array<i64: 32, 32>}, {pipeline_mode = #tpu.pipeline_mode<synchronous>, transform_indices = @transform_7, window_bounds = array<i64: 1, 32>}, {pipeline_mode = #tpu.pipeline_mode<synchronous>, transform_indices = @transform_8, window_bounds = array<i64: 32, 32>}, {pipeline_mode = #tpu.pipeline_mode<synchronous>, transform_indices = @transform_9, window_bounds = array<i64: 1, 32>}, {pipeline_mode = #tpu.pipeline_mode<synchronous>, transform_indices = @transform_10, window_bounds = array<i64: 32, 32>}, {pipeline_mode = #tpu.pipeline_mode<synchronous>, transform_indices = @transform_11, window_bounds = array<i64: 1, 32>}, {pipeline_mode = #tpu.pipeline_mode<synchronous>, transform_indices = @transform_12, window_bounds = array<i64: 1, 16>}, {pipeline_mode = #tpu.pipeline_mode<synchronous>, transform_indices = @transform_13, window_bounds = array<i64: 1, 16>}, {pipeline_mode = #tpu.pipeline_mode<synchronous>, transform_indices = @transform_14, window_bounds = array<i64: 32, 32>}, {pipeline_mode = #tpu.pipeline_mode<synchronous>, transform_indices = @transform_15, window_bounds = array<i64: 1, 32>}, {pipeline_mode = #tpu.pipeline_mode<synchronous>, transform_indices = @transform_16, window_bounds = array<i64: 32, 32>}, {pipeline_mode = #tpu.pipeline_mode<synchronous>, transform_indices = @transform_17, window_bounds = array<i64: 1, 32>}, {pipeline_mode = #tpu.pipeline_mode<synchronous>, transform_indices = @transform_18, window_bounds = array<i64: 32, 32>}, {pipeline_mode = #tpu.pipeline_mode<synchronous>, transform_indices = @transform_19, window_bounds = array<i64: 1, 32>}, {pipeline_mode = #tpu.pipeline_mode<synchronous>, transform_indices = @transform_20, window_bounds = array<i64: 1, 16>}, {pipeline_mode = #tpu.pipeline_mode<synchronous>, transform_indices = @transform_21, window_bounds = array<i64: 1, 16>}, {pipeline_mode = #tpu.pipeline_mode<synchronous>, transform_indices = @transform_22, window_bounds = array<i64: 32, 32>}, {pipeline_mode = #tpu.pipeline_mode<synchronous>, transform_indices = @transform_23, window_bounds = array<i64: 1, 32>}, {pipeline_mode = #tpu.pipeline_mode<synchronous>, transform_indices = @transform_24, window_bounds = array<i64: 32, 32>}, {pipeline_mode = #tpu.pipeline_mode<synchronous>, transform_indices = @transform_25, window_bounds = array<i64: 1, 32>}, {pipeline_mode = #tpu.pipeline_mode<synchronous>, transform_indices = @transform_26, window_bounds = array<i64: 32, 128>}, {pipeline_mode = #tpu.pipeline_mode<synchronous>, transform_indices = @transform_27, window_bounds = array<i64: 1, 128>}, {pipeline_mode = #tpu.pipeline_mode<synchronous>, transform_indices = @transform_28, window_bounds = array<i64: 128, 32>}, {pipeline_mode = #tpu.pipeline_mode<synchronous>, transform_indices = @transform_29, window_bounds = array<i64: 1, 32>}, {pipeline_mode = #tpu.pipeline_mode<synchronous>, transform_indices = @transform_30, window_bounds = array<i64: 32, 128>}, {pipeline_mode = #tpu.pipeline_mode<synchronous>, transform_indices = @transform_31, window_bounds = array<i64: 1, 128>}, {pipeline_mode = #tpu.pipeline_mode<synchronous>, transform_indices = @transform_32, window_bounds = array<i64: 128, 32>}, {pipeline_mode = #tpu.pipeline_mode<synchronous>, transform_indices = @transform_33, window_bounds = array<i64: 1, 32>}, {transform_indices = @transform_34, window_bounds = array<i64: 1, 8, 32>}, {transform_indices = @transform_35, window_bounds = array<i64: 1, 16, 32>}]} {
    %c0 = arith.constant 0 : index
    %c0_0 = arith.constant 0 : index
    %c0_1 = arith.constant 0 : index
    %0 = vector.load %arg1[%c0, %c0_0, %c0_1] : memref<1x16x32xf32, #tpu.memory_space<vmem>>, vector<1x16x32xf32>
    %1 = vector.shape_cast %0 : vector<1x16x32xf32> to vector<16x32xf32>
    %c0_2 = arith.constant 0 : index
    %c0_3 = arith.constant 0 : index
    %c0_4 = arith.constant 0 : index
    %2 = vector.load %arg2[%c0_2, %c0_3, %c0_4] : memref<1x8x32xf32, #tpu.memory_space<vmem>>, vector<1x8x32xf32>
    %3 = vector.shape_cast %2 : vector<1x8x32xf32> to vector<8x32xf32>
    %c0_5 = arith.constant 0 : index
    %c0_6 = arith.constant 0 : index
    %c0_7 = arith.constant 0 : index
    %4 = vector.load %arg3[%c0_5, %c0_6, %c0_7] : memref<1x6x32xf32, #tpu.memory_space<vmem>>, vector<1x6x32xf32>
    %5 = vector.shape_cast %4 : vector<1x6x32xf32> to vector<6x32xf32>
    %c0_8 = arith.constant 0 : index
    %c0_9 = arith.constant 0 : index
    %c0_10 = arith.constant 0 : index
    %6 = vector.load %arg4[%c0_8, %c0_9, %c0_10] : memref<1x6x32xf32, #tpu.memory_space<vmem>>, vector<1x6x32xf32>
    %7 = vector.shape_cast %6 : vector<1x6x32xf32> to vector<6x32xf32>
    %c0_11 = arith.constant 0 : index
    %c0_12 = arith.constant 0 : index
    %8 = vector.load %arg5[%c0_11, %c0_12] : memref<24x16xf32, #tpu.memory_space<vmem>>, vector<24x16xf32>
    %c0_13 = arith.constant 0 : index
    %c0_14 = arith.constant 0 : index
    %9 = vector.load %arg6[%c0_13, %c0_14] : memref<24x16xf32, #tpu.memory_space<vmem>>, vector<24x16xf32>
    %10 = vector.extract_strided_slice %5 {offsets = [0, 0], sizes = [1, 32], strides = [1, 1]} : vector<6x32xf32> to vector<1x32xf32>
    %11 = vector.extract_strided_slice %5 {offsets = [1, 0], sizes = [1, 32], strides = [1, 1]} : vector<6x32xf32> to vector<1x32xf32>
    %12 = vector.extract_strided_slice %5 {offsets = [2, 0], sizes = [1, 32], strides = [1, 1]} : vector<6x32xf32> to vector<1x32xf32>
    %13 = vector.extract_strided_slice %5 {offsets = [3, 0], sizes = [1, 32], strides = [1, 1]} : vector<6x32xf32> to vector<1x32xf32>
    %14 = vector.extract_strided_slice %5 {offsets = [4, 0], sizes = [1, 32], strides = [1, 1]} : vector<6x32xf32> to vector<1x32xf32>
    %15 = vector.extract_strided_slice %5 {offsets = [5, 0], sizes = [1, 32], strides = [1, 1]} : vector<6x32xf32> to vector<1x32xf32>
    %16 = vector.extract_strided_slice %7 {offsets = [0, 0], sizes = [1, 32], strides = [1, 1]} : vector<6x32xf32> to vector<1x32xf32>
    %17 = vector.extract_strided_slice %7 {offsets = [1, 0], sizes = [1, 32], strides = [1, 1]} : vector<6x32xf32> to vector<1x32xf32>
    %18 = vector.extract_strided_slice %7 {offsets = [2, 0], sizes = [1, 32], strides = [1, 1]} : vector<6x32xf32> to vector<1x32xf32>
    %19 = vector.extract_strided_slice %7 {offsets = [3, 0], sizes = [1, 32], strides = [1, 1]} : vector<6x32xf32> to vector<1x32xf32>
    %20 = vector.extract_strided_slice %7 {offsets = [4, 0], sizes = [1, 32], strides = [1, 1]} : vector<6x32xf32> to vector<1x32xf32>
    %21 = vector.extract_strided_slice %7 {offsets = [5, 0], sizes = [1, 32], strides = [1, 1]} : vector<6x32xf32> to vector<1x32xf32>
    %cst = arith.constant dense<0.000000e+00> : vector<16xf32>
    %22 = vector.multi_reduction <add>, %1, %cst [1] : vector<16x32xf32> to vector<16xf32>
    %23 = vector.shape_cast %22 : vector<16xf32> to vector<16x1xf32>
    %cst_15 = arith.constant 3.200000e+01 : f32
    %24 = vector.broadcast %cst_15 : f32 to vector<16x1xf32>
    %25 = arith.divf %23, %24 : vector<16x1xf32>
    %26 = vector.broadcast %25 : vector<16x1xf32> to vector<16x32xf32>
    %27 = arith.subf %1, %26 : vector<16x32xf32>
    %28 = arith.mulf %27, %27 : vector<16x32xf32>
    %cst_16 = arith.constant dense<0.000000e+00> : vector<16xf32>
    %29 = vector.multi_reduction <add>, %28, %cst_16 [1] : vector<16x32xf32> to vector<16xf32>
    %30 = vector.shape_cast %29 : vector<16xf32> to vector<16x1xf32>
    %cst_17 = arith.constant 3.200000e+01 : f32
    %31 = vector.broadcast %cst_17 : f32 to vector<16x1xf32>
    %32 = arith.divf %30, %31 : vector<16x1xf32>
    %cst_18 = arith.constant 9.99999997E-7 : f32
    %33 = vector.broadcast %cst_18 : f32 to vector<16x1xf32>
    %34 = arith.addf %32, %33 : vector<16x1xf32>
    %35 = math.rsqrt %34 : vector<16x1xf32>
    %36 = vector.broadcast %35 : vector<16x1xf32> to vector<16x32xf32>
    %37 = arith.mulf %27, %36 : vector<16x32xf32>
    %cst_19 = arith.constant 1.000000e+00 : f32
    %38 = vector.broadcast %cst_19 : f32 to vector<1x32xf32>
    %39 = arith.addf %38, %11 : vector<1x32xf32>
    %40 = vector.broadcast %39 : vector<1x32xf32> to vector<16x32xf32>
    %41 = arith.mulf %37, %40 : vector<16x32xf32>
    %42 = vector.broadcast %10 : vector<1x32xf32> to vector<16x32xf32>
    %43 = arith.addf %41, %42 : vector<16x32xf32>
    %cst_20 = arith.constant dense<0.000000e+00> : vector<8xf32>
    %44 = vector.multi_reduction <add>, %3, %cst_20 [1] : vector<8x32xf32> to vector<8xf32>
    %45 = vector.shape_cast %44 : vector<8xf32> to vector<8x1xf32>
    %cst_21 = arith.constant 3.200000e+01 : f32
    %46 = vector.broadcast %cst_21 : f32 to vector<8x1xf32>
    %47 = arith.divf %45, %46 : vector<8x1xf32>
    %48 = vector.broadcast %47 : vector<8x1xf32> to vector<8x32xf32>
    %49 = arith.subf %3, %48 : vector<8x32xf32>
    %50 = arith.mulf %49, %49 : vector<8x32xf32>
    %cst_22 = arith.constant dense<0.000000e+00> : vector<8xf32>
    %51 = vector.multi_reduction <add>, %50, %cst_22 [1] : vector<8x32xf32> to vector<8xf32>
    %52 = vector.shape_cast %51 : vector<8xf32> to vector<8x1xf32>
    %cst_23 = arith.constant 3.200000e+01 : f32
    %53 = vector.broadcast %cst_23 : f32 to vector<8x1xf32>
    %54 = arith.divf %52, %53 : vector<8x1xf32>
    %cst_24 = arith.constant 9.99999997E-7 : f32
    %55 = vector.broadcast %cst_24 : f32 to vector<8x1xf32>
    %56 = arith.addf %54, %55 : vector<8x1xf32>
    %57 = math.rsqrt %56 : vector<8x1xf32>
    %58 = vector.broadcast %57 : vector<8x1xf32> to vector<8x32xf32>
    %59 = arith.mulf %49, %58 : vector<8x32xf32>
    %cst_25 = arith.constant 1.000000e+00 : f32
    %60 = vector.broadcast %cst_25 : f32 to vector<1x32xf32>
    %61 = arith.addf %60, %17 : vector<1x32xf32>
    %62 = vector.broadcast %61 : vector<1x32xf32> to vector<8x32xf32>
    %63 = arith.mulf %59, %62 : vector<8x32xf32>
    %64 = vector.broadcast %16 : vector<1x32xf32> to vector<8x32xf32>
    %65 = arith.addf %63, %64 : vector<8x32xf32>
    %66 = arith.truncf %43 : vector<16x32xf32> to vector<16x32xbf16>
    %67 = arith.truncf %65 : vector<8x32xf32> to vector<8x32xbf16>
    %c0_26 = arith.constant 0 : index
    %c0_27 = arith.constant 0 : index
    %68 = vector.load %arg7[%c0_26, %c0_27] : memref<32x32xbf16, #tpu.memory_space<vmem>>, vector<32x32xbf16>
    %cst_28 = arith.constant dense<0.000000e+00> : vector<16x32xf32>
    %69 = tpu.matmul %66, %68, %cst_28 {dimension_numbers = #tpu.dot_dimension_numbers<[1], [0], [0], [1], [0, 0, 1, 1], [], []>} : vector<16x32xbf16>, vector<32x32xbf16>, vector<16x32xf32> -> vector<16x32xf32>
    %c0_29 = arith.constant 0 : index
    %c0_30 = arith.constant 0 : index
    %70 = vector.load %arg8[%c0_29, %c0_30] : memref<1x32xf32, #tpu.memory_space<vmem>>, vector<1x32xf32>
    %71 = vector.broadcast %70 : vector<1x32xf32> to vector<16x32xf32>
    %72 = arith.addf %69, %71 : vector<16x32xf32>
    %c0_31 = arith.constant 0 : index
    %c0_32 = arith.constant 0 : index
    %73 = vector.load %arg9[%c0_31, %c0_32] : memref<32x32xbf16, #tpu.memory_space<vmem>>, vector<32x32xbf16>
    %cst_33 = arith.constant dense<0.000000e+00> : vector<16x32xf32>
    %74 = tpu.matmul %66, %73, %cst_33 {dimension_numbers = #tpu.dot_dimension_numbers<[1], [0], [0], [1], [0, 0, 1, 1], [], []>} : vector<16x32xbf16>, vector<32x32xbf16>, vector<16x32xf32> -> vector<16x32xf32>
    %c0_34 = arith.constant 0 : index
    %c0_35 = arith.constant 0 : index
    %75 = vector.load %arg10[%c0_34, %c0_35] : memref<1x32xf32, #tpu.memory_space<vmem>>, vector<1x32xf32>
    %76 = vector.broadcast %75 : vector<1x32xf32> to vector<16x32xf32>
    %77 = arith.addf %74, %76 : vector<16x32xf32>
    %c0_36 = arith.constant 0 : index
    %c0_37 = arith.constant 0 : index
    %78 = vector.load %arg11[%c0_36, %c0_37] : memref<32x32xbf16, #tpu.memory_space<vmem>>, vector<32x32xbf16>
    %cst_38 = arith.constant dense<0.000000e+00> : vector<16x32xf32>
    %79 = tpu.matmul %66, %78, %cst_38 {dimension_numbers = #tpu.dot_dimension_numbers<[1], [0], [0], [1], [0, 0, 1, 1], [], []>} : vector<16x32xbf16>, vector<32x32xbf16>, vector<16x32xf32> -> vector<16x32xf32>
    %c0_39 = arith.constant 0 : index
    %c0_40 = arith.constant 0 : index
    %80 = vector.load %arg12[%c0_39, %c0_40] : memref<1x32xf32, #tpu.memory_space<vmem>>, vector<1x32xf32>
    %81 = vector.broadcast %80 : vector<1x32xf32> to vector<16x32xf32>
    %82 = arith.addf %79, %81 : vector<16x32xf32>
    %c0_41 = arith.constant 0 : index
    %c0_42 = arith.constant 0 : index
    %83 = vector.load %arg15[%c0_41, %c0_42] : memref<32x32xbf16, #tpu.memory_space<vmem>>, vector<32x32xbf16>
    %cst_43 = arith.constant dense<0.000000e+00> : vector<8x32xf32>
    %84 = tpu.matmul %67, %83, %cst_43 {dimension_numbers = #tpu.dot_dimension_numbers<[1], [0], [0], [1], [0, 0, 1, 1], [], []>} : vector<8x32xbf16>, vector<32x32xbf16>, vector<8x32xf32> -> vector<8x32xf32>
    %c0_44 = arith.constant 0 : index
    %c0_45 = arith.constant 0 : index
    %85 = vector.load %arg16[%c0_44, %c0_45] : memref<1x32xf32, #tpu.memory_space<vmem>>, vector<1x32xf32>
    %86 = vector.broadcast %85 : vector<1x32xf32> to vector<8x32xf32>
    %87 = arith.addf %84, %86 : vector<8x32xf32>
    %c0_46 = arith.constant 0 : index
    %c0_47 = arith.constant 0 : index
    %88 = vector.load %arg17[%c0_46, %c0_47] : memref<32x32xbf16, #tpu.memory_space<vmem>>, vector<32x32xbf16>
    %cst_48 = arith.constant dense<0.000000e+00> : vector<8x32xf32>
    %89 = tpu.matmul %67, %88, %cst_48 {dimension_numbers = #tpu.dot_dimension_numbers<[1], [0], [0], [1], [0, 0, 1, 1], [], []>} : vector<8x32xbf16>, vector<32x32xbf16>, vector<8x32xf32> -> vector<8x32xf32>
    %c0_49 = arith.constant 0 : index
    %c0_50 = arith.constant 0 : index
    %90 = vector.load %arg18[%c0_49, %c0_50] : memref<1x32xf32, #tpu.memory_space<vmem>>, vector<1x32xf32>
    %91 = vector.broadcast %90 : vector<1x32xf32> to vector<8x32xf32>
    %92 = arith.addf %89, %91 : vector<8x32xf32>
    %c0_51 = arith.constant 0 : index
    %c0_52 = arith.constant 0 : index
    %93 = vector.load %arg19[%c0_51, %c0_52] : memref<32x32xbf16, #tpu.memory_space<vmem>>, vector<32x32xbf16>
    %cst_53 = arith.constant dense<0.000000e+00> : vector<8x32xf32>
    %94 = tpu.matmul %67, %93, %cst_53 {dimension_numbers = #tpu.dot_dimension_numbers<[1], [0], [0], [1], [0, 0, 1, 1], [], []>} : vector<8x32xbf16>, vector<32x32xbf16>, vector<8x32xf32> -> vector<8x32xf32>
    %c0_54 = arith.constant 0 : index
    %c0_55 = arith.constant 0 : index
    %95 = vector.load %arg20[%c0_54, %c0_55] : memref<1x32xf32, #tpu.memory_space<vmem>>, vector<1x32xf32>
    %96 = vector.broadcast %95 : vector<1x32xf32> to vector<8x32xf32>
    %97 = arith.addf %94, %96 : vector<8x32xf32>
    %c0_56 = arith.constant 0 : index
    %c0_57 = arith.constant 0 : index
    %98 = vector.load %arg13[%c0_56, %c0_57] : memref<1x16xf32, #tpu.memory_space<vmem>>, vector<1x16xf32>
    %c0_58 = arith.constant 0 : index
    %c0_59 = arith.constant 0 : index
    %99 = vector.load %arg14[%c0_58, %c0_59] : memref<1x16xf32, #tpu.memory_space<vmem>>, vector<1x16xf32>
    %c0_60 = arith.constant 0 : index
    %c0_61 = arith.constant 0 : index
    %100 = vector.load %arg21[%c0_60, %c0_61] : memref<1x16xf32, #tpu.memory_space<vmem>>, vector<1x16xf32>
    %c0_62 = arith.constant 0 : index
    %c0_63 = arith.constant 0 : index
    %101 = vector.load %arg22[%c0_62, %c0_63] : memref<1x16xf32, #tpu.memory_space<vmem>>, vector<1x16xf32>
    %102 = vector.extract_strided_slice %8 {offsets = [0, 0], sizes = [8, 16], strides = [1, 1]} : vector<24x16xf32> to vector<8x16xf32>
    %103 = vector.extract_strided_slice %8 {offsets = [8, 0], sizes = [16, 16], strides = [1, 1]} : vector<24x16xf32> to vector<16x16xf32>
    %104 = vector.extract_strided_slice %9 {offsets = [0, 0], sizes = [8, 16], strides = [1, 1]} : vector<24x16xf32> to vector<8x16xf32>
    %105 = vector.extract_strided_slice %9 {offsets = [8, 0], sizes = [16, 16], strides = [1, 1]} : vector<24x16xf32> to vector<16x16xf32>
    %106 = vector.extract_strided_slice %87 {offsets = [0, 0], sizes = [8, 16], strides = [1, 1]} : vector<8x32xf32> to vector<8x16xf32>
    %107 = arith.mulf %106, %106 : vector<8x16xf32>
    %cst_64 = arith.constant dense<0.000000e+00> : vector<8xf32>
    %108 = vector.multi_reduction <add>, %107, %cst_64 [1] : vector<8x16xf32> to vector<8xf32>
    %109 = vector.shape_cast %108 : vector<8xf32> to vector<8x1xf32>
    %cst_65 = arith.constant 1.600000e+01 : f32
    %110 = vector.broadcast %cst_65 : f32 to vector<8x1xf32>
    %111 = arith.divf %109, %110 : vector<8x1xf32>
    %cst_66 = arith.constant 9.99999997E-7 : f32
    %112 = vector.broadcast %cst_66 : f32 to vector<8x1xf32>
    %113 = arith.addf %111, %112 : vector<8x1xf32>
    %114 = math.rsqrt %113 : vector<8x1xf32>
    %115 = vector.broadcast %114 : vector<8x1xf32> to vector<8x16xf32>
    %116 = arith.mulf %106, %115 : vector<8x16xf32>
    %117 = vector.broadcast %100 : vector<1x16xf32> to vector<8x16xf32>
    %118 = arith.mulf %116, %117 : vector<8x16xf32>
    %119 = vector.extract_strided_slice %118 {offsets = [0, 0], sizes = [8, 8], strides = [1, 1]} : vector<8x16xf32> to vector<8x8xf32>
    %120 = vector.extract_strided_slice %118 {offsets = [0, 8], sizes = [8, 8], strides = [1, 1]} : vector<8x16xf32> to vector<8x8xf32>
    %cst_67 = arith.constant 0.000000e+00 : f32
    %121 = vector.broadcast %cst_67 : f32 to vector<8x8xf32>
    %122 = arith.subf %121, %120 : vector<8x8xf32>
    %123 = tpu.concatenate %122, %119 in 1 : vector<8x8xf32>, vector<8x8xf32> -> vector<8x16xf32>
    %124 = arith.mulf %118, %102 : vector<8x16xf32>
    %125 = arith.mulf %123, %104 : vector<8x16xf32>
    %126 = arith.addf %124, %125 : vector<8x16xf32>
    %127 = arith.truncf %126 : vector<8x16xf32> to vector<8x16xbf16>
    %c0_68 = arith.constant 0 : index
    %c0_69 = arith.constant 0 : index
    %128 = vector.load %arg37[%c0_68, %c0_69] : memref<24x16xbf16, #tpu.memory_space<vmem>>, vector<8x16xbf16>
    tpu.vector_store %arg37[%c0_68, %c0_69], %127 {strides = array<i32>} : memref<24x16xbf16, #tpu.memory_space<vmem>>, vector<8x16xbf16>,
    %129 = vector.extract_strided_slice %72 {offsets = [0, 0], sizes = [16, 16], strides = [1, 1]} : vector<16x32xf32> to vector<16x16xf32>
    %130 = arith.mulf %129, %129 : vector<16x16xf32>
    %cst_70 = arith.constant dense<0.000000e+00> : vector<16xf32>
    %131 = vector.multi_reduction <add>, %130, %cst_70 [1] : vector<16x16xf32> to vector<16xf32>
    %132 = vector.shape_cast %131 : vector<16xf32> to vector<16x1xf32>
    %cst_71 = arith.constant 1.600000e+01 : f32
    %133 = vector.broadcast %cst_71 : f32 to vector<16x1xf32>
    %134 = arith.divf %132, %133 : vector<16x1xf32>
    %cst_72 = arith.constant 9.99999997E-7 : f32
    %135 = vector.broadcast %cst_72 : f32 to vector<16x1xf32>
    %136 = arith.addf %134, %135 : vector<16x1xf32>
    %137 = math.rsqrt %136 : vector<16x1xf32>
    %138 = vector.broadcast %137 : vector<16x1xf32> to vector<16x16xf32>
    %139 = arith.mulf %129, %138 : vector<16x16xf32>
    %140 = vector.broadcast %98 : vector<1x16xf32> to vector<16x16xf32>
    %141 = arith.mulf %139, %140 : vector<16x16xf32>
    %142 = vector.extract_strided_slice %141 {offsets = [0, 0], sizes = [16, 8], strides = [1, 1]} : vector<16x16xf32> to vector<16x8xf32>
    %143 = vector.extract_strided_slice %141 {offsets = [0, 8], sizes = [16, 8], strides = [1, 1]} : vector<16x16xf32> to vector<16x8xf32>
    %cst_73 = arith.constant 0.000000e+00 : f32
    %144 = vector.broadcast %cst_73 : f32 to vector<16x8xf32>
    %145 = arith.subf %144, %143 : vector<16x8xf32>
    %146 = tpu.concatenate %145, %142 in 1 : vector<16x8xf32>, vector<16x8xf32> -> vector<16x16xf32>
    %147 = arith.mulf %141, %103 : vector<16x16xf32>
    %148 = arith.mulf %146, %105 : vector<16x16xf32>
    %149 = arith.addf %147, %148 : vector<16x16xf32>
    %150 = arith.truncf %149 : vector<16x16xf32> to vector<16x16xbf16>
    %c8 = arith.constant 8 : index
    %c0_74 = arith.constant 0 : index
    %151 = vector.load %arg37[%c8, %c0_74] : memref<24x16xbf16, #tpu.memory_space<vmem>>, vector<16x16xbf16>
    tpu.vector_store %arg37[%c8, %c0_74], %150 {strides = array<i32>} : memref<24x16xbf16, #tpu.memory_space<vmem>>, vector<16x16xbf16>,
    %152 = vector.extract_strided_slice %92 {offsets = [0, 0], sizes = [8, 16], strides = [1, 1]} : vector<8x32xf32> to vector<8x16xf32>
    %153 = arith.mulf %152, %152 : vector<8x16xf32>
    %cst_75 = arith.constant dense<0.000000e+00> : vector<8xf32>
    %154 = vector.multi_reduction <add>, %153, %cst_75 [1] : vector<8x16xf32> to vector<8xf32>
    %155 = vector.shape_cast %154 : vector<8xf32> to vector<8x1xf32>
    %cst_76 = arith.constant 1.600000e+01 : f32
    %156 = vector.broadcast %cst_76 : f32 to vector<8x1xf32>
    %157 = arith.divf %155, %156 : vector<8x1xf32>
    %cst_77 = arith.constant 9.99999997E-7 : f32
    %158 = vector.broadcast %cst_77 : f32 to vector<8x1xf32>
    %159 = arith.addf %157, %158 : vector<8x1xf32>
    %160 = math.rsqrt %159 : vector<8x1xf32>
    %161 = vector.broadcast %160 : vector<8x1xf32> to vector<8x16xf32>
    %162 = arith.mulf %152, %161 : vector<8x16xf32>
    %163 = vector.broadcast %101 : vector<1x16xf32> to vector<8x16xf32>
    %164 = arith.mulf %162, %163 : vector<8x16xf32>
    %165 = vector.extract_strided_slice %164 {offsets = [0, 0], sizes = [8, 8], strides = [1, 1]} : vector<8x16xf32> to vector<8x8xf32>
    %166 = vector.extract_strided_slice %164 {offsets = [0, 8], sizes = [8, 8], strides = [1, 1]} : vector<8x16xf32> to vector<8x8xf32>
    %cst_78 = arith.constant 0.000000e+00 : f32
    %167 = vector.broadcast %cst_78 : f32 to vector<8x8xf32>
    %168 = arith.subf %167, %166 : vector<8x8xf32>
    %169 = tpu.concatenate %168, %165 in 1 : vector<8x8xf32>, vector<8x8xf32> -> vector<8x16xf32>
    %170 = arith.mulf %164, %102 : vector<8x16xf32>
    %171 = arith.mulf %169, %104 : vector<8x16xf32>
    %172 = arith.addf %170, %171 : vector<8x16xf32>
    %173 = arith.truncf %172 : vector<8x16xf32> to vector<8x16xbf16>
    %c0_79 = arith.constant 0 : index
    %c0_80 = arith.constant 0 : index
    %174 = vector.load %arg38[%c0_79, %c0_80] : memref<24x16xbf16, #tpu.memory_space<vmem>>, vector<8x16xbf16>
    tpu.vector_store %arg38[%c0_79, %c0_80], %173 {strides = array<i32>} : memref<24x16xbf16, #tpu.memory_space<vmem>>, vector<8x16xbf16>,
    %175 = vector.extract_strided_slice %77 {offsets = [0, 0], sizes = [16, 16], strides = [1, 1]} : vector<16x32xf32> to vector<16x16xf32>
    %176 = arith.mulf %175, %175 : vector<16x16xf32>
    %cst_81 = arith.constant dense<0.000000e+00> : vector<16xf32>
    %177 = vector.multi_reduction <add>, %176, %cst_81 [1] : vector<16x16xf32> to vector<16xf32>
    %178 = vector.shape_cast %177 : vector<16xf32> to vector<16x1xf32>
    %cst_82 = arith.constant 1.600000e+01 : f32
    %179 = vector.broadcast %cst_82 : f32 to vector<16x1xf32>
    %180 = arith.divf %178, %179 : vector<16x1xf32>
    %cst_83 = arith.constant 9.99999997E-7 : f32
    %181 = vector.broadcast %cst_83 : f32 to vector<16x1xf32>
    %182 = arith.addf %180, %181 : vector<16x1xf32>
    %183 = math.rsqrt %182 : vector<16x1xf32>
    %184 = vector.broadcast %183 : vector<16x1xf32> to vector<16x16xf32>
    %185 = arith.mulf %175, %184 : vector<16x16xf32>
    %186 = vector.broadcast %99 : vector<1x16xf32> to vector<16x16xf32>
    %187 = arith.mulf %185, %186 : vector<16x16xf32>
    %188 = vector.extract_strided_slice %187 {offsets = [0, 0], sizes = [16, 8], strides = [1, 1]} : vector<16x16xf32> to vector<16x8xf32>
    %189 = vector.extract_strided_slice %187 {offsets = [0, 8], sizes = [16, 8], strides = [1, 1]} : vector<16x16xf32> to vector<16x8xf32>
    %cst_84 = arith.constant 0.000000e+00 : f32
    %190 = vector.broadcast %cst_84 : f32 to vector<16x8xf32>
    %191 = arith.subf %190, %189 : vector<16x8xf32>
    %192 = tpu.concatenate %191, %188 in 1 : vector<16x8xf32>, vector<16x8xf32> -> vector<16x16xf32>
    %193 = arith.mulf %187, %103 : vector<16x16xf32>
    %194 = arith.mulf %192, %105 : vector<16x16xf32>
    %195 = arith.addf %193, %194 : vector<16x16xf32>
    %196 = arith.truncf %195 : vector<16x16xf32> to vector<16x16xbf16>
    %c8_85 = arith.constant 8 : index
    %c0_86 = arith.constant 0 : index
    %197 = vector.load %arg38[%c8_85, %c0_86] : memref<24x16xbf16, #tpu.memory_space<vmem>>, vector<16x16xbf16>
    tpu.vector_store %arg38[%c8_85, %c0_86], %196 {strides = array<i32>} : memref<24x16xbf16, #tpu.memory_space<vmem>>, vector<16x16xbf16>,
    %198 = vector.extract_strided_slice %97 {offsets = [0, 0], sizes = [8, 16], strides = [1, 1]} : vector<8x32xf32> to vector<8x16xf32>
    %199 = arith.truncf %198 : vector<8x16xf32> to vector<8x16xbf16>
    %c0_87 = arith.constant 0 : index
    %c0_88 = arith.constant 0 : index
    %200 = vector.load %arg39[%c0_87, %c0_88] : memref<24x16xbf16, #tpu.memory_space<vmem>>, vector<8x16xbf16>
    tpu.vector_store %arg39[%c0_87, %c0_88], %199 {strides = array<i32>} : memref<24x16xbf16, #tpu.memory_space<vmem>>, vector<8x16xbf16>,
    %201 = vector.extract_strided_slice %82 {offsets = [0, 0], sizes = [16, 16], strides = [1, 1]} : vector<16x32xf32> to vector<16x16xf32>
    %202 = arith.truncf %201 : vector<16x16xf32> to vector<16x16xbf16>
    %c8_89 = arith.constant 8 : index
    %c0_90 = arith.constant 0 : index
    %203 = vector.load %arg39[%c8_89, %c0_90] : memref<24x16xbf16, #tpu.memory_space<vmem>>, vector<16x16xbf16>
    tpu.vector_store %arg39[%c8_89, %c0_90], %202 {strides = array<i32>} : memref<24x16xbf16, #tpu.memory_space<vmem>>, vector<16x16xbf16>,
    %c0_91 = arith.constant 0 : index
    %c0_92 = arith.constant 0 : index
    %204 = vector.load %arg37[%c0_91, %c0_92] : memref<24x16xbf16, #tpu.memory_space<vmem>>, vector<24x16xbf16>
    %c0_93 = arith.constant 0 : index
    %c0_94 = arith.constant 0 : index
    %205 = vector.load %arg38[%c0_93, %c0_94] : memref<24x16xbf16, #tpu.memory_space<vmem>>, vector<24x16xbf16>
    %c0_95 = arith.constant 0 : index
    %c0_96 = arith.constant 0 : index
    %206 = vector.load %arg39[%c0_95, %c0_96] : memref<24x16xbf16, #tpu.memory_space<vmem>>, vector<24x16xbf16>
    %cst_97 = arith.constant dense<0.000000e+00> : vector<24x24xf32>
    %207 = tpu.matmul %204, %205, %cst_97 {dimension_numbers = #tpu.dot_dimension_numbers<[1], [1], [0], [0], [0, 0, 1, 0], [], []>} : vector<24x16xbf16>, vector<24x16xbf16>, vector<24x24xf32> -> vector<24x24xf32>
    %cst_98 = arith.constant 2.500000e-01 : f32
    %208 = vector.broadcast %cst_98 : f32 to vector<24x24xf32>
    %209 = arith.mulf %207, %208 : vector<24x24xf32>
    %cst_99 = arith.constant dense<0xFF800000> : vector<24xf32>
    %210 = vector.multi_reduction <maximumf>, %209, %cst_99 [1] : vector<24x24xf32> to vector<24xf32>
    %211 = vector.shape_cast %210 : vector<24xf32> to vector<24x1xf32>
    %212 = vector.broadcast %211 : vector<24x1xf32> to vector<24x24xf32>
    %213 = arith.subf %209, %212 : vector<24x24xf32>
    %214 = math.exp %213 : vector<24x24xf32>
    %cst_100 = arith.constant dense<0.000000e+00> : vector<24xf32>
    %215 = vector.multi_reduction <add>, %214, %cst_100 [1] : vector<24x24xf32> to vector<24xf32>
    %216 = vector.shape_cast %215 : vector<24xf32> to vector<24x1xf32>
    %217 = tpu.reciprocal %216 {approx = true} : vector<24x1xf32> -> vector<24x1xf32>
    %218 = vector.broadcast %217 : vector<24x1xf32> to vector<24x24xf32>
    %219 = arith.mulf %214, %218 : vector<24x24xf32>
    %220 = arith.truncf %219 : vector<24x24xf32> to vector<24x24xbf16>
    %cst_101 = arith.constant dense<0.000000e+00> : vector<24x16xf32>
    %221 = tpu.matmul %220, %206, %cst_101 {dimension_numbers = #tpu.dot_dimension_numbers<[1], [0], [0], [1], [0, 0, 1, 1], [], []>} : vector<24x24xbf16>, vector<24x16xbf16>, vector<24x16xf32> -> vector<24x16xf32>
    %222 = arith.truncf %221 : vector<24x16xf32> to vector<24x16xbf16>
    %c0_102 = arith.constant 0 : index
    %c0_103 = arith.constant 0 : index
    %223 = vector.load %arg40[%c0_102, %c0_103] : memref<24x32xbf16, #tpu.memory_space<vmem>>, vector<24x16xbf16>
    tpu.vector_store %arg40[%c0_102, %c0_103], %222 {strides = array<i32>} : memref<24x32xbf16, #tpu.memory_space<vmem>>, vector<24x16xbf16>,
    %224 = vector.extract_strided_slice %87 {offsets = [0, 16], sizes = [8, 16], strides = [1, 1]} : vector<8x32xf32> to vector<8x16xf32>
    %225 = arith.mulf %224, %224 : vector<8x16xf32>
    %cst_104 = arith.constant dense<0.000000e+00> : vector<8xf32>
    %226 = vector.multi_reduction <add>, %225, %cst_104 [1] : vector<8x16xf32> to vector<8xf32>
    %227 = vector.shape_cast %226 : vector<8xf32> to vector<8x1xf32>
    %cst_105 = arith.constant 1.600000e+01 : f32
    %228 = vector.broadcast %cst_105 : f32 to vector<8x1xf32>
    %229 = arith.divf %227, %228 : vector<8x1xf32>
    %cst_106 = arith.constant 9.99999997E-7 : f32
    %230 = vector.broadcast %cst_106 : f32 to vector<8x1xf32>
    %231 = arith.addf %229, %230 : vector<8x1xf32>
    %232 = math.rsqrt %231 : vector<8x1xf32>
    %233 = vector.broadcast %232 : vector<8x1xf32> to vector<8x16xf32>
    %234 = arith.mulf %224, %233 : vector<8x16xf32>
    %235 = vector.broadcast %100 : vector<1x16xf32> to vector<8x16xf32>
    %236 = arith.mulf %234, %235 : vector<8x16xf32>
    %237 = vector.extract_strided_slice %236 {offsets = [0, 0], sizes = [8, 8], strides = [1, 1]} : vector<8x16xf32> to vector<8x8xf32>
    %238 = vector.extract_strided_slice %236 {offsets = [0, 8], sizes = [8, 8], strides = [1, 1]} : vector<8x16xf32> to vector<8x8xf32>
    %cst_107 = arith.constant 0.000000e+00 : f32
    %239 = vector.broadcast %cst_107 : f32 to vector<8x8xf32>
    %240 = arith.subf %239, %238 : vector<8x8xf32>
    %241 = tpu.concatenate %240, %237 in 1 : vector<8x8xf32>, vector<8x8xf32> -> vector<8x16xf32>
    %242 = arith.mulf %236, %102 : vector<8x16xf32>
    %243 = arith.mulf %241, %104 : vector<8x16xf32>
    %244 = arith.addf %242, %243 : vector<8x16xf32>
    %245 = arith.truncf %244 : vector<8x16xf32> to vector<8x16xbf16>
    %c0_108 = arith.constant 0 : index
    %c0_109 = arith.constant 0 : index
    %246 = vector.load %arg37[%c0_108, %c0_109] : memref<24x16xbf16, #tpu.memory_space<vmem>>, vector<8x16xbf16>
    tpu.vector_store %arg37[%c0_108, %c0_109], %245 {strides = array<i32>} : memref<24x16xbf16, #tpu.memory_space<vmem>>, vector<8x16xbf16>,
    %247 = vector.extract_strided_slice %72 {offsets = [0, 16], sizes = [16, 16], strides = [1, 1]} : vector<16x32xf32> to vector<16x16xf32>
    %248 = arith.mulf %247, %247 : vector<16x16xf32>
    %cst_110 = arith.constant dense<0.000000e+00> : vector<16xf32>
    %249 = vector.multi_reduction <add>, %248, %cst_110 [1] : vector<16x16xf32> to vector<16xf32>
    %250 = vector.shape_cast %249 : vector<16xf32> to vector<16x1xf32>
    %cst_111 = arith.constant 1.600000e+01 : f32
    %251 = vector.broadcast %cst_111 : f32 to vector<16x1xf32>
    %252 = arith.divf %250, %251 : vector<16x1xf32>
    %cst_112 = arith.constant 9.99999997E-7 : f32
    %253 = vector.broadcast %cst_112 : f32 to vector<16x1xf32>
    %254 = arith.addf %252, %253 : vector<16x1xf32>
    %255 = math.rsqrt %254 : vector<16x1xf32>
    %256 = vector.broadcast %255 : vector<16x1xf32> to vector<16x16xf32>
    %257 = arith.mulf %247, %256 : vector<16x16xf32>
    %258 = vector.broadcast %98 : vector<1x16xf32> to vector<16x16xf32>
    %259 = arith.mulf %257, %258 : vector<16x16xf32>
    %260 = vector.extract_strided_slice %259 {offsets = [0, 0], sizes = [16, 8], strides = [1, 1]} : vector<16x16xf32> to vector<16x8xf32>
    %261 = vector.extract_strided_slice %259 {offsets = [0, 8], sizes = [16, 8], strides = [1, 1]} : vector<16x16xf32> to vector<16x8xf32>
    %cst_113 = arith.constant 0.000000e+00 : f32
    %262 = vector.broadcast %cst_113 : f32 to vector<16x8xf32>
    %263 = arith.subf %262, %261 : vector<16x8xf32>
    %264 = tpu.concatenate %263, %260 in 1 : vector<16x8xf32>, vector<16x8xf32> -> vector<16x16xf32>
    %265 = arith.mulf %259, %103 : vector<16x16xf32>
    %266 = arith.mulf %264, %105 : vector<16x16xf32>
    %267 = arith.addf %265, %266 : vector<16x16xf32>
    %268 = arith.truncf %267 : vector<16x16xf32> to vector<16x16xbf16>
    %c8_114 = arith.constant 8 : index
    %c0_115 = arith.constant 0 : index
    %269 = vector.load %arg37[%c8_114, %c0_115] : memref<24x16xbf16, #tpu.memory_space<vmem>>, vector<16x16xbf16>
    tpu.vector_store %arg37[%c8_114, %c0_115], %268 {strides = array<i32>} : memref<24x16xbf16, #tpu.memory_space<vmem>>, vector<16x16xbf16>,
    %270 = vector.extract_strided_slice %92 {offsets = [0, 16], sizes = [8, 16], strides = [1, 1]} : vector<8x32xf32> to vector<8x16xf32>
    %271 = arith.mulf %270, %270 : vector<8x16xf32>
    %cst_116 = arith.constant dense<0.000000e+00> : vector<8xf32>
    %272 = vector.multi_reduction <add>, %271, %cst_116 [1] : vector<8x16xf32> to vector<8xf32>
    %273 = vector.shape_cast %272 : vector<8xf32> to vector<8x1xf32>
    %cst_117 = arith.constant 1.600000e+01 : f32
    %274 = vector.broadcast %cst_117 : f32 to vector<8x1xf32>
    %275 = arith.divf %273, %274 : vector<8x1xf32>
    %cst_118 = arith.constant 9.99999997E-7 : f32
    %276 = vector.broadcast %cst_118 : f32 to vector<8x1xf32>
    %277 = arith.addf %275, %276 : vector<8x1xf32>
    %278 = math.rsqrt %277 : vector<8x1xf32>
    %279 = vector.broadcast %278 : vector<8x1xf32> to vector<8x16xf32>
    %280 = arith.mulf %270, %279 : vector<8x16xf32>
    %281 = vector.broadcast %101 : vector<1x16xf32> to vector<8x16xf32>
    %282 = arith.mulf %280, %281 : vector<8x16xf32>
    %283 = vector.extract_strided_slice %282 {offsets = [0, 0], sizes = [8, 8], strides = [1, 1]} : vector<8x16xf32> to vector<8x8xf32>
    %284 = vector.extract_strided_slice %282 {offsets = [0, 8], sizes = [8, 8], strides = [1, 1]} : vector<8x16xf32> to vector<8x8xf32>
    %cst_119 = arith.constant 0.000000e+00 : f32
    %285 = vector.broadcast %cst_119 : f32 to vector<8x8xf32>
    %286 = arith.subf %285, %284 : vector<8x8xf32>
    %287 = tpu.concatenate %286, %283 in 1 : vector<8x8xf32>, vector<8x8xf32> -> vector<8x16xf32>
    %288 = arith.mulf %282, %102 : vector<8x16xf32>
    %289 = arith.mulf %287, %104 : vector<8x16xf32>
    %290 = arith.addf %288, %289 : vector<8x16xf32>
    %291 = arith.truncf %290 : vector<8x16xf32> to vector<8x16xbf16>
    %c0_120 = arith.constant 0 : index
    %c0_121 = arith.constant 0 : index
    %292 = vector.load %arg38[%c0_120, %c0_121] : memref<24x16xbf16, #tpu.memory_space<vmem>>, vector<8x16xbf16>
    tpu.vector_store %arg38[%c0_120, %c0_121], %291 {strides = array<i32>} : memref<24x16xbf16, #tpu.memory_space<vmem>>, vector<8x16xbf16>,
    %293 = vector.extract_strided_slice %77 {offsets = [0, 16], sizes = [16, 16], strides = [1, 1]} : vector<16x32xf32> to vector<16x16xf32>
    %294 = arith.mulf %293, %293 : vector<16x16xf32>
    %cst_122 = arith.constant dense<0.000000e+00> : vector<16xf32>
    %295 = vector.multi_reduction <add>, %294, %cst_122 [1] : vector<16x16xf32> to vector<16xf32>
    %296 = vector.shape_cast %295 : vector<16xf32> to vector<16x1xf32>
    %cst_123 = arith.constant 1.600000e+01 : f32
    %297 = vector.broadcast %cst_123 : f32 to vector<16x1xf32>
    %298 = arith.divf %296, %297 : vector<16x1xf32>
    %cst_124 = arith.constant 9.99999997E-7 : f32
    %299 = vector.broadcast %cst_124 : f32 to vector<16x1xf32>
    %300 = arith.addf %298, %299 : vector<16x1xf32>
    %301 = math.rsqrt %300 : vector<16x1xf32>
    %302 = vector.broadcast %301 : vector<16x1xf32> to vector<16x16xf32>
    %303 = arith.mulf %293, %302 : vector<16x16xf32>
    %304 = vector.broadcast %99 : vector<1x16xf32> to vector<16x16xf32>
    %305 = arith.mulf %303, %304 : vector<16x16xf32>
    %306 = vector.extract_strided_slice %305 {offsets = [0, 0], sizes = [16, 8], strides = [1, 1]} : vector<16x16xf32> to vector<16x8xf32>
    %307 = vector.extract_strided_slice %305 {offsets = [0, 8], sizes = [16, 8], strides = [1, 1]} : vector<16x16xf32> to vector<16x8xf32>
    %cst_125 = arith.constant 0.000000e+00 : f32
    %308 = vector.broadcast %cst_125 : f32 to vector<16x8xf32>
    %309 = arith.subf %308, %307 : vector<16x8xf32>
    %310 = tpu.concatenate %309, %306 in 1 : vector<16x8xf32>, vector<16x8xf32> -> vector<16x16xf32>
    %311 = arith.mulf %305, %103 : vector<16x16xf32>
    %312 = arith.mulf %310, %105 : vector<16x16xf32>
    %313 = arith.addf %311, %312 : vector<16x16xf32>
    %314 = arith.truncf %313 : vector<16x16xf32> to vector<16x16xbf16>
    %c8_126 = arith.constant 8 : index
    %c0_127 = arith.constant 0 : index
    %315 = vector.load %arg38[%c8_126, %c0_127] : memref<24x16xbf16, #tpu.memory_space<vmem>>, vector<16x16xbf16>
    tpu.vector_store %arg38[%c8_126, %c0_127], %314 {strides = array<i32>} : memref<24x16xbf16, #tpu.memory_space<vmem>>, vector<16x16xbf16>,
    %316 = vector.extract_strided_slice %97 {offsets = [0, 16], sizes = [8, 16], strides = [1, 1]} : vector<8x32xf32> to vector<8x16xf32>
    %317 = arith.truncf %316 : vector<8x16xf32> to vector<8x16xbf16>
    %c0_128 = arith.constant 0 : index
    %c0_129 = arith.constant 0 : index
    %318 = vector.load %arg39[%c0_128, %c0_129] : memref<24x16xbf16, #tpu.memory_space<vmem>>, vector<8x16xbf16>
    tpu.vector_store %arg39[%c0_128, %c0_129], %317 {strides = array<i32>} : memref<24x16xbf16, #tpu.memory_space<vmem>>, vector<8x16xbf16>,
    %319 = vector.extract_strided_slice %82 {offsets = [0, 16], sizes = [16, 16], strides = [1, 1]} : vector<16x32xf32> to vector<16x16xf32>
    %320 = arith.truncf %319 : vector<16x16xf32> to vector<16x16xbf16>
    %c8_130 = arith.constant 8 : index
    %c0_131 = arith.constant 0 : index
    %321 = vector.load %arg39[%c8_130, %c0_131] : memref<24x16xbf16, #tpu.memory_space<vmem>>, vector<16x16xbf16>
    tpu.vector_store %arg39[%c8_130, %c0_131], %320 {strides = array<i32>} : memref<24x16xbf16, #tpu.memory_space<vmem>>, vector<16x16xbf16>,
    %c0_132 = arith.constant 0 : index
    %c0_133 = arith.constant 0 : index
    %322 = vector.load %arg37[%c0_132, %c0_133] : memref<24x16xbf16, #tpu.memory_space<vmem>>, vector<24x16xbf16>
    %c0_134 = arith.constant 0 : index
    %c0_135 = arith.constant 0 : index
    %323 = vector.load %arg38[%c0_134, %c0_135] : memref<24x16xbf16, #tpu.memory_space<vmem>>, vector<24x16xbf16>
    %c0_136 = arith.constant 0 : index
    %c0_137 = arith.constant 0 : index
    %324 = vector.load %arg39[%c0_136, %c0_137] : memref<24x16xbf16, #tpu.memory_space<vmem>>, vector<24x16xbf16>
    %cst_138 = arith.constant dense<0.000000e+00> : vector<24x24xf32>
    %325 = tpu.matmul %322, %323, %cst_138 {dimension_numbers = #tpu.dot_dimension_numbers<[1], [1], [0], [0], [0, 0, 1, 0], [], []>} : vector<24x16xbf16>, vector<24x16xbf16>, vector<24x24xf32> -> vector<24x24xf32>
    %cst_139 = arith.constant 2.500000e-01 : f32
    %326 = vector.broadcast %cst_139 : f32 to vector<24x24xf32>
    %327 = arith.mulf %325, %326 : vector<24x24xf32>
    %cst_140 = arith.constant dense<0xFF800000> : vector<24xf32>
    %328 = vector.multi_reduction <maximumf>, %327, %cst_140 [1] : vector<24x24xf32> to vector<24xf32>
    %329 = vector.shape_cast %328 : vector<24xf32> to vector<24x1xf32>
    %330 = vector.broadcast %329 : vector<24x1xf32> to vector<24x24xf32>
    %331 = arith.subf %327, %330 : vector<24x24xf32>
    %332 = math.exp %331 : vector<24x24xf32>
    %cst_141 = arith.constant dense<0.000000e+00> : vector<24xf32>
    %333 = vector.multi_reduction <add>, %332, %cst_141 [1] : vector<24x24xf32> to vector<24xf32>
    %334 = vector.shape_cast %333 : vector<24xf32> to vector<24x1xf32>
    %335 = tpu.reciprocal %334 {approx = true} : vector<24x1xf32> -> vector<24x1xf32>
    %336 = vector.broadcast %335 : vector<24x1xf32> to vector<24x24xf32>
    %337 = arith.mulf %332, %336 : vector<24x24xf32>
    %338 = arith.truncf %337 : vector<24x24xf32> to vector<24x24xbf16>
    %cst_142 = arith.constant dense<0.000000e+00> : vector<24x16xf32>
    %339 = tpu.matmul %338, %324, %cst_142 {dimension_numbers = #tpu.dot_dimension_numbers<[1], [0], [0], [1], [0, 0, 1, 1], [], []>} : vector<24x24xbf16>, vector<24x16xbf16>, vector<24x16xf32> -> vector<24x16xf32>
    %340 = arith.truncf %339 : vector<24x16xf32> to vector<24x16xbf16>
    %c0_143 = arith.constant 0 : index
    %c16 = arith.constant 16 : index
    %341 = vector.load %arg40[%c0_143, %c16] : memref<24x32xbf16, #tpu.memory_space<vmem>>, vector<24x16xbf16>
    tpu.vector_store %arg40[%c0_143, %c16], %340 {strides = array<i32>} : memref<24x32xbf16, #tpu.memory_space<vmem>>, vector<24x16xbf16>,
    %c0_144 = arith.constant 0 : index
    %c0_145 = arith.constant 0 : index
    %342 = vector.load %arg40[%c0_144, %c0_145] : memref<24x32xbf16, #tpu.memory_space<vmem>>, vector<24x32xbf16>
    %343 = vector.extract_strided_slice %342 {offsets = [8, 0], sizes = [16, 32], strides = [1, 1]} : vector<24x32xbf16> to vector<16x32xbf16>
    %c0_146 = arith.constant 0 : index
    %c0_147 = arith.constant 0 : index
    %344 = vector.load %arg23[%c0_146, %c0_147] : memref<32x32xbf16, #tpu.memory_space<vmem>>, vector<32x32xbf16>
    %cst_148 = arith.constant dense<0.000000e+00> : vector<16x32xf32>
    %345 = tpu.matmul %343, %344, %cst_148 {dimension_numbers = #tpu.dot_dimension_numbers<[1], [0], [0], [1], [0, 0, 1, 1], [], []>} : vector<16x32xbf16>, vector<32x32xbf16>, vector<16x32xf32> -> vector<16x32xf32>
    %c0_149 = arith.constant 0 : index
    %c0_150 = arith.constant 0 : index
    %346 = vector.load %arg24[%c0_149, %c0_150] : memref<1x32xf32, #tpu.memory_space<vmem>>, vector<1x32xf32>
    %347 = vector.broadcast %346 : vector<1x32xf32> to vector<16x32xf32>
    %348 = arith.addf %345, %347 : vector<16x32xf32>
    %349 = vector.extract_strided_slice %342 {offsets = [0, 0], sizes = [8, 32], strides = [1, 1]} : vector<24x32xbf16> to vector<8x32xbf16>
    %c0_151 = arith.constant 0 : index
    %c0_152 = arith.constant 0 : index
    %350 = vector.load %arg25[%c0_151, %c0_152] : memref<32x32xbf16, #tpu.memory_space<vmem>>, vector<32x32xbf16>
    %cst_153 = arith.constant dense<0.000000e+00> : vector<8x32xf32>
    %351 = tpu.matmul %349, %350, %cst_153 {dimension_numbers = #tpu.dot_dimension_numbers<[1], [0], [0], [1], [0, 0, 1, 1], [], []>} : vector<8x32xbf16>, vector<32x32xbf16>, vector<8x32xf32> -> vector<8x32xf32>
    %c0_154 = arith.constant 0 : index
    %c0_155 = arith.constant 0 : index
    %352 = vector.load %arg26[%c0_154, %c0_155] : memref<1x32xf32, #tpu.memory_space<vmem>>, vector<1x32xf32>
    %353 = vector.broadcast %352 : vector<1x32xf32> to vector<8x32xf32>
    %354 = arith.addf %351, %353 : vector<8x32xf32>
    %355 = vector.broadcast %12 : vector<1x32xf32> to vector<16x32xf32>
    %356 = arith.mulf %355, %348 : vector<16x32xf32>
    %357 = arith.addf %1, %356 : vector<16x32xf32>
    %cst_156 = arith.constant dense<0.000000e+00> : vector<16xf32>
    %358 = vector.multi_reduction <add>, %357, %cst_156 [1] : vector<16x32xf32> to vector<16xf32>
    %359 = vector.shape_cast %358 : vector<16xf32> to vector<16x1xf32>
    %cst_157 = arith.constant 3.200000e+01 : f32
    %360 = vector.broadcast %cst_157 : f32 to vector<16x1xf32>
    %361 = arith.divf %359, %360 : vector<16x1xf32>
    %362 = vector.broadcast %361 : vector<16x1xf32> to vector<16x32xf32>
    %363 = arith.subf %357, %362 : vector<16x32xf32>
    %364 = arith.mulf %363, %363 : vector<16x32xf32>
    %cst_158 = arith.constant dense<0.000000e+00> : vector<16xf32>
    %365 = vector.multi_reduction <add>, %364, %cst_158 [1] : vector<16x32xf32> to vector<16xf32>
    %366 = vector.shape_cast %365 : vector<16xf32> to vector<16x1xf32>
    %cst_159 = arith.constant 3.200000e+01 : f32
    %367 = vector.broadcast %cst_159 : f32 to vector<16x1xf32>
    %368 = arith.divf %366, %367 : vector<16x1xf32>
    %cst_160 = arith.constant 9.99999997E-7 : f32
    %369 = vector.broadcast %cst_160 : f32 to vector<16x1xf32>
    %370 = arith.addf %368, %369 : vector<16x1xf32>
    %371 = math.rsqrt %370 : vector<16x1xf32>
    %372 = vector.broadcast %371 : vector<16x1xf32> to vector<16x32xf32>
    %373 = arith.mulf %363, %372 : vector<16x32xf32>
    %cst_161 = arith.constant 1.000000e+00 : f32
    %374 = vector.broadcast %cst_161 : f32 to vector<1x32xf32>
    %375 = arith.addf %374, %14 : vector<1x32xf32>
    %376 = vector.broadcast %375 : vector<1x32xf32> to vector<16x32xf32>
    %377 = arith.mulf %373, %376 : vector<16x32xf32>
    %378 = vector.broadcast %13 : vector<1x32xf32> to vector<16x32xf32>
    %379 = arith.addf %377, %378 : vector<16x32xf32>
    %380 = arith.truncf %379 : vector<16x32xf32> to vector<16x32xbf16>
    %c0_162 = arith.constant 0 : index
    %c0_163 = arith.constant 0 : index
    %381 = vector.load %arg27[%c0_162, %c0_163] : memref<32x128xbf16, #tpu.memory_space<vmem>>, vector<32x128xbf16>
    %cst_164 = arith.constant dense<0.000000e+00> : vector<16x128xf32>
    %382 = tpu.matmul %380, %381, %cst_164 {dimension_numbers = #tpu.dot_dimension_numbers<[1], [0], [0], [1], [0, 0, 1, 1], [], []>} : vector<16x32xbf16>, vector<32x128xbf16>, vector<16x128xf32> -> vector<16x128xf32>
    %c0_165 = arith.constant 0 : index
    %c0_166 = arith.constant 0 : index
    %383 = vector.load %arg28[%c0_165, %c0_166] : memref<1x128xf32, #tpu.memory_space<vmem>>, vector<1x128xf32>
    %384 = vector.broadcast %383 : vector<1x128xf32> to vector<16x128xf32>
    %385 = arith.addf %382, %384 : vector<16x128xf32>
    %cst_167 = arith.constant 5.000000e-01 : f32
    %386 = vector.broadcast %cst_167 : f32 to vector<16x128xf32>
    %387 = arith.mulf %386, %385 : vector<16x128xf32>
    %cst_168 = arith.constant 4.471500e-02 : f32
    %388 = vector.broadcast %cst_168 : f32 to vector<16x128xf32>
    %389 = arith.mulf %388, %385 : vector<16x128xf32>
    %390 = arith.mulf %389, %385 : vector<16x128xf32>
    %391 = arith.mulf %390, %385 : vector<16x128xf32>
    %392 = arith.addf %385, %391 : vector<16x128xf32>
    %cst_169 = arith.constant 0.797884583 : f32
    %393 = vector.broadcast %cst_169 : f32 to vector<16x128xf32>
    %394 = arith.mulf %393, %392 : vector<16x128xf32>
    %395 = math.tanh %394 : vector<16x128xf32>
    %cst_170 = arith.constant 1.000000e+00 : f32
    %396 = vector.broadcast %cst_170 : f32 to vector<16x128xf32>
    %397 = arith.addf %396, %395 : vector<16x128xf32>
    %398 = arith.mulf %387, %397 : vector<16x128xf32>
    %399 = arith.truncf %398 : vector<16x128xf32> to vector<16x128xbf16>
    %c0_171 = arith.constant 0 : index
    %c0_172 = arith.constant 0 : index
    %400 = vector.load %arg29[%c0_171, %c0_172] : memref<128x32xbf16, #tpu.memory_space<vmem>>, vector<128x32xbf16>
    %cst_173 = arith.constant dense<0.000000e+00> : vector<16x32xf32>
    %401 = tpu.matmul %399, %400, %cst_173 {dimension_numbers = #tpu.dot_dimension_numbers<[1], [0], [0], [1], [0, 0, 1, 1], [], []>} : vector<16x128xbf16>, vector<128x32xbf16>, vector<16x32xf32> -> vector<16x32xf32>
    %c0_174 = arith.constant 0 : index
    %c0_175 = arith.constant 0 : index
    %402 = vector.load %arg30[%c0_174, %c0_175] : memref<1x32xf32, #tpu.memory_space<vmem>>, vector<1x32xf32>
    %403 = vector.broadcast %402 : vector<1x32xf32> to vector<16x32xf32>
    %404 = arith.addf %401, %403 : vector<16x32xf32>
    %405 = vector.broadcast %15 : vector<1x32xf32> to vector<16x32xf32>
    %406 = arith.mulf %405, %404 : vector<16x32xf32>
    %407 = arith.addf %357, %406 : vector<16x32xf32>
    %c0_176 = arith.constant 0 : index
    %c0_177 = arith.constant 0 : index
    %c0_178 = arith.constant 0 : index
    %408 = vector.load %arg36[%c0_176, %c0_177, %c0_178] : memref<1x16x32xf32, #tpu.memory_space<vmem>>, vector<1x16x32xf32>
    %409 = vector.shape_cast %408 : vector<1x16x32xf32> to vector<16x32xf32>
    %410 = vector.shape_cast %407 : vector<16x32xf32> to vector<1x16x32xf32>
    tpu.vector_store %arg36[%c0_176, %c0_177, %c0_178], %410 {strides = array<i32>} : memref<1x16x32xf32, #tpu.memory_space<vmem>>, vector<1x16x32xf32>,
    %411 = vector.broadcast %18 : vector<1x32xf32> to vector<8x32xf32>
    %412 = arith.mulf %411, %354 : vector<8x32xf32>
    %413 = arith.addf %3, %412 : vector<8x32xf32>
    %cst_179 = arith.constant dense<0.000000e+00> : vector<8xf32>
    %414 = vector.multi_reduction <add>, %413, %cst_179 [1] : vector<8x32xf32> to vector<8xf32>
    %415 = vector.shape_cast %414 : vector<8xf32> to vector<8x1xf32>
    %cst_180 = arith.constant 3.200000e+01 : f32
    %416 = vector.broadcast %cst_180 : f32 to vector<8x1xf32>
    %417 = arith.divf %415, %416 : vector<8x1xf32>
    %418 = vector.broadcast %417 : vector<8x1xf32> to vector<8x32xf32>
    %419 = arith.subf %413, %418 : vector<8x32xf32>
    %420 = arith.mulf %419, %419 : vector<8x32xf32>
    %cst_181 = arith.constant dense<0.000000e+00> : vector<8xf32>
    %421 = vector.multi_reduction <add>, %420, %cst_181 [1] : vector<8x32xf32> to vector<8xf32>
    %422 = vector.shape_cast %421 : vector<8xf32> to vector<8x1xf32>
    %cst_182 = arith.constant 3.200000e+01 : f32
    %423 = vector.broadcast %cst_182 : f32 to vector<8x1xf32>
    %424 = arith.divf %422, %423 : vector<8x1xf32>
    %cst_183 = arith.constant 9.99999997E-7 : f32
    %425 = vector.broadcast %cst_183 : f32 to vector<8x1xf32>
    %426 = arith.addf %424, %425 : vector<8x1xf32>
    %427 = math.rsqrt %426 : vector<8x1xf32>
    %428 = vector.broadcast %427 : vector<8x1xf32> to vector<8x32xf32>
    %429 = arith.mulf %419, %428 : vector<8x32xf32>
    %cst_184 = arith.constant 1.000000e+00 : f32
    %430 = vector.broadcast %cst_184 : f32 to vector<1x32xf32>
    %431 = arith.addf %430, %20 : vector<1x32xf32>
    %432 = vector.broadcast %431 : vector<1x32xf32> to vector<8x32xf32>
    %433 = arith.mulf %429, %432 : vector<8x32xf32>
    %434 = vector.broadcast %19 : vector<1x32xf32> to vector<8x32xf32>
    %435 = arith.addf %433, %434 : vector<8x32xf32>
    %436 = arith.truncf %435 : vector<8x32xf32> to vector<8x32xbf16>
    %c0_185 = arith.constant 0 : index
    %c0_186 = arith.constant 0 : index
    %437 = vector.load %arg31[%c0_185, %c0_186] : memref<32x128xbf16, #tpu.memory_space<vmem>>, vector<32x128xbf16>
    %cst_187 = arith.constant dense<0.000000e+00> : vector<8x128xf32>
    %438 = tpu.matmul %436, %437, %cst_187 {dimension_numbers = #tpu.dot_dimension_numbers<[1], [0], [0], [1], [0, 0, 1, 1], [], []>} : vector<8x32xbf16>, vector<32x128xbf16>, vector<8x128xf32> -> vector<8x128xf32>
    %c0_188 = arith.constant 0 : index
    %c0_189 = arith.constant 0 : index
    %439 = vector.load %arg32[%c0_188, %c0_189] : memref<1x128xf32, #tpu.memory_space<vmem>>, vector<1x128xf32>
    %440 = vector.broadcast %439 : vector<1x128xf32> to vector<8x128xf32>
    %441 = arith.addf %438, %440 : vector<8x128xf32>
    %cst_190 = arith.constant 5.000000e-01 : f32
    %442 = vector.broadcast %cst_190 : f32 to vector<8x128xf32>
    %443 = arith.mulf %442, %441 : vector<8x128xf32>
    %cst_191 = arith.constant 4.471500e-02 : f32
    %444 = vector.broadcast %cst_191 : f32 to vector<8x128xf32>
    %445 = arith.mulf %444, %441 : vector<8x128xf32>
    %446 = arith.mulf %445, %441 : vector<8x128xf32>
    %447 = arith.mulf %446, %441 : vector<8x128xf32>
    %448 = arith.addf %441, %447 : vector<8x128xf32>
    %cst_192 = arith.constant 0.797884583 : f32
    %449 = vector.broadcast %cst_192 : f32 to vector<8x128xf32>
    %450 = arith.mulf %449, %448 : vector<8x128xf32>
    %451 = math.tanh %450 : vector<8x128xf32>
    %cst_193 = arith.constant 1.000000e+00 : f32
    %452 = vector.broadcast %cst_193 : f32 to vector<8x128xf32>
    %453 = arith.addf %452, %451 : vector<8x128xf32>
    %454 = arith.mulf %443, %453 : vector<8x128xf32>
    %455 = arith.truncf %454 : vector<8x128xf32> to vector<8x128xbf16>
    %c0_194 = arith.constant 0 : index
    %c0_195 = arith.constant 0 : index
    %456 = vector.load %arg33[%c0_194, %c0_195] : memref<128x32xbf16, #tpu.memory_space<vmem>>, vector<128x32xbf16>
    %cst_196 = arith.constant dense<0.000000e+00> : vector<8x32xf32>
    %457 = tpu.matmul %455, %456, %cst_196 {dimension_numbers = #tpu.dot_dimension_numbers<[1], [0], [0], [1], [0, 0, 1, 1], [], []>} : vector<8x128xbf16>, vector<128x32xbf16>, vector<8x32xf32> -> vector<8x32xf32>
    %c0_197 = arith.constant 0 : index
    %c0_198 = arith.constant 0 : index
    %458 = vector.load %arg34[%c0_197, %c0_198] : memref<1x32xf32, #tpu.memory_space<vmem>>, vector<1x32xf32>
    %459 = vector.broadcast %458 : vector<1x32xf32> to vector<8x32xf32>
    %460 = arith.addf %457, %459 : vector<8x32xf32>
    %461 = vector.broadcast %21 : vector<1x32xf32> to vector<8x32xf32>
    %462 = arith.mulf %461, %460 : vector<8x32xf32>
    %463 = arith.addf %413, %462 : vector<8x32xf32>
    %c0_199 = arith.constant 0 : index
    %c0_200 = arith.constant 0 : index
    %c0_201 = arith.constant 0 : index
    %464 = vector.load %arg35[%c0_199, %c0_200, %c0_201] : memref<1x8x32xf32, #tpu.memory_space<vmem>>, vector<1x8x32xf32>
    %465 = vector.shape_cast %464 : vector<1x8x32xf32> to vector<8x32xf32>
    %466 = vector.shape_cast %463 : vector<8x32xf32> to vector<1x8x32xf32>
    tpu.vector_store %arg35[%c0_199, %c0_200, %c0_201], %466 {strides = array<i32>} : memref<1x8x32xf32, #tpu.memory_space<vmem>>, vector<1x8x32xf32>,
    return
  }
  func.func @transform_0(%arg0: i32) -> (i32, i32, i32) {
    %c0_i32 = arith.constant 0 : i32
    %c0_i32_0 = arith.constant 0 : i32
    %c0_i32_1 = arith.constant 0 : i32
    return %arg0, %c0_i32, %c0_i32_0 : i32, i32, i32
  }
  func.func @transform_1(%arg0: i32) -> (i32, i32, i32) {
    %c0_i32 = arith.constant 0 : i32
    %c0_i32_0 = arith.constant 0 : i32
    %c0_i32_1 = arith.constant 0 : i32
    return %arg0, %c0_i32, %c0_i32_0 : i32, i32, i32
  }
  func.func @transform_2(%arg0: i32) -> (i32, i32, i32) {
    %c0_i32 = arith.constant 0 : i32
    %c0_i32_0 = arith.constant 0 : i32
    %c0_i32_1 = arith.constant 0 : i32
    return %arg0, %c0_i32, %c0_i32_0 : i32, i32, i32
  }
  func.func @transform_3(%arg0: i32) -> (i32, i32, i32) {
    %c0_i32 = arith.constant 0 : i32
    %c0_i32_0 = arith.constant 0 : i32
    %c0_i32_1 = arith.constant 0 : i32
    return %arg0, %c0_i32, %c0_i32_0 : i32, i32, i32
  }
  func.func @transform_4(%arg0: i32) -> (i32, i32) {
    %c0_i32 = arith.constant 0 : i32
    %c0_i32_0 = arith.constant 0 : i32
    %c0_i32_1 = arith.constant 0 : i32
    return %c0_i32, %c0_i32_0 : i32, i32
  }
  func.func @transform_5(%arg0: i32) -> (i32, i32) {
    %c0_i32 = arith.constant 0 : i32
    %c0_i32_0 = arith.constant 0 : i32
    %c0_i32_1 = arith.constant 0 : i32
    return %c0_i32, %c0_i32_0 : i32, i32
  }
  func.func @transform_6(%arg0: i32) -> (i32, i32) {
    %c0_i32 = arith.constant 0 : i32
    %c0_i32_0 = arith.constant 0 : i32
    %c0_i32_1 = arith.constant 0 : i32
    return %c0_i32, %c0_i32_0 : i32, i32
  }
  func.func @transform_7(%arg0: i32) -> (i32, i32) {
    %c0_i32 = arith.constant 0 : i32
    %c0_i32_0 = arith.constant 0 : i32
    %c0_i32_1 = arith.constant 0 : i32
    return %c0_i32, %c0_i32_0 : i32, i32
  }
  func.func @transform_8(%arg0: i32) -> (i32, i32) {
    %c0_i32 = arith.constant 0 : i32
    %c0_i32_0 = arith.constant 0 : i32
    %c0_i32_1 = arith.constant 0 : i32
    return %c0_i32, %c0_i32_0 : i32, i32
  }
  func.func @transform_9(%arg0: i32) -> (i32, i32) {
    %c0_i32 = arith.constant 0 : i32
    %c0_i32_0 = arith.constant 0 : i32
    %c0_i32_1 = arith.constant 0 : i32
    return %c0_i32, %c0_i32_0 : i32, i32
  }
  func.func @transform_10(%arg0: i32) -> (i32, i32) {
    %c0_i32 = arith.constant 0 : i32
    %c0_i32_0 = arith.constant 0 : i32
    %c0_i32_1 = arith.constant 0 : i32
    return %c0_i32, %c0_i32_0 : i32, i32
  }
  func.func @transform_11(%arg0: i32) -> (i32, i32) {
    %c0_i32 = arith.constant 0 : i32
    %c0_i32_0 = arith.constant 0 : i32
    %c0_i32_1 = arith.constant 0 : i32
    return %c0_i32, %c0_i32_0 : i32, i32
  }
  func.func @transform_12(%arg0: i32) -> (i32, i32) {
    %c0_i32 = arith.constant 0 : i32
    %c0_i32_0 = arith.constant 0 : i32
    %c0_i32_1 = arith.constant 0 : i32
    return %c0_i32, %c0_i32_0 : i32, i32
  }
  func.func @transform_13(%arg0: i32) -> (i32, i32) {
    %c0_i32 = arith.constant 0 : i32
    %c0_i32_0 = arith.constant 0 : i32
    %c0_i32_1 = arith.constant 0 : i32
    return %c0_i32, %c0_i32_0 : i32, i32
  }
  func.func @transform_14(%arg0: i32) -> (i32, i32) {
    %c0_i32 = arith.constant 0 : i32
    %c0_i32_0 = arith.constant 0 : i32
    %c0_i32_1 = arith.constant 0 : i32
    return %c0_i32, %c0_i32_0 : i32, i32
  }
  func.func @transform_15(%arg0: i32) -> (i32, i32) {
    %c0_i32 = arith.constant 0 : i32
    %c0_i32_0 = arith.constant 0 : i32
    %c0_i32_1 = arith.constant 0 : i32
    return %c0_i32, %c0_i32_0 : i32, i32
  }
  func.func @transform_16(%arg0: i32) -> (i32, i32) {
    %c0_i32 = arith.constant 0 : i32
    %c0_i32_0 = arith.constant 0 : i32
    %c0_i32_1 = arith.constant 0 : i32
    return %c0_i32, %c0_i32_0 : i32, i32
  }
  func.func @transform_17(%arg0: i32) -> (i32, i32) {
    %c0_i32 = arith.constant 0 : i32
    %c0_i32_0 = arith.constant 0 : i32
    %c0_i32_1 = arith.constant 0 : i32
    return %c0_i32, %c0_i32_0 : i32, i32
  }
  func.func @transform_18(%arg0: i32) -> (i32, i32) {
    %c0_i32 = arith.constant 0 : i32
    %c0_i32_0 = arith.constant 0 : i32
    %c0_i32_1 = arith.constant 0 : i32
    return %c0_i32, %c0_i32_0 : i32, i32
  }
  func.func @transform_19(%arg0: i32) -> (i32, i32) {
    %c0_i32 = arith.constant 0 : i32
    %c0_i32_0 = arith.constant 0 : i32
    %c0_i32_1 = arith.constant 0 : i32
    return %c0_i32, %c0_i32_0 : i32, i32
  }
  func.func @transform_20(%arg0: i32) -> (i32, i32) {
    %c0_i32 = arith.constant 0 : i32
    %c0_i32_0 = arith.constant 0 : i32
    %c0_i32_1 = arith.constant 0 : i32
    return %c0_i32, %c0_i32_0 : i32, i32
  }
  func.func @transform_21(%arg0: i32) -> (i32, i32) {
    %c0_i32 = arith.constant 0 : i32
    %c0_i32_0 = arith.constant 0 : i32
    %c0_i32_1 = arith.constant 0 : i32
    return %c0_i32, %c0_i32_0 : i32, i32
  }
  func.func @transform_22(%arg0: i32) -> (i32, i32) {
    %c0_i32 = arith.constant 0 : i32
    %c0_i32_0 = arith.constant 0 : i32
    %c0_i32_1 = arith.constant 0 : i32
    return %c0_i32, %c0_i32_0 : i32, i32
  }
  func.func @transform_23(%arg0: i32) -> (i32, i32) {
    %c0_i32 = arith.constant 0 : i32
    %c0_i32_0 = arith.constant 0 : i32
    %c0_i32_1 = arith.constant 0 : i32
    return %c0_i32, %c0_i32_0 : i32, i32
  }
  func.func @transform_24(%arg0: i32) -> (i32, i32) {
    %c0_i32 = arith.constant 0 : i32
    %c0_i32_0 = arith.constant 0 : i32
    %c0_i32_1 = arith.constant 0 : i32
    return %c0_i32, %c0_i32_0 : i32, i32
  }
  func.func @transform_25(%arg0: i32) -> (i32, i32) {
    %c0_i32 = arith.constant 0 : i32
    %c0_i32_0 = arith.constant 0 : i32
    %c0_i32_1 = arith.constant 0 : i32
    return %c0_i32, %c0_i32_0 : i32, i32
  }
  func.func @transform_26(%arg0: i32) -> (i32, i32) {
    %c0_i32 = arith.constant 0 : i32
    %c0_i32_0 = arith.constant 0 : i32
    %c0_i32_1 = arith.constant 0 : i32
    return %c0_i32, %c0_i32_0 : i32, i32
  }
  func.func @transform_27(%arg0: i32) -> (i32, i32) {
    %c0_i32 = arith.constant 0 : i32
    %c0_i32_0 = arith.constant 0 : i32
    %c0_i32_1 = arith.constant 0 : i32
    return %c0_i32, %c0_i32_0 : i32, i32
  }
  func.func @transform_28(%arg0: i32) -> (i32, i32) {
    %c0_i32 = arith.constant 0 : i32
    %c0_i32_0 = arith.constant 0 : i32
    %c0_i32_1 = arith.constant 0 : i32
    return %c0_i32, %c0_i32_0 : i32, i32
  }
  func.func @transform_29(%arg0: i32) -> (i32, i32) {
    %c0_i32 = arith.constant 0 : i32
    %c0_i32_0 = arith.constant 0 : i32
    %c0_i32_1 = arith.constant 0 : i32
    return %c0_i32, %c0_i32_0 : i32, i32
  }
  func.func @transform_30(%arg0: i32) -> (i32, i32) {
    %c0_i32 = arith.constant 0 : i32
    %c0_i32_0 = arith.constant 0 : i32
    %c0_i32_1 = arith.constant 0 : i32
    return %c0_i32, %c0_i32_0 : i32, i32
  }
  func.func @transform_31(%arg0: i32) -> (i32, i32) {
    %c0_i32 = arith.constant 0 : i32
    %c0_i32_0 = arith.constant 0 : i32
    %c0_i32_1 = arith.constant 0 : i32
    return %c0_i32, %c0_i32_0 : i32, i32
  }
  func.func @transform_32(%arg0: i32) -> (i32, i32) {
    %c0_i32 = arith.constant 0 : i32
    %c0_i32_0 = arith.constant 0 : i32
    %c0_i32_1 = arith.constant 0 : i32
    return %c0_i32, %c0_i32_0 : i32, i32
  }
  func.func @transform_33(%arg0: i32) -> (i32, i32) {
    %c0_i32 = arith.constant 0 : i32
    %c0_i32_0 = arith.constant 0 : i32
    %c0_i32_1 = arith.constant 0 : i32
    return %c0_i32, %c0_i32_0 : i32, i32
  }
  func.func @transform_34(%arg0: i32) -> (i32, i32, i32) {
    %c0_i32 = arith.constant 0 : i32
    %c0_i32_0 = arith.constant 0 : i32
    %c0_i32_1 = arith.constant 0 : i32
    return %arg0, %c0_i32, %c0_i32_0 : i32, i32, i32
  }
  func.func @transform_35(%arg0: i32) -> (i32, i32, i32) {
    %c0_i32 = arith.constant 0 : i32
    %c0_i32_0 = arith.constant 0 : i32
    %c0_i32_1 = arith.constant 0 : i32
    return %arg0, %c0_i32, %c0_i32_0 : i32, i32, i32
  }
}

module attributes {stable_mosaic.version = 11 : i64} {
  func.func @_flux_block_kernel(%arg0: i32, %arg1: memref<1x16x32xf32, #tpu.memory_space<vmem>>, %arg2: memref<1x8x32xf32, #tpu.memory_space<vmem>>, %arg3: memref<1x6x32xf32, #tpu.memory_space<vmem>>, %arg4: memref<1x6x32xf32, #tpu.memory_space<vmem>>, %arg5: memref<24x16xf32, #tpu.memory_space<vmem>>, %arg6: memref<24x16xf32, #tpu.memory_space<vmem>>, %arg7: memref<32x32xbf16, #tpu.memory_space<vmem>>, %arg8: memref<1x32xf32, #tpu.memory_space<vmem>>, %arg9: memref<32x32xbf16, #tpu.memory_space<vmem>>, %arg10: memref<1x32xf32, #tpu.memory_space<vmem>>, %arg11: memref<32x32xbf16, #tpu.memory_space<vmem>>, %arg12: memref<1x32xf32, #tpu.memory_space<vmem>>, %arg13: memref<1x16xf32, #tpu.memory_space<vmem>>, %arg14: memref<1x16xf32, #tpu.memory_space<vmem>>, %arg15: memref<32x32xbf16, #tpu.memory_space<vmem>>, %arg16: memref<1x32xf32, #tpu.memory_space<vmem>>, %arg17: memref<32x32xbf16, #tpu.memory_space<vmem>>, %arg18: memref<1x32xf32, #tpu.memory_space<vmem>>, %arg19: memref<32x32xbf16, #tpu.memory_space<vmem>>, %arg20: memref<1x32xf32, #tpu.memory_space<vmem>>, %arg21: memref<1x16xf32, #tpu.memory_space<vmem>>, %arg22: memref<1x16xf32, #tpu.memory_space<vmem>>, %arg23: memref<32x32xbf16, #tpu.memory_space<vmem>>, %arg24: memref<1x32xf32, #tpu.memory_space<vmem>>, %arg25: memref<32x32xbf16, #tpu.memory_space<vmem>>, %arg26: memref<1x32xf32, #tpu.memory_space<vmem>>, %arg27: memref<32x128xbf16, #tpu.memory_space<vmem>>, %arg28: memref<1x128xf32, #tpu.memory_space<vmem>>, %arg29: memref<128x32xbf16, #tpu.memory_space<vmem>>, %arg30: memref<1x32xf32, #tpu.memory_space<vmem>>, %arg31: memref<32x128xbf16, #tpu.memory_space<vmem>>, %arg32: memref<1x128xf32, #tpu.memory_space<vmem>>, %arg33: memref<128x32xbf16, #tpu.memory_space<vmem>>, %arg34: memref<1x32xf32, #tpu.memory_space<vmem>>, %arg35: memref<1x8x32xf32, #tpu.memory_space<vmem>>, %arg36: memref<1x16x32xf32, #tpu.memory_space<vmem>>, %arg37: memref<24x16xbf16, #tpu.memory_space<vmem>>, %arg38: memref<24x16xbf16, #tpu.memory_space<vmem>>, %arg39: memref<24x16xbf16, #tpu.memory_space<vmem>>, %arg40: memref<24x32xbf16, #tpu.memory_space<vmem>>) attributes {dimension_semantics = [#tpu.dimension_semantics<parallel>], iteration_bounds = array<i64: 2>, scalar_prefetch = 0 : i64, scratch_operands = 4 : i64, tpu.core_type = #tpu.core_type<tc>, window_params = [{transform_indices = @transform_0, window_bounds = array<i64: 1, 16, 32>}, {transform_indices = @transform_1, window_bounds = array<i64: 1, 8, 32>}, {transform_indices = @transform_2, window_bounds = array<i64: 1, 6, 32>}, {transform_indices = @transform_3, window_bounds = array<i64: 1, 6, 32>}, {pipeline_mode = #tpu.pipeline_mode<synchronous>, transform_indices = @transform_4, window_bounds = array<i64: 24, 16>}, {pipeline_mode = #tpu.pipeline_mode<synchronous>, transform_indices = @transform_5, window_bounds = array<i64: 24, 16>}, {pipeline_mode = #tpu.pipeline_mode<synchronous>, transform_indices = @transform_6, window_bounds = array<i64: 32, 32>}, {pipeline_mode = #tpu.pipeline_mode<synchronous>, transform_indices = @transform_7, window_bounds = array<i64: 1, 32>}, {pipeline_mode = #tpu.pipeline_mode<synchronous>, transform_indices = @transform_8, window_bounds = array<i64: 32, 32>}, {pipeline_mode = #tpu.pipeline_mode<synchronous>, transform_indices = @transform_9, window_bounds = array<i64: 1, 32>}, {pipeline_mode = #tpu.pipeline_mode<synchronous>, transform_indices = @transform_10, window_bounds = array<i64: 32, 32>}, {pipeline_mode = #tpu.pipeline_mode<synchronous>, transform_indices = @transform_11, window_bounds = array<i64: 1, 32>}, {pipeline_mode = #tpu.pipeline_mode<synchronous>, transform_indices = @transform_12, window_bounds = array<i64: 1, 16>}, {pipeline_mode = #tpu.pipeline_mode<synchronous>, transform_indices = @transform_13, window_bounds = array<i64: 1, 16>}, {pipeline_mode = #tpu.pipeline_mode<synchronous>, transform_indices = @transform_14, window_bounds = array<i64: 32, 32>}, {pipeline_mode = #tpu.pipeline_mode<synchronous>, transform_indices = @transform_15, window_bounds = array<i64: 1, 32>}, {pipeline_mode = #tpu.pipeline_mode<synchronous>, transform_indices = @transform_16, window_bounds = array<i64: 32, 32>}, {pipeline_mode = #tpu.pipeline_mode<synchronous>, transform_indices = @transform_17, window_bounds = array<i64: 1, 32>}, {pipeline_mode = #tpu.pipeline_mode<synchronous>, transform_indices = @transform_18, window_bounds = array<i64: 32, 32>}, {pipeline_mode = #tpu.pipeline_mode<synchronous>, transform_indices = @transform_19, window_bounds = array<i64: 1, 32>}, {pipeline_mode = #tpu.pipeline_mode<synchronous>, transform_indices = @transform_20, window_bounds = array<i64: 1, 16>}, {pipeline_mode = #tpu.pipeline_mode<synchronous>, transform_indices = @transform_21, window_bounds = array<i64: 1, 16>}, {pipeline_mode = #tpu.pipeline_mode<synchronous>, transform_indices = @transform_22, window_bounds = array<i64: 32, 32>}, {pipeline_mode = #tpu.pipeline_mode<synchronous>, transform_indices = @transform_23, window_bounds = array<i64: 1, 32>}, {pipeline_mode = #tpu.pipeline_mode<synchronous>, transform_indices = @transform_24, window_bounds = array<i64: 32, 32>}, {pipeline_mode = #tpu.pipeline_mode<synchronous>, transform_indices = @transform_25, window_bounds = array<i64: 1, 32>}, {pipeline_mode = #tpu.pipeline_mode<synchronous>, transform_indices = @transform_26, window_bounds = array<i64: 32, 128>}, {pipeline_mode = #tpu.pipeline_mode<synchronous>, transform_indices = @transform_27, window_bounds = array<i64: 1, 128>}, {pipeline_mode = #tpu.pipeline_mode<synchronous>, transform_indices = @transform_28, window_bounds = array<i64: 128, 32>}, {pipeline_mode = #tpu.pipeline_mode<synchronous>, transform_indices = @transform_29, window_bounds = array<i64: 1, 32>}, {pipeline_mode = #tpu.pipeline_mode<synchronous>, transform_indices = @transform_30, window_bounds = array<i64: 32, 128>}, {pipeline_mode = #tpu.pipeline_mode<synchronous>, transform_indices = @transform_31, window_bounds = array<i64: 1, 128>}, {pipeline_mode = #tpu.pipeline_mode<synchronous>, transform_indices = @transform_32, window_bounds = array<i64: 128, 32>}, {pipeline_mode = #tpu.pipeline_mode<synchronous>, transform_indices = @transform_33, window_bounds = array<i64: 1, 32>}, {transform_indices = @transform_34, window_bounds = array<i64: 1, 8, 32>}, {transform_indices = @transform_35, window_bounds = array<i64: 1, 16, 32>}]} {
    %c0 = arith.constant 0 : index
    %c0_0 = arith.constant 0 : index
    %c0_1 = arith.constant 0 : index
    %0 = vector.load %arg1[%c0, %c0_0, %c0_1] : memref<1x16x32xf32, #tpu.memory_space<vmem>>, vector<1x16x32xf32>
    %1 = vector.shape_cast %0 : vector<1x16x32xf32> to vector<16x32xf32>
    %c0_2 = arith.constant 0 : index
    %c0_3 = arith.constant 0 : index
    %c0_4 = arith.constant 0 : index
    %2 = vector.load %arg2[%c0_2, %c0_3, %c0_4] : memref<1x8x32xf32, #tpu.memory_space<vmem>>, vector<1x8x32xf32>
    %3 = vector.shape_cast %2 : vector<1x8x32xf32> to vector<8x32xf32>
    %c0_5 = arith.constant 0 : index
    %c0_6 = arith.constant 0 : index
    %c0_7 = arith.constant 0 : index
    %4 = vector.load %arg3[%c0_5, %c0_6, %c0_7] : memref<1x6x32xf32, #tpu.memory_space<vmem>>, vector<1x6x32xf32>
    %5 = vector.shape_cast %4 : vector<1x6x32xf32> to vector<6x32xf32>
    %c0_8 = arith.constant 0 : index
    %c0_9 = arith.constant 0 : index
    %c0_10 = arith.constant 0 : index
    %6 = vector.load %arg4[%c0_8, %c0_9, %c0_10] : memref<1x6x32xf32, #tpu.memory_space<vmem>>, vector<1x6x32xf32>
    %7 = vector.shape_cast %6 : vector<1x6x32xf32> to vector<6x32xf32>
    %c0_11 = arith.constant 0 : index
    %c0_12 = arith.constant 0 : index
    %8 = vector.load %arg5[%c0_11, %c0_12] : memref<24x16xf32, #tpu.memory_space<vmem>>, vector<24x16xf32>
    %c0_13 = arith.constant 0 : index
    %c0_14 = arith.constant 0 : index
    %9 = vector.load %arg6[%c0_13, %c0_14] : memref<24x16xf32, #tpu.memory_space<vmem>>, vector<24x16xf32>
    %10 = vector.extract_strided_slice %5 {offsets = [0, 0], sizes = [1, 32], strides = [1, 1]} : vector<6x32xf32> to vector<1x32xf32>
    %11 = vector.extract_strided_slice %5 {offsets = [1, 0], sizes = [1, 32], strides = [1, 1]} : vector<6x32xf32> to vector<1x32xf32>
    %12 = vector.extract_strided_slice %5 {offsets = [2, 0], sizes = [1, 32], strides = [1, 1]} : vector<6x32xf32> to vector<1x32xf32>
    %13 = vector.extract_strided_slice %5 {offsets = [3, 0], sizes = [1, 32], strides = [1, 1]} : vector<6x32xf32> to vector<1x32xf32>
    %14 = vector.extract_strided_slice %5 {offsets = [4, 0], sizes = [1, 32], strides = [1, 1]} : vector<6x32xf32> to vector<1x32xf32>
    %15 = vector.extract_strided_slice %5 {offsets = [5, 0], sizes = [1, 32], strides = [1, 1]} : vector<6x32xf32> to vector<1x32xf32>
    %16 = vector.extract_strided_slice %7 {offsets = [0, 0], sizes = [1, 32], strides = [1, 1]} : vector<6x32xf32> to vector<1x32xf32>
    %17 = vector.extract_strided_slice %7 {offsets = [1, 0], sizes = [1, 32], strides = [1, 1]} : vector<6x32xf32> to vector<1x32xf32>
    %18 = vector.extract_strided_slice %7 {offsets = [2, 0], sizes = [1, 32], strides = [1, 1]} : vector<6x32xf32> to vector<1x32xf32>
    %19 = vector.extract_strided_slice %7 {offsets = [3, 0], sizes = [1, 32], strides = [1, 1]} : vector<6x32xf32> to vector<1x32xf32>
    %20 = vector.extract_strided_slice %7 {offsets = [4, 0], sizes = [1, 32], strides = [1, 1]} : vector<6x32xf32> to vector<1x32xf32>
    %21 = vector.extract_strided_slice %7 {offsets = [5, 0], sizes = [1, 32], strides = [1, 1]} : vector<6x32xf32> to vector<1x32xf32>
    %cst = arith.constant dense<0.000000e+00> : vector<16xf32>
    %22 = vector.multi_reduction <add>, %1, %cst [1] : vector<16x32xf32> to vector<16xf32>
    %23 = vector.shape_cast %22 : vector<16xf32> to vector<16x1xf32>
    %cst_15 = arith.constant 3.200000e+01 : f32
    %24 = vector.broadcast %cst_15 : f32 to vector<16x1xf32>
    %25 = arith.divf %23, %24 : vector<16x1xf32>
    %26 = vector.broadcast %25 : vector<16x1xf32> to vector<16x32xf32>
    %27 = arith.subf %1, %26 : vector<16x32xf32>
    %28 = arith.mulf %27, %27 : vector<16x32xf32>
    %cst_16 = arith.constant dense<0.000000e+00> : vector<16xf32>
    %29 = vector.multi_reduction <add>, %28, %cst_16 [1] : vector<16x32xf32> to vector<16xf32>
    %30 = vector.shape_cast %29 : vector<16xf32> to vector<16x1xf32>
    %cst_17 = arith.constant 3.200000e+01 : f32
    %31 = vector.broadcast %cst_17 : f32 to vector<16x1xf32>
    %32 = arith.divf %30, %31 : vector<16x1xf32>
    %cst_18 = arith.constant 9.99999997E-7 : f32
    %33 = vector.broadcast %cst_18 : f32 to vector<16x1xf32>
    %34 = arith.addf %32, %33 : vector<16x1xf32>
    %35 = math.rsqrt %34 : vector<16x1xf32>
    %36 = vector.broadcast %35 : vector<16x1xf32> to vector<16x32xf32>
    %37 = arith.mulf %27, %36 : vector<16x32xf32>
    %cst_19 = arith.constant 1.000000e+00 : f32
    %38 = vector.broadcast %cst_19 : f32 to vector<1x32xf32>
    %39 = arith.addf %38, %11 : vector<1x32xf32>
    %40 = vector.broadcast %39 : vector<1x32xf32> to vector<16x32xf32>
    %41 = arith.mulf %37, %40 : vector<16x32xf32>
    %42 = vector.broadcast %10 : vector<1x32xf32> to vector<16x32xf32>
    %43 = arith.addf %41, %42 : vector<16x32xf32>
    %cst_20 = arith.constant dense<0.000000e+00> : vector<8xf32>
    %44 = vector.multi_reduction <add>, %3, %cst_20 [1] : vector<8x32xf32> to vector<8xf32>
    %45 = vector.shape_cast %44 : vector<8xf32> to vector<8x1xf32>
    %cst_21 = arith.constant 3.200000e+01 : f32
    %46 = vector.broadcast %cst_21 : f32 to vector<8x1xf32>
    %47 = arith.divf %45, %46 : vector<8x1xf32>
    %48 = vector.broadcast %47 : vector<8x1xf32> to vector<8x32xf32>
    %49 = arith.subf %3, %48 : vector<8x32xf32>
    %50 = arith.mulf %49, %49 : vector<8x32xf32>
    %cst_22 = arith.constant dense<0.000000e+00> : vector<8xf32>
    %51 = vector.multi_reduction <add>, %50, %cst_22 [1] : vector<8x32xf32> to vector<8xf32>
    %52 = vector.shape_cast %51 : vector<8xf32> to vector<8x1xf32>
    %cst_23 = arith.constant 3.200000e+01 : f32
    %53 = vector.broadcast %cst_23 : f32 to vector<8x1xf32>
    %54 = arith.divf %52, %53 : vector<8x1xf32>
    %cst_24 = arith.constant 9.99999997E-7 : f32
    %55 = vector.broadcast %cst_24 : f32 to vector<8x1xf32>
    %56 = arith.addf %54, %55 : vector<8x1xf32>
    %57 = math.rsqrt %56 : vector<8x1xf32>
    %58 = vector.broadcast %57 : vector<8x1xf32> to vector<8x32xf32>
    %59 = arith.mulf %49, %58 : vector<8x32xf32>
    %cst_25 = arith.constant 1.000000e+00 : f32
    %60 = vector.broadcast %cst_25 : f32 to vector<1x32xf32>
    %61 = arith.addf %60, %17 : vector<1x32xf32>
    %62 = vector.broadcast %61 : vector<1x32xf32> to vector<8x32xf32>
    %63 = arith.mulf %59, %62 : vector<8x32xf32>
    %64 = vector.broadcast %16 : vector<1x32xf32> to vector<8x32xf32>
    %65 = arith.addf %63, %64 : vector<8x32xf32>
    %66 = arith.truncf %43 : vector<16x32xf32> to vector<16x32xbf16>
    %67 = arith.truncf %65 : vector<8x32xf32> to vector<8x32xbf16>
    %c0_26 = arith.constant 0 : index
    %c0_27 = arith.constant 0 : index
    %68 = vector.load %arg7[%c0_26, %c0_27] : memref<32x32xbf16, #tpu.memory_space<vmem>>, vector<32x32xbf16>
    %cst_28 = arith.constant dense<0.000000e+00> : vector<16x32xf32>
    %69 = tpu.matmul %66, %68, %cst_28 {dimension_numbers = #tpu.dot_dimension_numbers<[1], [0], [0], [1], [0, 0, 1, 1], [], []>} : vector<16x32xbf16>, vector<32x32xbf16>, vector<16x32xf32> -> vector<16x32xf32>
    %c0_29 = arith.constant 0 : index
    %c0_30 = arith.constant 0 : index
    %70 = vector.load %arg8[%c0_29, %c0_30] : memref<1x32xf32, #tpu.memory_space<vmem>>, vector<1x32xf32>
    %71 = vector.broadcast %70 : vector<1x32xf32> to vector<16x32xf32>
    %72 = arith.addf %69, %71 : vector<16x32xf32>
    %c0_31 = arith.constant 0 : index
    %c0_32 = arith.constant 0 : index
    %73 = vector.load %arg9[%c0_31, %c0_32] : memref<32x32xbf16, #tpu.memory_space<vmem>>, vector<32x32xbf16>
    %cst_33 = arith.constant dense<0.000000e+00> : vector<16x32xf32>
    %74 = tpu.matmul %66, %73, %cst_33 {dimension_numbers = #tpu.dot_dimension_numbers<[1], [0], [0], [1], [0, 0, 1, 1], [], []>} : vector<16x32xbf16>, vector<32x32xbf16>, vector<16x32xf32> -> vector<16x32xf32>
    %c0_34 = arith.constant 0 : index
    %c0_35 = arith.constant 0 : index
    %75 = vector.load %arg10[%c0_34, %c0_35] : memref<1x32xf32, #tpu.memory_space<vmem>>, vector<1x32xf32>
    %76 = vector.broadcast %75 : vector<1x32xf32> to vector<16x32xf32>
    %77 = arith.addf %74, %76 : vector<16x32xf32>
    %c0_36 = arith.constant 0 : index
    %c0_37 = arith.constant 0 : index
    %78 = vector.load %arg11[%c0_36, %c0_37] : memref<32x32xbf16, #tpu.memory_space<vmem>>, vector<32x32xbf16>
    %cst_38 = arith.constant dense<0.000000e+00> : vector<16x32xf32>
    %79 = tpu.matmul %66, %78, %cst_38 {dimension_numbers = #tpu.dot_dimension_numbers<[1], [0], [0], [1], [0, 0, 1, 1], [], []>} : vector<16x32xbf16>, vector<32x32xbf16>, vector<16x32xf32> -> vector<16x32xf32>
    %c0_39 = arith.constant 0 : index
    %c0_40 = arith.constant 0 : index
    %80 = vector.load %arg12[%c0_39, %c0_40] : memref<1x32xf32, #tpu.memory_space<vmem>>, vector<1x32xf32>
    %81 = vector.broadcast %80 : vector<1x32xf32> to vector<16x32xf32>
    %82 = arith.addf %79, %81 : vector<16x32xf32>
    %c0_41 = arith.constant 0 : index
    %c0_42 = arith.constant 0 : index
    %83 = vector.load %arg15[%c0_41, %c0_42] : memref<32x32xbf16, #tpu.memory_space<vmem>>, vector<32x32xbf16>
    %cst_43 = arith.constant dense<0.000000e+00> : vector<8x32xf32>
    %84 = tpu.matmul %67, %83, %cst_43 {dimension_numbers = #tpu.dot_dimension_numbers<[1], [0], [0], [1], [0, 0, 1, 1], [], []>} : vector<8x32xbf16>, vector<32x32xbf16>, vector<8x32xf32> -> vector<8x32xf32>
    %c0_44 = arith.constant 0 : index
    %c0_45 = arith.constant 0 : index
    %85 = vector.load %arg16[%c0_44, %c0_45] : memref<1x32xf32, #tpu.memory_space<vmem>>, vector<1x32xf32>
    %86 = vector.broadcast %85 : vector<1x32xf32> to vector<8x32xf32>
    %87 = arith.addf %84, %86 : vector<8x32xf32>
    %c0_46 = arith.constant 0 : index
    %c0_47 = arith.constant 0 : index
    %88 = vector.load %arg17[%c0_46, %c0_47] : memref<32x32xbf16, #tpu.memory_space<vmem>>, vector<32x32xbf16>
    %cst_48 = arith.constant dense<0.000000e+00> : vector<8x32xf32>
    %89 = tpu.matmul %67, %88, %cst_48 {dimension_numbers = #tpu.dot_dimension_numbers<[1], [0], [0], [1], [0, 0, 1, 1], [], []>} : vector<8x32xbf16>, vector<32x32xbf16>, vector<8x32xf32> -> vector<8x32xf32>
    %c0_49 = arith.constant 0 : index
    %c0_50 = arith.constant 0 : index
    %90 = vector.load %arg18[%c0_49, %c0_50] : memref<1x32xf32, #tpu.memory_space<vmem>>, vector<1x32xf32>
    %91 = vector.broadcast %90 : vector<1x32xf32> to vector<8x32xf32>
    %92 = arith.addf %89, %91 : vector<8x32xf32>
    %c0_51 = arith.constant 0 : index
    %c0_52 = arith.constant 0 : index
    %93 = vector.load %arg19[%c0_51, %c0_52] : memref<32x32xbf16, #tpu.memory_space<vmem>>, vector<32x32xbf16>
    %cst_53 = arith.constant dense<0.000000e+00> : vector<8x32xf32>
    %94 = tpu.matmul %67, %93, %cst_53 {dimension_numbers = #tpu.dot_dimension_numbers<[1], [0], [0], [1], [0, 0, 1, 1], [], []>} : vector<8x32xbf16>, vector<32x32xbf16>, vector<8x32xf32> -> vector<8x32xf32>
    %c0_54 = arith.constant 0 : index
    %c0_55 = arith.constant 0 : index
    %95 = vector.load %arg20[%c0_54, %c0_55] : memref<1x32xf32, #tpu.memory_space<vmem>>, vector<1x32xf32>
    %96 = vector.broadcast %95 : vector<1x32xf32> to vector<8x32xf32>
    %97 = arith.addf %94, %96 : vector<8x32xf32>
    %c0_56 = arith.constant 0 : index
    %c0_57 = arith.constant 0 : index
    %98 = vector.load %arg13[%c0_56, %c0_57] : memref<1x16xf32, #tpu.memory_space<vmem>>, vector<1x16xf32>
    %c0_58 = arith.constant 0 : index
    %c0_59 = arith.constant 0 : index
    %99 = vector.load %arg14[%c0_58, %c0_59] : memref<1x16xf32, #tpu.memory_space<vmem>>, vector<1x16xf32>
    %c0_60 = arith.constant 0 : index
    %c0_61 = arith.constant 0 : index
    %100 = vector.load %arg21[%c0_60, %c0_61] : memref<1x16xf32, #tpu.memory_space<vmem>>, vector<1x16xf32>
    %c0_62 = arith.constant 0 : index
    %c0_63 = arith.constant 0 : index
    %101 = vector.load %arg22[%c0_62, %c0_63] : memref<1x16xf32, #tpu.memory_space<vmem>>, vector<1x16xf32>
    %102 = vector.extract_strided_slice %8 {offsets = [0, 0], sizes = [8, 16], strides = [1, 1]} : vector<24x16xf32> to vector<8x16xf32>
    %103 = vector.extract_strided_slice %8 {offsets = [8, 0], sizes = [16, 16], strides = [1, 1]} : vector<24x16xf32> to vector<16x16xf32>
    %104 = vector.extract_strided_slice %9 {offsets = [0, 0], sizes = [8, 16], strides = [1, 1]} : vector<24x16xf32> to vector<8x16xf32>
    %105 = vector.extract_strided_slice %9 {offsets = [8, 0], sizes = [16, 16], strides = [1, 1]} : vector<24x16xf32> to vector<16x16xf32>
    %106 = vector.extract_strided_slice %87 {offsets = [0, 0], sizes = [8, 16], strides = [1, 1]} : vector<8x32xf32> to vector<8x16xf32>
    %107 = arith.mulf %106, %106 : vector<8x16xf32>
    %cst_64 = arith.constant dense<0.000000e+00> : vector<8xf32>
    %108 = vector.multi_reduction <add>, %107, %cst_64 [1] : vector<8x16xf32> to vector<8xf32>
    %109 = vector.shape_cast %108 : vector<8xf32> to vector<8x1xf32>
    %cst_65 = arith.constant 1.600000e+01 : f32
    %110 = vector.broadcast %cst_65 : f32 to vector<8x1xf32>
    %111 = arith.divf %109, %110 : vector<8x1xf32>
    %cst_66 = arith.constant 9.99999997E-7 : f32
    %112 = vector.broadcast %cst_66 : f32 to vector<8x1xf32>
    %113 = arith.addf %111, %112 : vector<8x1xf32>
    %114 = math.rsqrt %113 : vector<8x1xf32>
    %115 = vector.broadcast %114 : vector<8x1xf32> to vector<8x16xf32>
    %116 = arith.mulf %106, %115 : vector<8x16xf32>
    %117 = vector.broadcast %100 : vector<1x16xf32> to vector<8x16xf32>
    %118 = arith.mulf %116, %117 : vector<8x16xf32>
    %119 = vector.extract_strided_slice %118 {offsets = [0, 0], sizes = [8, 8], strides = [1, 1]} : vector<8x16xf32> to vector<8x8xf32>
    %120 = vector.extract_strided_slice %118 {offsets = [0, 8], sizes = [8, 8], strides = [1, 1]} : vector<8x16xf32> to vector<8x8xf32>
    %cst_67 = arith.constant 0.000000e+00 : f32
    %121 = vector.broadcast %cst_67 : f32 to vector<8x8xf32>
    %122 = arith.subf %121, %120 : vector<8x8xf32>
    %123 = tpu.concatenate %122, %119 in 1 : vector<8x8xf32>, vector<8x8xf32> -> vector<8x16xf32>
    %124 = arith.mulf %118, %102 : vector<8x16xf32>
    %125 = arith.mulf %123, %104 : vector<8x16xf32>
    %126 = arith.addf %124, %125 : vector<8x16xf32>
    %127 = arith.truncf %126 : vector<8x16xf32> to vector<8x16xbf16>
    %c0_68 = arith.constant 0 : index
    %c0_69 = arith.constant 0 : index
    %128 = vector.load %arg37[%c0_68, %c0_69] : memref<24x16xbf16, #tpu.memory_space<vmem>>, vector<8x16xbf16>
    tpu.vector_store %arg37[%c0_68, %c0_69], %127 {strides = array<i32>} : memref<24x16xbf16, #tpu.memory_space<vmem>>, vector<8x16xbf16>,
    %129 = vector.extract_strided_slice %72 {offsets = [0, 0], sizes = [16, 16], strides = [1, 1]} : vector<16x32xf32> to vector<16x16xf32>
    %130 = arith.mulf %129, %129 : vector<16x16xf32>
    %cst_70 = arith.constant dense<0.000000e+00> : vector<16xf32>
    %131 = vector.multi_reduction <add>, %130, %cst_70 [1] : vector<16x16xf32> to vector<16xf32>
    %132 = vector.shape_cast %131 : vector<16xf32> to vector<16x1xf32>
    %cst_71 = arith.constant 1.600000e+01 : f32
    %133 = vector.broadcast %cst_71 : f32 to vector<16x1xf32>
    %134 = arith.divf %132, %133 : vector<16x1xf32>
    %cst_72 = arith.constant 9.99999997E-7 : f32
    %135 = vector.broadcast %cst_72 : f32 to vector<16x1xf32>
    %136 = arith.addf %134, %135 : vector<16x1xf32>
    %137 = math.rsqrt %136 : vector<16x1xf32>
    %138 = vector.broadcast %137 : vector<16x1xf32> to vector<16x16xf32>
    %139 = arith.mulf %129, %138 : vector<16x16xf32>
    %140 = vector.broadcast %98 : vector<1x16xf32> to vector<16x16xf32>
    %141 = arith.mulf %139, %140 : vector<16x16xf32>
    %142 = vector.extract_strided_slice %141 {offsets = [0, 0], sizes = [16, 8], strides = [1, 1]} : vector<16x16xf32> to vector<16x8xf32>
    %143 = vector.extract_strided_slice %141 {offsets = [0, 8], sizes = [16, 8], strides = [1, 1]} : vector<16x16xf32> to vector<16x8xf32>
    %cst_73 = arith.constant 0.000000e+00 : f32
    %144 = vector.broadcast %cst_73 : f32 to vector<16x8xf32>
    %145 = arith.subf %144, %143 : vector<16x8xf32>
    %146 = tpu.concatenate %145, %142 in 1 : vector<16x8xf32>, vector<16x8xf32> -> vector<16x16xf32>
    %147 = arith.mulf %141, %103 : vector<16x16xf32>
    %148 = arith.mulf %146, %105 : vector<16x16xf32>
    %149 = arith.addf %147, %148 : vector<16x16xf32>
    %150 = arith.truncf %149 : vector<16x16xf32> to vector<16x16xbf16>
    %c8 = arith.constant 8 : index
    %c0_74 = arith.constant 0 : index
    %151 = vector.load %arg37[%c8, %c0_74] : memref<24x16xbf16, #tpu.memory_space<vmem>>, vector<16x16xbf16>
    tpu.vector_store %arg37[%c8, %c0_74], %150 {strides = array<i32>} : memref<24x16xbf16, #tpu.memory_space<vmem>>, vector<16x16xbf16>,
    %152 = vector.extract_strided_slice %92 {offsets = [0, 0], sizes = [8, 16], strides = [1, 1]} : vector<8x32xf32> to vector<8x16xf32>
    %153 = arith.mulf %152, %152 : vector<8x16xf32>
    %cst_75 = arith.constant dense<0.000000e+00> : vector<8xf32>
    %154 = vector.multi_reduction <add>, %153, %cst_75 [1] : vector<8x16xf32> to vector<8xf32>
    %155 = vector.shape_cast %154 : vector<8xf32> to vector<8x1xf32>
    %cst_76 = arith.constant 1.600000e+01 : f32
    %156 = vector.broadcast %cst_76 : f32 to vector<8x1xf32>
    %157 = arith.divf %155, %156 : vector<8x1xf32>
    %cst_77 = arith.constant 9.99999997E-7 : f32
    %158 = vector.broadcast %cst_77 : f32 to vector<8x1xf32>
    %159 = arith.addf %157, %158 : vector<8x1xf32>
    %160 = math.rsqrt %159 : vector<8x1xf32>
    %161 = vector.broadcast %160 : vector<8x1xf32> to vector<8x16xf32>
    %162 = arith.mulf %152, %161 : vector<8x16xf32>
    %163 = vector.broadcast %101 : vector<1x16xf32> to vector<8x16xf32>
    %164 = arith.mulf %162, %163 : vector<8x16xf32>
    %165 = vector.extract_strided_slice %164 {offsets = [0, 0], sizes = [8, 8], strides = [1, 1]} : vector<8x16xf32> to vector<8x8xf32>
    %166 = vector.extract_strided_slice %164 {offsets = [0, 8], sizes = [8, 8], strides = [1, 1]} : vector<8x16xf32> to vector<8x8xf32>
    %cst_78 = arith.constant 0.000000e+00 : f32
    %167 = vector.broadcast %cst_78 : f32 to vector<8x8xf32>
    %168 = arith.subf %167, %166 : vector<8x8xf32>
    %169 = tpu.concatenate %168, %165 in 1 : vector<8x8xf32>, vector<8x8xf32> -> vector<8x16xf32>
    %170 = arith.mulf %164, %102 : vector<8x16xf32>
    %171 = arith.mulf %169, %104 : vector<8x16xf32>
    %172 = arith.addf %170, %171 : vector<8x16xf32>
    %173 = arith.truncf %172 : vector<8x16xf32> to vector<8x16xbf16>
    %c0_79 = arith.constant 0 : index
    %c0_80 = arith.constant 0 : index
    %174 = vector.load %arg38[%c0_79, %c0_80] : memref<24x16xbf16, #tpu.memory_space<vmem>>, vector<8x16xbf16>
    tpu.vector_store %arg38[%c0_79, %c0_80], %173 {strides = array<i32>} : memref<24x16xbf16, #tpu.memory_space<vmem>>, vector<8x16xbf16>,
    %175 = vector.extract_strided_slice %77 {offsets = [0, 0], sizes = [16, 16], strides = [1, 1]} : vector<16x32xf32> to vector<16x16xf32>
    %176 = arith.mulf %175, %175 : vector<16x16xf32>
    %cst_81 = arith.constant dense<0.000000e+00> : vector<16xf32>
    %177 = vector.multi_reduction <add>, %176, %cst_81 [1] : vector<16x16xf32> to vector<16xf32>
    %178 = vector.shape_cast %177 : vector<16xf32> to vector<16x1xf32>
    %cst_82 = arith.constant 1.600000e+01 : f32
    %179 = vector.broadcast %cst_82 : f32 to vector<16x1xf32>
    %180 = arith.divf %178, %179 : vector<16x1xf32>
    %cst_83 = arith.constant 9.99999997E-7 : f32
    %181 = vector.broadcast %cst_83 : f32 to vector<16x1xf32>
    %182 = arith.addf %180, %181 : vector<16x1xf32>
    %183 = math.rsqrt %182 : vector<16x1xf32>
    %184 = vector.broadcast %183 : vector<16x1xf32> to vector<16x16xf32>
    %185 = arith.mulf %175, %184 : vector<16x16xf32>
    %186 = vector.broadcast %99 : vector<1x16xf32> to vector<16x16xf32>
    %187 = arith.mulf %185, %186 : vector<16x16xf32>
    %188 = vector.extract_strided_slice %187 {offsets = [0, 0], sizes = [16, 8], strides = [1, 1]} : vector<16x16xf32> to vector<16x8xf32>
    %189 = vector.extract_strided_slice %187 {offsets = [0, 8], sizes = [16, 8], strides = [1, 1]} : vector<16x16xf32> to vector<16x8xf32>
    %cst_84 = arith.constant 0.000000e+00 : f32
    %190 = vector.broadcast %cst_84 : f32 to vector<16x8xf32>
    %191 = arith.subf %190, %189 : vector<16x8xf32>
    %192 = tpu.concatenate %191, %188 in 1 : vector<16x8xf32>, vector<16x8xf32> -> vector<16x16xf32>
    %193 = arith.mulf %187, %103 : vector<16x16xf32>
    %194 = arith.mulf %192, %105 : vector<16x16xf32>
    %195 = arith.addf %193, %194 : vector<16x16xf32>
    %196 = arith.truncf %195 : vector<16x16xf32> to vector<16x16xbf16>
    %c8_85 = arith.constant 8 : index
    %c0_86 = arith.constant 0 : index
    %197 = vector.load %arg38[%c8_85, %c0_86] : memref<24x16xbf16, #tpu.memory_space<vmem>>, vector<16x16xbf16>
    tpu.vector_store %arg38[%c8_85, %c0_86], %196 {strides = array<i32>} : memref<24x16xbf16, #tpu.memory_space<vmem>>, vector<16x16xbf16>,
    %198 = vector.extract_strided_slice %97 {offsets = [0, 0], sizes = [8, 16], strides = [1, 1]} : vector<8x32xf32> to vector<8x16xf32>
    %199 = arith.truncf %198 : vector<8x16xf32> to vector<8x16xbf16>
    %c0_87 = arith.constant 0 : index
    %c0_88 = arith.constant 0 : index
    %200 = vector.load %arg39[%c0_87, %c0_88] : memref<24x16xbf16, #tpu.memory_space<vmem>>, vector<8x16xbf16>
    tpu.vector_store %arg39[%c0_87, %c0_88], %199 {strides = array<i32>} : memref<24x16xbf16, #tpu.memory_space<vmem>>, vector<8x16xbf16>,
    %201 = vector.extract_strided_slice %82 {offsets = [0, 0], sizes = [16, 16], strides = [1, 1]} : vector<16x32xf32> to vector<16x16xf32>
    %202 = arith.truncf %201 : vector<16x16xf32> to vector<16x16xbf16>
    %c8_89 = arith.constant 8 : index
    %c0_90 = arith.constant 0 : index
    %203 = vector.load %arg39[%c8_89, %c0_90] : memref<24x16xbf16, #tpu.memory_space<vmem>>, vector<16x16xbf16>
    tpu.vector_store %arg39[%c8_89, %c0_90], %202 {strides = array<i32>} : memref<24x16xbf16, #tpu.memory_space<vmem>>, vector<16x16xbf16>,
    %c0_91 = arith.constant 0 : index
    %c0_92 = arith.constant 0 : index
    %204 = vector.load %arg37[%c0_91, %c0_92] : memref<24x16xbf16, #tpu.memory_space<vmem>>, vector<24x16xbf16>
    %c0_93 = arith.constant 0 : index
    %c0_94 = arith.constant 0 : index
    %205 = vector.load %arg38[%c0_93, %c0_94] : memref<24x16xbf16, #tpu.memory_space<vmem>>, vector<24x16xbf16>
    %c0_95 = arith.constant 0 : index
    %c0_96 = arith.constant 0 : index
    %206 = vector.load %arg39[%c0_95, %c0_96] : memref<24x16xbf16, #tpu.memory_space<vmem>>, vector<24x16xbf16>
    %cst_97 = arith.constant dense<0.000000e+00> : vector<24x24xf32>
    %207 = tpu.matmul %204, %205, %cst_97 {dimension_numbers = #tpu.dot_dimension_numbers<[1], [1], [0], [0], [0, 0, 1, 0], [], []>} : vector<24x16xbf16>, vector<24x16xbf16>, vector<24x24xf32> -> vector<24x24xf32>
    %cst_98 = arith.constant 2.500000e-01 : f32
    %208 = vector.broadcast %cst_98 : f32 to vector<24x24xf32>
    %209 = arith.mulf %207, %208 : vector<24x24xf32>
    %cst_99 = arith.constant dense<0xFF800000> : vector<24xf32>
    %210 = vector.multi_reduction <maximumf>, %209, %cst_99 [1] : vector<24x24xf32> to vector<24xf32>
    %211 = vector.shape_cast %210 : vector<24xf32> to vector<24x1xf32>
    %212 = vector.broadcast %211 : vector<24x1xf32> to vector<24x24xf32>
    %213 = arith.subf %209, %212 : vector<24x24xf32>
    %214 = math.exp %213 : vector<24x24xf32>
    %cst_100 = arith.constant dense<0.000000e+00> : vector<24xf32>
    %215 = vector.multi_reduction <add>, %214, %cst_100 [1] : vector<24x24xf32> to vector<24xf32>
    %216 = vector.shape_cast %215 : vector<24xf32> to vector<24x1xf32>
    %217 = tpu.reciprocal %216 {approx = true} : vector<24x1xf32> -> vector<24x1xf32>
    %218 = vector.broadcast %217 : vector<24x1xf32> to vector<24x24xf32>
    %219 = arith.mulf %214, %218 : vector<24x24xf32>
    %220 = arith.truncf %219 : vector<24x24xf32> to vector<24x24xbf16>
    %cst_101 = arith.constant dense<0.000000e+00> : vector<24x16xf32>
    %221 = tpu.matmul %220, %206, %cst_101 {dimension_numbers = #tpu.dot_dimension_numbers<[1], [0], [0], [1], [0, 0, 1, 1], [], []>} : vector<24x24xbf16>, vector<24x16xbf16>, vector<24x16xf32> -> vector<24x16xf32>
    %222 = arith.truncf %221 : vector<24x16xf32> to vector<24x16xbf16>
    %c0_102 = arith.constant 0 : index
    %c0_103 = arith.constant 0 : index
    %223 = vector.load %arg40[%c0_102, %c0_103] : memref<24x32xbf16, #tpu.memory_space<vmem>>, vector<24x16xbf16>
    tpu.vector_store %arg40[%c0_102, %c0_103], %222 {strides = array<i32>} : memref<24x32xbf16, #tpu.memory_space<vmem>>, vector<24x16xbf16>,
    %224 = vector.extract_strided_slice %87 {offsets = [0, 16], sizes = [8, 16], strides = [1, 1]} : vector<8x32xf32> to vector<8x16xf32>
    %225 = arith.mulf %224, %224 : vector<8x16xf32>
    %cst_104 = arith.constant dense<0.000000e+00> : vector<8xf32>
    %226 = vector.multi_reduction <add>, %225, %cst_104 [1] : vector<8x16xf32> to vector<8xf32>
    %227 = vector.shape_cast %226 : vector<8xf32> to vector<8x1xf32>
    %cst_105 = arith.constant 1.600000e+01 : f32
    %228 = vector.broadcast %cst_105 : f32 to vector<8x1xf32>
    %229 = arith.divf %227, %228 : vector<8x1xf32>
    %cst_106 = arith.constant 9.99999997E-7 : f32
    %230 = vector.broadcast %cst_106 : f32 to vector<8x1xf32>
    %231 = arith.addf %229, %230 : vector<8x1xf32>
    %232 = math.rsqrt %231 : vector<8x1xf32>
    %233 = vector.broadcast %232 : vector<8x1xf32> to vector<8x16xf32>
    %234 = arith.mulf %224, %233 : vector<8x16xf32>
    %235 = vector.broadcast %100 : vector<1x16xf32> to vector<8x16xf32>
    %236 = arith.mulf %234, %235 : vector<8x16xf32>
    %237 = vector.extract_strided_slice %236 {offsets = [0, 0], sizes = [8, 8], strides = [1, 1]} : vector<8x16xf32> to vector<8x8xf32>
    %238 = vector.extract_strided_slice %236 {offsets = [0, 8], sizes = [8, 8], strides = [1, 1]} : vector<8x16xf32> to vector<8x8xf32>
    %cst_107 = arith.constant 0.000000e+00 : f32
    %239 = vector.broadcast %cst_107 : f32 to vector<8x8xf32>
    %240 = arith.subf %239, %238 : vector<8x8xf32>
    %241 = tpu.concatenate %240, %237 in 1 : vector<8x8xf32>, vector<8x8xf32> -> vector<8x16xf32>
    %242 = arith.mulf %236, %102 : vector<8x16xf32>
    %243 = arith.mulf %241, %104 : vector<8x16xf32>
    %244 = arith.addf %242, %243 : vector<8x16xf32>
    %245 = arith.truncf %244 : vector<8x16xf32> to vector<8x16xbf16>
    %c0_108 = arith.constant 0 : index
    %c0_109 = arith.constant 0 : index
    %246 = vector.load %arg37[%c0_108, %c0_109] : memref<24x16xbf16, #tpu.memory_space<vmem>>, vector<8x16xbf16>
    tpu.vector_store %arg37[%c0_108, %c0_109], %245 {strides = array<i32>} : memref<24x16xbf16, #tpu.memory_space<vmem>>, vector<8x16xbf16>,
    %247 = vector.extract_strided_slice %72 {offsets = [0, 16], sizes = [16, 16], strides = [1, 1]} : vector<16x32xf32> to vector<16x16xf32>
    %248 = arith.mulf %247, %247 : vector<16x16xf32>
    %cst_110 = arith.constant dense<0.000000e+00> : vector<16xf32>
    %249 = vector.multi_reduction <add>, %248, %cst_110 [1] : vector<16x16xf32> to vector<16xf32>
    %250 = vector.shape_cast %249 : vector<16xf32> to vector<16x1xf32>
    %cst_111 = arith.constant 1.600000e+01 : f32
    %251 = vector.broadcast %cst_111 : f32 to vector<16x1xf32>
    %252 = arith.divf %250, %251 : vector<16x1xf32>
    %cst_112 = arith.constant 9.99999997E-7 : f32
    %253 = vector.broadcast %cst_112 : f32 to vector<16x1xf32>
    %254 = arith.addf %252, %253 : vector<16x1xf32>
    %255 = math.rsqrt %254 : vector<16x1xf32>
    %256 = vector.broadcast %255 : vector<16x1xf32> to vector<16x16xf32>
    %257 = arith.mulf %247, %256 : vector<16x16xf32>
    %258 = vector.broadcast %98 : vector<1x16xf32> to vector<16x16xf32>
    %259 = arith.mulf %257, %258 : vector<16x16xf32>
    %260 = vector.extract_strided_slice %259 {offsets = [0, 0], sizes = [16, 8], strides = [1, 1]} : vector<16x16xf32> to vector<16x8xf32>
    %261 = vector.extract_strided_slice %259 {offsets = [0, 8], sizes = [16, 8], strides = [1, 1]} : vector<16x16xf32> to vector<16x8xf32>
    %cst_113 = arith.constant 0.000000e+00 : f32
    %262 = vector.broadcast %cst_113 : f32 to vector<16x8xf32>
    %263 = arith.subf %262, %261 : vector<16x8xf32>
    %264 = tpu.concatenate %263, %260 in 1 : vector<16x8xf32>, vector<16x8xf32> -> vector<16x16xf32>
    %265 = arith.mulf %259, %103 : vector<16x16xf32>
    %266 = arith.mulf %264, %105 : vector<16x16xf32>
    %267 = arith.addf %265, %266 : vector<16x16xf32>
    %268 = arith.truncf %267 : vector<16x16xf32> to vector<16x16xbf16>
    %c8_114 = arith.constant 8 : index
    %c0_115 = arith.constant 0 : index
    %269 = vector.load %arg37[%c8_114, %c0_115] : memref<24x16xbf16, #tpu.memory_space<vmem>>, vector<16x16xbf16>
    tpu.vector_store %arg37[%c8_114, %c0_115], %268 {strides = array<i32>} : memref<24x16xbf16, #tpu.memory_space<vmem>>, vector<16x16xbf16>,
    %270 = vector.extract_strided_slice %92 {offsets = [0, 16], sizes = [8, 16], strides = [1, 1]} : vector<8x32xf32> to vector<8x16xf32>
    %271 = arith.mulf %270, %270 : vector<8x16xf32>
    %cst_116 = arith.constant dense<0.000000e+00> : vector<8xf32>
    %272 = vector.multi_reduction <add>, %271, %cst_116 [1] : vector<8x16xf32> to vector<8xf32>
    %273 = vector.shape_cast %272 : vector<8xf32> to vector<8x1xf32>
    %cst_117 = arith.constant 1.600000e+01 : f32
    %274 = vector.broadcast %cst_117 : f32 to vector<8x1xf32>
    %275 = arith.divf %273, %274 : vector<8x1xf32>
    %cst_118 = arith.constant 9.99999997E-7 : f32
    %276 = vector.broadcast %cst_118 : f32 to vector<8x1xf32>
    %277 = arith.addf %275, %276 : vector<8x1xf32>
    %278 = math.rsqrt %277 : vector<8x1xf32>
    %279 = vector.broadcast %278 : vector<8x1xf32> to vector<8x16xf32>
    %280 = arith.mulf %270, %279 : vector<8x16xf32>
    %281 = vector.broadcast %101 : vector<1x16xf32> to vector<8x16xf32>
    %282 = arith.mulf %280, %281 : vector<8x16xf32>
    %283 = vector.extract_strided_slice %282 {offsets = [0, 0], sizes = [8, 8], strides = [1, 1]} : vector<8x16xf32> to vector<8x8xf32>
    %284 = vector.extract_strided_slice %282 {offsets = [0, 8], sizes = [8, 8], strides = [1, 1]} : vector<8x16xf32> to vector<8x8xf32>
    %cst_119 = arith.constant 0.000000e+00 : f32
    %285 = vector.broadcast %cst_119 : f32 to vector<8x8xf32>
    %286 = arith.subf %285, %284 : vector<8x8xf32>
    %287 = tpu.concatenate %286, %283 in 1 : vector<8x8xf32>, vector<8x8xf32> -> vector<8x16xf32>
    %288 = arith.mulf %282, %102 : vector<8x16xf32>
    %289 = arith.mulf %287, %104 : vector<8x16xf32>
    %290 = arith.addf %288, %289 : vector<8x16xf32>
    %291 = arith.truncf %290 : vector<8x16xf32> to vector<8x16xbf16>
    %c0_120 = arith.constant 0 : index
    %c0_121 = arith.constant 0 : index
    %292 = vector.load %arg38[%c0_120, %c0_121] : memref<24x16xbf16, #tpu.memory_space<vmem>>, vector<8x16xbf16>
    tpu.vector_store %arg38[%c0_120, %c0_121], %291 {strides = array<i32>} : memref<24x16xbf16, #tpu.memory_space<vmem>>, vector<8x16xbf16>,
    %293 = vector.extract_strided_slice %77 {offsets = [0, 16], sizes = [16, 16], strides = [1, 1]} : vector<16x32xf32> to vector<16x16xf32>
    %294 = arith.mulf %293, %293 : vector<16x16xf32>
    %cst_122 = arith.constant dense<0.000000e+00> : vector<16xf32>
    %295 = vector.multi_reduction <add>, %294, %cst_122 [1] : vector<16x16xf32> to vector<16xf32>
    %296 = vector.shape_cast %295 : vector<16xf32> to vector<16x1xf32>
    %cst_123 = arith.constant 1.600000e+01 : f32
    %297 = vector.broadcast %cst_123 : f32 to vector<16x1xf32>
    %298 = arith.divf %296, %297 : vector<16x1xf32>
    %cst_124 = arith.constant 9.99999997E-7 : f32
    %299 = vector.broadcast %cst_124 : f32 to vector<16x1xf32>
    %300 = arith.addf %298, %299 : vector<16x1xf32>
    %301 = math.rsqrt %300 : vector<16x1xf32>
    %302 = vector.broadcast %301 : vector<16x1xf32> to vector<16x16xf32>
    %303 = arith.mulf %293, %302 : vector<16x16xf32>
    %304 = vector.broadcast %99 : vector<1x16xf32> to vector<16x16xf32>
    %305 = arith.mulf %303, %304 : vector<16x16xf32>
    %306 = vector.extract_strided_slice %305 {offsets = [0, 0], sizes = [16, 8], strides = [1, 1]} : vector<16x16xf32> to vector<16x8xf32>
    %307 = vector.extract_strided_slice %305 {offsets = [0, 8], sizes = [16, 8], strides = [1, 1]} : vector<16x16xf32> to vector<16x8xf32>
    %cst_125 = arith.constant 0.000000e+00 : f32
    %308 = vector.broadcast %cst_125 : f32 to vector<16x8xf32>
    %309 = arith.subf %308, %307 : vector<16x8xf32>
    %310 = tpu.concatenate %309, %306 in 1 : vector<16x8xf32>, vector<16x8xf32> -> vector<16x16xf32>
    %311 = arith.mulf %305, %103 : vector<16x16xf32>
    %312 = arith.mulf %310, %105 : vector<16x16xf32>
    %313 = arith.addf %311, %312 : vector<16x16xf32>
    %314 = arith.truncf %313 : vector<16x16xf32> to vector<16x16xbf16>
    %c8_126 = arith.constant 8 : index
    %c0_127 = arith.constant 0 : index
    %315 = vector.load %arg38[%c8_126, %c0_127] : memref<24x16xbf16, #tpu.memory_space<vmem>>, vector<16x16xbf16>
    tpu.vector_store %arg38[%c8_126, %c0_127], %314 {strides = array<i32>} : memref<24x16xbf16, #tpu.memory_space<vmem>>, vector<16x16xbf16>,
    %316 = vector.extract_strided_slice %97 {offsets = [0, 16], sizes = [8, 16], strides = [1, 1]} : vector<8x32xf32> to vector<8x16xf32>
    %317 = arith.truncf %316 : vector<8x16xf32> to vector<8x16xbf16>
    %c0_128 = arith.constant 0 : index
    %c0_129 = arith.constant 0 : index
    %318 = vector.load %arg39[%c0_128, %c0_129] : memref<24x16xbf16, #tpu.memory_space<vmem>>, vector<8x16xbf16>
    tpu.vector_store %arg39[%c0_128, %c0_129], %317 {strides = array<i32>} : memref<24x16xbf16, #tpu.memory_space<vmem>>, vector<8x16xbf16>,
    %319 = vector.extract_strided_slice %82 {offsets = [0, 16], sizes = [16, 16], strides = [1, 1]} : vector<16x32xf32> to vector<16x16xf32>
    %320 = arith.truncf %319 : vector<16x16xf32> to vector<16x16xbf16>
    %c8_130 = arith.constant 8 : index
    %c0_131 = arith.constant 0 : index
    %321 = vector.load %arg39[%c8_130, %c0_131] : memref<24x16xbf16, #tpu.memory_space<vmem>>, vector<16x16xbf16>
    tpu.vector_store %arg39[%c8_130, %c0_131], %320 {strides = array<i32>} : memref<24x16xbf16, #tpu.memory_space<vmem>>, vector<16x16xbf16>,
    %c0_132 = arith.constant 0 : index
    %c0_133 = arith.constant 0 : index
    %322 = vector.load %arg37[%c0_132, %c0_133] : memref<24x16xbf16, #tpu.memory_space<vmem>>, vector<24x16xbf16>
    %c0_134 = arith.constant 0 : index
    %c0_135 = arith.constant 0 : index
    %323 = vector.load %arg38[%c0_134, %c0_135] : memref<24x16xbf16, #tpu.memory_space<vmem>>, vector<24x16xbf16>
    %c0_136 = arith.constant 0 : index
    %c0_137 = arith.constant 0 : index
    %324 = vector.load %arg39[%c0_136, %c0_137] : memref<24x16xbf16, #tpu.memory_space<vmem>>, vector<24x16xbf16>
    %cst_138 = arith.constant dense<0.000000e+00> : vector<24x24xf32>
    %325 = tpu.matmul %322, %323, %cst_138 {dimension_numbers = #tpu.dot_dimension_numbers<[1], [1], [0], [0], [0, 0, 1, 0], [], []>} : vector<24x16xbf16>, vector<24x16xbf16>, vector<24x24xf32> -> vector<24x24xf32>
    %cst_139 = arith.constant 2.500000e-01 : f32
    %326 = vector.broadcast %cst_139 : f32 to vector<24x24xf32>
    %327 = arith.mulf %325, %326 : vector<24x24xf32>
    %cst_140 = arith.constant dense<0xFF800000> : vector<24xf32>
    %328 = vector.multi_reduction <maximumf>, %327, %cst_140 [1] : vector<24x24xf32> to vector<24xf32>
    %329 = vector.shape_cast %328 : vector<24xf32> to vector<24x1xf32>
    %330 = vector.broadcast %329 : vector<24x1xf32> to vector<24x24xf32>
    %331 = arith.subf %327, %330 : vector<24x24xf32>
    %332 = math.exp %331 : vector<24x24xf32>
    %cst_141 = arith.constant dense<0.000000e+00> : vector<24xf32>
    %333 = vector.multi_reduction <add>, %332, %cst_141 [1] : vector<24x24xf32> to vector<24xf32>
    %334 = vector.shape_cast %333 : vector<24xf32> to vector<24x1xf32>
    %335 = tpu.reciprocal %334 {approx = true} : vector<24x1xf32> -> vector<24x1xf32>
    %336 = vector.broadcast %335 : vector<24x1xf32> to vector<24x24xf32>
    %337 = arith.mulf %332, %336 : vector<24x24xf32>
    %338 = arith.truncf %337 : vector<24x24xf32> to vector<24x24xbf16>
    %cst_142 = arith.constant dense<0.000000e+00> : vector<24x16xf32>
    %339 = tpu.matmul %338, %324, %cst_142 {dimension_numbers = #tpu.dot_dimension_numbers<[1], [0], [0], [1], [0, 0, 1, 1], [], []>} : vector<24x24xbf16>, vector<24x16xbf16>, vector<24x16xf32> -> vector<24x16xf32>
    %340 = arith.truncf %339 : vector<24x16xf32> to vector<24x16xbf16>
    %c0_143 = arith.constant 0 : index
    %c16 = arith.constant 16 : index
    %341 = vector.load %arg40[%c0_143, %c16] : memref<24x32xbf16, #tpu.memory_space<vmem>>, vector<24x16xbf16>
    tpu.vector_store %arg40[%c0_143, %c16], %340 {strides = array<i32>} : memref<24x32xbf16, #tpu.memory_space<vmem>>, vector<24x16xbf16>,
    %c0_144 = arith.constant 0 : index
    %c0_145 = arith.constant 0 : index
    %342 = vector.load %arg40[%c0_144, %c0_145] : memref<24x32xbf16, #tpu.memory_space<vmem>>, vector<24x32xbf16>
    %343 = vector.extract_strided_slice %342 {offsets = [8, 0], sizes = [16, 32], strides = [1, 1]} : vector<24x32xbf16> to vector<16x32xbf16>
    %c0_146 = arith.constant 0 : index
    %c0_147 = arith.constant 0 : index
    %344 = vector.load %arg23[%c0_146, %c0_147] : memref<32x32xbf16, #tpu.memory_space<vmem>>, vector<32x32xbf16>
    %cst_148 = arith.constant dense<0.000000e+00> : vector<16x32xf32>
    %345 = tpu.matmul %343, %344, %cst_148 {dimension_numbers = #tpu.dot_dimension_numbers<[1], [0], [0], [1], [0, 0, 1, 1], [], []>} : vector<16x32xbf16>, vector<32x32xbf16>, vector<16x32xf32> -> vector<16x32xf32>
    %c0_149 = arith.constant 0 : index
    %c0_150 = arith.constant 0 : index
    %346 = vector.load %arg24[%c0_149, %c0_150] : memref<1x32xf32, #tpu.memory_space<vmem>>, vector<1x32xf32>
    %347 = vector.broadcast %346 : vector<1x32xf32> to vector<16x32xf32>
    %348 = arith.addf %345, %347 : vector<16x32xf32>
    %349 = vector.extract_strided_slice %342 {offsets = [0, 0], sizes = [8, 32], strides = [1, 1]} : vector<24x32xbf16> to vector<8x32xbf16>
    %c0_151 = arith.constant 0 : index
    %c0_152 = arith.constant 0 : index
    %350 = vector.load %arg25[%c0_151, %c0_152] : memref<32x32xbf16, #tpu.memory_space<vmem>>, vector<32x32xbf16>
    %cst_153 = arith.constant dense<0.000000e+00> : vector<8x32xf32>
    %351 = tpu.matmul %349, %350, %cst_153 {dimension_numbers = #tpu.dot_dimension_numbers<[1], [0], [0], [1], [0, 0, 1, 1], [], []>} : vector<8x32xbf16>, vector<32x32xbf16>, vector<8x32xf32> -> vector<8x32xf32>
    %c0_154 = arith.constant 0 : index
    %c0_155 = arith.constant 0 : index
    %352 = vector.load %arg26[%c0_154, %c0_155] : memref<1x32xf32, #tpu.memory_space<vmem>>, vector<1x32xf32>
    %353 = vector.broadcast %352 : vector<1x32xf32> to vector<8x32xf32>
    %354 = arith.addf %351, %353 : vector<8x32xf32>
    %355 = vector.broadcast %12 : vector<1x32xf32> to vector<16x32xf32>
    %356 = arith.mulf %355, %348 : vector<16x32xf32>
    %357 = arith.addf %1, %356 : vector<16x32xf32>
    %cst_156 = arith.constant dense<0.000000e+00> : vector<16xf32>
    %358 = vector.multi_reduction <add>, %357, %cst_156 [1] : vector<16x32xf32> to vector<16xf32>
    %359 = vector.shape_cast %358 : vector<16xf32> to vector<16x1xf32>
    %cst_157 = arith.constant 3.200000e+01 : f32
    %360 = vector.broadcast %cst_157 : f32 to vector<16x1xf32>
    %361 = arith.divf %359, %360 : vector<16x1xf32>
    %362 = vector.broadcast %361 : vector<16x1xf32> to vector<16x32xf32>
    %363 = arith.subf %357, %362 : vector<16x32xf32>
    %364 = arith.mulf %363, %363 : vector<16x32xf32>
    %cst_158 = arith.constant dense<0.000000e+00> : vector<16xf32>
    %365 = vector.multi_reduction <add>, %364, %cst_158 [1] : vector<16x32xf32> to vector<16xf32>
    %366 = vector.shape_cast %365 : vector<16xf32> to vector<16x1xf32>
    %cst_159 = arith.constant 3.200000e+01 : f32
    %367 = vector.broadcast %cst_159 : f32 to vector<16x1xf32>
    %368 = arith.divf %366, %367 : vector<16x1xf32>
    %cst_160 = arith.constant 9.99999997E-7 : f32
    %369 = vector.broadcast %cst_160 : f32 to vector<16x1xf32>
    %370 = arith.addf %368, %369 : vector<16x1xf32>
    %371 = math.rsqrt %370 : vector<16x1xf32>
    %372 = vector.broadcast %371 : vector<16x1xf32> to vector<16x32xf32>
    %373 = arith.mulf %363, %372 : vector<16x32xf32>
    %cst_161 = arith.constant 1.000000e+00 : f32
    %374 = vector.broadcast %cst_161 : f32 to vector<1x32xf32>
    %375 = arith.addf %374, %14 : vector<1x32xf32>
    %376 = vector.broadcast %375 : vector<1x32xf32> to vector<16x32xf32>
    %377 = arith.mulf %373, %376 : vector<16x32xf32>
    %378 = vector.broadcast %13 : vector<1x32xf32> to vector<16x32xf32>
    %379 = arith.addf %377, %378 : vector<16x32xf32>
    %380 = arith.truncf %379 : vector<16x32xf32> to vector<16x32xbf16>
    %c0_162 = arith.constant 0 : index
    %c0_163 = arith.constant 0 : index
    %381 = vector.load %arg27[%c0_162, %c0_163] : memref<32x128xbf16, #tpu.memory_space<vmem>>, vector<32x128xbf16>
    %cst_164 = arith.constant dense<0.000000e+00> : vector<16x128xf32>
    %382 = tpu.matmul %380, %381, %cst_164 {dimension_numbers = #tpu.dot_dimension_numbers<[1], [0], [0], [1], [0, 0, 1, 1], [], []>} : vector<16x32xbf16>, vector<32x128xbf16>, vector<16x128xf32> -> vector<16x128xf32>
    %c0_165 = arith.constant 0 : index
    %c0_166 = arith.constant 0 : index
    %383 = vector.load %arg28[%c0_165, %c0_166] : memref<1x128xf32, #tpu.memory_space<vmem>>, vector<1x128xf32>
    %384 = vector.broadcast %383 : vector<1x128xf32> to vector<16x128xf32>
    %385 = arith.addf %382, %384 : vector<16x128xf32>
    %cst_167 = arith.constant 5.000000e-01 : f32
    %386 = vector.broadcast %cst_167 : f32 to vector<16x128xf32>
    %387 = arith.mulf %386, %385 : vector<16x128xf32>
    %cst_168 = arith.constant 4.471500e-02 : f32
    %388 = vector.broadcast %cst_168 : f32 to vector<16x128xf32>
    %389 = arith.mulf %388, %385 : vector<16x128xf32>
    %390 = arith.mulf %389, %385 : vector<16x128xf32>
    %391 = arith.mulf %390, %385 : vector<16x128xf32>
    %392 = arith.addf %385, %391 : vector<16x128xf32>
    %cst_169 = arith.constant 0.797884583 : f32
    %393 = vector.broadcast %cst_169 : f32 to vector<16x128xf32>
    %394 = arith.mulf %393, %392 : vector<16x128xf32>
    %395 = math.tanh %394 : vector<16x128xf32>
    %cst_170 = arith.constant 1.000000e+00 : f32
    %396 = vector.broadcast %cst_170 : f32 to vector<16x128xf32>
    %397 = arith.addf %396, %395 : vector<16x128xf32>
    %398 = arith.mulf %387, %397 : vector<16x128xf32>
    %399 = arith.truncf %398 : vector<16x128xf32> to vector<16x128xbf16>
    %c0_171 = arith.constant 0 : index
    %c0_172 = arith.constant 0 : index
    %400 = vector.load %arg29[%c0_171, %c0_172] : memref<128x32xbf16, #tpu.memory_space<vmem>>, vector<128x32xbf16>
    %cst_173 = arith.constant dense<0.000000e+00> : vector<16x32xf32>
    %401 = tpu.matmul %399, %400, %cst_173 {dimension_numbers = #tpu.dot_dimension_numbers<[1], [0], [0], [1], [0, 0, 1, 1], [], []>} : vector<16x128xbf16>, vector<128x32xbf16>, vector<16x32xf32> -> vector<16x32xf32>
    %c0_174 = arith.constant 0 : index
    %c0_175 = arith.constant 0 : index
    %402 = vector.load %arg30[%c0_174, %c0_175] : memref<1x32xf32, #tpu.memory_space<vmem>>, vector<1x32xf32>
    %403 = vector.broadcast %402 : vector<1x32xf32> to vector<16x32xf32>
    %404 = arith.addf %401, %403 : vector<16x32xf32>
    %405 = vector.broadcast %15 : vector<1x32xf32> to vector<16x32xf32>
    %406 = arith.mulf %405, %404 : vector<16x32xf32>
    %407 = arith.addf %357, %406 : vector<16x32xf32>
    %c0_176 = arith.constant 0 : index
    %c0_177 = arith.constant 0 : index
    %c0_178 = arith.constant 0 : index
    %408 = vector.load %arg36[%c0_176, %c0_177, %c0_178] : memref<1x16x32xf32, #tpu.memory_space<vmem>>, vector<1x16x32xf32>
    %409 = vector.shape_cast %408 : vector<1x16x32xf32> to vector<16x32xf32>
    %410 = vector.shape_cast %407 : vector<16x32xf32> to vector<1x16x32xf32>
    tpu.vector_store %arg36[%c0_176, %c0_177, %c0_178], %410 {strides = array<i32>} : memref<1x16x32xf32, #tpu.memory_space<vmem>>, vector<1x16x32xf32>,
    %411 = vector.broadcast %18 : vector<1x32xf32> to vector<8x32xf32>
    %412 = arith.mulf %411, %354 : vector<8x32xf32>
    %413 = arith.addf %3, %412 : vector<8x32xf32>
    %cst_179 = arith.constant dense<0.000000e+00> : vector<8xf32>
    %414 = vector.multi_reduction <add>, %413, %cst_179 [1] : vector<8x32xf32> to vector<8xf32>
    %415 = vector.shape_cast %414 : vector<8xf32> to vector<8x1xf32>
    %cst_180 = arith.constant 3.200000e+01 : f32
    %416 = vector.broadcast %cst_180 : f32 to vector<8x1xf32>
    %417 = arith.divf %415, %416 : vector<8x1xf32>
    %418 = vector.broadcast %417 : vector<8x1xf32> to vector<8x32xf32>
    %419 = arith.subf %413, %418 : vector<8x32xf32>
    %420 = arith.mulf %419, %419 : vector<8x32xf32>
    %cst_181 = arith.constant dense<0.000000e+00> : vector<8xf32>
    %421 = vector.multi_reduction <add>, %420, %cst_181 [1] : vector<8x32xf32> to vector<8xf32>
    %422 = vector.shape_cast %421 : vector<8xf32> to vector<8x1xf32>
    %cst_182 = arith.constant 3.200000e+01 : f32
    %423 = vector.broadcast %cst_182 : f32 to vector<8x1xf32>
    %424 = arith.divf %422, %423 : vector<8x1xf32>
    %cst_183 = arith.constant 9.99999997E-7 : f32
    %425 = vector.broadcast %cst_183 : f32 to vector<8x1xf32>
    %426 = arith.addf %424, %425 : vector<8x1xf32>
    %427 = math.rsqrt %426 : vector<8x1xf32>
    %428 = vector.broadcast %427 : vector<8x1xf32> to vector<8x32xf32>
    %429 = arith.mulf %419, %428 : vector<8x32xf32>
    %cst_184 = arith.constant 1.000000e+00 : f32
    %430 = vector.broadcast %cst_184 : f32 to vector<1x32xf32>
    %431 = arith.addf %430, %20 : vector<1x32xf32>
    %432 = vector.broadcast %431 : vector<1x32xf32> to vector<8x32xf32>
    %433 = arith.mulf %429, %432 : vector<8x32xf32>
    %434 = vector.broadcast %19 : vector<1x32xf32> to vector<8x32xf32>
    %435 = arith.addf %433, %434 : vector<8x32xf32>
    %436 = arith.truncf %435 : vector<8x32xf32> to vector<8x32xbf16>
    %c0_185 = arith.constant 0 : index
    %c0_186 = arith.constant 0 : index
    %437 = vector.load %arg31[%c0_185, %c0_186] : memref<32x128xbf16, #tpu.memory_space<vmem>>, vector<32x128xbf16>
    %cst_187 = arith.constant dense<0.000000e+00> : vector<8x128xf32>
    %438 = tpu.matmul %436, %437, %cst_187 {dimension_numbers = #tpu.dot_dimension_numbers<[1], [0], [0], [1], [0, 0, 1, 1], [], []>} : vector<8x32xbf16>, vector<32x128xbf16>, vector<8x128xf32> -> vector<8x128xf32>
    %c0_188 = arith.constant 0 : index
    %c0_189 = arith.constant 0 : index
    %439 = vector.load %arg32[%c0_188, %c0_189] : memref<1x128xf32, #tpu.memory_space<vmem>>, vector<1x128xf32>
    %440 = vector.broadcast %439 : vector<1x128xf32> to vector<8x128xf32>
    %441 = arith.addf %438, %440 : vector<8x128xf32>
    %cst_190 = arith.constant 5.000000e-01 : f32
    %442 = vector.broadcast %cst_190 : f32 to vector<8x128xf32>
    %443 = arith.mulf %442, %441 : vector<8x128xf32>
    %cst_191 = arith.constant 4.471500e-02 : f32
    %444 = vector.broadcast %cst_191 : f32 to vector<8x128xf32>
    %445 = arith.mulf %444, %441 : vector<8x128xf32>
    %446 = arith.mulf %445, %441 : vector<8x128xf32>
    %447 = arith.mulf %446, %441 : vector<8x128xf32>
    %448 = arith.addf %441, %447 : vector<8x128xf32>
    %cst_192 = arith.constant 0.797884583 : f32
    %449 = vector.broadcast %cst_192 : f32 to vector<8x128xf32>
    %450 = arith.mulf %449, %448 : vector<8x128xf32>
    %451 = math.tanh %450 : vector<8x128xf32>
    %cst_193 = arith.constant 1.000000e+00 : f32
    %452 = vector.broadcast %cst_193 : f32 to vector<8x128xf32>
    %453 = arith.addf %452, %451 : vector<8x128xf32>
    %454 = arith.mulf %443, %453 : vector<8x128xf32>
    %455 = arith.truncf %454 : vector<8x128xf32> to vector<8x128xbf16>
    %c0_194 = arith.constant 0 : index
    %c0_195 = arith.constant 0 : index
    %456 = vector.load %arg33[%c0_194, %c0_195] : memref<128x32xbf16, #tpu.memory_space<vmem>>, vector<128x32xbf16>
    %cst_196 = arith.constant dense<0.000000e+00> : vector<8x32xf32>
    %457 = tpu.matmul %455, %456, %cst_196 {dimension_numbers = #tpu.dot_dimension_numbers<[1], [0], [0], [1], [0, 0, 1, 1], [], []>} : vector<8x128xbf16>, vector<128x32xbf16>, vector<8x32xf32> -> vector<8x32xf32>
    %c0_197 = arith.constant 0 : index
    %c0_198 = arith.constant 0 : index
    %458 = vector.load %arg34[%c0_197, %c0_198] : memref<1x32xf32, #tpu.memory_space<vmem>>, vector<1x32xf32>
    %459 = vector.broadcast %458 : vector<1x32xf32> to vector<8x32xf32>
    %460 = arith.addf %457, %459 : vector<8x32xf32>
    %461 = vector.broadcast %21 : vector<1x32xf32> to vector<8x32xf32>
    %462 = arith.mulf %461, %460 : vector<8x32xf32>
    %463 = arith.addf %413, %462 : vector<8x32xf32>
    %c0_199 = arith.constant 0 : index
    %c0_200 = arith.constant 0 : index
    %c0_201 = arith.constant 0 : index
    %464 = vector.load %arg35[%c0_199, %c0_200, %c0_201] : memref<1x8x32xf32, #tpu.memory_space<vmem>>, vector<1x8x32xf32>
    %465 = vector.shape_cast %464 : vector<1x8x32xf32> to vector<8x32xf32>
    %466 = vector.shape_cast %463 : vector<8x32xf32> to vector<1x8x32xf32>
    tpu.vector_store %arg35[%c0_199, %c0_200, %c0_201], %466 {strides = array<i32>} : memref<1x8x32xf32, #tpu.memory_space<vmem>>, vector<1x8x32xf32>,
    return
  }
  func.func @transform_0(%arg0: i32) -> (i32, i32, i32) {
    %c0_i32 = arith.constant 0 : i32
    %c0_i32_0 = arith.constant 0 : i32
    %c0_i32_1 = arith.constant 0 : i32
    return %arg0, %c0_i32, %c0_i32_0 : i32, i32, i32
  }
  func.func @transform_1(%arg0: i32) -> (i32, i32, i32) {
    %c0_i32 = arith.constant 0 : i32
    %c0_i32_0 = arith.constant 0 : i32
    %c0_i32_1 = arith.constant 0 : i32
    return %arg0, %c0_i32, %c0_i32_0 : i32, i32, i32
  }
  func.func @transform_2(%arg0: i32) -> (i32, i32, i32) {
    %c0_i32 = arith.constant 0 : i32
    %c0_i32_0 = arith.constant 0 : i32
    %c0_i32_1 = arith.constant 0 : i32
    return %arg0, %c0_i32, %c0_i32_0 : i32, i32, i32
  }
  func.func @transform_3(%arg0: i32) -> (i32, i32, i32) {
    %c0_i32 = arith.constant 0 : i32
    %c0_i32_0 = arith.constant 0 : i32
    %c0_i32_1 = arith.constant 0 : i32
    return %arg0, %c0_i32, %c0_i32_0 : i32, i32, i32
  }
  func.func @transform_4(%arg0: i32) -> (i32, i32) {
    %c0_i32 = arith.constant 0 : i32
    %c0_i32_0 = arith.constant 0 : i32
    %c0_i32_1 = arith.constant 0 : i32
    return %c0_i32, %c0_i32_0 : i32, i32
  }
  func.func @transform_5(%arg0: i32) -> (i32, i32) {
    %c0_i32 = arith.constant 0 : i32
    %c0_i32_0 = arith.constant 0 : i32
    %c0_i32_1 = arith.constant 0 : i32
    return %c0_i32, %c0_i32_0 : i32, i32
  }
  func.func @transform_6(%arg0: i32) -> (i32, i32) {
    %c0_i32 = arith.constant 0 : i32
    %c0_i32_0 = arith.constant 0 : i32
    %c0_i32_1 = arith.constant 0 : i32
    return %c0_i32, %c0_i32_0 : i32, i32
  }
  func.func @transform_7(%arg0: i32) -> (i32, i32) {
    %c0_i32 = arith.constant 0 : i32
    %c0_i32_0 = arith.constant 0 : i32
    %c0_i32_1 = arith.constant 0 : i32
    return %c0_i32, %c0_i32_0 : i32, i32
  }
  func.func @transform_8(%arg0: i32) -> (i32, i32) {
    %c0_i32 = arith.constant 0 : i32
    %c0_i32_0 = arith.constant 0 : i32
    %c0_i32_1 = arith.constant 0 : i32
    return %c0_i32, %c0_i32_0 : i32, i32
  }
  func.func @transform_9(%arg0: i32) -> (i32, i32) {
    %c0_i32 = arith.constant 0 : i32
    %c0_i32_0 = arith.constant 0 : i32
    %c0_i32_1 = arith.constant 0 : i32
    return %c0_i32, %c0_i32_0 : i32, i32
  }
  func.func @transform_10(%arg0: i32) -> (i32, i32) {
    %c0_i32 = arith.constant 0 : i32
    %c0_i32_0 = arith.constant 0 : i32
    %c0_i32_1 = arith.constant 0 : i32
    return %c0_i32, %c0_i32_0 : i32, i32
  }
  func.func @transform_11(%arg0: i32) -> (i32, i32) {
    %c0_i32 = arith.constant 0 : i32
    %c0_i32_0 = arith.constant 0 : i32
    %c0_i32_1 = arith.constant 0 : i32
    return %c0_i32, %c0_i32_0 : i32, i32
  }
  func.func @transform_12(%arg0: i32) -> (i32, i32) {
    %c0_i32 = arith.constant 0 : i32
    %c0_i32_0 = arith.constant 0 : i32
    %c0_i32_1 = arith.constant 0 : i32
    return %c0_i32, %c0_i32_0 : i32, i32
  }
  func.func @transform_13(%arg0: i32) -> (i32, i32) {
    %c0_i32 = arith.constant 0 : i32
    %c0_i32_0 = arith.constant 0 : i32
    %c0_i32_1 = arith.constant 0 : i32
    return %c0_i32, %c0_i32_0 : i32, i32
  }
  func.func @transform_14(%arg0: i32) -> (i32, i32) {
    %c0_i32 = arith.constant 0 : i32
    %c0_i32_0 = arith.constant 0 : i32
    %c0_i32_1 = arith.constant 0 : i32
    return %c0_i32, %c0_i32_0 : i32, i32
  }
  func.func @transform_15(%arg0: i32) -> (i32, i32) {
    %c0_i32 = arith.constant 0 : i32
    %c0_i32_0 = arith.constant 0 : i32
    %c0_i32_1 = arith.constant 0 : i32
    return %c0_i32, %c0_i32_0 : i32, i32
  }
  func.func @transform_16(%arg0: i32) -> (i32, i32) {
    %c0_i32 = arith.constant 0 : i32
    %c0_i32_0 = arith.constant 0 : i32
    %c0_i32_1 = arith.constant 0 : i32
    return %c0_i32, %c0_i32_0 : i32, i32
  }
  func.func @transform_17(%arg0: i32) -> (i32, i32) {
    %c0_i32 = arith.constant 0 : i32
    %c0_i32_0 = arith.constant 0 : i32
    %c0_i32_1 = arith.constant 0 : i32
    return %c0_i32, %c0_i32_0 : i32, i32
  }
  func.func @transform_18(%arg0: i32) -> (i32, i32) {
    %c0_i32 = arith.constant 0 : i32
    %c0_i32_0 = arith.constant 0 : i32
    %c0_i32_1 = arith.constant 0 : i32
    return %c0_i32, %c0_i32_0 : i32, i32
  }
  func.func @transform_19(%arg0: i32) -> (i32, i32) {
    %c0_i32 = arith.constant 0 : i32
    %c0_i32_0 = arith.constant 0 : i32
    %c0_i32_1 = arith.constant 0 : i32
    return %c0_i32, %c0_i32_0 : i32, i32
  }
  func.func @transform_20(%arg0: i32) -> (i32, i32) {
    %c0_i32 = arith.constant 0 : i32
    %c0_i32_0 = arith.constant 0 : i32
    %c0_i32_1 = arith.constant 0 : i32
    return %c0_i32, %c0_i32_0 : i32, i32
  }
  func.func @transform_21(%arg0: i32) -> (i32, i32) {
    %c0_i32 = arith.constant 0 : i32
    %c0_i32_0 = arith.constant 0 : i32
    %c0_i32_1 = arith.constant 0 : i32
    return %c0_i32, %c0_i32_0 : i32, i32
  }
  func.func @transform_22(%arg0: i32) -> (i32, i32) {
    %c0_i32 = arith.constant 0 : i32
    %c0_i32_0 = arith.constant 0 : i32
    %c0_i32_1 = arith.constant 0 : i32
    return %c0_i32, %c0_i32_0 : i32, i32
  }
  func.func @transform_23(%arg0: i32) -> (i32, i32) {
    %c0_i32 = arith.constant 0 : i32
    %c0_i32_0 = arith.constant 0 : i32
    %c0_i32_1 = arith.constant 0 : i32
    return %c0_i32, %c0_i32_0 : i32, i32
  }
  func.func @transform_24(%arg0: i32) -> (i32, i32) {
    %c0_i32 = arith.constant 0 : i32
    %c0_i32_0 = arith.constant 0 : i32
    %c0_i32_1 = arith.constant 0 : i32
    return %c0_i32, %c0_i32_0 : i32, i32
  }
  func.func @transform_25(%arg0: i32) -> (i32, i32) {
    %c0_i32 = arith.constant 0 : i32
    %c0_i32_0 = arith.constant 0 : i32
    %c0_i32_1 = arith.constant 0 : i32
    return %c0_i32, %c0_i32_0 : i32, i32
  }
  func.func @transform_26(%arg0: i32) -> (i32, i32) {
    %c0_i32 = arith.constant 0 : i32
    %c0_i32_0 = arith.constant 0 : i32
    %c0_i32_1 = arith.constant 0 : i32
    return %c0_i32, %c0_i32_0 : i32, i32
  }
  func.func @transform_27(%arg0: i32) -> (i32, i32) {
    %c0_i32 = arith.constant 0 : i32
    %c0_i32_0 = arith.constant 0 : i32
    %c0_i32_1 = arith.constant 0 : i32
    return %c0_i32, %c0_i32_0 : i32, i32
  }
  func.func @transform_28(%arg0: i32) -> (i32, i32) {
    %c0_i32 = arith.constant 0 : i32
    %c0_i32_0 = arith.constant 0 : i32
    %c0_i32_1 = arith.constant 0 : i32
    return %c0_i32, %c0_i32_0 : i32, i32
  }
  func.func @transform_29(%arg0: i32) -> (i32, i32) {
    %c0_i32 = arith.constant 0 : i32
    %c0_i32_0 = arith.constant 0 : i32
    %c0_i32_1 = arith.constant 0 : i32
    return %c0_i32, %c0_i32_0 : i32, i32
  }
  func.func @transform_30(%arg0: i32) -> (i32, i32) {
    %c0_i32 = arith.constant 0 : i32
    %c0_i32_0 = arith.constant 0 : i32
    %c0_i32_1 = arith.constant 0 : i32
    return %c0_i32, %c0_i32_0 : i32, i32
  }
  func.func @transform_31(%arg0: i32) -> (i32, i32) {
    %c0_i32 = arith.constant 0 : i32
    %c0_i32_0 = arith.constant 0 : i32
    %c0_i32_1 = arith.constant 0 : i32
    return %c0_i32, %c0_i32_0 : i32, i32
  }
  func.func @transform_32(%arg0: i32) -> (i32, i32) {
    %c0_i32 = arith.constant 0 : i32
    %c0_i32_0 = arith.constant 0 : i32
    %c0_i32_1 = arith.constant 0 : i32
    return %c0_i32, %c0_i32_0 : i32, i32
  }
  func.func @transform_33(%arg0: i32) -> (i32, i32) {
    %c0_i32 = arith.constant 0 : i32
    %c0_i32_0 = arith.constant 0 : i32
    %c0_i32_1 = arith.constant 0 : i32
    return %c0_i32, %c0_i32_0 : i32, i32
  }
  func.func @transform_34(%arg0: i32) -> (i32, i32, i32) {
    %c0_i32 = arith.constant 0 : i32
    %c0_i32_0 = arith.constant 0 : i32
    %c0_i32_1 = arith.constant 0 : i32
    return %arg0, %c0_i32, %c0_i32_0 : i32, i32, i32
  }
  func.func @transform_35(%arg0: i32) -> (i32, i32, i32) {
    %c0_i32 = arith.constant 0 : i32
    %c0_i32_0 = arith.constant 0 : i32
    %c0_i32_1 = arith.constant 0 : i32
    return %arg0, %c0_i32, %c0_i32_0 : i32, i32, i32
  }
}

</mosaic_0001>

<llo_original>
// kernel: tpu_custom_call.1
$region0: #{tpu_custom_call.1}
  #allocation0 [shape = 'u32[]', space=smem, size = 0x4, offset = 0x4, fixed_abs, tag = 'smem constant byte address 0x4 - core index']
  #allocation1 [shape = 'u32[72,128]{1,0:T(1,128)}', space=vmem, size = 0x9000, scoped, tag = 'internal scratch']
  #allocation2 [shape = 'bf16[24,16]{1,0:T(8,128)(2,1)}', space=vmem, size = 0x1800, scoped, tag = 'scratch operand']
  #allocation3 [shape = 'bf16[24,16]{1,0:T(8,128)(2,1)}', space=vmem, size = 0x1800, scoped, tag = 'scratch operand']
  #allocation4 [shape = 'bf16[24,16]{1,0:T(8,128)(2,1)}', space=vmem, size = 0x1800, scoped, tag = 'scratch operand']
  #allocation5 [shape = 'bf16[24,32]{1,0:T(8,128)(2,1)}', space=vmem, size = 0x1800, scoped, tag = 'scratch operand']
  %s0 = inlined_call_operand.smem [shape: u32[36], index: -1, kind: input, shape index: {}]
  %s1 = sld [smem:[%s0]]
  %s2 = scalar_lea.smem %s0, 1
  %s3 = sld [smem:[%s2]]
  %s4 = scalar_lea.smem %s0, 2
  %s5 = sld [smem:[%s4]]
  %s6 = scalar_lea.smem %s0, 3
  %s7 = sld [smem:[%s6]]
  %s8 = scalar_lea.smem %s0, 4
  %s9 = sld [smem:[%s8]]
  %s10 = scalar_lea.smem %s0, 5
  %s11 = sld [smem:[%s10]]
  %s12 = scalar_lea.smem %s0, 6
  %s13 = sld [smem:[%s12]]
  %s14 = scalar_lea.smem %s0, 7
  %s15 = sld [smem:[%s14]]
  %s16 = scalar_lea.smem %s0, 8
  %s17 = sld [smem:[%s16]]
  %s18 = scalar_lea.smem %s0, 9
  %s19 = sld [smem:[%s18]]
  %s20 = scalar_lea.smem %s0, 10
  %s21 = sld [smem:[%s20]]
  %s22 = scalar_lea.smem %s0, 11
  %s23 = sld [smem:[%s22]]
  %s24 = scalar_lea.smem %s0, 12
  %s25 = sld [smem:[%s24]]
  %s26 = scalar_lea.smem %s0, 13
  %s27 = sld [smem:[%s26]]
  %s28 = scalar_lea.smem %s0, 14
  %s29 = sld [smem:[%s28]]
  %s30 = scalar_lea.smem %s0, 15
  %s31 = sld [smem:[%s30]]
  %s32 = scalar_lea.smem %s0, 16
  %s33 = sld [smem:[%s32]]
  %s34 = scalar_lea.smem %s0, 17
  %s35 = sld [smem:[%s34]]
  %s36 = scalar_lea.smem %s0, 18
  %s37 = sld [smem:[%s36]]
  %s38 = scalar_lea.smem %s0, 19
  %s39 = sld [smem:[%s38]]
  %s40 = scalar_lea.smem %s0, 20
  %s41 = sld [smem:[%s40]]
  %s42 = scalar_lea.smem %s0, 21
  %s43 = sld [smem:[%s42]]
  %s44 = scalar_lea.smem %s0, 22
  %s45 = sld [smem:[%s44]]
  %s46 = scalar_lea.smem %s0, 23
  %s47 = sld [smem:[%s46]]
  %s48 = scalar_lea.smem %s0, 24
  %s49 = sld [smem:[%s48]]
  %s50 = scalar_lea.smem %s0, 25
  %s51 = sld [smem:[%s50]]
  %s52 = scalar_lea.smem %s0, 26
  %s53 = sld [smem:[%s52]]
  %s54 = scalar_lea.smem %s0, 27
  %s55 = sld [smem:[%s54]]
  %s56 = scalar_lea.smem %s0, 28
  %s57 = sld [smem:[%s56]]
  %s58 = scalar_lea.smem %s0, 29
  %s59 = sld [smem:[%s58]]
  %s60 = scalar_lea.smem %s0, 30
  %s61 = sld [smem:[%s60]]
  %s62 = scalar_lea.smem %s0, 31
  %s63 = sld [smem:[%s62]]
  %s64 = scalar_lea.smem %s0, 32
  %s65 = sld [smem:[%s64]]
  %s66 = scalar_lea.smem %s0, 33
  %s67 = sld [smem:[%s66]]
  %s68 = scalar_lea.smem %s0, 34
  %s69 = sld [smem:[%s68]]
  %s70 = scalar_lea.smem %s0, 35
  %s71 = sld [smem:[%s70]]
  %72 = xla_tuple %s69, %s71
  %s73 = sld [smem:[#allocation0]]
  $region177: #{tpu_custom_call.1} parent=0
    _
  %s75 = ssub.s32 1, %s73
  %s76 = scalar_select 0, %s75, %s73
  $region1: #{tpu_custom_call.1} parent=0
    #allocation6 [shape = 'u8[8192]{0}', space=vmem, size = 0x2000, scoped, tag = 'output window, operand 0']
    #allocation7 [shape = 's32[2]{0}', space=sflag, size = 0x8, scoped, tag = 'scoped memory for tpu_custom_call.1']
    #allocation8 [shape = 'u8[16384]{0}', space=vmem, size = 0x4000, scoped, tag = 'output window, operand 1']
    #allocation9 [shape = 's32[2]{0}', space=sflag, size = 0x8, scoped, tag = 'scoped memory for tpu_custom_call.1']
    %77 = vsyncpa [#allocation7], 0
    %s78 = scalar_lea.sflag [#allocation7], 1
    %79 = vsyncpa %s78, 0
    %80 = vsyncpa [#allocation9], 0
    %s81 = scalar_lea.sflag [#allocation9], 1
    %82 = vsyncpa %s81, 0
    loop: start=0, step=1, limit=4
    $region2: #{tpu_custom_call.1} parent=1 // loop_pre_header
      _
    $region3: #{tpu_custom_call.1} parent=1 // loop_header
      %s84 = sphi 0, %s88
      %p85 = scmp.ge.s32.totalorder %s84, 4
      %s94 = sphi 0, %s96
      %s97 = sphi 0, %s94
      %s98 = sphi 0, %s97
      %s114 = sphi 0, %s98
      %s120 = sphi 0, %s122
      %s123 = sphi 0, %s120
      %s124 = sphi 0, %s123
      %s140 = sphi 0, %s124
      %s146 = sphi 0, %s148
      %s149 = sphi 0, %s146
      %s150 = sphi 0, %s149
      %s166 = sphi 0, %s150
      %s172 = sphi 0, %s174
      %s175 = sphi 0, %s172
      %s176 = sphi 0, %s175
      %s192 = sphi 0, %s176
      %s196 = sphi 0, %s196
      %s198 = sphi 0, %s196
      %s199 = sphi 0, %s198
      %s213 = sphi 0, %s199
      %s217 = sphi 0, %s217
      %s219 = sphi 0, %s217
      %s220 = sphi 0, %s219
      %s234 = sphi 0, %s220
      %s238 = sphi 0, %s238
      %s240 = sphi 0, %s238
      %s241 = sphi 0, %s240
      %s255 = sphi 0, %s241
      %s259 = sphi 0, %s259
      %s261 = sphi 0, %s259
      %s262 = sphi 0, %s261
      %s276 = sphi 0, %s262
      %s280 = sphi 0, %s280
      %s282 = sphi 0, %s280
      %s283 = sphi 0, %s282
      %s297 = sphi 0, %s283
      %s301 = sphi 0, %s301
      %s303 = sphi 0, %s301
      %s304 = sphi 0, %s303
      %s318 = sphi 0, %s304
      %s322 = sphi 0, %s322
      %s324 = sphi 0, %s322
      %s325 = sphi 0, %s324
      %s339 = sphi 0, %s325
      %s343 = sphi 0, %s343
      %s345 = sphi 0, %s343
      %s346 = sphi 0, %s345
      %s360 = sphi 0, %s346
      %s364 = sphi 0, %s364
      %s366 = sphi 0, %s364
      %s367 = sphi 0, %s366
      %s381 = sphi 0, %s367
      %s385 = sphi 0, %s385
      %s387 = sphi 0, %s385
      %s388 = sphi 0, %s387
      %s402 = sphi 0, %s388
      %s406 = sphi 0, %s406
      %s408 = sphi 0, %s406
      %s409 = sphi 0, %s408
      %s423 = sphi 0, %s409
      %s427 = sphi 0, %s427
      %s429 = sphi 0, %s427
      %s430 = sphi 0, %s429
      %s444 = sphi 0, %s430
      %s448 = sphi 0, %s448
      %s450 = sphi 0, %s448
      %s451 = sphi 0, %s450
      %s465 = sphi 0, %s451
      %s469 = sphi 0, %s469
      %s471 = sphi 0, %s469
      %s472 = sphi 0, %s471
      %s486 = sphi 0, %s472
      %s490 = sphi 0, %s490
      %s492 = sphi 0, %s490
      %s493 = sphi 0, %s492
      %s507 = sphi 0, %s493
      %s511 = sphi 0, %s511
      %s513 = sphi 0, %s511
      %s514 = sphi 0, %s513
      %s528 = sphi 0, %s514
      %s532 = sphi 0, %s532
      %s534 = sphi 0, %s532
      %s535 = sphi 0, %s534
      %s549 = sphi 0, %s535
      %s553 = sphi 0, %s553
      %s555 = sphi 0, %s553
      %s556 = sphi 0, %s555
      %s570 = sphi 0, %s556
      %s574 = sphi 0, %s574
      %s576 = sphi 0, %s574
      %s577 = sphi 0, %s576
      %s591 = sphi 0, %s577
      %s595 = sphi 0, %s595
      %s597 = sphi 0, %s595
      %s598 = sphi 0, %s597
      %s612 = sphi 0, %s598
      %s616 = sphi 0, %s616
      %s618 = sphi 0, %s616
      %s619 = sphi 0, %s618
      %s633 = sphi 0, %s619
      %s637 = sphi 0, %s637
      %s639 = sphi 0, %s637
      %s640 = sphi 0, %s639
      %s654 = sphi 0, %s640
      %s658 = sphi 0, %s658
      %s660 = sphi 0, %s658
      %s661 = sphi 0, %s660
      %s675 = sphi 0, %s661
      %s679 = sphi 0, %s679
      %s681 = sphi 0, %s679
      %s682 = sphi 0, %s681
      %s696 = sphi 0, %s682
      %s700 = sphi 0, %s700
      %s702 = sphi 0, %s700
      %s703 = sphi 0, %s702
      %s717 = sphi 0, %s703
      %s721 = sphi 0, %s721
      %s723 = sphi 0, %s721
      %s724 = sphi 0, %s723
      %s738 = sphi 0, %s724
      %s742 = sphi 0, %s742
      %s744 = sphi 0, %s742
      %s745 = sphi 0, %s744
      %s759 = sphi 0, %s745
      %s763 = sphi 0, %s763
      %s765 = sphi 0, %s763
      %s766 = sphi 0, %s765
      %s780 = sphi 0, %s766
      %s784 = sphi 0, %s784
      %s786 = sphi 0, %s784
      %s787 = sphi 0, %s786
      %s801 = sphi 0, %s787
      %s805 = sphi 0, %s805
      %s807 = sphi 0, %s805
      %s808 = sphi 0, %s807
      %s822 = sphi 0, %s808
      %s828 = sphi 0, %s830
      %s831 = sphi 0, %s828
      %s832 = sphi 0, %s831
      %s848 = sphi 0, %s832
      %s854 = sphi 0, %s856
      %s857 = sphi 0, %s854
      %s858 = sphi 0, %s857
      %s874 = sphi 0, %s858
    $region4: #{tpu_custom_call.1} parent=1 // loop_header_branch
      %87 = sbr.rel (%p85) target = $region8
    $region5: #{tpu_custom_call.1} parent=1 // loop_body
      %s89 = ssub.s32 %s84, 1
      %s90 = ssub.s32 %s84, 2
      %s91 = sadd.s32 %s84, 1
      %s92 = ssub.s32 %s84, %s91
      %p93 = scmp.eq.s32.totalorder %s92, 0
      %s95 = sadd.s32 %s94, 1
      %s96 = scalar_select %p93, %s94, %s95
      %p99 = pneg %p93
      %p100 = scmp.eq.s32.totalorder %s84, 1
      %p101 = por %p99, %p100
      %p102 = scmp.ne.s32.totalorder %s94, %s97
      %p103 = scmp.eq.s32.totalorder %s84, 0
      %p104 = por %p102, %p103
      %p105 = scmp.ne.s32.totalorder %s94, %s97
      %p106 = scmp.eq.s32.totalorder %s89, 1
      %p107 = por %p105, %p106
      %p108 = scmp.ne.s32.totalorder %s97, %s98
      %p109 = scmp.eq.s32.totalorder %s89, 0
      %p110 = por %p108, %p109
      %p111 = scmp.ne.s32.totalorder %s97, %s98
      %p112 = scmp.eq.s32.totalorder %s90, 1
      %p113 = por %p111, %p112
      %p115 = scmp.ne.s32.totalorder %s98, %s114
      %p116 = scmp.eq.s32.totalorder %s90, 0
      %p117 = por %p115, %p116
      %s118 = ssub.s32 %s84, %s91
      %p119 = scmp.eq.s32.totalorder %s118, 0
      %s121 = sadd.s32 %s120, 1
      %s122 = scalar_select %p119, %s120, %s121
      %p125 = pneg %p119
      %p126 = scmp.eq.s32.totalorder %s84, 1
      %p127 = por %p125, %p126
      %p128 = scmp.ne.s32.totalorder %s120, %s123
      %p129 = scmp.eq.s32.totalorder %s84, 0
      %p130 = por %p128, %p129
      %p131 = scmp.ne.s32.totalorder %s120, %s123
      %p132 = scmp.eq.s32.totalorder %s89, 1
      %p133 = por %p131, %p132
      %p134 = scmp.ne.s32.totalorder %s123, %s124
      %p135 = scmp.eq.s32.totalorder %s89, 0
      %p136 = por %p134, %p135
      %p137 = scmp.ne.s32.totalorder %s123, %s124
      %p138 = scmp.eq.s32.totalorder %s90, 1
      %p139 = por %p137, %p138
      %p141 = scmp.ne.s32.totalorder %s124, %s140
      %p142 = scmp.eq.s32.totalorder %s90, 0
      %p143 = por %p141, %p142
      %s144 = ssub.s32 %s84, %s91
      %p145 = scmp.eq.s32.totalorder %s144, 0
      %s147 = sadd.s32 %s146, 1
      %s148 = scalar_select %p145, %s146, %s147
      %p151 = pneg %p145
      %p152 = scmp.eq.s32.totalorder %s84, 1
      %p153 = por %p151, %p152
      %p154 = scmp.ne.s32.totalorder %s146, %s149
      %p155 = scmp.eq.s32.totalorder %s84, 0
      %p156 = por %p154, %p155
      %p157 = scmp.ne.s32.totalorder %s146, %s149
      %p158 = scmp.eq.s32.totalorder %s89, 1
      %p159 = por %p157, %p158
      %p160 = scmp.ne.s32.totalorder %s149, %s150
      %p161 = scmp.eq.s32.totalorder %s89, 0
      %p162 = por %p160, %p161
      %p163 = scmp.ne.s32.totalorder %s149, %s150
      %p164 = scmp.eq.s32.totalorder %s90, 1
      %p165 = por %p163, %p164
      %p167 = scmp.ne.s32.totalorder %s150, %s166
      %p168 = scmp.eq.s32.totalorder %s90, 0
      %p169 = por %p167, %p168
      %s170 = ssub.s32 %s84, %s91
      %p171 = scmp.eq.s32.totalorder %s170, 0
      %s173 = sadd.s32 %s172, 1
      %s174 = scalar_select %p171, %s172, %s173
      %p177 = pneg %p171
      %p178 = scmp.eq.s32.totalorder %s84, 1
      %p179 = por %p177, %p178
      %p180 = scmp.ne.s32.totalorder %s172, %s175
      %p181 = scmp.eq.s32.totalorder %s84, 0
      %p182 = por %p180, %p181
      %p183 = scmp.ne.s32.totalorder %s172, %s175
      %p184 = scmp.eq.s32.totalorder %s89, 1
      %p185 = por %p183, %p184
      %p186 = scmp.ne.s32.totalorder %s175, %s176
      %p187 = scmp.eq.s32.totalorder %s89, 0
      %p188 = por %p186, %p187
      %p189 = scmp.ne.s32.totalorder %s175, %s176
      %p190 = scmp.eq.s32.totalorder %s90, 1
      %p191 = por %p189, %p190
      %p193 = scmp.ne.s32.totalorder %s176, %s192
      %p194 = scmp.eq.s32.totalorder %s90, 0
      %p195 = por %p193, %p194
      %s197 = sadd.s32 %s196, 1
      %p200 = scmp.eq.s32.totalorder %s84, 1
      %p201 = scmp.ne.s32.totalorder %s196, %s198
      %p202 = scmp.eq.s32.totalorder %s84, 0
      %p203 = por %p201, %p202
      %p204 = scmp.ne.s32.totalorder %s196, %s198
      %p205 = scmp.eq.s32.totalorder %s89, 1
      %p206 = por %p204, %p205
      %p207 = scmp.ne.s32.totalorder %s198, %s199
      %p208 = scmp.eq.s32.totalorder %s89, 0
      %p209 = por %p207, %p208
      %p210 = scmp.ne.s32.totalorder %s198, %s199
      %p211 = scmp.eq.s32.totalorder %s90, 1
      %p212 = por %p210, %p211
      %p214 = scmp.ne.s32.totalorder %s199, %s213
      %p215 = scmp.eq.s32.totalorder %s90, 0
      %p216 = por %p214, %p215
      %s218 = sadd.s32 %s217, 1
      %p221 = scmp.eq.s32.totalorder %s84, 1
      %p222 = scmp.ne.s32.totalorder %s217, %s219
      %p223 = scmp.eq.s32.totalorder %s84, 0
      %p224 = por %p222, %p223
      %p225 = scmp.ne.s32.totalorder %s217, %s219
      %p226 = scmp.eq.s32.totalorder %s89, 1
      %p227 = por %p225, %p226
      %p228 = scmp.ne.s32.totalorder %s219, %s220
      %p229 = scmp.eq.s32.totalorder %s89, 0
      %p230 = por %p228, %p229
      %p231 = scmp.ne.s32.totalorder %s219, %s220
      %p232 = scmp.eq.s32.totalorder %s90, 1
      %p233 = por %p231, %p232
      %p235 = scmp.ne.s32.totalorder %s220, %s234
      %p236 = scmp.eq.s32.totalorder %s90, 0
      %p237 = por %p235, %p236
      %s239 = sadd.s32 %s238, 1
      %p242 = scmp.eq.s32.totalorder %s84, 1
      %p243 = scmp.ne.s32.totalorder %s238, %s240
      %p244 = scmp.eq.s32.totalorder %s84, 0
      %p245 = por %p243, %p244
      %p246 = scmp.ne.s32.totalorder %s238, %s240
      %p247 = scmp.eq.s32.totalorder %s89, 1
      %p248 = por %p246, %p247
      %p249 = scmp.ne.s32.totalorder %s240, %s241
      %p250 = scmp.eq.s32.totalorder %s89, 0
      %p251 = por %p249, %p250
      %p252 = scmp.ne.s32.totalorder %s240, %s241
      %p253 = scmp.eq.s32.totalorder %s90, 1
      %p254 = por %p252, %p253
      %p256 = scmp.ne.s32.totalorder %s241, %s255
      %p257 = scmp.eq.s32.totalorder %s90, 0
      %p258 = por %p256, %p257
      %s260 = sadd.s32 %s259, 1
      %p263 = scmp.eq.s32.totalorder %s84, 1
      %p264 = scmp.ne.s32.totalorder %s259, %s261
      %p265 = scmp.eq.s32.totalorder %s84, 0
      %p266 = por %p264, %p265
      %p267 = scmp.ne.s32.totalorder %s259, %s261
      %p268 = scmp.eq.s32.totalorder %s89, 1
      %p269 = por %p267, %p268
      %p270 = scmp.ne.s32.totalorder %s261, %s262
      %p271 = scmp.eq.s32.totalorder %s89, 0
      %p272 = por %p270, %p271
      %p273 = scmp.ne.s32.totalorder %s261, %s262
      %p274 = scmp.eq.s32.totalorder %s90, 1
      %p275 = por %p273, %p274
      %p277 = scmp.ne.s32.totalorder %s262, %s276
      %p278 = scmp.eq.s32.totalorder %s90, 0
      %p279 = por %p277, %p278
      %s281 = sadd.s32 %s280, 1
      %p284 = scmp.eq.s32.totalorder %s84, 1
      %p285 = scmp.ne.s32.totalorder %s280, %s282
      %p286 = scmp.eq.s32.totalorder %s84, 0
      %p287 = por %p285, %p286
      %p288 = scmp.ne.s32.totalorder %s280, %s282
      %p289 = scmp.eq.s32.totalorder %s89, 1
      %p290 = por %p288, %p289
      %p291 = scmp.ne.s32.totalorder %s282, %s283
      %p292 = scmp.eq.s32.totalorder %s89, 0
      %p293 = por %p291, %p292
      %p294 = scmp.ne.s32.totalorder %s282, %s283
      %p295 = scmp.eq.s32.totalorder %s90, 1
      %p296 = por %p294, %p295
      %p298 = scmp.ne.s32.totalorder %s283, %s297
      %p299 = scmp.eq.s32.totalorder %s90, 0
      %p300 = por %p298, %p299
      %s302 = sadd.s32 %s301, 1
      %p305 = scmp.eq.s32.totalorder %s84, 1
      %p306 = scmp.ne.s32.totalorder %s301, %s303
      %p307 = scmp.eq.s32.totalorder %s84, 0
      %p308 = por %p306, %p307
      %p309 = scmp.ne.s32.totalorder %s301, %s303
      %p310 = scmp.eq.s32.totalorder %s89, 1
      %p311 = por %p309, %p310
      %p312 = scmp.ne.s32.totalorder %s303, %s304
      %p313 = scmp.eq.s32.totalorder %s89, 0
      %p314 = por %p312, %p313
      %p315 = scmp.ne.s32.totalorder %s303, %s304
      %p316 = scmp.eq.s32.totalorder %s90, 1
      %p317 = por %p315, %p316
      %p319 = scmp.ne.s32.totalorder %s304, %s318
      %p320 = scmp.eq.s32.totalorder %s90, 0
      %p321 = por %p319, %p320
      %s323 = sadd.s32 %s322, 1
      %p326 = scmp.eq.s32.totalorder %s84, 1
      %p327 = scmp.ne.s32.totalorder %s322, %s324
      %p328 = scmp.eq.s32.totalorder %s84, 0
      %p329 = por %p327, %p328
      %p330 = scmp.ne.s32.totalorder %s322, %s324
      %p331 = scmp.eq.s32.totalorder %s89, 1
      %p332 = por %p330, %p331
      %p333 = scmp.ne.s32.totalorder %s324, %s325
      %p334 = scmp.eq.s32.totalorder %s89, 0
      %p335 = por %p333, %p334
      %p336 = scmp.ne.s32.totalorder %s324, %s325
      %p337 = scmp.eq.s32.totalorder %s90, 1
      %p338 = por %p336, %p337
      %p340 = scmp.ne.s32.totalorder %s325, %s339
      %p341 = scmp.eq.s32.totalorder %s90, 0
      %p342 = por %p340, %p341
      %s344 = sadd.s32 %s343, 1
      %p347 = scmp.eq.s32.totalorder %s84, 1
      %p348 = scmp.ne.s32.totalorder %s343, %s345
      %p349 = scmp.eq.s32.totalorder %s84, 0
      %p350 = por %p348, %p349
      %p351 = scmp.ne.s32.totalorder %s343, %s345
      %p352 = scmp.eq.s32.totalorder %s89, 1
      %p353 = por %p351, %p352
      %p354 = scmp.ne.s32.totalorder %s345, %s346
      %p355 = scmp.eq.s32.totalorder %s89, 0
      %p356 = por %p354, %p355
      %p357 = scmp.ne.s32.totalorder %s345, %s346
      %p358 = scmp.eq.s32.totalorder %s90, 1
      %p359 = por %p357, %p358
      %p361 = scmp.ne.s32.totalorder %s346, %s360
      %p362 = scmp.eq.s32.totalorder %s90, 0
      %p363 = por %p361, %p362
      %s365 = sadd.s32 %s364, 1
      %p368 = scmp.eq.s32.totalorder %s84, 1
      %p369 = scmp.ne.s32.totalorder %s364, %s366
      %p370 = scmp.eq.s32.totalorder %s84, 0
      %p371 = por %p369, %p370
      %p372 = scmp.ne.s32.totalorder %s364, %s366
      %p373 = scmp.eq.s32.totalorder %s89, 1
      %p374 = por %p372, %p373
      %p375 = scmp.ne.s32.totalorder %s366, %s367
      %p376 = scmp.eq.s32.totalorder %s89, 0
      %p377 = por %p375, %p376
      %p378 = scmp.ne.s32.totalorder %s366, %s367
      %p379 = scmp.eq.s32.totalorder %s90, 1
      %p380 = por %p378, %p379
      %p382 = scmp.ne.s32.totalorder %s367, %s381
      %p383 = scmp.eq.s32.totalorder %s90, 0
      %p384 = por %p382, %p383
      %s386 = sadd.s32 %s385, 1
      %p389 = scmp.eq.s32.totalorder %s84, 1
      %p390 = scmp.ne.s32.totalorder %s385, %s387
      %p391 = scmp.eq.s32.totalorder %s84, 0
      %p392 = por %p390, %p391
      %p393 = scmp.ne.s32.totalorder %s385, %s387
      %p394 = scmp.eq.s32.totalorder %s89, 1
      %p395 = por %p393, %p394
      %p396 = scmp.ne.s32.totalorder %s387, %s388
      %p397 = scmp.eq.s32.totalorder %s89, 0
      %p398 = por %p396, %p397
      %p399 = scmp.ne.s32.totalorder %s387, %s388
      %p400 = scmp.eq.s32.totalorder %s90, 1
      %p401 = por %p399, %p400
      %p403 = scmp.ne.s32.totalorder %s388, %s402
      %p404 = scmp.eq.s32.totalorder %s90, 0
      %p405 = por %p403, %p404
      %s407 = sadd.s32 %s406, 1
      %p410 = scmp.eq.s32.totalorder %s84, 1
      %p411 = scmp.ne.s32.totalorder %s406, %s408
      %p412 = scmp.eq.s32.totalorder %s84, 0
      %p413 = por %p411, %p412
      %p414 = scmp.ne.s32.totalorder %s406, %s408
      %p415 = scmp.eq.s32.totalorder %s89, 1
      %p416 = por %p414, %p415
      %p417 = scmp.ne.s32.totalorder %s408, %s409
      %p418 = scmp.eq.s32.totalorder %s89, 0
      %p419 = por %p417, %p418
      %p420 = scmp.ne.s32.totalorder %s408, %s409
      %p421 = scmp.eq.s32.totalorder %s90, 1
      %p422 = por %p420, %p421
      %p424 = scmp.ne.s32.totalorder %s409, %s423
      %p425 = scmp.eq.s32.totalorder %s90, 0
      %p426 = por %p424, %p425
      %s428 = sadd.s32 %s427, 1
      %p431 = scmp.eq.s32.totalorder %s84, 1
      %p432 = scmp.ne.s32.totalorder %s427, %s429
      %p433 = scmp.eq.s32.totalorder %s84, 0
      %p434 = por %p432, %p433
      %p435 = scmp.ne.s32.totalorder %s427, %s429
      %p436 = scmp.eq.s32.totalorder %s89, 1
      %p437 = por %p435, %p436
      %p438 = scmp.ne.s32.totalorder %s429, %s430
      %p439 = scmp.eq.s32.totalorder %s89, 0
      %p440 = por %p438, %p439
      %p441 = scmp.ne.s32.totalorder %s429, %s430
      %p442 = scmp.eq.s32.totalorder %s90, 1
      %p443 = por %p441, %p442
      %p445 = scmp.ne.s32.totalorder %s430, %s444
      %p446 = scmp.eq.s32.totalorder %s90, 0
      %p447 = por %p445, %p446
      %s449 = sadd.s32 %s448, 1
      %p452 = scmp.eq.s32.totalorder %s84, 1
      %p453 = scmp.ne.s32.totalorder %s448, %s450
      %p454 = scmp.eq.s32.totalorder %s84, 0
      %p455 = por %p453, %p454
      %p456 = scmp.ne.s32.totalorder %s448, %s450
      %p457 = scmp.eq.s32.totalorder %s89, 1
      %p458 = por %p456, %p457
      %p459 = scmp.ne.s32.totalorder %s450, %s451
      %p460 = scmp.eq.s32.totalorder %s89, 0
      %p461 = por %p459, %p460
      %p462 = scmp.ne.s32.totalorder %s450, %s451
      %p463 = scmp.eq.s32.totalorder %s90, 1
      %p464 = por %p462, %p463
      %p466 = scmp.ne.s32.totalorder %s451, %s465
      %p467 = scmp.eq.s32.totalorder %s90, 0
      %p468 = por %p466, %p467
      %s470 = sadd.s32 %s469, 1
      %p473 = scmp.eq.s32.totalorder %s84, 1
      %p474 = scmp.ne.s32.totalorder %s469, %s471
      %p475 = scmp.eq.s32.totalorder %s84, 0
      %p476 = por %p474, %p475
      %p477 = scmp.ne.s32.totalorder %s469, %s471
      %p478 = scmp.eq.s32.totalorder %s89, 1
      %p479 = por %p477, %p478
      %p480 = scmp.ne.s32.totalorder %s471, %s472
      %p481 = scmp.eq.s32.totalorder %s89, 0
      %p482 = por %p480, %p481
      %p483 = scmp.ne.s32.totalorder %s471, %s472
      %p484 = scmp.eq.s32.totalorder %s90, 1
      %p485 = por %p483, %p484
      %p487 = scmp.ne.s32.totalorder %s472, %s486
      %p488 = scmp.eq.s32.totalorder %s90, 0
      %p489 = por %p487, %p488
      %s491 = sadd.s32 %s490, 1
      %p494 = scmp.eq.s32.totalorder %s84, 1
      %p495 = scmp.ne.s32.totalorder %s490, %s492
      %p496 = scmp.eq.s32.totalorder %s84, 0
      %p497 = por %p495, %p496
      %p498 = scmp.ne.s32.totalorder %s490, %s492
      %p499 = scmp.eq.s32.totalorder %s89, 1
      %p500 = por %p498, %p499
      %p501 = scmp.ne.s32.totalorder %s492, %s493
      %p502 = scmp.eq.s32.totalorder %s89, 0
      %p503 = por %p501, %p502
      %p504 = scmp.ne.s32.totalorder %s492, %s493
      %p505 = scmp.eq.s32.totalorder %s90, 1
      %p506 = por %p504, %p505
      %p508 = scmp.ne.s32.totalorder %s493, %s507
      %p509 = scmp.eq.s32.totalorder %s90, 0
      %p510 = por %p508, %p509
      %s512 = sadd.s32 %s511, 1
      %p515 = scmp.eq.s32.totalorder %s84, 1
      %p516 = scmp.ne.s32.totalorder %s511, %s513
      %p517 = scmp.eq.s32.totalorder %s84, 0
      %p518 = por %p516, %p517
      %p519 = scmp.ne.s32.totalorder %s511, %s513
      %p520 = scmp.eq.s32.totalorder %s89, 1
      %p521 = por %p519, %p520
      %p522 = scmp.ne.s32.totalorder %s513, %s514
      %p523 = scmp.eq.s32.totalorder %s89, 0
      %p524 = por %p522, %p523
      %p525 = scmp.ne.s32.totalorder %s513, %s514
      %p526 = scmp.eq.s32.totalorder %s90, 1
      %p527 = por %p525, %p526
      %p529 = scmp.ne.s32.totalorder %s514, %s528
      %p530 = scmp.eq.s32.totalorder %s90, 0
      %p531 = por %p529, %p530
      %s533 = sadd.s32 %s532, 1
      %p536 = scmp.eq.s32.totalorder %s84, 1
      %p537 = scmp.ne.s32.totalorder %s532, %s534
      %p538 = scmp.eq.s32.totalorder %s84, 0
      %p539 = por %p537, %p538
      %p540 = scmp.ne.s32.totalorder %s532, %s534
      %p541 = scmp.eq.s32.totalorder %s89, 1
      %p542 = por %p540, %p541
      %p543 = scmp.ne.s32.totalorder %s534, %s535
      %p544 = scmp.eq.s32.totalorder %s89, 0
      %p545 = por %p543, %p544
      %p546 = scmp.ne.s32.totalorder %s534, %s535
      %p547 = scmp.eq.s32.totalorder %s90, 1
      %p548 = por %p546, %p547
      %p550 = scmp.ne.s32.totalorder %s535, %s549
      %p551 = scmp.eq.s32.totalorder %s90, 0
      %p552 = por %p550, %p551
      %s554 = sadd.s32 %s553, 1
      %p557 = scmp.eq.s32.totalorder %s84, 1
      %p558 = scmp.ne.s32.totalorder %s553, %s555
      %p559 = scmp.eq.s32.totalorder %s84, 0
      %p560 = por %p558, %p559
      %p561 = scmp.ne.s32.totalorder %s553, %s555
      %p562 = scmp.eq.s32.totalorder %s89, 1
      %p563 = por %p561, %p562
      %p564 = scmp.ne.s32.totalorder %s555, %s556
      %p565 = scmp.eq.s32.totalorder %s89, 0
      %p566 = por %p564, %p565
      %p567 = scmp.ne.s32.totalorder %s555, %s556
      %p568 = scmp.eq.s32.totalorder %s90, 1
      %p569 = por %p567, %p568
      %p571 = scmp.ne.s32.totalorder %s556, %s570
      %p572 = scmp.eq.s32.totalorder %s90, 0
      %p573 = por %p571, %p572
      %s575 = sadd.s32 %s574, 1
      %p578 = scmp.eq.s32.totalorder %s84, 1
      %p579 = scmp.ne.s32.totalorder %s574, %s576
      %p580 = scmp.eq.s32.totalorder %s84, 0
      %p581 = por %p579, %p580
      %p582 = scmp.ne.s32.totalorder %s574, %s576
      %p583 = scmp.eq.s32.totalorder %s89, 1
      %p584 = por %p582, %p583
      %p585 = scmp.ne.s32.totalorder %s576, %s577
      %p586 = scmp.eq.s32.totalorder %s89, 0
      %p587 = por %p585, %p586
      %p588 = scmp.ne.s32.totalorder %s576, %s577
      %p589 = scmp.eq.s32.totalorder %s90, 1
      %p590 = por %p588, %p589
      %p592 = scmp.ne.s32.totalorder %s577, %s591
      %p593 = scmp.eq.s32.totalorder %s90, 0
      %p594 = por %p592, %p593
      %s596 = sadd.s32 %s595, 1
      %p599 = scmp.eq.s32.totalorder %s84, 1
      %p600 = scmp.ne.s32.totalorder %s595, %s597
      %p601 = scmp.eq.s32.totalorder %s84, 0
      %p602 = por %p600, %p601
      %p603 = scmp.ne.s32.totalorder %s595, %s597
      %p604 = scmp.eq.s32.totalorder %s89, 1
      %p605 = por %p603, %p604
      %p606 = scmp.ne.s32.totalorder %s597, %s598
      %p607 = scmp.eq.s32.totalorder %s89, 0
      %p608 = por %p606, %p607
      %p609 = scmp.ne.s32.totalorder %s597, %s598
      %p610 = scmp.eq.s32.totalorder %s90, 1
      %p611 = por %p609, %p610
      %p613 = scmp.ne.s32.totalorder %s598, %s612
      %p614 = scmp.eq.s32.totalorder %s90, 0
      %p615 = por %p613, %p614
      %s617 = sadd.s32 %s616, 1
      %p620 = scmp.eq.s32.totalorder %s84, 1
      %p621 = scmp.ne.s32.totalorder %s616, %s618
      %p622 = scmp.eq.s32.totalorder %s84, 0
      %p623 = por %p621, %p622
      %p624 = scmp.ne.s32.totalorder %s616, %s618
      %p625 = scmp.eq.s32.totalorder %s89, 1
      %p626 = por %p624, %p625
      %p627 = scmp.ne.s32.totalorder %s618, %s619
      %p628 = scmp.eq.s32.totalorder %s89, 0
      %p629 = por %p627, %p628
      %p630 = scmp.ne.s32.totalorder %s618, %s619
      %p631 = scmp.eq.s32.totalorder %s90, 1
      %p632 = por %p630, %p631
      %p634 = scmp.ne.s32.totalorder %s619, %s633
      %p635 = scmp.eq.s32.totalorder %s90, 0
      %p636 = por %p634, %p635
      %s638 = sadd.s32 %s637, 1
      %p641 = scmp.eq.s32.totalorder %s84, 1
      %p642 = scmp.ne.s32.totalorder %s637, %s639
      %p643 = scmp.eq.s32.totalorder %s84, 0
      %p644 = por %p642, %p643
      %p645 = scmp.ne.s32.totalorder %s637, %s639
      %p646 = scmp.eq.s32.totalorder %s89, 1
      %p647 = por %p645, %p646
      %p648 = scmp.ne.s32.totalorder %s639, %s640
      %p649 = scmp.eq.s32.totalorder %s89, 0
      %p650 = por %p648, %p649
      %p651 = scmp.ne.s32.totalorder %s639, %s640
      %p652 = scmp.eq.s32.totalorder %s90, 1
      %p653 = por %p651, %p652
      %p655 = scmp.ne.s32.totalorder %s640, %s654
      %p656 = scmp.eq.s32.totalorder %s90, 0
      %p657 = por %p655, %p656
      %s659 = sadd.s32 %s658, 1
      %p662 = scmp.eq.s32.totalorder %s84, 1
      %p663 = scmp.ne.s32.totalorder %s658, %s660
      %p664 = scmp.eq.s32.totalorder %s84, 0
      %p665 = por %p663, %p664
      %p666 = scmp.ne.s32.totalorder %s658, %s660
      %p667 = scmp.eq.s32.totalorder %s89, 1
      %p668 = por %p666, %p667
      %p669 = scmp.ne.s32.totalorder %s660, %s661
      %p670 = scmp.eq.s32.totalorder %s89, 0
      %p671 = por %p669, %p670
      %p672 = scmp.ne.s32.totalorder %s660, %s661
      %p673 = scmp.eq.s32.totalorder %s90, 1
      %p674 = por %p672, %p673
      %p676 = scmp.ne.s32.totalorder %s661, %s675
      %p677 = scmp.eq.s32.totalorder %s90, 0
      %p678 = por %p676, %p677
      %s680 = sadd.s32 %s679, 1
      %p683 = scmp.eq.s32.totalorder %s84, 1
      %p684 = scmp.ne.s32.totalorder %s679, %s681
      %p685 = scmp.eq.s32.totalorder %s84, 0
      %p686 = por %p684, %p685
      %p687 = scmp.ne.s32.totalorder %s679, %s681
      %p688 = scmp.eq.s32.totalorder %s89, 1
      %p689 = por %p687, %p688
      %p690 = scmp.ne.s32.totalorder %s681, %s682
      %p691 = scmp.eq.s32.totalorder %s89, 0
      %p692 = por %p690, %p691
      %p693 = scmp.ne.s32.totalorder %s681, %s682
      %p694 = scmp.eq.s32.totalorder %s90, 1
      %p695 = por %p693, %p694
      %p697 = scmp.ne.s32.totalorder %s682, %s696
      %p698 = scmp.eq.s32.totalorder %s90, 0
      %p699 = por %p697, %p698
      %s701 = sadd.s32 %s700, 1
      %p704 = scmp.eq.s32.totalorder %s84, 1
      %p705 = scmp.ne.s32.totalorder %s700, %s702
      %p706 = scmp.eq.s32.totalorder %s84, 0
      %p707 = por %p705, %p706
      %p708 = scmp.ne.s32.totalorder %s700, %s702
      %p709 = scmp.eq.s32.totalorder %s89, 1
      %p710 = por %p708, %p709
      %p711 = scmp.ne.s32.totalorder %s702, %s703
      %p712 = scmp.eq.s32.totalorder %s89, 0
      %p713 = por %p711, %p712
      %p714 = scmp.ne.s32.totalorder %s702, %s703
      %p715 = scmp.eq.s32.totalorder %s90, 1
      %p716 = por %p714, %p715
      %p718 = scmp.ne.s32.totalorder %s703, %s717
      %p719 = scmp.eq.s32.totalorder %s90, 0
      %p720 = por %p718, %p719
      %s722 = sadd.s32 %s721, 1
      %p725 = scmp.eq.s32.totalorder %s84, 1
      %p726 = scmp.ne.s32.totalorder %s721, %s723
      %p727 = scmp.eq.s32.totalorder %s84, 0
      %p728 = por %p726, %p727
      %p729 = scmp.ne.s32.totalorder %s721, %s723
      %p730 = scmp.eq.s32.totalorder %s89, 1
      %p731 = por %p729, %p730
      %p732 = scmp.ne.s32.totalorder %s723, %s724
      %p733 = scmp.eq.s32.totalorder %s89, 0
      %p734 = por %p732, %p733
      %p735 = scmp.ne.s32.totalorder %s723, %s724
      %p736 = scmp.eq.s32.totalorder %s90, 1
      %p737 = por %p735, %p736
      %p739 = scmp.ne.s32.totalorder %s724, %s738
      %p740 = scmp.eq.s32.totalorder %s90, 0
      %p741 = por %p739, %p740
      %s743 = sadd.s32 %s742, 1
      %p746 = scmp.eq.s32.totalorder %s84, 1
      %p747 = scmp.ne.s32.totalorder %s742, %s744
      %p748 = scmp.eq.s32.totalorder %s84, 0
      %p749 = por %p747, %p748
      %p750 = scmp.ne.s32.totalorder %s742, %s744
      %p751 = scmp.eq.s32.totalorder %s89, 1
      %p752 = por %p750, %p751
      %p753 = scmp.ne.s32.totalorder %s744, %s745
      %p754 = scmp.eq.s32.totalorder %s89, 0
      %p755 = por %p753, %p754
      %p756 = scmp.ne.s32.totalorder %s744, %s745
      %p757 = scmp.eq.s32.totalorder %s90, 1
      %p758 = por %p756, %p757
      %p760 = scmp.ne.s32.totalorder %s745, %s759
      %p761 = scmp.eq.s32.totalorder %s90, 0
      %p762 = por %p760, %p761
      %s764 = sadd.s32 %s763, 1
      %p767 = scmp.eq.s32.totalorder %s84, 1
      %p768 = scmp.ne.s32.totalorder %s763, %s765
      %p769 = scmp.eq.s32.totalorder %s84, 0
      %p770 = por %p768, %p769
      %p771 = scmp.ne.s32.totalorder %s763, %s765
      %p772 = scmp.eq.s32.totalorder %s89, 1
      %p773 = por %p771, %p772
      %p774 = scmp.ne.s32.totalorder %s765, %s766
      %p775 = scmp.eq.s32.totalorder %s89, 0
      %p776 = por %p774, %p775
      %p777 = scmp.ne.s32.totalorder %s765, %s766
      %p778 = scmp.eq.s32.totalorder %s90, 1
      %p779 = por %p777, %p778
      %p781 = scmp.ne.s32.totalorder %s766, %s780
      %p782 = scmp.eq.s32.totalorder %s90, 0
      %p783 = por %p781, %p782
      %s785 = sadd.s32 %s784, 1
      %p788 = scmp.eq.s32.totalorder %s84, 1
      %p789 = scmp.ne.s32.totalorder %s784, %s786
      %p790 = scmp.eq.s32.totalorder %s84, 0
      %p791 = por %p789, %p790
      %p792 = scmp.ne.s32.totalorder %s784, %s786
      %p793 = scmp.eq.s32.totalorder %s89, 1
      %p794 = por %p792, %p793
      %p795 = scmp.ne.s32.totalorder %s786, %s787
      %p796 = scmp.eq.s32.totalorder %s89, 0
      %p797 = por %p795, %p796
      %p798 = scmp.ne.s32.totalorder %s786, %s787
      %p799 = scmp.eq.s32.totalorder %s90, 1
      %p800 = por %p798, %p799
      %p802 = scmp.ne.s32.totalorder %s787, %s801
      %p803 = scmp.eq.s32.totalorder %s90, 0
      %p804 = por %p802, %p803
      %s806 = sadd.s32 %s805, 1
      %p809 = scmp.eq.s32.totalorder %s84, 1
      %p810 = scmp.ne.s32.totalorder %s805, %s807
      %p811 = scmp.eq.s32.totalorder %s84, 0
      %p812 = por %p810, %p811
      %p813 = scmp.ne.s32.totalorder %s805, %s807
      %p814 = scmp.eq.s32.totalorder %s89, 1
      %p815 = por %p813, %p814
      %p816 = scmp.ne.s32.totalorder %s807, %s808
      %p817 = scmp.eq.s32.totalorder %s89, 0
      %p818 = por %p816, %p817
      %p819 = scmp.ne.s32.totalorder %s807, %s808
      %p820 = scmp.eq.s32.totalorder %s90, 1
      %p821 = por %p819, %p820
      %p823 = scmp.ne.s32.totalorder %s808, %s822
      %p824 = scmp.eq.s32.totalorder %s90, 0
      %p825 = por %p823, %p824
      %s826 = ssub.s32 %s84, %s91
      %p827 = scmp.eq.s32.totalorder %s826, 0
      %s829 = sadd.s32 %s828, 1
      %s830 = scalar_select %p827, %s828, %s829
      %p833 = pneg %p827
      %p834 = scmp.eq.s32.totalorder %s84, 1
      %p835 = por %p833, %p834
      %p836 = scmp.ne.s32.totalorder %s828, %s831
      %p837 = scmp.eq.s32.totalorder %s84, 0
      %p838 = por %p836, %p837
      %p839 = scmp.ne.s32.totalorder %s828, %s831
      %p840 = scmp.eq.s32.totalorder %s89, 1
      %p841 = por %p839, %p840
      %p842 = scmp.ne.s32.totalorder %s831, %s832
      %p843 = scmp.eq.s32.totalorder %s89, 0
      %p844 = por %p842, %p843
      %p845 = scmp.ne.s32.totalorder %s831, %s832
      %p846 = scmp.eq.s32.totalorder %s90, 1
      %p847 = por %p845, %p846
      %p849 = scmp.ne.s32.totalorder %s832, %s848
      %p850 = scmp.eq.s32.totalorder %s90, 0
      %p851 = por %p849, %p850
      %s852 = ssub.s32 %s84, %s91
      %p853 = scmp.eq.s32.totalorder %s852, 0
      %s855 = sadd.s32 %s854, 1
      %s856 = scalar_select %p853, %s854, %s855
      %p859 = pneg %p853
      %p860 = scmp.eq.s32.totalorder %s84, 1
      %p861 = por %p859, %p860
      %p862 = scmp.ne.s32.totalorder %s854, %s857
      %p863 = scmp.eq.s32.totalorder %s84, 0
      %p864 = por %p862, %p863
      %p865 = scmp.ne.s32.totalorder %s854, %s857
      %p866 = scmp.eq.s32.totalorder %s89, 1
      %p867 = por %p865, %p866
      %p868 = scmp.ne.s32.totalorder %s857, %s858
      %p869 = scmp.eq.s32.totalorder %s89, 0
      %p870 = por %p868, %p869
      %p871 = scmp.ne.s32.totalorder %s857, %s858
      %p872 = scmp.eq.s32.totalorder %s90, 1
      %p873 = por %p871, %p872
      %p875 = scmp.ne.s32.totalorder %s858, %s874
      %p876 = scmp.eq.s32.totalorder %s90, 0
      %p877 = por %p875, %p876
      %p878 = scmp.le.s32.totalorder 1, %s84
      %p879 = scmp.lt.s32.totalorder %s84, 3
      %p880 = pnand %p878, %p879
      %p881 = pneg %p880
      // Predicated region
      $region9: #{tpu_custom_call.1} parent=5 // pred_check
        _
      $region10: #{tpu_custom_call.1} parent=5 // pred_check_branch
        %883 = sbr.rel (%p880) target = $region12
      $region11: #{tpu_custom_call.1} parent=5 // pred_region
        %s884 = ssub.s32 %s84, 1
        // Predicated region
        $region13: #{tpu_custom_call.1} parent=11 // pred_check
          %p885 = pneg %p209
        $region14: #{tpu_custom_call.1} parent=11 // pred_check_branch
          %887 = sbr.rel (%p885) target = $region16
        $region15: #{tpu_custom_call.1} parent=11 // pred_region
          _
        $region16: #{tpu_custom_call.1} parent=11 // pred_fallthru
          _
        // Predicated region
        $region17: #{tpu_custom_call.1} parent=11 // pred_check
          %p888 = pneg %p230
        $region18: #{tpu_custom_call.1} parent=11 // pred_check_branch
          %890 = sbr.rel (%p888) target = $region20
        $region19: #{tpu_custom_call.1} parent=11 // pred_region
          _
        $region20: #{tpu_custom_call.1} parent=11 // pred_fallthru
          _
        // Predicated region
        $region21: #{tpu_custom_call.1} parent=11 // pred_check
          %p891 = pneg %p251
        $region22: #{tpu_custom_call.1} parent=11 // pred_check_branch
          %893 = sbr.rel (%p891) target = $region24
        $region23: #{tpu_custom_call.1} parent=11 // pred_region
          _
        $region24: #{tpu_custom_call.1} parent=11 // pred_fallthru
          _
        // Predicated region
        $region25: #{tpu_custom_call.1} parent=11 // pred_check
          %p894 = pneg %p272
        $region26: #{tpu_custom_call.1} parent=11 // pred_check_branch
          %896 = sbr.rel (%p894) target = $region28
        $region27: #{tpu_custom_call.1} parent=11 // pred_region
          _
        $region28: #{tpu_custom_call.1} parent=11 // pred_fallthru
          _
        // Predicated region
        $region29: #{tpu_custom_call.1} parent=11 // pred_check
          %p897 = pneg %p293
        $region30: #{tpu_custom_call.1} parent=11 // pred_check_branch
          %899 = sbr.rel (%p897) target = $region32
        $region31: #{tpu_custom_call.1} parent=11 // pred_region
          _
        $region32: #{tpu_custom_call.1} parent=11 // pred_fallthru
          _
        // Predicated region
        $region33: #{tpu_custom_call.1} parent=11 // pred_check
          %p900 = pneg %p314
        $region34: #{tpu_custom_call.1} parent=11 // pred_check_branch
          %902 = sbr.rel (%p900) target = $region36
        $region35: #{tpu_custom_call.1} parent=11 // pred_region
          _
        $region36: #{tpu_custom_call.1} parent=11 // pred_fallthru
          _
        // Predicated region
        $region37: #{tpu_custom_call.1} parent=11 // pred_check
          %p903 = pneg %p335
        $region38: #{tpu_custom_call.1} parent=11 // pred_check_branch
          %905 = sbr.rel (%p903) target = $region40
        $region39: #{tpu_custom_call.1} parent=11 // pred_region
          _
        $region40: #{tpu_custom_call.1} parent=11 // pred_fallthru
          _
        // Predicated region
        $region41: #{tpu_custom_call.1} parent=11 // pred_check
          %p906 = pneg %p356
        $region42: #{tpu_custom_call.1} parent=11 // pred_check_branch
          %908 = sbr.rel (%p906) target = $region44
        $region43: #{tpu_custom_call.1} parent=11 // pred_region
          _
        $region44: #{tpu_custom_call.1} parent=11 // pred_fallthru
          _
        // Predicated region
        $region45: #{tpu_custom_call.1} parent=11 // pred_check
          %p909 = pneg %p377
        $region46: #{tpu_custom_call.1} parent=11 // pred_check_branch
          %911 = sbr.rel (%p909) target = $region48
        $region47: #{tpu_custom_call.1} parent=11 // pred_region
          _
        $region48: #{tpu_custom_call.1} parent=11 // pred_fallthru
          _
        // Predicated region
        $region49: #{tpu_custom_call.1} parent=11 // pred_check
          %p912 = pneg %p398
        $region50: #{tpu_custom_call.1} parent=11 // pred_check_branch
          %914 = sbr.rel (%p912) target = $region52
        $region51: #{tpu_custom_call.1} parent=11 // pred_region
          _
        $region52: #{tpu_custom_call.1} parent=11 // pred_fallthru
          _
        // Predicated region
        $region53: #{tpu_custom_call.1} parent=11 // pred_check
          %p915 = pneg %p419
        $region54: #{tpu_custom_call.1} parent=11 // pred_check_branch
          %917 = sbr.rel (%p915) target = $region56
        $region55: #{tpu_custom_call.1} parent=11 // pred_region
          _
        $region56: #{tpu_custom_call.1} parent=11 // pred_fallthru
          _
        // Predicated region
        $region57: #{tpu_custom_call.1} parent=11 // pred_check
          %p918 = pneg %p440
        $region58: #{tpu_custom_call.1} parent=11 // pred_check_branch
          %920 = sbr.rel (%p918) target = $region60
        $region59: #{tpu_custom_call.1} parent=11 // pred_region
          _
        $region60: #{tpu_custom_call.1} parent=11 // pred_fallthru
          _
        // Predicated region
        $region61: #{tpu_custom_call.1} parent=11 // pred_check
          %p921 = pneg %p461
        $region62: #{tpu_custom_call.1} parent=11 // pred_check_branch
          %923 = sbr.rel (%p921) target = $region64
        $region63: #{tpu_custom_call.1} parent=11 // pred_region
          _
        $region64: #{tpu_custom_call.1} parent=11 // pred_fallthru
          _
        // Predicated region
        $region65: #{tpu_custom_call.1} parent=11 // pred_check
          %p924 = pneg %p482
        $region66: #{tpu_custom_call.1} parent=11 // pred_check_branch
          %926 = sbr.rel (%p924) target = $region68
        $region67: #{tpu_custom_call.1} parent=11 // pred_region
          _
        $region68: #{tpu_custom_call.1} parent=11 // pred_fallthru
          _
        // Predicated region
        $region69: #{tpu_custom_call.1} parent=11 // pred_check
          %p927 = pneg %p503
        $region70: #{tpu_custom_call.1} parent=11 // pred_check_branch
          %929 = sbr.rel (%p927) target = $region72
        $region71: #{tpu_custom_call.1} parent=11 // pred_region
          _
        $region72: #{tpu_custom_call.1} parent=11 // pred_fallthru
          _
        // Predicated region
        $region73: #{tpu_custom_call.1} parent=11 // pred_check
          %p930 = pneg %p524
        $region74: #{tpu_custom_call.1} parent=11 // pred_check_branch
          %932 = sbr.rel (%p930) target = $region76
        $region75: #{tpu_custom_call.1} parent=11 // pred_region
          _
        $region76: #{tpu_custom_call.1} parent=11 // pred_fallthru
          _
        // Predicated region
        $region77: #{tpu_custom_call.1} parent=11 // pred_check
          %p933 = pneg %p545
        $region78: #{tpu_custom_call.1} parent=11 // pred_check_branch
          %935 = sbr.rel (%p933) target = $region80
        $region79: #{tpu_custom_call.1} parent=11 // pred_region
          _
        $region80: #{tpu_custom_call.1} parent=11 // pred_fallthru
          _
        // Predicated region
        $region81: #{tpu_custom_call.1} parent=11 // pred_check
          %p936 = pneg %p566
        $region82: #{tpu_custom_call.1} parent=11 // pred_check_branch
          %938 = sbr.rel (%p936) target = $region84
        $region83: #{tpu_custom_call.1} parent=11 // pred_region
          _
        $region84: #{tpu_custom_call.1} parent=11 // pred_fallthru
          _
        // Predicated region
        $region85: #{tpu_custom_call.1} parent=11 // pred_check
          %p939 = pneg %p587
        $region86: #{tpu_custom_call.1} parent=11 // pred_check_branch
          %941 = sbr.rel (%p939) target = $region88
        $region87: #{tpu_custom_call.1} parent=11 // pred_region
          _
        $region88: #{tpu_custom_call.1} parent=11 // pred_fallthru
          _
        // Predicated region
        $region89: #{tpu_custom_call.1} parent=11 // pred_check
          %p942 = pneg %p608
        $region90: #{tpu_custom_call.1} parent=11 // pred_check_branch
          %944 = sbr.rel (%p942) target = $region92
        $region91: #{tpu_custom_call.1} parent=11 // pred_region
          _
        $region92: #{tpu_custom_call.1} parent=11 // pred_fallthru
          _
        // Predicated region
        $region93: #{tpu_custom_call.1} parent=11 // pred_check
          %p945 = pneg %p629
        $region94: #{tpu_custom_call.1} parent=11 // pred_check_branch
          %947 = sbr.rel (%p945) target = $region96
        $region95: #{tpu_custom_call.1} parent=11 // pred_region
          _
        $region96: #{tpu_custom_call.1} parent=11 // pred_fallthru
          _
        // Predicated region
        $region97: #{tpu_custom_call.1} parent=11 // pred_check
          %p948 = pneg %p650
        $region98: #{tpu_custom_call.1} parent=11 // pred_check_branch
          %950 = sbr.rel (%p948) target = $region100
        $region99: #{tpu_custom_call.1} parent=11 // pred_region
          _
        $region100: #{tpu_custom_call.1} parent=11 // pred_fallthru
          _
        // Predicated region
        $region101: #{tpu_custom_call.1} parent=11 // pred_check
          %p951 = pneg %p671
        $region102: #{tpu_custom_call.1} parent=11 // pred_check_branch
          %953 = sbr.rel (%p951) target = $region104
        $region103: #{tpu_custom_call.1} parent=11 // pred_region
          _
        $region104: #{tpu_custom_call.1} parent=11 // pred_fallthru
          _
        // Predicated region
        $region105: #{tpu_custom_call.1} parent=11 // pred_check
          %p954 = pneg %p692
        $region106: #{tpu_custom_call.1} parent=11 // pred_check_branch
          %956 = sbr.rel (%p954) target = $region108
        $region107: #{tpu_custom_call.1} parent=11 // pred_region
          _
        $region108: #{tpu_custom_call.1} parent=11 // pred_fallthru
          _
        // Predicated region
        $region109: #{tpu_custom_call.1} parent=11 // pred_check
          %p957 = pneg %p713
        $region110: #{tpu_custom_call.1} parent=11 // pred_check_branch
          %959 = sbr.rel (%p957) target = $region112
        $region111: #{tpu_custom_call.1} parent=11 // pred_region
          _
        $region112: #{tpu_custom_call.1} parent=11 // pred_fallthru
          _
        // Predicated region
        $region113: #{tpu_custom_call.1} parent=11 // pred_check
          %p960 = pneg %p734
        $region114: #{tpu_custom_call.1} parent=11 // pred_check_branch
          %962 = sbr.rel (%p960) target = $region116
        $region115: #{tpu_custom_call.1} parent=11 // pred_region
          _
        $region116: #{tpu_custom_call.1} parent=11 // pred_fallthru
          _
        // Predicated region
        $region117: #{tpu_custom_call.1} parent=11 // pred_check
          %p963 = pneg %p755
        $region118: #{tpu_custom_call.1} parent=11 // pred_check_branch
          %965 = sbr.rel (%p963) target = $region120
        $region119: #{tpu_custom_call.1} parent=11 // pred_region
          _
        $region120: #{tpu_custom_call.1} parent=11 // pred_fallthru
          _
        // Predicated region
        $region121: #{tpu_custom_call.1} parent=11 // pred_check
          %p966 = pneg %p776
        $region122: #{tpu_custom_call.1} parent=11 // pred_check_branch
          %968 = sbr.rel (%p966) target = $region124
        $region123: #{tpu_custom_call.1} parent=11 // pred_region
          _
        $region124: #{tpu_custom_call.1} parent=11 // pred_fallthru
          _
        // Predicated region
        $region125: #{tpu_custom_call.1} parent=11 // pred_check
          %p969 = pneg %p797
        $region126: #{tpu_custom_call.1} parent=11 // pred_check_branch
          %971 = sbr.rel (%p969) target = $region128
        $region127: #{tpu_custom_call.1} parent=11 // pred_region
          _
        $region128: #{tpu_custom_call.1} parent=11 // pred_fallthru
          _
        // Predicated region
        $region129: #{tpu_custom_call.1} parent=11 // pred_check
          %p972 = pneg %p818
        $region130: #{tpu_custom_call.1} parent=11 // pred_check_branch
          %974 = sbr.rel (%p972) target = $region132
        $region131: #{tpu_custom_call.1} parent=11 // pred_region
          _
        $region132: #{tpu_custom_call.1} parent=11 // pred_fallthru
          _
      $region12: #{tpu_custom_call.1} parent=5 // pred_fallthru
        _
      %p975 = scmp.lt.s32.totalorder %s84, 2
      // Predicated region
      $region133: #{tpu_custom_call.1} parent=5 // pred_check
        %p976 = pneg %p975
      $region134: #{tpu_custom_call.1} parent=5 // pred_check_branch
        %978 = sbr.rel (%p976) target = $region136
      $region135: #{tpu_custom_call.1} parent=5 // pred_region
        // Predicated region
        $region137: #{tpu_custom_call.1} parent=135 // pred_check
          %p979 = pneg %p104
        $region138: #{tpu_custom_call.1} parent=135 // pred_check_branch
          %981 = sbr.rel (%p979) target = $region140
        $region139: #{tpu_custom_call.1} parent=135 // pred_region
          %p982 = scmp.lt.s32.totalorder %s84, 1
          %s983 = scalar_select %p982, %s84, 1
          %s984 = smul.addr %s983, 2
          %s985 = smul.addr %s984, 8
          %s986 = scalar_lea.vmem %s1, %s985
        $region140: #{tpu_custom_call.1} parent=135 // pred_fallthru
          _
        // Predicated region
        $region141: #{tpu_custom_call.1} parent=135 // pred_check
          %p987 = pneg %p130
        $region142: #{tpu_custom_call.1} parent=135 // pred_check_branch
          %989 = sbr.rel (%p987) target = $region144
        $region143: #{tpu_custom_call.1} parent=135 // pred_region
          %p990 = scmp.lt.s32.totalorder %s84, 1
          %s991 = scalar_select %p990, %s84, 1
          %s992 = smul.addr %s991, 8
          %s993 = scalar_lea.vmem %s3, %s992
        $region144: #{tpu_custom_call.1} parent=135 // pred_fallthru
          _
        // Predicated region
        $region145: #{tpu_custom_call.1} parent=135 // pred_check
          %p994 = pneg %p156
        $region146: #{tpu_custom_call.1} parent=135 // pred_check_branch
          %996 = sbr.rel (%p994) target = $region148
        $region147: #{tpu_custom_call.1} parent=135 // pred_region
          %p997 = scmp.lt.s32.totalorder %s84, 1
          %s998 = scalar_select %p997, %s84, 1
          %s999 = smul.addr %s998, 8
          %s1000 = scalar_lea.vmem %s5, %s999
        $region148: #{tpu_custom_call.1} parent=135 // pred_fallthru
          _
        // Predicated region
        $region149: #{tpu_custom_call.1} parent=135 // pred_check
          %p1001 = pneg %p182
        $region150: #{tpu_custom_call.1} parent=135 // pred_check_branch
          %1003 = sbr.rel (%p1001) target = $region152
        $region151: #{tpu_custom_call.1} parent=135 // pred_region
          %p1004 = scmp.lt.s32.totalorder %s84, 1
          %s1005 = scalar_select %p1004, %s84, 1
          %s1006 = smul.addr %s1005, 8
          %s1007 = scalar_lea.vmem %s7, %s1006
        $region152: #{tpu_custom_call.1} parent=135 // pred_fallthru
          _
      $region136: #{tpu_custom_call.1} parent=5 // pred_fallthru
        _
      %p1008 = scmp.le.s32.totalorder 1, %s84
      %p1009 = scmp.lt.s32.totalorder %s84, 3
      %p1010 = pnand %p1008, %p1009
      %p1011 = pneg %p1010
      // Predicated region
      $region153: #{tpu_custom_call.1} parent=5 // pred_check
        _
      $region154: #{tpu_custom_call.1} parent=5 // pred_check_branch
        %1013 = sbr.rel (%p1010) target = $region156
      $region155: #{tpu_custom_call.1} parent=5 // pred_region
        %s1014 = ssub.s32 %s84, 1
        %p1015 = scmp.lt.s32.totalorder %s89, 1
        %s1016 = scalar_select %p1015, %s89, 1
        %s1017 = smul.addr %s1016, 2
        %s1018 = smul.addr %s1017, 8
        %s1019 = scalar_lea.vmem %s1, %s1018
        %p1020 = pneg %p110
        %p1021 = pneg %p107
        %p1022 = scmp.lt.s32.totalorder %s89, 1
        %s1023 = scalar_select %p1022, %s89, 1
        %s1024 = smul.addr %s1023, 8
        %s1025 = scalar_lea.vmem %s3, %s1024
        %p1026 = pneg %p136
        %p1027 = pneg %p133
        %p1028 = scmp.lt.s32.totalorder %s89, 1
        %s1029 = scalar_select %p1028, %s89, 1
        %s1030 = smul.addr %s1029, 8
        %s1031 = scalar_lea.vmem %s5, %s1030
        %p1032 = pneg %p162
        %p1033 = pneg %p159
        %p1034 = scmp.lt.s32.totalorder %s89, 1
        %s1035 = scalar_select %p1034, %s89, 1
        %s1036 = smul.addr %s1035, 8
        %s1037 = scalar_lea.vmem %s7, %s1036
        %p1038 = pneg %p188
        %p1039 = pneg %p185
        %p1040 = pneg %p209
        %p1041 = pneg %p206
        %p1042 = pneg %p230
        %p1043 = pneg %p227
        %p1044 = pneg %p251
        %p1045 = pneg %p248
        %p1046 = pneg %p272
        %p1047 = pneg %p269
        %p1048 = pneg %p293
        %p1049 = pneg %p290
        %p1050 = pneg %p314
        %p1051 = pneg %p311
        %p1052 = pneg %p335
        %p1053 = pneg %p332
        %p1054 = pneg %p356
        %p1055 = pneg %p353
        %p1056 = pneg %p377
        %p1057 = pneg %p374
        %p1058 = pneg %p398
        %p1059 = pneg %p395
        %p1060 = pneg %p419
        %p1061 = pneg %p416
        %p1062 = pneg %p440
        %p1063 = pneg %p437
        %p1064 = pneg %p461
        %p1065 = pneg %p458
        %p1066 = pneg %p482
        %p1067 = pneg %p479
        %p1068 = pneg %p503
        %p1069 = pneg %p500
        %p1070 = pneg %p524
        %p1071 = pneg %p521
        %p1072 = pneg %p545
        %p1073 = pneg %p542
        %p1074 = pneg %p566
        %p1075 = pneg %p563
        %p1076 = pneg %p587
        %p1077 = pneg %p584
        %p1078 = pneg %p608
        %p1079 = pneg %p605
        %p1080 = pneg %p629
        %p1081 = pneg %p626
        %p1082 = pneg %p650
        %p1083 = pneg %p647
        %p1084 = pneg %p671
        %p1085 = pneg %p668
        %p1086 = pneg %p692
        %p1087 = pneg %p689
        %p1088 = pneg %p713
        %p1089 = pneg %p710
        %p1090 = pneg %p734
        %p1091 = pneg %p731
        %p1092 = pneg %p755
        %p1093 = pneg %p752
        %p1094 = pneg %p776
        %p1095 = pneg %p773
        %p1096 = pneg %p797
        %p1097 = pneg %p794
        %p1098 = pneg %p818
        %p1099 = pneg %p815
        %p1100 = pneg %p844
        %p1101 = pneg %p841
        %s1102 = sand.u32 %s831, 1
        %s1103 = scalar_lea.sflag [#allocation7], %s1102
        %s1104 = sand.u32 %s831, 1
        %s1105 = smul.addr %s1104, 8
        %s1106 = scalar_lea.vmem [#allocation6], %s1105
        %p1107 = pneg %p870
        %p1108 = pneg %p867
        %s1109 = sand.u32 %s857, 1
        %s1110 = scalar_lea.sflag [#allocation9], %s1109
        %s1111 = sand.u32 %s857, 1
        %s1112 = smul.addr %s1111, 16
        %s1113 = scalar_lea.vmem [#allocation8], %s1112
        %p1114 = scmp.lt.s32.totalorder %s89, 1
        %s1115 = scalar_select %p1114, %s89, 1
        %s1116 = smul.addr %s1115, 2
        %s1117 = smul.addr %s1116, 8
        %s1118 = scalar_lea.vmem %s1, %s1117
        %p1119 = scmp.lt.s32.totalorder %s89, 1
        %s1120 = scalar_select %p1119, %s89, 1
        %s1121 = smul.addr %s1120, 8
        %s1122 = scalar_lea.vmem %s3, %s1121
        %p1123 = scmp.lt.s32.totalorder %s89, 1
        %s1124 = scalar_select %p1123, %s89, 1
        %s1125 = smul.addr %s1124, 8
        %s1126 = scalar_lea.vmem %s5, %s1125
        %p1127 = scmp.lt.s32.totalorder %s89, 1
        %s1128 = scalar_select %p1127, %s89, 1
        %s1129 = smul.addr %s1128, 8
        %s1130 = scalar_lea.vmem %s7, %s1129
        %v1132 = vld [vmem:[%s1118] sm:$0xff]
        %v1133 = vld [vmem:[%s1118 + $0x8] sm:$0xff]
        %v1134 = vld [vmem:[%s1122] sm:$0xff]
        %v1135 = vld [vmem:[%s1126] sm:$0x3f]
        %v1136 = vld [vmem:[%s1130] sm:$0x3f]
        %v1137 = vld [vmem:[%s9] sm:$0xff]
        %v1138 = vld [vmem:[%s9 + $0x8] sm:$0xff]
        %v1139 = vld [vmem:[%s9 + $0x10] sm:$0xff]
        %v1140 = vld [vmem:[%s11] sm:$0xff]
        %v1141 = vld [vmem:[%s11 + $0x8] sm:$0xff]
        %v1142 = vld [vmem:[%s11 + $0x10] sm:$0xff]
        %vm1143 = vcmask 261120
        %v1144 = vsel %vm1143, %v1132, 0.0
        %1145 = vadd.xlane.f32.xlu0 %v1144
        %v1146 = vpop.xlane.xlu0 %1145
        %v1147 = vsel %vm1143, %v1133, 0.0
        %1148 = vadd.xlane.f32.xlu0 %v1147
        %v1149 = vpop.xlane.xlu0 %1148
        %v1150 = vrcp.pop 32.0
        %v1151 = vmul.f32 32.0, %v1150
        %v1152 = vsub.f32 1.0, %v1151
        %v1153 = vmul.f32 %v1150, %v1152
        %v1154 = vadd.f32 %v1150, %v1153
        %vm1155 = vweird.f32 %v1150
        %v1156 = vsel %vm1155, %v1150, %v1154
        %v1157 = vmul.f32 %v1146, %v1156
        %v1158 = vmul.f32 %v1149, %v1156
        %v1159 = vsub.f32 %v1132, %v1157
        %v1160 = vsub.f32 %v1133, %v1158
        %v1161 = vmul.f32 %v1159, %v1159
        %v1162 = vmul.f32 %v1160, %v1160
        %v1163 = vsel %vm1143, %v1161, 0.0
        %1164 = vadd.xlane.f32.xlu0 %v1163
        %v1165 = vpop.xlane.xlu0 %1164
        %v1166 = vsel %vm1143, %v1162, 0.0
        %1167 = vadd.xlane.f32.xlu0 %v1166
        %v1168 = vpop.xlane.xlu0 %1167
        %v1169 = vmul.f32 %v1165, %v1156
        %v1170 = vmul.f32 %v1168, %v1156
        %v1171 = vadd.f32 %v1169, 1e-06
        %v1172 = vadd.f32 %v1170, 1e-06
        %v1173 = vrsqrt.pop %v1171
        %v1174 = vmul.f32 %v1173, %v1171
        %v1175 = vmul.f32 %v1174, %v1173
        %v1176 = vmul.f32 0.5, %v1175
        %v1177 = vsub.f32 1.5, %v1176
        %v1178 = vmul.f32 %v1173, %v1177
        %vm1179 = vweird.f32 %v1171
        %vm1180 = vweird.f32 %v1173
        %vm1181 = vmor %vm1179, %vm1180
        %v1182 = vsel %vm1181, %v1173, %v1178
        %v1183 = vrsqrt.pop %v1172
        %v1184 = vmul.f32 %v1183, %v1172
        %v1185 = vmul.f32 %v1184, %v1183
        %v1186 = vmul.f32 0.5, %v1185
        %v1187 = vsub.f32 1.5, %v1186
        %v1188 = vmul.f32 %v1183, %v1187
        %vm1189 = vweird.f32 %v1172
        %vm1190 = vweird.f32 %v1183
        %vm1191 = vmor %vm1189, %vm1190
        %v1192 = vsel %vm1191, %v1183, %v1188
        %v1193 = vmul.f32 %v1159, %v1182
        %v1194 = vmul.f32 %v1160, %v1192
        %v1195 = vadd.f32 %v1135, 1.0
        %v1196 = vperm.slane %v1195, 1
        %v1197 = vmul.f32 %v1193, %v1196
        %v1198 = vmul.f32 %v1194, %v1196
        %v1199 = vperm.slane %v1135, 0
        %v1200 = vadd.f32 %v1197, %v1199
        %v1201 = vadd.f32 %v1198, %v1199
        %v1202 = vsel %vm1143, %v1134, 0.0
        %1203 = vadd.xlane.f32.xlu0 %v1202
        %v1204 = vpop.xlane.xlu0 %1203
        %v1205 = vmul.f32 %v1204, %v1156
        %v1206 = vsub.f32 %v1134, %v1205
        %v1207 = vmul.f32 %v1206, %v1206
        %v1208 = vsel %vm1143, %v1207, 0.0
        %1209 = vadd.xlane.f32.xlu0 %v1208
        %v1210 = vpop.xlane.xlu0 %1209
        %v1211 = vmul.f32 %v1210, %v1156
        %v1212 = vadd.f32 %v1211, 1e-06
        %v1213 = vrsqrt.pop %v1212
        %v1214 = vmul.f32 %v1213, %v1212
        %v1215 = vmul.f32 %v1214, %v1213
        %v1216 = vmul.f32 0.5, %v1215
        %v1217 = vsub.f32 1.5, %v1216
        %v1218 = vmul.f32 %v1213, %v1217
        %vm1219 = vweird.f32 %v1212
        %vm1220 = vweird.f32 %v1213
        %vm1221 = vmor %vm1219, %vm1220
        %v1222 = vsel %vm1221, %v1213, %v1218
        %v1223 = vmul.f32 %v1206, %v1222
        %v1224 = vadd.f32 %v1136, 1.0
        %v1225 = vperm.slane %v1224, 1
        %v1226 = vmul.f32 %v1223, %v1225
        %v1227 = vperm.slane %v1136, 0
        %v1228 = vadd.f32 %v1226, %v1227
        %v1229 = vpack.c.bf16 %v1201, %v1200
        %v1230 = vpack.c.bf16 %v1228, %v1228
        %v1231 = vld [vmem:[%s13] sm:$0xf]
        %v1232 = vld [vmem:[%s13 + $0x4] sm:$0xf]
        %v1233 = vld [vmem:[%s13 + $0x8] sm:$0xf]
        %v1234 = vld [vmem:[%s13 + $0xc] sm:$0xf]
        %v1235 = vld [vmem:[%s15] sm:$0x1]
        %v1237 = vperm.slane %v1235, 0
        %v1243 = vunpack.c.l.b16 %v1231
        %v1244 = vunpack.c.l.b16 %v1232
        %v1245 = vunpack.c.l.b16 %v1233
        %v1246 = vunpack.c.l.b16 %v1234
        %v1247 = vpack.c.b16 %v1244, %v1243
        %v1248 = vpack.c.b16 %v1246, %v1245
        %v1252 = vsel %vm1143, %v1229, 0
        %1254 = vmatpush.bf16.msra.mxu0 0
        %1255 = vmatpush.bf16.msra.mxu0 0
        %1256 = vmatpush.bf16.msra.mxu0 0
        %1257 = vmatpush.bf16.msra.mxu0 0
        %1258 = vmatpush.bf16.msra.mxu0 0
        %1259 = vmatpush.bf16.msra.mxu0 0
        %1260 = vmatpush.bf16.msra.mxu0 %v1248
        %1261 = vmatpush.bf16.msra.mxu0 %v1247
        %1262 = vmatmul.bf16.gmra.mxu0 %v1252
        %v1263 = vpop.f32.mrf.mxu0
        %v1264 = vadd.f32 %v1237, %v1263
        %v1265 = vpop.f32.mrf.mxu0
        %v1266 = vadd.f32 %v1237, %v1265
        %1267 = vdwg.mxu0
        %v1268 = vld [vmem:[%s17] sm:$0xf]
        %v1269 = vld [vmem:[%s17 + $0x4] sm:$0xf]
        %v1270 = vld [vmem:[%s17 + $0x8] sm:$0xf]
        %v1271 = vld [vmem:[%s17 + $0xc] sm:$0xf]
        %v1272 = vld [vmem:[%s19] sm:$0x1]
        %v1274 = vperm.slane %v1272, 0
        %v1280 = vunpack.c.l.b16 %v1268
        %v1281 = vunpack.c.l.b16 %v1269
        %v1282 = vunpack.c.l.b16 %v1270
        %v1283 = vunpack.c.l.b16 %v1271
        %v1284 = vpack.c.b16 %v1281, %v1280
        %v1285 = vpack.c.b16 %v1283, %v1282
        %1288 = vmatpush.bf16.msra.mxu0 0
        %1289 = vmatpush.bf16.msra.mxu0 0
        %1290 = vmatpush.bf16.msra.mxu0 0
        %1291 = vmatpush.bf16.msra.mxu0 0
        %1292 = vmatpush.bf16.msra.mxu0 0
        %1293 = vmatpush.bf16.msra.mxu0 0
        %1294 = vmatpush.bf16.msra.mxu0 %v1285
        %1295 = vmatpush.bf16.msra.mxu0 %v1284
        %1296 = vmatmul.bf16.gmra.mxu0 %v1252
        %v1297 = vpop.f32.mrf.mxu0
        %v1298 = vadd.f32 %v1274, %v1297
        %v1299 = vpop.f32.mrf.mxu0
        %v1300 = vadd.f32 %v1274, %v1299
        %1301 = vdwg.mxu0
        %v1302 = vld [vmem:[%s21] sm:$0xf]
        %v1303 = vld [vmem:[%s21 + $0x4] sm:$0xf]
        %v1304 = vld [vmem:[%s21 + $0x8] sm:$0xf]
        %v1305 = vld [vmem:[%s21 + $0xc] sm:$0xf]
        %v1306 = vld [vmem:[%s23] sm:$0x1]
        %v1308 = vperm.slane %v1306, 0
        %v1314 = vunpack.c.l.b16 %v1302
        %v1315 = vunpack.c.l.b16 %v1303
        %v1316 = vunpack.c.l.b16 %v1304
        %v1317 = vunpack.c.l.b16 %v1305
        %v1318 = vpack.c.b16 %v1315, %v1314
        %v1319 = vpack.c.b16 %v1317, %v1316
        %1322 = vmatpush.bf16.msra.mxu0 0
        %1323 = vmatpush.bf16.msra.mxu0 0
        %1324 = vmatpush.bf16.msra.mxu0 0
        %1325 = vmatpush.bf16.msra.mxu0 0
        %1326 = vmatpush.bf16.msra.mxu0 0
        %1327 = vmatpush.bf16.msra.mxu0 0
        %1328 = vmatpush.bf16.msra.mxu0 %v1319
        %1329 = vmatpush.bf16.msra.mxu0 %v1318
        %1330 = vmatmul.bf16.gmra.mxu0 %v1252
        %v1331 = vpop.f32.mrf.mxu0
        %v1332 = vadd.f32 %v1308, %v1331
        %v1333 = vpop.f32.mrf.mxu0
        %v1334 = vadd.f32 %v1308, %v1333
        %1335 = vdwg.mxu0
        %v1336 = vld [vmem:[%s29] sm:$0xf]
        %v1337 = vld [vmem:[%s29 + $0x4] sm:$0xf]
        %v1338 = vld [vmem:[%s29 + $0x8] sm:$0xf]
        %v1339 = vld [vmem:[%s29 + $0xc] sm:$0xf]
        %v1340 = vld [vmem:[%s31] sm:$0x1]
        %v1342 = vperm.slane %v1340, 0
        %v1348 = vunpack.c.l.b16 %v1336
        %v1349 = vunpack.c.l.b16 %v1337
        %v1350 = vunpack.c.l.b16 %v1338
        %v1351 = vunpack.c.l.b16 %v1339
        %v1352 = vpack.c.b16 %v1349, %v1348
        %v1353 = vpack.c.b16 %v1351, %v1350
        %v1357 = vsel %vm1143, %v1230, 0
        %1359 = vmatpush.bf16.msra.mxu0 0
        %1360 = vmatpush.bf16.msra.mxu0 0
        %1361 = vmatpush.bf16.msra.mxu0 0
        %1362 = vmatpush.bf16.msra.mxu0 0
        %1363 = vmatpush.bf16.msra.mxu0 0
        %1364 = vmatpush.bf16.msra.mxu0 0
        %1365 = vmatpush.bf16.msra.mxu0 %v1353
        %1366 = vmatpush.bf16.msra.mxu0 %v1352
        %1367 = vmatmul.bf16.gmra.mxu0 %v1357
        %v1368 = vpop.f32.mrf.mxu0
        %v1369 = vadd.f32 %v1342, %v1368
        %v1370 = vpop.f32.mrf.mxu0
        %1371 = vdwg.mxu0
        %v1372 = vld [vmem:[%s33] sm:$0xf]
        %v1373 = vld [vmem:[%s33 + $0x4] sm:$0xf]
        %v1374 = vld [vmem:[%s33 + $0x8] sm:$0xf]
        %v1375 = vld [vmem:[%s33 + $0xc] sm:$0xf]
        %v1376 = vld [vmem:[%s35] sm:$0x1]
        %v1378 = vperm.slane %v1376, 0
        %v1384 = vunpack.c.l.b16 %v1372
        %v1385 = vunpack.c.l.b16 %v1373
        %v1386 = vunpack.c.l.b16 %v1374
        %v1387 = vunpack.c.l.b16 %v1375
        %v1388 = vpack.c.b16 %v1385, %v1384
        %v1389 = vpack.c.b16 %v1387, %v1386
        %1392 = vmatpush.bf16.msra.mxu0 0
        %1393 = vmatpush.bf16.msra.mxu0 0
        %1394 = vmatpush.bf16.msra.mxu0 0
        %1395 = vmatpush.bf16.msra.mxu0 0
        %1396 = vmatpush.bf16.msra.mxu0 0
        %1397 = vmatpush.bf16.msra.mxu0 0
        %1398 = vmatpush.bf16.msra.mxu0 %v1389
        %1399 = vmatpush.bf16.msra.mxu0 %v1388
        %1400 = vmatmul.bf16.gmra.mxu0 %v1357
        %v1401 = vpop.f32.mrf.mxu0
        %v1402 = vadd.f32 %v1378, %v1401
        %v1403 = vpop.f32.mrf.mxu0
        %1404 = vdwg.mxu0
        %v1405 = vld [vmem:[%s37] sm:$0xf]
        %v1406 = vld [vmem:[%s37 + $0x4] sm:$0xf]
        %v1407 = vld [vmem:[%s37 + $0x8] sm:$0xf]
        %v1408 = vld [vmem:[%s37 + $0xc] sm:$0xf]
        %v1409 = vld [vmem:[%s39] sm:$0x1]
        %v1411 = vperm.slane %v1409, 0
        %v1417 = vunpack.c.l.b16 %v1405
        %v1418 = vunpack.c.l.b16 %v1406
        %v1419 = vunpack.c.l.b16 %v1407
        %v1420 = vunpack.c.l.b16 %v1408
        %v1421 = vpack.c.b16 %v1418, %v1417
        %v1422 = vpack.c.b16 %v1420, %v1419
        %1425 = vmatpush.bf16.msra.mxu0 0
        %1426 = vmatpush.bf16.msra.mxu0 0
        %1427 = vmatpush.bf16.msra.mxu0 0
        %1428 = vmatpush.bf16.msra.mxu0 0
        %1429 = vmatpush.bf16.msra.mxu0 0
        %1430 = vmatpush.bf16.msra.mxu0 0
        %1431 = vmatpush.bf16.msra.mxu0 %v1422
        %1432 = vmatpush.bf16.msra.mxu0 %v1421
        %1433 = vmatmul.bf16.gmra.mxu0 %v1357
        %v1434 = vpop.f32.mrf.mxu0
        %v1435 = vadd.f32 %v1411, %v1434
        %v1436 = vpop.f32.mrf.mxu0
        %1437 = vdwg.mxu0
        %v1438 = vld [vmem:[%s25] sm:$0x1]
        %v1439 = vld [vmem:[%s27] sm:$0x1]
        %v1440 = vld [vmem:[%s41] sm:$0x1]
        %v1441 = vld [vmem:[%s43] sm:$0x1]
        %v1442 = vmul.f32 %v1369, %v1369
        %vm1443 = vcmask 130048
        %v1444 = vsel %vm1443, %v1442, 0.0
        %1445 = vadd.xlane.f32.xlu0 %v1444
        %v1446 = vpop.xlane.xlu0 %1445
        %v1447 = vrcp.pop 16.0
        %v1448 = vmul.f32 16.0, %v1447
        %v1449 = vsub.f32 1.0, %v1448
        %v1450 = vmul.f32 %v1447, %v1449
        %v1451 = vadd.f32 %v1447, %v1450
        %vm1452 = vweird.f32 %v1447
        %v1453 = vsel %vm1452, %v1447, %v1451
        %v1454 = vmul.f32 %v1446, %v1453
        %v1455 = vadd.f32 %v1454, 1e-06
        %v1456 = vrsqrt.pop %v1455
        %v1457 = vmul.f32 %v1456, %v1455
        %v1458 = vmul.f32 %v1457, %v1456
        %v1459 = vmul.f32 0.5, %v1458
        %v1460 = vsub.f32 1.5, %v1459
        %v1461 = vmul.f32 %v1456, %v1460
        %vm1462 = vweird.f32 %v1455
        %vm1463 = vweird.f32 %v1456
        %vm1464 = vmor %vm1462, %vm1463
        %v1465 = vsel %vm1464, %v1456, %v1461
        %v1466 = vmul.f32 %v1369, %v1465
        %v1468 = vperm.slane %v1440, 0
        %v1470 = vmul.f32 %v1466, %v1468
        %v1471 = vsub.f32 0.0, %v1470
        %1473 = vrot.lane.b32.xlu0 %v1471, 120
        %v1474 = vpop.permute.xlu0 %1473
        %1477 = vrot.lane.b32.xlu0 %v1470, 8
        %v1478 = vpop.permute.xlu0 %1477
        %vm1480 = vcmask 64512
        %v1481 = vsel %vm1480, %v1474, %v1478
        %v1482 = vmul.f32 %v1470, %v1137
        %v1483 = vmul.f32 %v1481, %v1140
        %v1484 = vadd.f32 %v1482, %v1483
        %v1485 = vpack.c.bf16 %v1484, %v1484
        %vm1486 = vcmask 125952
        %1487 = vst.msk [vmem:[#allocation2] sm:$0xf] %vm1486, %v1485
        %v1488 = vmul.f32 %v1264, %v1264
        %v1489 = vmul.f32 %v1266, %v1266
        %v1490 = vsel %vm1443, %v1488, 0.0
        %1491 = vadd.xlane.f32.xlu0 %v1490
        %v1492 = vpop.xlane.xlu0 %1491
        %v1493 = vsel %vm1443, %v1489, 0.0
        %1494 = vadd.xlane.f32.xlu0 %v1493
        %v1495 = vpop.xlane.xlu0 %1494
        %v1496 = vmul.f32 %v1492, %v1453
        %v1497 = vmul.f32 %v1495, %v1453
        %v1498 = vadd.f32 %v1496, 1e-06
        %v1499 = vadd.f32 %v1497, 1e-06
        %v1500 = vrsqrt.pop %v1498
        %v1501 = vmul.f32 %v1500, %v1498
        %v1502 = vmul.f32 %v1501, %v1500
        %v1503 = vmul.f32 0.5, %v1502
        %v1504 = vsub.f32 1.5, %v1503
        %v1505 = vmul.f32 %v1500, %v1504
        %vm1506 = vweird.f32 %v1498
        %vm1507 = vweird.f32 %v1500
        %vm1508 = vmor %vm1506, %vm1507
        %v1509 = vsel %vm1508, %v1500, %v1505
        %v1510 = vrsqrt.pop %v1499
        %v1511 = vmul.f32 %v1510, %v1499
        %v1512 = vmul.f32 %v1511, %v1510
        %v1513 = vmul.f32 0.5, %v1512
        %v1514 = vsub.f32 1.5, %v1513
        %v1515 = vmul.f32 %v1510, %v1514
        %vm1516 = vweird.f32 %v1499
        %vm1517 = vweird.f32 %v1510
        %vm1518 = vmor %vm1516, %vm1517
        %v1519 = vsel %vm1518, %v1510, %v1515
        %v1520 = vmul.f32 %v1264, %v1509
        %v1521 = vmul.f32 %v1266, %v1519
        %v1523 = vperm.slane %v1438, 0
        %v1525 = vmul.f32 %v1520, %v1523
        %v1526 = vmul.f32 %v1521, %v1523
        %v1527 = vsub.f32 0.0, %v1525
        %v1528 = vsub.f32 0.0, %v1526
        %1531 = vrot.lane.b32.xlu0 %v1527, 120
        %v1532 = vpop.permute.xlu0 %1531
        %1533 = vrot.lane.b32.xlu0 %v1528, 120
        %v1534 = vpop.permute.xlu0 %1533
        %1539 = vrot.lane.b32.xlu0 %v1525, 8
        %v1540 = vpop.permute.xlu0 %1539
        %1541 = vrot.lane.b32.xlu0 %v1526, 8
        %v1542 = vpop.permute.xlu0 %1541
        %v1545 = vsel %vm1480, %v1532, %v1540
        %v1546 = vsel %vm1480, %v1534, %v1542
        %v1547 = vmul.f32 %v1525, %v1138
        %v1548 = vmul.f32 %v1526, %v1139
        %v1549 = vmul.f32 %v1545, %v1141
        %v1550 = vmul.f32 %v1546, %v1142
        %v1551 = vadd.f32 %v1547, %v1549
        %v1552 = vadd.f32 %v1548, %v1550
        %v1553 = vpack.c.bf16 %v1551, %v1551
        %v1554 = vpack.c.bf16 %v1552, %v1552
        %1555 = vst.msk [vmem:[#allocation2 + $0x4] sm:$0xf] %vm1486, %v1553
        %1556 = vst.msk [vmem:[#allocation2 + $0x8] sm:$0xf] %vm1486, %v1554
        %v1557 = vmul.f32 %v1402, %v1402
        %v1558 = vsel %vm1443, %v1557, 0.0
        %1559 = vadd.xlane.f32.xlu0 %v1558
        %v1560 = vpop.xlane.xlu0 %1559
        %v1561 = vmul.f32 %v1560, %v1453
        %v1562 = vadd.f32 %v1561, 1e-06
        %v1563 = vrsqrt.pop %v1562
        %v1564 = vmul.f32 %v1563, %v1562
        %v1565 = vmul.f32 %v1564, %v1563
        %v1566 = vmul.f32 0.5, %v1565
        %v1567 = vsub.f32 1.5, %v1566
        %v1568 = vmul.f32 %v1563, %v1567
        %vm1569 = vweird.f32 %v1562
        %vm1570 = vweird.f32 %v1563
        %vm1571 = vmor %vm1569, %vm1570
        %v1572 = vsel %vm1571, %v1563, %v1568
        %v1573 = vmul.f32 %v1402, %v1572
        %v1575 = vperm.slane %v1441, 0
        %v1577 = vmul.f32 %v1573, %v1575
        %v1578 = vsub.f32 0.0, %v1577
        %1580 = vrot.lane.b32.xlu0 %v1578, 120
        %v1581 = vpop.permute.xlu0 %1580
        %1584 = vrot.lane.b32.xlu0 %v1577, 8
        %v1585 = vpop.permute.xlu0 %1584
        %v1587 = vsel %vm1480, %v1581, %v1585
        %v1588 = vmul.f32 %v1577, %v1137
        %v1589 = vmul.f32 %v1587, %v1140
        %v1590 = vadd.f32 %v1588, %v1589
        %v1591 = vpack.c.bf16 %v1590, %v1590
        %1592 = vst.msk [vmem:[#allocation3] sm:$0xf] %vm1486, %v1591
        %v1593 = vmul.f32 %v1298, %v1298
        %v1594 = vmul.f32 %v1300, %v1300
        %v1595 = vsel %vm1443, %v1593, 0.0
        %1596 = vadd.xlane.f32.xlu0 %v1595
        %v1597 = vpop.xlane.xlu0 %1596
        %v1598 = vsel %vm1443, %v1594, 0.0
        %1599 = vadd.xlane.f32.xlu0 %v1598
        %v1600 = vpop.xlane.xlu0 %1599
        %v1601 = vmul.f32 %v1597, %v1453
        %v1602 = vmul.f32 %v1600, %v1453
        %v1603 = vadd.f32 %v1601, 1e-06
        %v1604 = vadd.f32 %v1602, 1e-06
        %v1605 = vrsqrt.pop %v1603
        %v1606 = vmul.f32 %v1605, %v1603
        %v1607 = vmul.f32 %v1606, %v1605
        %v1608 = vmul.f32 0.5, %v1607
        %v1609 = vsub.f32 1.5, %v1608
        %v1610 = vmul.f32 %v1605, %v1609
        %vm1611 = vweird.f32 %v1603
        %vm1612 = vweird.f32 %v1605
        %vm1613 = vmor %vm1611, %vm1612
        %v1614 = vsel %vm1613, %v1605, %v1610
        %v1615 = vrsqrt.pop %v1604
        %v1616 = vmul.f32 %v1615, %v1604
        %v1617 = vmul.f32 %v1616, %v1615
        %v1618 = vmul.f32 0.5, %v1617
        %v1619 = vsub.f32 1.5, %v1618
        %v1620 = vmul.f32 %v1615, %v1619
        %vm1621 = vweird.f32 %v1604
        %vm1622 = vweird.f32 %v1615
        %vm1623 = vmor %vm1621, %vm1622
        %v1624 = vsel %vm1623, %v1615, %v1620
        %v1625 = vmul.f32 %v1298, %v1614
        %v1626 = vmul.f32 %v1300, %v1624
        %v1628 = vperm.slane %v1439, 0
        %v1630 = vmul.f32 %v1625, %v1628
        %v1631 = vmul.f32 %v1626, %v1628
        %v1632 = vsub.f32 0.0, %v1630
        %v1633 = vsub.f32 0.0, %v1631
        %1636 = vrot.lane.b32.xlu0 %v1632, 120
        %v1637 = vpop.permute.xlu0 %1636
        %1638 = vrot.lane.b32.xlu0 %v1633, 120
        %v1639 = vpop.permute.xlu0 %1638
        %1644 = vrot.lane.b32.xlu0 %v1630, 8
        %v1645 = vpop.permute.xlu0 %1644
        %1646 = vrot.lane.b32.xlu0 %v1631, 8
        %v1647 = vpop.permute.xlu0 %1646
        %v1650 = vsel %vm1480, %v1637, %v1645
        %v1651 = vsel %vm1480, %v1639, %v1647
        %v1652 = vmul.f32 %v1630, %v1138
        %v1653 = vmul.f32 %v1631, %v1139
        %v1654 = vmul.f32 %v1650, %v1141
        %v1655 = vmul.f32 %v1651, %v1142
        %v1656 = vadd.f32 %v1652, %v1654
        %v1657 = vadd.f32 %v1653, %v1655
        %v1658 = vpack.c.bf16 %v1656, %v1656
        %v1659 = vpack.c.bf16 %v1657, %v1657
        %1660 = vst.msk [vmem:[#allocation3 + $0x4] sm:$0xf] %vm1486, %v1658
        %1661 = vst.msk [vmem:[#allocation3 + $0x8] sm:$0xf] %vm1486, %v1659
        %v1662 = vpack.c.bf16 %v1435, %v1435
        %1663 = vst.msk [vmem:[#allocation4] sm:$0xf] %vm1486, %v1662
        %v1664 = vpack.c.bf16 %v1332, %v1332
        %v1665 = vpack.c.bf16 %v1334, %v1334
        %1666 = vst.msk [vmem:[#allocation4 + $0x4] sm:$0xf] %vm1486, %v1664
        %1667 = vst.msk [vmem:[#allocation4 + $0x8] sm:$0xf] %vm1486, %v1665
        %v1668 = vld [vmem:[#allocation2] sm:$0xf]
        %v1669 = vld [vmem:[#allocation2 + $0x4] sm:$0xf]
        %v1670 = vld [vmem:[#allocation2 + $0x8] sm:$0xf]
        %v1671 = vld [vmem:[#allocation3] sm:$0xf]
        %v1672 = vld [vmem:[#allocation3 + $0x4] sm:$0xf]
        %v1673 = vld [vmem:[#allocation3 + $0x8] sm:$0xf]
        %v1674 = vld [vmem:[#allocation4] sm:$0xf]
        %v1675 = vld [vmem:[#allocation4 + $0x4] sm:$0xf]
        %v1676 = vld [vmem:[#allocation4 + $0x8] sm:$0xf]
        %v1680 = vunpack.c.l.b16 %v1668
        %v1681 = vunpack.c.l.b16 %v1669
        %v1682 = vunpack.c.l.b16 %v1670
        %v1683 = vpack.c.b16 %v1681, %v1680
        %v1684 = vpack.c.b16 %v1682, %v1682
        %v1688 = vunpack.c.l.b16 %v1671
        %v1689 = vunpack.c.l.b16 %v1672
        %v1690 = vunpack.c.l.b16 %v1673
        %v1691 = vpack.c.b16 %v1689, %v1688
        %v1692 = vpack.c.b16 %v1690, %v1690
        %v1694 = vsel %vm1443, %v1683, 0
        %v1697 = vsel %vm1443, %v1684, 0
        %v1700 = vsel %vm1443, %v1691, 0
        %v1703 = vsel %vm1443, %v1692, 0
        %1705 = vmatpush.bf16.xpose.msra.mxu0 0
        %1706 = vmatpush.bf16.xpose.msra.mxu0 0
        %1707 = vmatpush.bf16.xpose.msra.mxu0 0
        %1708 = vmatpush.bf16.xpose.msra.mxu0 0
        %1709 = vmatpush.bf16.xpose.msra.mxu0 0
        %1710 = vmatpush.bf16.xpose.msra.mxu0 0
        %1711 = vmatpush.bf16.xpose.msra.mxu0 %v1703
        %1712 = vmatpush.bf16.xpose.msra.mxu0 %v1700
        %1713 = vmatmul.bf16.gmra.mxu0 %v1694
        %v1714 = vpop.f32.mrf.mxu0
        %v1715 = vadd.f32 0.0, %v1714
        %v1716 = vpop.f32.mrf.mxu0
        %v1717 = vadd.f32 0.0, %v1716
        %1718 = vmatmul.bf16.gmra.mxu0 %v1697
        %v1719 = vpop.f32.mrf.mxu0
        %v1720 = vadd.f32 0.0, %v1719
        %v1721 = vpop.f32.mrf.mxu0
        %1722 = vdwg.mxu0
        %v1723 = vmul.f32 %v1715, 0.25
        %v1724 = vmul.f32 %v1717, 0.25
        %v1725 = vmul.f32 %v1720, 0.25
        %vm1726 = vcmask 195584
        %v1727 = vsel %vm1726, %v1723, -inf
        %1728 = vmax.xlane.f32.xlu0 %v1727
        %v1729 = vpop.xlane.xlu0 %1728
        %v1730 = vsel %vm1726, %v1724, -inf
        %1731 = vmax.xlane.f32.xlu0 %v1730
        %v1732 = vpop.xlane.xlu0 %1731
        %v1733 = vsel %vm1726, %v1725, -inf
        %1734 = vmax.xlane.f32.xlu0 %v1733
        %v1735 = vpop.xlane.xlu0 %1734
        %v1736 = vsub.f32 %v1723, %v1729
        %v1737 = vsub.f32 %v1724, %v1732
        %v1738 = vsub.f32 %v1725, %v1735
        %v1739 = vmul.f32 %v1736, 1.442695
        %v1740 = vpow.pop %v1739
        %v1741 = vmul.f32 %v1737, 1.442695
        %v1742 = vpow.pop %v1741
        %v1743 = vmul.f32 %v1738, 1.442695
        %v1744 = vpow.pop %v1743
        %v1745 = vsel %vm1726, %v1740, 0.0
        %1746 = vadd.xlane.f32.xlu0 %v1745
        %v1747 = vpop.xlane.xlu0 %1746
        %v1748 = vsel %vm1726, %v1742, 0.0
        %1749 = vadd.xlane.f32.xlu0 %v1748
        %v1750 = vpop.xlane.xlu0 %1749
        %v1751 = vsel %vm1726, %v1744, 0.0
        %1752 = vadd.xlane.f32.xlu0 %v1751
        %v1753 = vpop.xlane.xlu0 %1752
        %v1754 = vrcp.pop %v1747
        %v1755 = vrcp.pop %v1750
        %v1756 = vrcp.pop %v1753
        %v1757 = vmul.f32 %v1740, %v1754
        %v1758 = vmul.f32 %v1742, %v1755
        %v1759 = vmul.f32 %v1744, %v1756
        %v1760 = vpack.c.bf16 %v1758, %v1757
        %v1761 = vpack.c.bf16 %v1759, %v1759
        %v1765 = vunpack.c.l.b16 %v1674
        %v1766 = vunpack.c.l.b16 %v1675
        %v1767 = vunpack.c.l.b16 %v1676
        %v1768 = vpack.c.b16 %v1766, %v1765
        %v1769 = vpack.c.b16 %v1767, %v1767
        %v1772 = vsel %vm1726, %v1760, 0
        %v1775 = vsel %vm1726, %v1761, 0
        %vm1777 = vcmask 1043456
        %v1779 = vsel %vm1777, %v1769, 0
        %1781 = vmatpush.bf16.msra.mxu0 0
        %1782 = vmatpush.bf16.msra.mxu0 0
        %1783 = vmatpush.bf16.msra.mxu0 0
        %1784 = vmatpush.bf16.msra.mxu0 0
        %1785 = vmatpush.bf16.msra.mxu0 0
        %1786 = vmatpush.bf16.msra.mxu0 0
        %1787 = vmatpush.bf16.msra.mxu0 %v1779
        %1788 = vmatpush.bf16.msra.mxu0 %v1768
        %1789 = vmatmul.bf16.gmra.mxu0 %v1772
        %v1790 = vpop.f32.mrf.mxu0
        %v1791 = vadd.f32 0.0, %v1790
        %v1792 = vpop.f32.mrf.mxu0
        %v1793 = vadd.f32 0.0, %v1792
        %1794 = vmatmul.bf16.gmra.mxu0 %v1775
        %v1795 = vpop.f32.mrf.mxu0
        %v1796 = vadd.f32 0.0, %v1795
        %v1797 = vpop.f32.mrf.mxu0
        %1798 = vdwg.mxu0
        %v1799 = vpack.c.bf16 %v1791, %v1791
        %v1800 = vpack.c.bf16 %v1793, %v1793
        %v1801 = vpack.c.bf16 %v1796, %v1796
        %1802 = vst.msk [vmem:[#allocation5] sm:$0xf] %vm1486, %v1799
        %1803 = vst.msk [vmem:[#allocation5 + $0x4] sm:$0xf] %vm1486, %v1800
        %1804 = vst.msk [vmem:[#allocation5 + $0x8] sm:$0xf] %vm1486, %v1801
        %1806 = vrot.lane.b32.xlu0 %v1442, 112
        %v1807 = vpop.permute.xlu0 %1806
        %v1809 = vsel %vm1443, %v1807, 0.0
        %1810 = vadd.xlane.f32.xlu0 %v1809
        %v1811 = vpop.xlane.xlu0 %1810
        %v1812 = vmul.f32 %v1811, %v1453
        %v1813 = vadd.f32 %v1812, 1e-06
        %v1814 = vrsqrt.pop %v1813
        %v1815 = vmul.f32 %v1814, %v1813
        %v1816 = vmul.f32 %v1815, %v1814
        %v1817 = vmul.f32 0.5, %v1816
        %v1818 = vsub.f32 1.5, %v1817
        %v1819 = vmul.f32 %v1814, %v1818
        %vm1820 = vweird.f32 %v1813
        %vm1821 = vweird.f32 %v1814
        %vm1822 = vmor %vm1820, %vm1821
        %v1823 = vsel %vm1822, %v1814, %v1819
        %v1824 = vmul.f32 %v1369, %v1823
        %1825 = vrot.lane.b32.xlu0 %v1468, 16
        %v1826 = vpop.permute.xlu0 %1825
        %v1828 = vmul.f32 %v1824, %v1826
        %v1829 = vsub.f32 0.0, %v1828
        %1831 = vrot.lane.b32.xlu0 %v1829, 104
        %v1832 = vpop.permute.xlu0 %1831
        %1835 = vrot.lane.b32.xlu0 %v1828, 120
        %v1836 = vpop.permute.xlu0 %1835
        %v1838 = vsel %vm1480, %v1832, %v1836
        %1840 = vrot.lane.b32.xlu0 %v1137, 16
        %v1841 = vpop.permute.xlu0 %1840
        %v1843 = vmul.f32 %v1828, %v1841
        %v1844 = vmul.f32 %v1838, %v1140
        %1846 = vrot.lane.b32.xlu0 %v1844, 16
        %v1847 = vpop.permute.xlu0 %1846
        %v1849 = vadd.f32 %v1843, %v1847
        %v1850 = vpack.c.bf16 %v1849, %v1849
        %1852 = vrot.lane.b32.xlu0 %v1850, 112
        %v1853 = vpop.permute.xlu0 %1852
        %1855 = vst.msk [vmem:[#allocation2] sm:$0xf] %vm1486, %v1853
        %1858 = vrot.lane.b32.xlu0 %v1488, 112
        %v1859 = vpop.permute.xlu0 %1858
        %1860 = vrot.lane.b32.xlu0 %v1489, 112
        %v1861 = vpop.permute.xlu0 %1860
        %v1864 = vsel %vm1443, %v1859, 0.0
        %1865 = vadd.xlane.f32.xlu0 %v1864
        %v1866 = vpop.xlane.xlu0 %1865
        %v1867 = vsel %vm1443, %v1861, 0.0
        %1868 = vadd.xlane.f32.xlu0 %v1867
        %v1869 = vpop.xlane.xlu0 %1868
        %v1870 = vmul.f32 %v1866, %v1453
        %v1871 = vmul.f32 %v1869, %v1453
        %v1872 = vadd.f32 %v1870, 1e-06
        %v1873 = vadd.f32 %v1871, 1e-06
        %v1874 = vrsqrt.pop %v1872
        %v1875 = vmul.f32 %v1874, %v1872
        %v1876 = vmul.f32 %v1875, %v1874
        %v1877 = vmul.f32 0.5, %v1876
        %v1878 = vsub.f32 1.5, %v1877
        %v1879 = vmul.f32 %v1874, %v1878
        %vm1880 = vweird.f32 %v1872
        %vm1881 = vweird.f32 %v1874
        %vm1882 = vmor %vm1880, %vm1881
        %v1883 = vsel %vm1882, %v1874, %v1879
        %v1884 = vrsqrt.pop %v1873
        %v1885 = vmul.f32 %v1884, %v1873
        %v1886 = vmul.f32 %v1885, %v1884
        %v1887 = vmul.f32 0.5, %v1886
        %v1888 = vsub.f32 1.5, %v1887
        %v1889 = vmul.f32 %v1884, %v1888
        %vm1890 = vweird.f32 %v1873
        %vm1891 = vweird.f32 %v1884
        %vm1892 = vmor %vm1890, %vm1891
        %v1893 = vsel %vm1892, %v1884, %v1889
        %v1894 = vmul.f32 %v1264, %v1883
        %v1895 = vmul.f32 %v1266, %v1893
        %1896 = vrot.lane.b32.xlu0 %v1523, 16
        %v1897 = vpop.permute.xlu0 %1896
        %v1899 = vmul.f32 %v1894, %v1897
        %v1900 = vmul.f32 %v1895, %v1897
        %v1901 = vsub.f32 0.0, %v1899
        %v1902 = vsub.f32 0.0, %v1900
        %1905 = vrot.lane.b32.xlu0 %v1901, 104
        %v1906 = vpop.permute.xlu0 %1905
        %1907 = vrot.lane.b32.xlu0 %v1902, 104
        %v1908 = vpop.permute.xlu0 %1907
        %1913 = vrot.lane.b32.xlu0 %v1899, 120
        %v1914 = vpop.permute.xlu0 %1913
        %1915 = vrot.lane.b32.xlu0 %v1900, 120
        %v1916 = vpop.permute.xlu0 %1915
        %v1919 = vsel %vm1480, %v1906, %v1914
        %v1920 = vsel %vm1480, %v1908, %v1916
        %1923 = vrot.lane.b32.xlu0 %v1138, 16
        %v1924 = vpop.permute.xlu0 %1923
        %1925 = vrot.lane.b32.xlu0 %v1139, 16
        %v1926 = vpop.permute.xlu0 %1925
        %v1929 = vmul.f32 %v1899, %v1924
        %v1930 = vmul.f32 %v1900, %v1926
        %v1931 = vmul.f32 %v1919, %v1141
        %v1932 = vmul.f32 %v1920, %v1142
        %1935 = vrot.lane.b32.xlu0 %v1931, 16
        %v1936 = vpop.permute.xlu0 %1935
        %1937 = vrot.lane.b32.xlu0 %v1932, 16
        %v1938 = vpop.permute.xlu0 %1937
        %v1941 = vadd.f32 %v1929, %v1936
        %v1942 = vadd.f32 %v1930, %v1938
        %v1943 = vpack.c.bf16 %v1941, %v1941
        %v1944 = vpack.c.bf16 %v1942, %v1942
        %1947 = vrot.lane.b32.xlu0 %v1943, 112
        %v1948 = vpop.permute.xlu0 %1947
        %1949 = vrot.lane.b32.xlu0 %v1944, 112
        %v1950 = vpop.permute.xlu0 %1949
        %1953 = vst.msk [vmem:[#allocation2 + $0x4] sm:$0xf] %vm1486, %v1948
        %1954 = vst.msk [vmem:[#allocation2 + $0x8] sm:$0xf] %vm1486, %v1950
        %1956 = vrot.lane.b32.xlu0 %v1557, 112
        %v1957 = vpop.permute.xlu0 %1956
        %v1959 = vsel %vm1443, %v1957, 0.0
        %1960 = vadd.xlane.f32.xlu0 %v1959
        %v1961 = vpop.xlane.xlu0 %1960
        %v1962 = vmul.f32 %v1961, %v1453
        %v1963 = vadd.f32 %v1962, 1e-06
        %v1964 = vrsqrt.pop %v1963
        %v1965 = vmul.f32 %v1964, %v1963
        %v1966 = vmul.f32 %v1965, %v1964
        %v1967 = vmul.f32 0.5, %v1966
        %v1968 = vsub.f32 1.5, %v1967
        %v1969 = vmul.f32 %v1964, %v1968
        %vm1970 = vweird.f32 %v1963
        %vm1971 = vweird.f32 %v1964
        %vm1972 = vmor %vm1970, %vm1971
        %v1973 = vsel %vm1972, %v1964, %v1969
        %v1974 = vmul.f32 %v1402, %v1973
        %1975 = vrot.lane.b32.xlu0 %v1575, 16
        %v1976 = vpop.permute.xlu0 %1975
        %v1978 = vmul.f32 %v1974, %v1976
        %v1979 = vsub.f32 0.0, %v1978
        %1981 = vrot.lane.b32.xlu0 %v1979, 104
        %v1982 = vpop.permute.xlu0 %1981
        %1985 = vrot.lane.b32.xlu0 %v1978, 120
        %v1986 = vpop.permute.xlu0 %1985
        %v1988 = vsel %vm1480, %v1982, %v1986
        %v1989 = vmul.f32 %v1978, %v1841
        %v1990 = vmul.f32 %v1988, %v1140
        %1992 = vrot.lane.b32.xlu0 %v1990, 16
        %v1993 = vpop.permute.xlu0 %1992
        %v1995 = vadd.f32 %v1989, %v1993
        %v1996 = vpack.c.bf16 %v1995, %v1995
        %1998 = vrot.lane.b32.xlu0 %v1996, 112
        %v1999 = vpop.permute.xlu0 %1998
        %2001 = vst.msk [vmem:[#allocation3] sm:$0xf] %vm1486, %v1999
        %2004 = vrot.lane.b32.xlu0 %v1593, 112
        %v2005 = vpop.permute.xlu0 %2004
        %2006 = vrot.lane.b32.xlu0 %v1594, 112
        %v2007 = vpop.permute.xlu0 %2006
        %v2010 = vsel %vm1443, %v2005, 0.0
        %2011 = vadd.xlane.f32.xlu0 %v2010
        %v2012 = vpop.xlane.xlu0 %2011
        %v2013 = vsel %vm1443, %v2007, 0.0
        %2014 = vadd.xlane.f32.xlu0 %v2013
        %v2015 = vpop.xlane.xlu0 %2014
        %v2016 = vmul.f32 %v2012, %v1453
        %v2017 = vmul.f32 %v2015, %v1453
        %v2018 = vadd.f32 %v2016, 1e-06
        %v2019 = vadd.f32 %v2017, 1e-06
        %v2020 = vrsqrt.pop %v2018
        %v2021 = vmul.f32 %v2020, %v2018
        %v2022 = vmul.f32 %v2021, %v2020
        %v2023 = vmul.f32 0.5, %v2022
        %v2024 = vsub.f32 1.5, %v2023
        %v2025 = vmul.f32 %v2020, %v2024
        %vm2026 = vweird.f32 %v2018
        %vm2027 = vweird.f32 %v2020
        %vm2028 = vmor %vm2026, %vm2027
        %v2029 = vsel %vm2028, %v2020, %v2025
        %v2030 = vrsqrt.pop %v2019
        %v2031 = vmul.f32 %v2030, %v2019
        %v2032 = vmul.f32 %v2031, %v2030
        %v2033 = vmul.f32 0.5, %v2032
        %v2034 = vsub.f32 1.5, %v2033
        %v2035 = vmul.f32 %v2030, %v2034
        %vm2036 = vweird.f32 %v2019
        %vm2037 = vweird.f32 %v2030
        %vm2038 = vmor %vm2036, %vm2037
        %v2039 = vsel %vm2038, %v2030, %v2035
        %v2040 = vmul.f32 %v1298, %v2029
        %v2041 = vmul.f32 %v1300, %v2039
        %2042 = vrot.lane.b32.xlu0 %v1628, 16
        %v2043 = vpop.permute.xlu0 %2042
        %v2045 = vmul.f32 %v2040, %v2043
        %v2046 = vmul.f32 %v2041, %v2043
        %v2047 = vsub.f32 0.0, %v2045
        %v2048 = vsub.f32 0.0, %v2046
        %2051 = vrot.lane.b32.xlu0 %v2047, 104
        %v2052 = vpop.permute.xlu0 %2051
        %2053 = vrot.lane.b32.xlu0 %v2048, 104
        %v2054 = vpop.permute.xlu0 %2053
        %2059 = vrot.lane.b32.xlu0 %v2045, 120
        %v2060 = vpop.permute.xlu0 %2059
        %2061 = vrot.lane.b32.xlu0 %v2046, 120
        %v2062 = vpop.permute.xlu0 %2061
        %v2065 = vsel %vm1480, %v2052, %v2060
        %v2066 = vsel %vm1480, %v2054, %v2062
        %v2067 = vmul.f32 %v2045, %v1924
        %v2068 = vmul.f32 %v2046, %v1926
        %v2069 = vmul.f32 %v2065, %v1141
        %v2070 = vmul.f32 %v2066, %v1142
        %2073 = vrot.lane.b32.xlu0 %v2069, 16
        %v2074 = vpop.permute.xlu0 %2073
        %2075 = vrot.lane.b32.xlu0 %v2070, 16
        %v2076 = vpop.permute.xlu0 %2075
        %v2079 = vadd.f32 %v2067, %v2074
        %v2080 = vadd.f32 %v2068, %v2076
        %v2081 = vpack.c.bf16 %v2079, %v2079
        %v2082 = vpack.c.bf16 %v2080, %v2080
        %2085 = vrot.lane.b32.xlu0 %v2081, 112
        %v2086 = vpop.permute.xlu0 %2085
        %2087 = vrot.lane.b32.xlu0 %v2082, 112
        %v2088 = vpop.permute.xlu0 %2087
        %2091 = vst.msk [vmem:[#allocation3 + $0x4] sm:$0xf] %vm1486, %v2086
        %2092 = vst.msk [vmem:[#allocation3 + $0x8] sm:$0xf] %vm1486, %v2088
        %2094 = vrot.lane.b32.xlu0 %v1662, 112
        %v2095 = vpop.permute.xlu0 %2094
        %2097 = vst.msk [vmem:[#allocation4] sm:$0xf] %vm1486, %v2095
        %2100 = vrot.lane.b32.xlu0 %v1664, 112
        %v2101 = vpop.permute.xlu0 %2100
        %2102 = vrot.lane.b32.xlu0 %v1665, 112
        %v2103 = vpop.permute.xlu0 %2102
        %2106 = vst.msk [vmem:[#allocation4 + $0x4] sm:$0xf] %vm1486, %v2101
        %2107 = vst.msk [vmem:[#allocation4 + $0x8] sm:$0xf] %vm1486, %v2103
        %v2108 = vld [vmem:[#allocation2] sm:$0xf]
        %v2109 = vld [vmem:[#allocation2 + $0x4] sm:$0xf]
        %v2110 = vld [vmem:[#allocation2 + $0x8] sm:$0xf]
        %v2111 = vld [vmem:[#allocation3] sm:$0xf]
        %v2112 = vld [vmem:[#allocation3 + $0x4] sm:$0xf]
        %v2113 = vld [vmem:[#allocation3 + $0x8] sm:$0xf]
        %v2114 = vld [vmem:[#allocation4] sm:$0xf]
        %v2115 = vld [vmem:[#allocation4 + $0x4] sm:$0xf]
        %v2116 = vld [vmem:[#allocation4 + $0x8] sm:$0xf]
        %v2120 = vunpack.c.l.b16 %v2108
        %v2121 = vunpack.c.l.b16 %v2109
        %v2122 = vunpack.c.l.b16 %v2110
        %v2123 = vpack.c.b16 %v2121, %v2120
        %v2124 = vpack.c.b16 %v2122, %v2122
        %v2128 = vunpack.c.l.b16 %v2111
        %v2129 = vunpack.c.l.b16 %v2112
        %v2130 = vunpack.c.l.b16 %v2113
        %v2131 = vpack.c.b16 %v2129, %v2128
        %v2132 = vpack.c.b16 %v2130, %v2130
        %v2134 = vsel %vm1443, %v2123, 0
        %v2137 = vsel %vm1443, %v2124, 0
        %v2140 = vsel %vm1443, %v2131, 0
        %v2143 = vsel %vm1443, %v2132, 0
        %2145 = vmatpush.bf16.xpose.msra.mxu0 0
        %2146 = vmatpush.bf16.xpose.msra.mxu0 0
        %2147 = vmatpush.bf16.xpose.msra.mxu0 0
        %2148 = vmatpush.bf16.xpose.msra.mxu0 0
        %2149 = vmatpush.bf16.xpose.msra.mxu0 0
        %2150 = vmatpush.bf16.xpose.msra.mxu0 0
        %2151 = vmatpush.bf16.xpose.msra.mxu0 %v2143
        %2152 = vmatpush.bf16.xpose.msra.mxu0 %v2140
        %2153 = vmatmul.bf16.gmra.mxu0 %v2134
        %v2154 = vpop.f32.mrf.mxu0
        %v2155 = vadd.f32 0.0, %v2154
        %v2156 = vpop.f32.mrf.mxu0
        %v2157 = vadd.f32 0.0, %v2156
        %2158 = vmatmul.bf16.gmra.mxu0 %v2137
        %v2159 = vpop.f32.mrf.mxu0
        %v2160 = vadd.f32 0.0, %v2159
        %v2161 = vpop.f32.mrf.mxu0
        %2162 = vdwg.mxu0
        %v2163 = vmul.f32 %v2155, 0.25
        %v2164 = vmul.f32 %v2157, 0.25
        %v2165 = vmul.f32 %v2160, 0.25
        %v2166 = vsel %vm1726, %v2163, -inf
        %2167 = vmax.xlane.f32.xlu0 %v2166
        %v2168 = vpop.xlane.xlu0 %2167
        %v2169 = vsel %vm1726, %v2164, -inf
        %2170 = vmax.xlane.f32.xlu0 %v2169
        %v2171 = vpop.xlane.xlu0 %2170
        %v2172 = vsel %vm1726, %v2165, -inf
        %2173 = vmax.xlane.f32.xlu0 %v2172
        %v2174 = vpop.xlane.xlu0 %2173
        %v2175 = vsub.f32 %v2163, %v2168
        %v2176 = vsub.f32 %v2164, %v2171
        %v2177 = vsub.f32 %v2165, %v2174
        %v2178 = vmul.f32 %v2175, 1.442695
        %v2179 = vpow.pop %v2178
        %v2180 = vmul.f32 %v2176, 1.442695
        %v2181 = vpow.pop %v2180
        %v2182 = vmul.f32 %v2177, 1.442695
        %v2183 = vpow.pop %v2182
        %v2184 = vsel %vm1726, %v2179, 0.0
        %2185 = vadd.xlane.f32.xlu0 %v2184
        %v2186 = vpop.xlane.xlu0 %2185
        %v2187 = vsel %vm1726, %v2181, 0.0
        %2188 = vadd.xlane.f32.xlu0 %v2187
        %v2189 = vpop.xlane.xlu0 %2188
        %v2190 = vsel %vm1726, %v2183, 0.0
        %2191 = vadd.xlane.f32.xlu0 %v2190
        %v2192 = vpop.xlane.xlu0 %2191
        %v2193 = vrcp.pop %v2186
        %v2194 = vrcp.pop %v2189
        %v2195 = vrcp.pop %v2192
        %v2196 = vmul.f32 %v2179, %v2193
        %v2197 = vmul.f32 %v2181, %v2194
        %v2198 = vmul.f32 %v2183, %v2195
        %v2199 = vpack.c.bf16 %v2197, %v2196
        %v2200 = vpack.c.bf16 %v2198, %v2198
        %v2204 = vunpack.c.l.b16 %v2114
        %v2205 = vunpack.c.l.b16 %v2115
        %v2206 = vunpack.c.l.b16 %v2116
        %v2207 = vpack.c.b16 %v2205, %v2204
        %v2208 = vpack.c.b16 %v2206, %v2206
        %v2211 = vsel %vm1726, %v2199, 0
        %v2214 = vsel %vm1726, %v2200, 0
        %v2217 = vsel %vm1777, %v2208, 0
        %2219 = vmatpush.bf16.msra.mxu0 0
        %2220 = vmatpush.bf16.msra.mxu0 0
        %2221 = vmatpush.bf16.msra.mxu0 0
        %2222 = vmatpush.bf16.msra.mxu0 0
        %2223 = vmatpush.bf16.msra.mxu0 0
        %2224 = vmatpush.bf16.msra.mxu0 0
        %2225 = vmatpush.bf16.msra.mxu0 %v2217
        %2226 = vmatpush.bf16.msra.mxu0 %v2207
        %2227 = vmatmul.bf16.gmra.mxu0 %v2211
        %v2228 = vpop.f32.mrf.mxu0
        %v2229 = vadd.f32 0.0, %v2228
        %v2230 = vpop.f32.mrf.mxu0
        %v2231 = vadd.f32 0.0, %v2230
        %2232 = vmatmul.bf16.gmra.mxu0 %v2214
        %v2233 = vpop.f32.mrf.mxu0
        %v2234 = vadd.f32 0.0, %v2233
        %v2235 = vpop.f32.mrf.mxu0
        %2236 = vdwg.mxu0
        %v2237 = vpack.c.bf16 %v2229, %v2229
        %v2238 = vpack.c.bf16 %v2231, %v2231
        %v2239 = vpack.c.bf16 %v2234, %v2234
        %2243 = vrot.lane.b32.xlu0 %v2237, 16
        %v2244 = vpop.permute.xlu0 %2243
        %2245 = vrot.lane.b32.xlu0 %v2238, 16
        %v2246 = vpop.permute.xlu0 %2245
        %2247 = vrot.lane.b32.xlu0 %v2239, 16
        %v2248 = vpop.permute.xlu0 %2247
        %vm2252 = vcmask 257152
        %2253 = vst.msk [vmem:[#allocation5] sm:$0xf] %vm2252, %v2244
        %2254 = vst.msk [vmem:[#allocation5 + $0x4] sm:$0xf] %vm2252, %v2246
        %2255 = vst.msk [vmem:[#allocation5 + $0x8] sm:$0xf] %vm2252, %v2248
        %v2256 = vld [vmem:[#allocation5] sm:$0xf]
        %v2257 = vld [vmem:[#allocation5 + $0x4] sm:$0xf]
        %v2258 = vld [vmem:[#allocation5 + $0x8] sm:$0xf]
        %v2259 = vld [vmem:[%s45] sm:$0xf]
        %v2260 = vld [vmem:[%s45 + $0x4] sm:$0xf]
        %v2261 = vld [vmem:[%s45 + $0x8] sm:$0xf]
        %v2262 = vld [vmem:[%s45 + $0xc] sm:$0xf]
        %v2263 = vld [vmem:[%s47] sm:$0x1]
        %v2265 = vperm.slane %v2263, 0
        %v2269 = vunpack.c.l.b16 %v2257
        %v2270 = vunpack.c.l.b16 %v2258
        %v2271 = vpack.c.b16 %v2270, %v2269
        %v2276 = vunpack.c.l.b16 %v2259
        %v2277 = vunpack.c.l.b16 %v2260
        %v2278 = vunpack.c.l.b16 %v2261
        %v2279 = vunpack.c.l.b16 %v2262
        %v2280 = vpack.c.b16 %v2277, %v2276
        %v2281 = vpack.c.b16 %v2279, %v2278
        %v2285 = vsel %vm1143, %v2271, 0
        %2287 = vmatpush.bf16.msra.mxu0 0
        %2288 = vmatpush.bf16.msra.mxu0 0
        %2289 = vmatpush.bf16.msra.mxu0 0
        %2290 = vmatpush.bf16.msra.mxu0 0
        %2291 = vmatpush.bf16.msra.mxu0 0
        %2292 = vmatpush.bf16.msra.mxu0 0
        %2293 = vmatpush.bf16.msra.mxu0 %v2281
        %2294 = vmatpush.bf16.msra.mxu0 %v2280
        %2295 = vmatmul.bf16.gmra.mxu0 %v2285
        %v2296 = vpop.f32.mrf.mxu0
        %v2297 = vadd.f32 %v2265, %v2296
        %v2298 = vpop.f32.mrf.mxu0
        %v2299 = vadd.f32 %v2265, %v2298
        %2300 = vdwg.mxu0
        %v2301 = vld [vmem:[%s49] sm:$0xf]
        %v2302 = vld [vmem:[%s49 + $0x4] sm:$0xf]
        %v2303 = vld [vmem:[%s49 + $0x8] sm:$0xf]
        %v2304 = vld [vmem:[%s49 + $0xc] sm:$0xf]
        %v2305 = vld [vmem:[%s51] sm:$0x1]
        %v2307 = vperm.slane %v2305, 0
        %v2313 = vunpack.c.l.b16 %v2301
        %v2314 = vunpack.c.l.b16 %v2302
        %v2315 = vunpack.c.l.b16 %v2303
        %v2316 = vunpack.c.l.b16 %v2304
        %v2317 = vpack.c.b16 %v2314, %v2313
        %v2318 = vpack.c.b16 %v2316, %v2315
        %v2322 = vsel %vm1143, %v2256, 0
        %2324 = vmatpush.bf16.msra.mxu0 0
        %2325 = vmatpush.bf16.msra.mxu0 0
        %2326 = vmatpush.bf16.msra.mxu0 0
        %2327 = vmatpush.bf16.msra.mxu0 0
        %2328 = vmatpush.bf16.msra.mxu0 0
        %2329 = vmatpush.bf16.msra.mxu0 0
        %2330 = vmatpush.bf16.msra.mxu0 %v2318
        %2331 = vmatpush.bf16.msra.mxu0 %v2317
        %2332 = vmatmul.bf16.gmra.mxu0 %v2322
        %v2333 = vpop.f32.mrf.mxu0
        %v2334 = vadd.f32 %v2307, %v2333
        %v2335 = vpop.f32.mrf.mxu0
        %2336 = vdwg.mxu0
        %v2337 = vperm.slane %v1135, 2
        %v2338 = vmul.f32 %v2337, %v2297
        %v2339 = vmul.f32 %v2337, %v2299
        %v2340 = vadd.f32 %v1132, %v2338
        %v2341 = vadd.f32 %v1133, %v2339
        %v2342 = vsel %vm1143, %v2340, 0.0
        %2343 = vadd.xlane.f32.xlu0 %v2342
        %v2344 = vpop.xlane.xlu0 %2343
        %v2345 = vsel %vm1143, %v2341, 0.0
        %2346 = vadd.xlane.f32.xlu0 %v2345
        %v2347 = vpop.xlane.xlu0 %2346
        %v2348 = vmul.f32 %v2344, %v1156
        %v2349 = vmul.f32 %v2347, %v1156
        %v2350 = vsub.f32 %v2340, %v2348
        %v2351 = vsub.f32 %v2341, %v2349
        %v2352 = vmul.f32 %v2350, %v2350
        %v2353 = vmul.f32 %v2351, %v2351
        %v2354 = vsel %vm1143, %v2352, 0.0
        %2355 = vadd.xlane.f32.xlu0 %v2354
        %v2356 = vpop.xlane.xlu0 %2355
        %v2357 = vsel %vm1143, %v2353, 0.0
        %2358 = vadd.xlane.f32.xlu0 %v2357
        %v2359 = vpop.xlane.xlu0 %2358
        %v2360 = vmul.f32 %v2356, %v1156
        %v2361 = vmul.f32 %v2359, %v1156
        %v2362 = vadd.f32 %v2360, 1e-06
        %v2363 = vadd.f32 %v2361, 1e-06
        %v2364 = vrsqrt.pop %v2362
        %v2365 = vmul.f32 %v2364, %v2362
        %v2366 = vmul.f32 %v2365, %v2364
        %v2367 = vmul.f32 0.5, %v2366
        %v2368 = vsub.f32 1.5, %v2367
        %v2369 = vmul.f32 %v2364, %v2368
        %vm2370 = vweird.f32 %v2362
        %vm2371 = vweird.f32 %v2364
        %vm2372 = vmor %vm2370, %vm2371
        %v2373 = vsel %vm2372, %v2364, %v2369
        %v2374 = vrsqrt.pop %v2363
        %v2375 = vmul.f32 %v2374, %v2363
        %v2376 = vmul.f32 %v2375, %v2374
        %v2377 = vmul.f32 0.5, %v2376
        %v2378 = vsub.f32 1.5, %v2377
        %v2379 = vmul.f32 %v2374, %v2378
        %vm2380 = vweird.f32 %v2363
        %vm2381 = vweird.f32 %v2374
        %vm2382 = vmor %vm2380, %vm2381
        %v2383 = vsel %vm2382, %v2374, %v2379
        %v2384 = vmul.f32 %v2350, %v2373
        %v2385 = vmul.f32 %v2351, %v2383
        %v2386 = vperm.slane %v1195, 4
        %v2387 = vmul.f32 %v2384, %v2386
        %v2388 = vmul.f32 %v2385, %v2386
        %v2389 = vperm.slane %v1135, 3
        %v2390 = vadd.f32 %v2387, %v2389
        %v2391 = vadd.f32 %v2388, %v2389
        %v2392 = vpack.c.bf16 %v2391, %v2390
        %v2393 = vld [vmem:[%s53] sm:$0xf]
        %v2394 = vld [vmem:[%s53 + $0x4] sm:$0xf]
        %v2395 = vld [vmem:[%s53 + $0x8] sm:$0xf]
        %v2396 = vld [vmem:[%s53 + $0xc] sm:$0xf]
        %v2397 = vld [vmem:[%s55] sm:$0x1]
        %v2399 = vperm.slane %v2397, 0
        %v2405 = vunpack.c.l.b16 %v2393
        %v2406 = vunpack.c.l.b16 %v2394
        %v2407 = vunpack.c.l.b16 %v2395
        %v2408 = vunpack.c.l.b16 %v2396
        %v2409 = vpack.c.b16 %v2406, %v2405
        %v2410 = vpack.c.b16 %v2408, %v2407
        %v2414 = vsel %vm1143, %v2392, 0
        %2416 = vmatpush.bf16.msra.mxu0 0
        %2417 = vmatpush.bf16.msra.mxu0 0
        %2418 = vmatpush.bf16.msra.mxu0 0
        %2419 = vmatpush.bf16.msra.mxu0 0
        %2420 = vmatpush.bf16.msra.mxu0 0
        %2421 = vmatpush.bf16.msra.mxu0 0
        %2422 = vmatpush.bf16.msra.mxu0 %v2410
        %2423 = vmatpush.bf16.msra.mxu0 %v2409
        %2424 = vmatmul.bf16.gmra.mxu0 %v2414
        %v2425 = vpop.f32.mrf.mxu0
        %v2426 = vadd.f32 %v2399, %v2425
        %v2427 = vpop.f32.mrf.mxu0
        %v2428 = vadd.f32 %v2399, %v2427
        %2429 = vdwg.mxu0
        %v2430 = vmul.f32 %v2426, 0.5
        %v2431 = vmul.f32 %v2428, 0.5
        %v2432 = vmul.f32 %v2426, 0.044715
        %v2433 = vmul.f32 %v2428, 0.044715
        %v2434 = vmul.f32 %v2432, %v2426
        %v2435 = vmul.f32 %v2433, %v2428
        %v2436 = vmul.f32 %v2434, %v2426
        %v2437 = vmul.f32 %v2435, %v2428
        %v2438 = vadd.f32 %v2426, %v2436
        %v2439 = vadd.f32 %v2428, %v2437
        %v2440 = vmul.f32 %v2438, 0.7978846
        %v2441 = vmul.f32 %v2439, 0.7978846
        %v2442 = vtanh.pop %v2440
        %v2443 = vtanh.pop %v2441
        %v2444 = vadd.f32 %v2442, 1.0
        %v2445 = vadd.f32 %v2443, 1.0
        %v2446 = vmul.f32 %v2430, %v2444
        %v2447 = vmul.f32 %v2431, %v2445
        %v2448 = vpack.c.bf16 %v2447, %v2446
        %v2449 = vld [vmem:[%s57] sm:$0xf]
        %v2450 = vld [vmem:[%s57 + $0x4] sm:$0xf]
        %v2451 = vld [vmem:[%s57 + $0x8] sm:$0xf]
        %v2452 = vld [vmem:[%s57 + $0xc] sm:$0xf]
        %v2453 = vld [vmem:[%s57 + $0x10] sm:$0xf]
        %v2454 = vld [vmem:[%s57 + $0x14] sm:$0xf]
        %v2455 = vld [vmem:[%s57 + $0x18] sm:$0xf]
        %v2456 = vld [vmem:[%s57 + $0x1c] sm:$0xf]
        %v2457 = vld [vmem:[%s57 + $0x20] sm:$0xf]
        %v2458 = vld [vmem:[%s57 + $0x24] sm:$0xf]
        %v2459 = vld [vmem:[%s57 + $0x28] sm:$0xf]
        %v2460 = vld [vmem:[%s57 + $0x2c] sm:$0xf]
        %v2461 = vld [vmem:[%s57 + $0x30] sm:$0xf]
        %v2462 = vld [vmem:[%s57 + $0x34] sm:$0xf]
        %v2463 = vld [vmem:[%s57 + $0x38] sm:$0xf]
        %v2464 = vld [vmem:[%s57 + $0x3c] sm:$0xf]
        %v2465 = vld [vmem:[%s59] sm:$0x1]
        %v2467 = vperm.slane %v2465, 0
        %v2485 = vunpack.c.l.b16 %v2449
        %v2486 = vunpack.c.l.b16 %v2450
        %v2487 = vunpack.c.l.b16 %v2451
        %v2488 = vunpack.c.l.b16 %v2452
        %v2489 = vunpack.c.l.b16 %v2453
        %v2490 = vunpack.c.l.b16 %v2454
        %v2491 = vunpack.c.l.b16 %v2455
        %v2492 = vunpack.c.l.b16 %v2456
        %v2493 = vunpack.c.l.b16 %v2457
        %v2494 = vunpack.c.l.b16 %v2458
        %v2495 = vunpack.c.l.b16 %v2459
        %v2496 = vunpack.c.l.b16 %v2460
        %v2497 = vunpack.c.l.b16 %v2461
        %v2498 = vunpack.c.l.b16 %v2462
        %v2499 = vunpack.c.l.b16 %v2463
        %v2500 = vunpack.c.l.b16 %v2464
        %v2501 = vpack.c.b16 %v2486, %v2485
        %v2502 = vpack.c.b16 %v2488, %v2487
        %v2503 = vpack.c.b16 %v2490, %v2489
        %v2504 = vpack.c.b16 %v2492, %v2491
        %v2505 = vpack.c.b16 %v2494, %v2493
        %v2506 = vpack.c.b16 %v2496, %v2495
        %v2507 = vpack.c.b16 %v2498, %v2497
        %v2508 = vpack.c.b16 %v2500, %v2499
        %2517 = vmatpush.bf16.msra.mxu0 %v2508
        %2518 = vmatpush.bf16.msra.mxu0 %v2507
        %2519 = vmatpush.bf16.msra.mxu0 %v2506
        %2520 = vmatpush.bf16.msra.mxu0 %v2505
        %2521 = vmatpush.bf16.msra.mxu0 %v2504
        %2522 = vmatpush.bf16.msra.mxu0 %v2503
        %2523 = vmatpush.bf16.msra.mxu0 %v2502
        %2524 = vmatpush.bf16.msra.mxu0 %v2501
        %2525 = vmatmul.bf16.gmra.mxu0 %v2448
        %v2526 = vpop.f32.mrf.mxu0
        %v2527 = vadd.f32 %v2467, %v2526
        %v2528 = vpop.f32.mrf.mxu0
        %v2529 = vadd.f32 %v2467, %v2528
        %2530 = vdwg.mxu0
        %v2531 = vperm.slane %v1135, 5
        %v2532 = vmul.f32 %v2531, %v2527
        %v2533 = vmul.f32 %v2531, %v2529
        %v2534 = vadd.f32 %v2340, %v2532
        %v2535 = vadd.f32 %v2341, %v2533
        %2536 = vst.msk [vmem:[%s1113] sm:$0xff] %vm1143, %v2534
        %2537 = vst.msk [vmem:[%s1113 + $0x8] sm:$0xff] %vm1143, %v2535
        %v2538 = vperm.slane %v1136, 2
        %v2539 = vmul.f32 %v2538, %v2334
        %v2540 = vadd.f32 %v1134, %v2539
        %v2541 = vsel %vm1143, %v2540, 0.0
        %2542 = vadd.xlane.f32.xlu0 %v2541
        %v2543 = vpop.xlane.xlu0 %2542
        %v2544 = vmul.f32 %v2543, %v1156
        %v2545 = vsub.f32 %v2540, %v2544
        %v2546 = vmul.f32 %v2545, %v2545
        %v2547 = vsel %vm1143, %v2546, 0.0
        %2548 = vadd.xlane.f32.xlu0 %v2547
        %v2549 = vpop.xlane.xlu0 %2548
        %v2550 = vmul.f32 %v2549, %v1156
        %v2551 = vadd.f32 %v2550, 1e-06
        %v2552 = vrsqrt.pop %v2551
        %v2553 = vmul.f32 %v2552, %v2551
        %v2554 = vmul.f32 %v2553, %v2552
        %v2555 = vmul.f32 0.5, %v2554
        %v2556 = vsub.f32 1.5, %v2555
        %v2557 = vmul.f32 %v2552, %v2556
        %vm2558 = vweird.f32 %v2551
        %vm2559 = vweird.f32 %v2552
        %vm2560 = vmor %vm2558, %vm2559
        %v2561 = vsel %vm2560, %v2552, %v2557
        %v2562 = vmul.f32 %v2545, %v2561
        %v2563 = vperm.slane %v1224, 4
        %v2564 = vmul.f32 %v2562, %v2563
        %v2565 = vperm.slane %v1136, 3
        %v2566 = vadd.f32 %v2564, %v2565
        %v2567 = vpack.c.bf16 %v2566, %v2566
        %v2568 = vld [vmem:[%s61] sm:$0xf]
        %v2569 = vld [vmem:[%s61 + $0x4] sm:$0xf]
        %v2570 = vld [vmem:[%s61 + $0x8] sm:$0xf]
        %v2571 = vld [vmem:[%s61 + $0xc] sm:$0xf]
        %v2572 = vld [vmem:[%s63] sm:$0x1]
        %v2574 = vperm.slane %v2572, 0
        %v2580 = vunpack.c.l.b16 %v2568
        %v2581 = vunpack.c.l.b16 %v2569
        %v2582 = vunpack.c.l.b16 %v2570
        %v2583 = vunpack.c.l.b16 %v2571
        %v2584 = vpack.c.b16 %v2581, %v2580
        %v2585 = vpack.c.b16 %v2583, %v2582
        %v2589 = vsel %vm1143, %v2567, 0
        %2591 = vmatpush.bf16.msra.mxu0 0
        %2592 = vmatpush.bf16.msra.mxu0 0
        %2593 = vmatpush.bf16.msra.mxu0 0
        %2594 = vmatpush.bf16.msra.mxu0 0
        %2595 = vmatpush.bf16.msra.mxu0 0
        %2596 = vmatpush.bf16.msra.mxu0 0
        %2597 = vmatpush.bf16.msra.mxu0 %v2585
        %2598 = vmatpush.bf16.msra.mxu0 %v2584
        %2599 = vmatmul.bf16.gmra.mxu0 %v2589
        %v2600 = vpop.f32.mrf.mxu0
        %v2601 = vadd.f32 %v2574, %v2600
        %v2602 = vpop.f32.mrf.mxu0
        %2603 = vdwg.mxu0
        %v2604 = vmul.f32 %v2601, 0.5
        %v2605 = vmul.f32 %v2601, 0.044715
        %v2606 = vmul.f32 %v2605, %v2601
        %v2607 = vmul.f32 %v2606, %v2601
        %v2608 = vadd.f32 %v2601, %v2607
        %v2609 = vmul.f32 %v2608, 0.7978846
        %v2610 = vtanh.pop %v2609
        %v2611 = vadd.f32 %v2610, 1.0
        %v2612 = vmul.f32 %v2604, %v2611
        %v2613 = vpack.c.bf16 %v2612, %v2612
        %v2614 = vld [vmem:[%s65] sm:$0xf]
        %v2615 = vld [vmem:[%s65 + $0x4] sm:$0xf]
        %v2616 = vld [vmem:[%s65 + $0x8] sm:$0xf]
        %v2617 = vld [vmem:[%s65 + $0xc] sm:$0xf]
        %v2618 = vld [vmem:[%s65 + $0x10] sm:$0xf]
        %v2619 = vld [vmem:[%s65 + $0x14] sm:$0xf]
        %v2620 = vld [vmem:[%s65 + $0x18] sm:$0xf]
        %v2621 = vld [vmem:[%s65 + $0x1c] sm:$0xf]
        %v2622 = vld [vmem:[%s65 + $0x20] sm:$0xf]
        %v2623 = vld [vmem:[%s65 + $0x24] sm:$0xf]
        %v2624 = vld [vmem:[%s65 + $0x28] sm:$0xf]
        %v2625 = vld [vmem:[%s65 + $0x2c] sm:$0xf]
        %v2626 = vld [vmem:[%s65 + $0x30] sm:$0xf]
        %v2627 = vld [vmem:[%s65 + $0x34] sm:$0xf]
        %v2628 = vld [vmem:[%s65 + $0x38] sm:$0xf]
        %v2629 = vld [vmem:[%s65 + $0x3c] sm:$0xf]
        %v2630 = vld [vmem:[%s67] sm:$0x1]
        %v2632 = vperm.slane %v2630, 0
        %v2650 = vunpack.c.l.b16 %v2614
        %v2651 = vunpack.c.l.b16 %v2615
        %v2652 = vunpack.c.l.b16 %v2616
        %v2653 = vunpack.c.l.b16 %v2617
        %v2654 = vunpack.c.l.b16 %v2618
        %v2655 = vunpack.c.l.b16 %v2619
        %v2656 = vunpack.c.l.b16 %v2620
        %v2657 = vunpack.c.l.b16 %v2621
        %v2658 = vunpack.c.l.b16 %v2622
        %v2659 = vunpack.c.l.b16 %v2623
        %v2660 = vunpack.c.l.b16 %v2624
        %v2661 = vunpack.c.l.b16 %v2625
        %v2662 = vunpack.c.l.b16 %v2626
        %v2663 = vunpack.c.l.b16 %v2627
        %v2664 = vunpack.c.l.b16 %v2628
        %v2665 = vunpack.c.l.b16 %v2629
        %v2666 = vpack.c.b16 %v2651, %v2650
        %v2667 = vpack.c.b16 %v2653, %v2652
        %v2668 = vpack.c.b16 %v2655, %v2654
        %v2669 = vpack.c.b16 %v2657, %v2656
        %v2670 = vpack.c.b16 %v2659, %v2658
        %v2671 = vpack.c.b16 %v2661, %v2660
        %v2672 = vpack.c.b16 %v2663, %v2662
        %v2673 = vpack.c.b16 %v2665, %v2664
        %2682 = vmatpush.bf16.msra.mxu0 %v2673
        %2683 = vmatpush.bf16.msra.mxu0 %v2672
        %2684 = vmatpush.bf16.msra.mxu0 %v2671
        %2685 = vmatpush.bf16.msra.mxu0 %v2670
        %2686 = vmatpush.bf16.msra.mxu0 %v2669
        %2687 = vmatpush.bf16.msra.mxu0 %v2668
        %2688 = vmatpush.bf16.msra.mxu0 %v2667
        %2689 = vmatpush.bf16.msra.mxu0 %v2666
        %2690 = vmatmul.bf16.gmra.mxu0 %v2613
        %v2691 = vpop.f32.mrf.mxu0
        %v2692 = vadd.f32 %v2632, %v2691
        %v2693 = vpop.f32.mrf.mxu0
        %2694 = vdwg.mxu0
        %v2695 = vperm.slane %v1136, 5
        %v2696 = vmul.f32 %v2695, %v2692
        %v2697 = vadd.f32 %v2540, %v2696
        %2698 = vst.msk [vmem:[%s1106] sm:$0xff] %vm1143, %v2697
        %s2699 = sand.u32 %s831, 1
        %s2700 = scalar_lea.sflag [#allocation7], %s2699
        %s2701 = sand.u32 %s831, 1
        %s2702 = smul.addr %s2701, 8
        %s2703 = scalar_lea.vmem [#allocation6], %s2702
        %s2704 = sand.u32 %s857, 1
        %s2705 = scalar_lea.sflag [#allocation9], %s2704
        %s2706 = sand.u32 %s857, 1
        %s2707 = smul.addr %s2706, 16
        %s2708 = scalar_lea.vmem [#allocation8], %s2707
        // Predicated region
        $region157: #{tpu_custom_call.1} parent=155 // pred_check
          %p2709 = pneg %p841
        $region158: #{tpu_custom_call.1} parent=155 // pred_check_branch
          %2711 = sbr.rel (%p2709) target = $region160
        $region159: #{tpu_custom_call.1} parent=155 // pred_region
          %2713 = vsyncadd %s2700, 0
          %s2714 = smul.addr %s89, 8
          %s2715 = scalar_lea.hbm %s69, %s2714
          %s2717 = sshll.u32 %s2703, 4
          %s2718 = int_to_ptr.vmem [resolvable:$true] %s2717
          %s2719 = sshll.u32 %s2715, 4
          %s2720 = int_to_ptr.hbm [resolvable:$true] %s2719
          %2722 = dma.vmem_to_hbm [thread:$0]  %s2718, 128, %s2720, %s2700
        $region160: #{tpu_custom_call.1} parent=155 // pred_fallthru
          _
        // Predicated region
        $region161: #{tpu_custom_call.1} parent=155 // pred_check
          %p2723 = pneg %p867
        $region162: #{tpu_custom_call.1} parent=155 // pred_check_branch
          %2725 = sbr.rel (%p2723) target = $region164
        $region163: #{tpu_custom_call.1} parent=155 // pred_region
          %2727 = vsyncadd %s2705, 0
          %s2728 = smul.addr %s89, 2
          %s2729 = smul.addr %s2728, 8
          %s2730 = scalar_lea.hbm %s71, %s2729
          %s2731 = sshll.u32 %s2708, 4
          %s2732 = int_to_ptr.vmem [resolvable:$true] %s2731
          %s2733 = sshll.u32 %s2730, 4
          %s2734 = int_to_ptr.hbm [resolvable:$true] %s2733
          %2739 = dma.vmem_to_hbm [thread:$0]  %s2732, 256, %s2734, %s2705, 128, 128, 8
        $region164: #{tpu_custom_call.1} parent=155 // pred_fallthru
          _
      $region156: #{tpu_custom_call.1} parent=5 // pred_fallthru
        _
      %p2740 = scmp.le.s32.totalorder 2, %s84
      // Predicated region
      $region165: #{tpu_custom_call.1} parent=5 // pred_check
        %p2741 = pneg %p2740
      $region166: #{tpu_custom_call.1} parent=5 // pred_check_branch
        %2743 = sbr.rel (%p2741) target = $region168
      $region167: #{tpu_custom_call.1} parent=5 // pred_region
        %s2744 = ssub.s32 %s84, 2
        // Predicated region
        $region169: #{tpu_custom_call.1} parent=167 // pred_check
          %p2745 = pneg %p847
        $region170: #{tpu_custom_call.1} parent=167 // pred_check_branch
          %2747 = sbr.rel (%p2745) target = $region172
        $region171: #{tpu_custom_call.1} parent=167 // pred_region
          %s2748 = sand.u32 %s832, 1
          %s2749 = scalar_lea.sflag [#allocation7], %s2748
          %s2750 = sand.u32 %s832, 1
          %s2751 = smul.addr %s2750, 8
          %s2752 = scalar_lea.vmem [#allocation6], %s2751
          %2754 = dma.done %s2749, 128
        $region172: #{tpu_custom_call.1} parent=167 // pred_fallthru
          _
        // Predicated region
        $region173: #{tpu_custom_call.1} parent=167 // pred_check
          %p2755 = pneg %p873
        $region174: #{tpu_custom_call.1} parent=167 // pred_check_branch
          %2757 = sbr.rel (%p2755) target = $region176
        $region175: #{tpu_custom_call.1} parent=167 // pred_region
          %s2758 = sand.u32 %s858, 1
          %s2759 = scalar_lea.sflag [#allocation9], %s2758
          %s2760 = sand.u32 %s858, 1
          %s2761 = smul.addr %s2760, 16
          %s2762 = scalar_lea.vmem [#allocation8], %s2761
          %2764 = dma.done %s2759, 256
        $region176: #{tpu_custom_call.1} parent=167 // pred_fallthru
          _
      $region168: #{tpu_custom_call.1} parent=5 // pred_fallthru
        _
    $region6: #{tpu_custom_call.1} parent=1 // loop_footer
      %s88 = sadd.s32 1, %s84
    $region7: #{tpu_custom_call.1} parent=1 // loop_footer_branch
      %83 = sbr.rel target = $region3
    $region8: #{tpu_custom_call.1} parent=1 // loop_exit
      _
    %2765 = vsyncpa [#allocation7], 1
    %s2766 = scalar_lea.sflag [#allocation7], 1
    %2767 = vsyncpa %s2766, 1
    %2768 = vsyncpa [#allocation9], 1
    %s2769 = scalar_lea.sflag [#allocation9], 1
    %2770 = vsyncpa %s2769, 1

// kernel: tpu_custom_call.1
$region0: #{tpu_custom_call.1}
  #allocation0 [shape = 'u32[]', space=smem, size = 0x4, offset = 0x4, fixed_abs, tag = 'smem constant byte address 0x4 - core index']
  #allocation1 [shape = 'u32[72,128]{1,0:T(1,128)}', space=vmem, size = 0x9000, scoped, tag = 'internal scratch']
  #allocation2 [shape = 'bf16[24,16]{1,0:T(8,128)(2,1)}', space=vmem, size = 0x1800, scoped, tag = 'scratch operand']
  #allocation3 [shape = 'bf16[24,16]{1,0:T(8,128)(2,1)}', space=vmem, size = 0x1800, scoped, tag = 'scratch operand']
  #allocation4 [shape = 'bf16[24,16]{1,0:T(8,128)(2,1)}', space=vmem, size = 0x1800, scoped, tag = 'scratch operand']
  #allocation5 [shape = 'bf16[24,32]{1,0:T(8,128)(2,1)}', space=vmem, size = 0x1800, scoped, tag = 'scratch operand']
  %s0 = inlined_call_operand.smem [shape: u32[36], index: -1, kind: input, shape index: {}]
  %s1 = sld [smem:[%s0]]
  %s2 = scalar_lea.smem %s0, 1
  %s3 = sld [smem:[%s2]]
  %s4 = scalar_lea.smem %s0, 2
  %s5 = sld [smem:[%s4]]
  %s6 = scalar_lea.smem %s0, 3
  %s7 = sld [smem:[%s6]]
  %s8 = scalar_lea.smem %s0, 4
  %s9 = sld [smem:[%s8]]
  %s10 = scalar_lea.smem %s0, 5
  %s11 = sld [smem:[%s10]]
  %s12 = scalar_lea.smem %s0, 6
  %s13 = sld [smem:[%s12]]
  %s14 = scalar_lea.smem %s0, 7
  %s15 = sld [smem:[%s14]]
  %s16 = scalar_lea.smem %s0, 8
  %s17 = sld [smem:[%s16]]
  %s18 = scalar_lea.smem %s0, 9
  %s19 = sld [smem:[%s18]]
  %s20 = scalar_lea.smem %s0, 10
  %s21 = sld [smem:[%s20]]
  %s22 = scalar_lea.smem %s0, 11
  %s23 = sld [smem:[%s22]]
  %s24 = scalar_lea.smem %s0, 12
  %s25 = sld [smem:[%s24]]
  %s26 = scalar_lea.smem %s0, 13
  %s27 = sld [smem:[%s26]]
  %s28 = scalar_lea.smem %s0, 14
  %s29 = sld [smem:[%s28]]
  %s30 = scalar_lea.smem %s0, 15
  %s31 = sld [smem:[%s30]]
  %s32 = scalar_lea.smem %s0, 16
  %s33 = sld [smem:[%s32]]
  %s34 = scalar_lea.smem %s0, 17
  %s35 = sld [smem:[%s34]]
  %s36 = scalar_lea.smem %s0, 18
  %s37 = sld [smem:[%s36]]
  %s38 = scalar_lea.smem %s0, 19
  %s39 = sld [smem:[%s38]]
  %s40 = scalar_lea.smem %s0, 20
  %s41 = sld [smem:[%s40]]
  %s42 = scalar_lea.smem %s0, 21
  %s43 = sld [smem:[%s42]]
  %s44 = scalar_lea.smem %s0, 22
  %s45 = sld [smem:[%s44]]
  %s46 = scalar_lea.smem %s0, 23
  %s47 = sld [smem:[%s46]]
  %s48 = scalar_lea.smem %s0, 24
  %s49 = sld [smem:[%s48]]
  %s50 = scalar_lea.smem %s0, 25
  %s51 = sld [smem:[%s50]]
  %s52 = scalar_lea.smem %s0, 26
  %s53 = sld [smem:[%s52]]
  %s54 = scalar_lea.smem %s0, 27
  %s55 = sld [smem:[%s54]]
  %s56 = scalar_lea.smem %s0, 28
  %s57 = sld [smem:[%s56]]
  %s58 = scalar_lea.smem %s0, 29
  %s59 = sld [smem:[%s58]]
  %s60 = scalar_lea.smem %s0, 30
  %s61 = sld [smem:[%s60]]
  %s62 = scalar_lea.smem %s0, 31
  %s63 = sld [smem:[%s62]]
  %s64 = scalar_lea.smem %s0, 32
  %s65 = sld [smem:[%s64]]
  %s66 = scalar_lea.smem %s0, 33
  %s67 = sld [smem:[%s66]]
  %s68 = scalar_lea.smem %s0, 34
  %s69 = sld [smem:[%s68]]
  %s70 = scalar_lea.smem %s0, 35
  %s71 = sld [smem:[%s70]]
  %72 = xla_tuple %s69, %s71
  %s73 = sld [smem:[#allocation0]]
  $region177: #{tpu_custom_call.1} parent=0
    _
  %s75 = ssub.s32 1, %s73
  %s76 = scalar_select 0, %s75, %s73
  $region1: #{tpu_custom_call.1} parent=0
    #allocation6 [shape = 'u8[8192]{0}', space=vmem, size = 0x2000, scoped, tag = 'output window, operand 0']
    #allocation7 [shape = 's32[2]{0}', space=sflag, size = 0x8, scoped, tag = 'scoped memory for tpu_custom_call.1']
    #allocation8 [shape = 'u8[16384]{0}', space=vmem, size = 0x4000, scoped, tag = 'output window, operand 1']
    #allocation9 [shape = 's32[2]{0}', space=sflag, size = 0x8, scoped, tag = 'scoped memory for tpu_custom_call.1']
    %77 = vsyncpa [#allocation7], 0
    %s78 = scalar_lea.sflag [#allocation7], 1
    %79 = vsyncpa %s78, 0
    %80 = vsyncpa [#allocation9], 0
    %s81 = scalar_lea.sflag [#allocation9], 1
    %82 = vsyncpa %s81, 0
    loop: start=0, step=1, limit=4
    $region2: #{tpu_custom_call.1} parent=1 // loop_pre_header
      _
    $region3: #{tpu_custom_call.1} parent=1 // loop_header
      %s84 = sphi 0, %s88
      %p85 = scmp.ge.s32.totalorder %s84, 4
      %s94 = sphi 0, %s96
      %s97 = sphi 0, %s94
      %s98 = sphi 0, %s97
      %s114 = sphi 0, %s98
      %s120 = sphi 0, %s122
      %s123 = sphi 0, %s120
      %s124 = sphi 0, %s123
      %s140 = sphi 0, %s124
      %s146 = sphi 0, %s148
      %s149 = sphi 0, %s146
      %s150 = sphi 0, %s149
      %s166 = sphi 0, %s150
      %s172 = sphi 0, %s174
      %s175 = sphi 0, %s172
      %s176 = sphi 0, %s175
      %s192 = sphi 0, %s176
      %s196 = sphi 0, %s196
      %s198 = sphi 0, %s196
      %s199 = sphi 0, %s198
      %s213 = sphi 0, %s199
      %s217 = sphi 0, %s217
      %s219 = sphi 0, %s217
      %s220 = sphi 0, %s219
      %s234 = sphi 0, %s220
      %s238 = sphi 0, %s238
      %s240 = sphi 0, %s238
      %s241 = sphi 0, %s240
      %s255 = sphi 0, %s241
      %s259 = sphi 0, %s259
      %s261 = sphi 0, %s259
      %s262 = sphi 0, %s261
      %s276 = sphi 0, %s262
      %s280 = sphi 0, %s280
      %s282 = sphi 0, %s280
      %s283 = sphi 0, %s282
      %s297 = sphi 0, %s283
      %s301 = sphi 0, %s301
      %s303 = sphi 0, %s301
      %s304 = sphi 0, %s303
      %s318 = sphi 0, %s304
      %s322 = sphi 0, %s322
      %s324 = sphi 0, %s322
      %s325 = sphi 0, %s324
      %s339 = sphi 0, %s325
      %s343 = sphi 0, %s343
      %s345 = sphi 0, %s343
      %s346 = sphi 0, %s345
      %s360 = sphi 0, %s346
      %s364 = sphi 0, %s364
      %s366 = sphi 0, %s364
      %s367 = sphi 0, %s366
      %s381 = sphi 0, %s367
      %s385 = sphi 0, %s385
      %s387 = sphi 0, %s385
      %s388 = sphi 0, %s387
      %s402 = sphi 0, %s388
      %s406 = sphi 0, %s406
      %s408 = sphi 0, %s406
      %s409 = sphi 0, %s408
      %s423 = sphi 0, %s409
      %s427 = sphi 0, %s427
      %s429 = sphi 0, %s427
      %s430 = sphi 0, %s429
      %s444 = sphi 0, %s430
      %s448 = sphi 0, %s448
      %s450 = sphi 0, %s448
      %s451 = sphi 0, %s450
      %s465 = sphi 0, %s451
      %s469 = sphi 0, %s469
      %s471 = sphi 0, %s469
      %s472 = sphi 0, %s471
      %s486 = sphi 0, %s472
      %s490 = sphi 0, %s490
      %s492 = sphi 0, %s490
      %s493 = sphi 0, %s492
      %s507 = sphi 0, %s493
      %s511 = sphi 0, %s511
      %s513 = sphi 0, %s511
      %s514 = sphi 0, %s513
      %s528 = sphi 0, %s514
      %s532 = sphi 0, %s532
      %s534 = sphi 0, %s532
      %s535 = sphi 0, %s534
      %s549 = sphi 0, %s535
      %s553 = sphi 0, %s553
      %s555 = sphi 0, %s553
      %s556 = sphi 0, %s555
      %s570 = sphi 0, %s556
      %s574 = sphi 0, %s574
      %s576 = sphi 0, %s574
      %s577 = sphi 0, %s576
      %s591 = sphi 0, %s577
      %s595 = sphi 0, %s595
      %s597 = sphi 0, %s595
      %s598 = sphi 0, %s597
      %s612 = sphi 0, %s598
      %s616 = sphi 0, %s616
      %s618 = sphi 0, %s616
      %s619 = sphi 0, %s618
      %s633 = sphi 0, %s619
      %s637 = sphi 0, %s637
      %s639 = sphi 0, %s637
      %s640 = sphi 0, %s639
      %s654 = sphi 0, %s640
      %s658 = sphi 0, %s658
      %s660 = sphi 0, %s658
      %s661 = sphi 0, %s660
      %s675 = sphi 0, %s661
      %s679 = sphi 0, %s679
      %s681 = sphi 0, %s679
      %s682 = sphi 0, %s681
      %s696 = sphi 0, %s682
      %s700 = sphi 0, %s700
      %s702 = sphi 0, %s700
      %s703 = sphi 0, %s702
      %s717 = sphi 0, %s703
      %s721 = sphi 0, %s721
      %s723 = sphi 0, %s721
      %s724 = sphi 0, %s723
      %s738 = sphi 0, %s724
      %s742 = sphi 0, %s742
      %s744 = sphi 0, %s742
      %s745 = sphi 0, %s744
      %s759 = sphi 0, %s745
      %s763 = sphi 0, %s763
      %s765 = sphi 0, %s763
      %s766 = sphi 0, %s765
      %s780 = sphi 0, %s766
      %s784 = sphi 0, %s784
      %s786 = sphi 0, %s784
      %s787 = sphi 0, %s786
      %s801 = sphi 0, %s787
      %s805 = sphi 0, %s805
      %s807 = sphi 0, %s805
      %s808 = sphi 0, %s807
      %s822 = sphi 0, %s808
      %s828 = sphi 0, %s830
      %s831 = sphi 0, %s828
      %s832 = sphi 0, %s831
      %s848 = sphi 0, %s832
      %s854 = sphi 0, %s856
      %s857 = sphi 0, %s854
      %s858 = sphi 0, %s857
      %s874 = sphi 0, %s858
    $region4: #{tpu_custom_call.1} parent=1 // loop_header_branch
      %87 = sbr.rel (%p85) target = $region8
    $region5: #{tpu_custom_call.1} parent=1 // loop_body
      %s89 = ssub.s32 %s84, 1
      %s90 = ssub.s32 %s84, 2
      %s91 = sadd.s32 %s84, 1
      %s92 = ssub.s32 %s84, %s91
      %p93 = scmp.eq.s32.totalorder %s92, 0
      %s95 = sadd.s32 %s94, 1
      %s96 = scalar_select %p93, %s94, %s95
      %p99 = pneg %p93
      %p100 = scmp.eq.s32.totalorder %s84, 1
      %p101 = por %p99, %p100
      %p102 = scmp.ne.s32.totalorder %s94, %s97
      %p103 = scmp.eq.s32.totalorder %s84, 0
      %p104 = por %p102, %p103
      %p105 = scmp.ne.s32.totalorder %s94, %s97
      %p106 = scmp.eq.s32.totalorder %s89, 1
      %p107 = por %p105, %p106
      %p108 = scmp.ne.s32.totalorder %s97, %s98
      %p109 = scmp.eq.s32.totalorder %s89, 0
      %p110 = por %p108, %p109
      %p111 = scmp.ne.s32.totalorder %s97, %s98
      %p112 = scmp.eq.s32.totalorder %s90, 1
      %p113 = por %p111, %p112
      %p115 = scmp.ne.s32.totalorder %s98, %s114
      %p116 = scmp.eq.s32.totalorder %s90, 0
      %p117 = por %p115, %p116
      %s118 = ssub.s32 %s84, %s91
      %p119 = scmp.eq.s32.totalorder %s118, 0
      %s121 = sadd.s32 %s120, 1
      %s122 = scalar_select %p119, %s120, %s121
      %p125 = pneg %p119
      %p126 = scmp.eq.s32.totalorder %s84, 1
      %p127 = por %p125, %p126
      %p128 = scmp.ne.s32.totalorder %s120, %s123
      %p129 = scmp.eq.s32.totalorder %s84, 0
      %p130 = por %p128, %p129
      %p131 = scmp.ne.s32.totalorder %s120, %s123
      %p132 = scmp.eq.s32.totalorder %s89, 1
      %p133 = por %p131, %p132
      %p134 = scmp.ne.s32.totalorder %s123, %s124
      %p135 = scmp.eq.s32.totalorder %s89, 0
      %p136 = por %p134, %p135
      %p137 = scmp.ne.s32.totalorder %s123, %s124
      %p138 = scmp.eq.s32.totalorder %s90, 1
      %p139 = por %p137, %p138
      %p141 = scmp.ne.s32.totalorder %s124, %s140
      %p142 = scmp.eq.s32.totalorder %s90, 0
      %p143 = por %p141, %p142
      %s144 = ssub.s32 %s84, %s91
      %p145 = scmp.eq.s32.totalorder %s144, 0
      %s147 = sadd.s32 %s146, 1
      %s148 = scalar_select %p145, %s146, %s147
      %p151 = pneg %p145
      %p152 = scmp.eq.s32.totalorder %s84, 1
      %p153 = por %p151, %p152
      %p154 = scmp.ne.s32.totalorder %s146, %s149
      %p155 = scmp.eq.s32.totalorder %s84, 0
      %p156 = por %p154, %p155
      %p157 = scmp.ne.s32.totalorder %s146, %s149
      %p158 = scmp.eq.s32.totalorder %s89, 1
      %p159 = por %p157, %p158
      %p160 = scmp.ne.s32.totalorder %s149, %s150
      %p161 = scmp.eq.s32.totalorder %s89, 0
      %p162 = por %p160, %p161
      %p163 = scmp.ne.s32.totalorder %s149, %s150
      %p164 = scmp.eq.s32.totalorder %s90, 1
      %p165 = por %p163, %p164
      %p167 = scmp.ne.s32.totalorder %s150, %s166
      %p168 = scmp.eq.s32.totalorder %s90, 0
      %p169 = por %p167, %p168
      %s170 = ssub.s32 %s84, %s91
      %p171 = scmp.eq.s32.totalorder %s170, 0
      %s173 = sadd.s32 %s172, 1
      %s174 = scalar_select %p171, %s172, %s173
      %p177 = pneg %p171
      %p178 = scmp.eq.s32.totalorder %s84, 1
      %p179 = por %p177, %p178
      %p180 = scmp.ne.s32.totalorder %s172, %s175
      %p181 = scmp.eq.s32.totalorder %s84, 0
      %p182 = por %p180, %p181
      %p183 = scmp.ne.s32.totalorder %s172, %s175
      %p184 = scmp.eq.s32.totalorder %s89, 1
      %p185 = por %p183, %p184
      %p186 = scmp.ne.s32.totalorder %s175, %s176
      %p187 = scmp.eq.s32.totalorder %s89, 0
      %p188 = por %p186, %p187
      %p189 = scmp.ne.s32.totalorder %s175, %s176
      %p190 = scmp.eq.s32.totalorder %s90, 1
      %p191 = por %p189, %p190
      %p193 = scmp.ne.s32.totalorder %s176, %s192
      %p194 = scmp.eq.s32.totalorder %s90, 0
      %p195 = por %p193, %p194
      %s197 = sadd.s32 %s196, 1
      %p200 = scmp.eq.s32.totalorder %s84, 1
      %p201 = scmp.ne.s32.totalorder %s196, %s198
      %p202 = scmp.eq.s32.totalorder %s84, 0
      %p203 = por %p201, %p202
      %p204 = scmp.ne.s32.totalorder %s196, %s198
      %p205 = scmp.eq.s32.totalorder %s89, 1
      %p206 = por %p204, %p205
      %p207 = scmp.ne.s32.totalorder %s198, %s199
      %p208 = scmp.eq.s32.totalorder %s89, 0
      %p209 = por %p207, %p208
      %p210 = scmp.ne.s32.totalorder %s198, %s199
      %p211 = scmp.eq.s32.totalorder %s90, 1
      %p212 = por %p210, %p211
      %p214 = scmp.ne.s32.totalorder %s199, %s213
      %p215 = scmp.eq.s32.totalorder %s90, 0
      %p216 = por %p214, %p215
      %s218 = sadd.s32 %s217, 1
      %p221 = scmp.eq.s32.totalorder %s84, 1
      %p222 = scmp.ne.s32.totalorder %s217, %s219
      %p223 = scmp.eq.s32.totalorder %s84, 0
      %p224 = por %p222, %p223
      %p225 = scmp.ne.s32.totalorder %s217, %s219
      %p226 = scmp.eq.s32.totalorder %s89, 1
      %p227 = por %p225, %p226
      %p228 = scmp.ne.s32.totalorder %s219, %s220
      %p229 = scmp.eq.s32.totalorder %s89, 0
      %p230 = por %p228, %p229
      %p231 = scmp.ne.s32.totalorder %s219, %s220
      %p232 = scmp.eq.s32.totalorder %s90, 1
      %p233 = por %p231, %p232
      %p235 = scmp.ne.s32.totalorder %s220, %s234
      %p236 = scmp.eq.s32.totalorder %s90, 0
      %p237 = por %p235, %p236
      %s239 = sadd.s32 %s238, 1
      %p242 = scmp.eq.s32.totalorder %s84, 1
      %p243 = scmp.ne.s32.totalorder %s238, %s240
      %p244 = scmp.eq.s32.totalorder %s84, 0
      %p245 = por %p243, %p244
      %p246 = scmp.ne.s32.totalorder %s238, %s240
      %p247 = scmp.eq.s32.totalorder %s89, 1
      %p248 = por %p246, %p247
      %p249 = scmp.ne.s32.totalorder %s240, %s241
      %p250 = scmp.eq.s32.totalorder %s89, 0
      %p251 = por %p249, %p250
      %p252 = scmp.ne.s32.totalorder %s240, %s241
      %p253 = scmp.eq.s32.totalorder %s90, 1
      %p254 = por %p252, %p253
      %p256 = scmp.ne.s32.totalorder %s241, %s255
      %p257 = scmp.eq.s32.totalorder %s90, 0
      %p258 = por %p256, %p257
      %s260 = sadd.s32 %s259, 1
      %p263 = scmp.eq.s32.totalorder %s84, 1
      %p264 = scmp.ne.s32.totalorder %s259, %s261
      %p265 = scmp.eq.s32.totalorder %s84, 0
      %p266 = por %p264, %p265
      %p267 = scmp.ne.s32.totalorder %s259, %s261
      %p268 = scmp.eq.s32.totalorder %s89, 1
      %p269 = por %p267, %p268
      %p270 = scmp.ne.s32.totalorder %s261, %s262
      %p271 = scmp.eq.s32.totalorder %s89, 0
      %p272 = por %p270, %p271
      %p273 = scmp.ne.s32.totalorder %s261, %s262
      %p274 = scmp.eq.s32.totalorder %s90, 1
      %p275 = por %p273, %p274
      %p277 = scmp.ne.s32.totalorder %s262, %s276
      %p278 = scmp.eq.s32.totalorder %s90, 0
      %p279 = por %p277, %p278
      %s281 = sadd.s32 %s280, 1
      %p284 = scmp.eq.s32.totalorder %s84, 1
      %p285 = scmp.ne.s32.totalorder %s280, %s282
      %p286 = scmp.eq.s32.totalorder %s84, 0
      %p287 = por %p285, %p286
      %p288 = scmp.ne.s32.totalorder %s280, %s282
      %p289 = scmp.eq.s32.totalorder %s89, 1
      %p290 = por %p288, %p289
      %p291 = scmp.ne.s32.totalorder %s282, %s283
      %p292 = scmp.eq.s32.totalorder %s89, 0
      %p293 = por %p291, %p292
      %p294 = scmp.ne.s32.totalorder %s282, %s283
      %p295 = scmp.eq.s32.totalorder %s90, 1
      %p296 = por %p294, %p295
      %p298 = scmp.ne.s32.totalorder %s283, %s297
      %p299 = scmp.eq.s32.totalorder %s90, 0
      %p300 = por %p298, %p299
      %s302 = sadd.s32 %s301, 1
      %p305 = scmp.eq.s32.totalorder %s84, 1
      %p306 = scmp.ne.s32.totalorder %s301, %s303
      %p307 = scmp.eq.s32.totalorder %s84, 0
      %p308 = por %p306, %p307
      %p309 = scmp.ne.s32.totalorder %s301, %s303
      %p310 = scmp.eq.s32.totalorder %s89, 1
      %p311 = por %p309, %p310
      %p312 = scmp.ne.s32.totalorder %s303, %s304
      %p313 = scmp.eq.s32.totalorder %s89, 0
      %p314 = por %p312, %p313
      %p315 = scmp.ne.s32.totalorder %s303, %s304
      %p316 = scmp.eq.s32.totalorder %s90, 1
      %p317 = por %p315, %p316
      %p319 = scmp.ne.s32.totalorder %s304, %s318
      %p320 = scmp.eq.s32.totalorder %s90, 0
      %p321 = por %p319, %p320
      %s323 = sadd.s32 %s322, 1
      %p326 = scmp.eq.s32.totalorder %s84, 1
      %p327 = scmp.ne.s32.totalorder %s322, %s324
      %p328 = scmp.eq.s32.totalorder %s84, 0
      %p329 = por %p327, %p328
      %p330 = scmp.ne.s32.totalorder %s322, %s324
      %p331 = scmp.eq.s32.totalorder %s89, 1
      %p332 = por %p330, %p331
      %p333 = scmp.ne.s32.totalorder %s324, %s325
      %p334 = scmp.eq.s32.totalorder %s89, 0
      %p335 = por %p333, %p334
      %p336 = scmp.ne.s32.totalorder %s324, %s325
      %p337 = scmp.eq.s32.totalorder %s90, 1
      %p338 = por %p336, %p337
      %p340 = scmp.ne.s32.totalorder %s325, %s339
      %p341 = scmp.eq.s32.totalorder %s90, 0
      %p342 = por %p340, %p341
      %s344 = sadd.s32 %s343, 1
      %p347 = scmp.eq.s32.totalorder %s84, 1
      %p348 = scmp.ne.s32.totalorder %s343, %s345
      %p349 = scmp.eq.s32.totalorder %s84, 0
      %p350 = por %p348, %p349
      %p351 = scmp.ne.s32.totalorder %s343, %s345
      %p352 = scmp.eq.s32.totalorder %s89, 1
      %p353 = por %p351, %p352
      %p354 = scmp.ne.s32.totalorder %s345, %s346
      %p355 = scmp.eq.s32.totalorder %s89, 0
      %p356 = por %p354, %p355
      %p357 = scmp.ne.s32.totalorder %s345, %s346
      %p358 = scmp.eq.s32.totalorder %s90, 1
      %p359 = por %p357, %p358
      %p361 = scmp.ne.s32.totalorder %s346, %s360
      %p362 = scmp.eq.s32.totalorder %s90, 0
      %p363 = por %p361, %p362
      %s365 = sadd.s32 %s364, 1
      %p368 = scmp.eq.s32.totalorder %s84, 1
      %p369 = scmp.ne.s32.totalorder %s364, %s366
      %p370 = scmp.eq.s32.totalorder %s84, 0
      %p371 = por %p369, %p370
      %p372 = scmp.ne.s32.totalorder %s364, %s366
      %p373 = scmp.eq.s32.totalorder %s89, 1
      %p374 = por %p372, %p373
      %p375 = scmp.ne.s32.totalorder %s366, %s367
      %p376 = scmp.eq.s32.totalorder %s89, 0
      %p377 = por %p375, %p376
      %p378 = scmp.ne.s32.totalorder %s366, %s367
      %p379 = scmp.eq.s32.totalorder %s90, 1
      %p380 = por %p378, %p379
      %p382 = scmp.ne.s32.totalorder %s367, %s381
      %p383 = scmp.eq.s32.totalorder %s90, 0
      %p384 = por %p382, %p383
      %s386 = sadd.s32 %s385, 1
      %p389 = scmp.eq.s32.totalorder %s84, 1
      %p390 = scmp.ne.s32.totalorder %s385, %s387
      %p391 = scmp.eq.s32.totalorder %s84, 0
      %p392 = por %p390, %p391
      %p393 = scmp.ne.s32.totalorder %s385, %s387
      %p394 = scmp.eq.s32.totalorder %s89, 1
      %p395 = por %p393, %p394
      %p396 = scmp.ne.s32.totalorder %s387, %s388
      %p397 = scmp.eq.s32.totalorder %s89, 0
      %p398 = por %p396, %p397
      %p399 = scmp.ne.s32.totalorder %s387, %s388
      %p400 = scmp.eq.s32.totalorder %s90, 1
      %p401 = por %p399, %p400
      %p403 = scmp.ne.s32.totalorder %s388, %s402
      %p404 = scmp.eq.s32.totalorder %s90, 0
      %p405 = por %p403, %p404
      %s407 = sadd.s32 %s406, 1
      %p410 = scmp.eq.s32.totalorder %s84, 1
      %p411 = scmp.ne.s32.totalorder %s406, %s408
      %p412 = scmp.eq.s32.totalorder %s84, 0
      %p413 = por %p411, %p412
      %p414 = scmp.ne.s32.totalorder %s406, %s408
      %p415 = scmp.eq.s32.totalorder %s89, 1
      %p416 = por %p414, %p415
      %p417 = scmp.ne.s32.totalorder %s408, %s409
      %p418 = scmp.eq.s32.totalorder %s89, 0
      %p419 = por %p417, %p418
      %p420 = scmp.ne.s32.totalorder %s408, %s409
      %p421 = scmp.eq.s32.totalorder %s90, 1
      %p422 = por %p420, %p421
      %p424 = scmp.ne.s32.totalorder %s409, %s423
      %p425 = scmp.eq.s32.totalorder %s90, 0
      %p426 = por %p424, %p425
      %s428 = sadd.s32 %s427, 1
      %p431 = scmp.eq.s32.totalorder %s84, 1
      %p432 = scmp.ne.s32.totalorder %s427, %s429
      %p433 = scmp.eq.s32.totalorder %s84, 0
      %p434 = por %p432, %p433
      %p435 = scmp.ne.s32.totalorder %s427, %s429
      %p436 = scmp.eq.s32.totalorder %s89, 1
      %p437 = por %p435, %p436
      %p438 = scmp.ne.s32.totalorder %s429, %s430
      %p439 = scmp.eq.s32.totalorder %s89, 0
      %p440 = por %p438, %p439
      %p441 = scmp.ne.s32.totalorder %s429, %s430
      %p442 = scmp.eq.s32.totalorder %s90, 1
      %p443 = por %p441, %p442
      %p445 = scmp.ne.s32.totalorder %s430, %s444
      %p446 = scmp.eq.s32.totalorder %s90, 0
      %p447 = por %p445, %p446
      %s449 = sadd.s32 %s448, 1
      %p452 = scmp.eq.s32.totalorder %s84, 1
      %p453 = scmp.ne.s32.totalorder %s448, %s450
      %p454 = scmp.eq.s32.totalorder %s84, 0
      %p455 = por %p453, %p454
      %p456 = scmp.ne.s32.totalorder %s448, %s450
      %p457 = scmp.eq.s32.totalorder %s89, 1
      %p458 = por %p456, %p457
      %p459 = scmp.ne.s32.totalorder %s450, %s451
      %p460 = scmp.eq.s32.totalorder %s89, 0
      %p461 = por %p459, %p460
      %p462 = scmp.ne.s32.totalorder %s450, %s451
      %p463 = scmp.eq.s32.totalorder %s90, 1
      %p464 = por %p462, %p463
      %p466 = scmp.ne.s32.totalorder %s451, %s465
      %p467 = scmp.eq.s32.totalorder %s90, 0
      %p468 = por %p466, %p467
      %s470 = sadd.s32 %s469, 1
      %p473 = scmp.eq.s32.totalorder %s84, 1
      %p474 = scmp.ne.s32.totalorder %s469, %s471
      %p475 = scmp.eq.s32.totalorder %s84, 0
      %p476 = por %p474, %p475
      %p477 = scmp.ne.s32.totalorder %s469, %s471
      %p478 = scmp.eq.s32.totalorder %s89, 1
      %p479 = por %p477, %p478
      %p480 = scmp.ne.s32.totalorder %s471, %s472
      %p481 = scmp.eq.s32.totalorder %s89, 0
      %p482 = por %p480, %p481
      %p483 = scmp.ne.s32.totalorder %s471, %s472
      %p484 = scmp.eq.s32.totalorder %s90, 1
      %p485 = por %p483, %p484
      %p487 = scmp.ne.s32.totalorder %s472, %s486
      %p488 = scmp.eq.s32.totalorder %s90, 0
      %p489 = por %p487, %p488
      %s491 = sadd.s32 %s490, 1
      %p494 = scmp.eq.s32.totalorder %s84, 1
      %p495 = scmp.ne.s32.totalorder %s490, %s492
      %p496 = scmp.eq.s32.totalorder %s84, 0
      %p497 = por %p495, %p496
      %p498 = scmp.ne.s32.totalorder %s490, %s492
      %p499 = scmp.eq.s32.totalorder %s89, 1
      %p500 = por %p498, %p499
      %p501 = scmp.ne.s32.totalorder %s492, %s493
      %p502 = scmp.eq.s32.totalorder %s89, 0
      %p503 = por %p501, %p502
      %p504 = scmp.ne.s32.totalorder %s492, %s493
      %p505 = scmp.eq.s32.totalorder %s90, 1
      %p506 = por %p504, %p505
      %p508 = scmp.ne.s32.totalorder %s493, %s507
      %p509 = scmp.eq.s32.totalorder %s90, 0
      %p510 = por %p508, %p509
      %s512 = sadd.s32 %s511, 1
      %p515 = scmp.eq.s32.totalorder %s84, 1
      %p516 = scmp.ne.s32.totalorder %s511, %s513
      %p517 = scmp.eq.s32.totalorder %s84, 0
      %p518 = por %p516, %p517
      %p519 = scmp.ne.s32.totalorder %s511, %s513
      %p520 = scmp.eq.s32.totalorder %s89, 1
      %p521 = por %p519, %p520
      %p522 = scmp.ne.s32.totalorder %s513, %s514
      %p523 = scmp.eq.s32.totalorder %s89, 0
      %p524 = por %p522, %p523
      %p525 = scmp.ne.s32.totalorder %s513, %s514
      %p526 = scmp.eq.s32.totalorder %s90, 1
      %p527 = por %p525, %p526
      %p529 = scmp.ne.s32.totalorder %s514, %s528
      %p530 = scmp.eq.s32.totalorder %s90, 0
      %p531 = por %p529, %p530
      %s533 = sadd.s32 %s532, 1
      %p536 = scmp.eq.s32.totalorder %s84, 1
      %p537 = scmp.ne.s32.totalorder %s532, %s534
      %p538 = scmp.eq.s32.totalorder %s84, 0
      %p539 = por %p537, %p538
      %p540 = scmp.ne.s32.totalorder %s532, %s534
      %p541 = scmp.eq.s32.totalorder %s89, 1
      %p542 = por %p540, %p541
      %p543 = scmp.ne.s32.totalorder %s534, %s535
      %p544 = scmp.eq.s32.totalorder %s89, 0
      %p545 = por %p543, %p544
      %p546 = scmp.ne.s32.totalorder %s534, %s535
      %p547 = scmp.eq.s32.totalorder %s90, 1
      %p548 = por %p546, %p547
      %p550 = scmp.ne.s32.totalorder %s535, %s549
      %p551 = scmp.eq.s32.totalorder %s90, 0
      %p552 = por %p550, %p551
      %s554 = sadd.s32 %s553, 1
      %p557 = scmp.eq.s32.totalorder %s84, 1
      %p558 = scmp.ne.s32.totalorder %s553, %s555
      %p559 = scmp.eq.s32.totalorder %s84, 0
      %p560 = por %p558, %p559
      %p561 = scmp.ne.s32.totalorder %s553, %s555
      %p562 = scmp.eq.s32.totalorder %s89, 1
      %p563 = por %p561, %p562
      %p564 = scmp.ne.s32.totalorder %s555, %s556
      %p565 = scmp.eq.s32.totalorder %s89, 0
      %p566 = por %p564, %p565
      %p567 = scmp.ne.s32.totalorder %s555, %s556
      %p568 = scmp.eq.s32.totalorder %s90, 1
      %p569 = por %p567, %p568
      %p571 = scmp.ne.s32.totalorder %s556, %s570
      %p572 = scmp.eq.s32.totalorder %s90, 0
      %p573 = por %p571, %p572
      %s575 = sadd.s32 %s574, 1
      %p578 = scmp.eq.s32.totalorder %s84, 1
      %p579 = scmp.ne.s32.totalorder %s574, %s576
      %p580 = scmp.eq.s32.totalorder %s84, 0
      %p581 = por %p579, %p580
      %p582 = scmp.ne.s32.totalorder %s574, %s576
      %p583 = scmp.eq.s32.totalorder %s89, 1
      %p584 = por %p582, %p583
      %p585 = scmp.ne.s32.totalorder %s576, %s577
      %p586 = scmp.eq.s32.totalorder %s89, 0
      %p587 = por %p585, %p586
      %p588 = scmp.ne.s32.totalorder %s576, %s577
      %p589 = scmp.eq.s32.totalorder %s90, 1
      %p590 = por %p588, %p589
      %p592 = scmp.ne.s32.totalorder %s577, %s591
      %p593 = scmp.eq.s32.totalorder %s90, 0
      %p594 = por %p592, %p593
      %s596 = sadd.s32 %s595, 1
      %p599 = scmp.eq.s32.totalorder %s84, 1
      %p600 = scmp.ne.s32.totalorder %s595, %s597
      %p601 = scmp.eq.s32.totalorder %s84, 0
      %p602 = por %p600, %p601
      %p603 = scmp.ne.s32.totalorder %s595, %s597
      %p604 = scmp.eq.s32.totalorder %s89, 1
      %p605 = por %p603, %p604
      %p606 = scmp.ne.s32.totalorder %s597, %s598
      %p607 = scmp.eq.s32.totalorder %s89, 0
      %p608 = por %p606, %p607
      %p609 = scmp.ne.s32.totalorder %s597, %s598
      %p610 = scmp.eq.s32.totalorder %s90, 1
      %p611 = por %p609, %p610
      %p613 = scmp.ne.s32.totalorder %s598, %s612
      %p614 = scmp.eq.s32.totalorder %s90, 0
      %p615 = por %p613, %p614
      %s617 = sadd.s32 %s616, 1
      %p620 = scmp.eq.s32.totalorder %s84, 1
      %p621 = scmp.ne.s32.totalorder %s616, %s618
      %p622 = scmp.eq.s32.totalorder %s84, 0
      %p623 = por %p621, %p622
      %p624 = scmp.ne.s32.totalorder %s616, %s618
      %p625 = scmp.eq.s32.totalorder %s89, 1
      %p626 = por %p624, %p625
      %p627 = scmp.ne.s32.totalorder %s618, %s619
      %p628 = scmp.eq.s32.totalorder %s89, 0
      %p629 = por %p627, %p628
      %p630 = scmp.ne.s32.totalorder %s618, %s619
      %p631 = scmp.eq.s32.totalorder %s90, 1
      %p632 = por %p630, %p631
      %p634 = scmp.ne.s32.totalorder %s619, %s633
      %p635 = scmp.eq.s32.totalorder %s90, 0
      %p636 = por %p634, %p635
      %s638 = sadd.s32 %s637, 1
      %p641 = scmp.eq.s32.totalorder %s84, 1
      %p642 = scmp.ne.s32.totalorder %s637, %s639
      %p643 = scmp.eq.s32.totalorder %s84, 0
      %p644 = por %p642, %p643
      %p645 = scmp.ne.s32.totalorder %s637, %s639
      %p646 = scmp.eq.s32.totalorder %s89, 1
      %p647 = por %p645, %p646
      %p648 = scmp.ne.s32.totalorder %s639, %s640
      %p649 = scmp.eq.s32.totalorder %s89, 0
      %p650 = por %p648, %p649
      %p651 = scmp.ne.s32.totalorder %s639, %s640
      %p652 = scmp.eq.s32.totalorder %s90, 1
      %p653 = por %p651, %p652
      %p655 = scmp.ne.s32.totalorder %s640, %s654
      %p656 = scmp.eq.s32.totalorder %s90, 0
      %p657 = por %p655, %p656
      %s659 = sadd.s32 %s658, 1
      %p662 = scmp.eq.s32.totalorder %s84, 1
      %p663 = scmp.ne.s32.totalorder %s658, %s660
      %p664 = scmp.eq.s32.totalorder %s84, 0
      %p665 = por %p663, %p664
      %p666 = scmp.ne.s32.totalorder %s658, %s660
      %p667 = scmp.eq.s32.totalorder %s89, 1
      %p668 = por %p666, %p667
      %p669 = scmp.ne.s32.totalorder %s660, %s661
      %p670 = scmp.eq.s32.totalorder %s89, 0
      %p671 = por %p669, %p670
      %p672 = scmp.ne.s32.totalorder %s660, %s661
      %p673 = scmp.eq.s32.totalorder %s90, 1
      %p674 = por %p672, %p673
      %p676 = scmp.ne.s32.totalorder %s661, %s675
      %p677 = scmp.eq.s32.totalorder %s90, 0
      %p678 = por %p676, %p677
      %s680 = sadd.s32 %s679, 1
      %p683 = scmp.eq.s32.totalorder %s84, 1
      %p684 = scmp.ne.s32.totalorder %s679, %s681
      %p685 = scmp.eq.s32.totalorder %s84, 0
      %p686 = por %p684, %p685
      %p687 = scmp.ne.s32.totalorder %s679, %s681
      %p688 = scmp.eq.s32.totalorder %s89, 1
      %p689 = por %p687, %p688
      %p690 = scmp.ne.s32.totalorder %s681, %s682
      %p691 = scmp.eq.s32.totalorder %s89, 0
      %p692 = por %p690, %p691
      %p693 = scmp.ne.s32.totalorder %s681, %s682
      %p694 = scmp.eq.s32.totalorder %s90, 1
      %p695 = por %p693, %p694
      %p697 = scmp.ne.s32.totalorder %s682, %s696
      %p698 = scmp.eq.s32.totalorder %s90, 0
      %p699 = por %p697, %p698
      %s701 = sadd.s32 %s700, 1
      %p704 = scmp.eq.s32.totalorder %s84, 1
      %p705 = scmp.ne.s32.totalorder %s700, %s702
      %p706 = scmp.eq.s32.totalorder %s84, 0
      %p707 = por %p705, %p706
      %p708 = scmp.ne.s32.totalorder %s700, %s702
      %p709 = scmp.eq.s32.totalorder %s89, 1
      %p710 = por %p708, %p709
      %p711 = scmp.ne.s32.totalorder %s702, %s703
      %p712 = scmp.eq.s32.totalorder %s89, 0
      %p713 = por %p711, %p712
      %p714 = scmp.ne.s32.totalorder %s702, %s703
      %p715 = scmp.eq.s32.totalorder %s90, 1
      %p716 = por %p714, %p715
      %p718 = scmp.ne.s32.totalorder %s703, %s717
      %p719 = scmp.eq.s32.totalorder %s90, 0
      %p720 = por %p718, %p719
      %s722 = sadd.s32 %s721, 1
      %p725 = scmp.eq.s32.totalorder %s84, 1
      %p726 = scmp.ne.s32.totalorder %s721, %s723
      %p727 = scmp.eq.s32.totalorder %s84, 0
      %p728 = por %p726, %p727
      %p729 = scmp.ne.s32.totalorder %s721, %s723
      %p730 = scmp.eq.s32.totalorder %s89, 1
      %p731 = por %p729, %p730
      %p732 = scmp.ne.s32.totalorder %s723, %s724
      %p733 = scmp.eq.s32.totalorder %s89, 0
      %p734 = por %p732, %p733
      %p735 = scmp.ne.s32.totalorder %s723, %s724
      %p736 = scmp.eq.s32.totalorder %s90, 1
      %p737 = por %p735, %p736
      %p739 = scmp.ne.s32.totalorder %s724, %s738
      %p740 = scmp.eq.s32.totalorder %s90, 0
      %p741 = por %p739, %p740
      %s743 = sadd.s32 %s742, 1
      %p746 = scmp.eq.s32.totalorder %s84, 1
      %p747 = scmp.ne.s32.totalorder %s742, %s744
      %p748 = scmp.eq.s32.totalorder %s84, 0
      %p749 = por %p747, %p748
      %p750 = scmp.ne.s32.totalorder %s742, %s744
      %p751 = scmp.eq.s32.totalorder %s89, 1
      %p752 = por %p750, %p751
      %p753 = scmp.ne.s32.totalorder %s744, %s745
      %p754 = scmp.eq.s32.totalorder %s89, 0
      %p755 = por %p753, %p754
      %p756 = scmp.ne.s32.totalorder %s744, %s745
      %p757 = scmp.eq.s32.totalorder %s90, 1
      %p758 = por %p756, %p757
      %p760 = scmp.ne.s32.totalorder %s745, %s759
      %p761 = scmp.eq.s32.totalorder %s90, 0
      %p762 = por %p760, %p761
      %s764 = sadd.s32 %s763, 1
      %p767 = scmp.eq.s32.totalorder %s84, 1
      %p768 = scmp.ne.s32.totalorder %s763, %s765
      %p769 = scmp.eq.s32.totalorder %s84, 0
      %p770 = por %p768, %p769
      %p771 = scmp.ne.s32.totalorder %s763, %s765
      %p772 = scmp.eq.s32.totalorder %s89, 1
      %p773 = por %p771, %p772
      %p774 = scmp.ne.s32.totalorder %s765, %s766
      %p775 = scmp.eq.s32.totalorder %s89, 0
      %p776 = por %p774, %p775
      %p777 = scmp.ne.s32.totalorder %s765, %s766
      %p778 = scmp.eq.s32.totalorder %s90, 1
      %p779 = por %p777, %p778
      %p781 = scmp.ne.s32.totalorder %s766, %s780
      %p782 = scmp.eq.s32.totalorder %s90, 0
      %p783 = por %p781, %p782
      %s785 = sadd.s32 %s784, 1
      %p788 = scmp.eq.s32.totalorder %s84, 1
      %p789 = scmp.ne.s32.totalorder %s784, %s786
      %p790 = scmp.eq.s32.totalorder %s84, 0
      %p791 = por %p789, %p790
      %p792 = scmp.ne.s32.totalorder %s784, %s786
      %p793 = scmp.eq.s32.totalorder %s89, 1
      %p794 = por %p792, %p793
      %p795 = scmp.ne.s32.totalorder %s786, %s787
      %p796 = scmp.eq.s32.totalorder %s89, 0
      %p797 = por %p795, %p796
      %p798 = scmp.ne.s32.totalorder %s786, %s787
      %p799 = scmp.eq.s32.totalorder %s90, 1
      %p800 = por %p798, %p799
      %p802 = scmp.ne.s32.totalorder %s787, %s801
      %p803 = scmp.eq.s32.totalorder %s90, 0
      %p804 = por %p802, %p803
      %s806 = sadd.s32 %s805, 1
      %p809 = scmp.eq.s32.totalorder %s84, 1
      %p810 = scmp.ne.s32.totalorder %s805, %s807
      %p811 = scmp.eq.s32.totalorder %s84, 0
      %p812 = por %p810, %p811
      %p813 = scmp.ne.s32.totalorder %s805, %s807
      %p814 = scmp.eq.s32.totalorder %s89, 1
      %p815 = por %p813, %p814
      %p816 = scmp.ne.s32.totalorder %s807, %s808
      %p817 = scmp.eq.s32.totalorder %s89, 0
      %p818 = por %p816, %p817
      %p819 = scmp.ne.s32.totalorder %s807, %s808
      %p820 = scmp.eq.s32.totalorder %s90, 1
      %p821 = por %p819, %p820
      %p823 = scmp.ne.s32.totalorder %s808, %s822
      %p824 = scmp.eq.s32.totalorder %s90, 0
      %p825 = por %p823, %p824
      %s826 = ssub.s32 %s84, %s91
      %p827 = scmp.eq.s32.totalorder %s826, 0
      %s829 = sadd.s32 %s828, 1
      %s830 = scalar_select %p827, %s828, %s829
      %p833 = pneg %p827
      %p834 = scmp.eq.s32.totalorder %s84, 1
      %p835 = por %p833, %p834
      %p836 = scmp.ne.s32.totalorder %s828, %s831
      %p837 = scmp.eq.s32.totalorder %s84, 0
      %p838 = por %p836, %p837
      %p839 = scmp.ne.s32.totalorder %s828, %s831
      %p840 = scmp.eq.s32.totalorder %s89, 1
      %p841 = por %p839, %p840
      %p842 = scmp.ne.s32.totalorder %s831, %s832
      %p843 = scmp.eq.s32.totalorder %s89, 0
      %p844 = por %p842, %p843
      %p845 = scmp.ne.s32.totalorder %s831, %s832
      %p846 = scmp.eq.s32.totalorder %s90, 1
      %p847 = por %p845, %p846
      %p849 = scmp.ne.s32.totalorder %s832, %s848
      %p850 = scmp.eq.s32.totalorder %s90, 0
      %p851 = por %p849, %p850
      %s852 = ssub.s32 %s84, %s91
      %p853 = scmp.eq.s32.totalorder %s852, 0
      %s855 = sadd.s32 %s854, 1
      %s856 = scalar_select %p853, %s854, %s855
      %p859 = pneg %p853
      %p860 = scmp.eq.s32.totalorder %s84, 1
      %p861 = por %p859, %p860
      %p862 = scmp.ne.s32.totalorder %s854, %s857
      %p863 = scmp.eq.s32.totalorder %s84, 0
      %p864 = por %p862, %p863
      %p865 = scmp.ne.s32.totalorder %s854, %s857
      %p866 = scmp.eq.s32.totalorder %s89, 1
      %p867 = por %p865, %p866
      %p868 = scmp.ne.s32.totalorder %s857, %s858
      %p869 = scmp.eq.s32.totalorder %s89, 0
      %p870 = por %p868, %p869
      %p871 = scmp.ne.s32.totalorder %s857, %s858
      %p872 = scmp.eq.s32.totalorder %s90, 1
      %p873 = por %p871, %p872
      %p875 = scmp.ne.s32.totalorder %s858, %s874
      %p876 = scmp.eq.s32.totalorder %s90, 0
      %p877 = por %p875, %p876
      %p878 = scmp.le.s32.totalorder 1, %s84
      %p879 = scmp.lt.s32.totalorder %s84, 3
      %p880 = pnand %p878, %p879
      %p881 = pneg %p880
      // Predicated region
      $region9: #{tpu_custom_call.1} parent=5 // pred_check
        _
      $region10: #{tpu_custom_call.1} parent=5 // pred_check_branch
        %883 = sbr.rel (%p880) target = $region12
      $region11: #{tpu_custom_call.1} parent=5 // pred_region
        %s884 = ssub.s32 %s84, 1
        // Predicated region
        $region13: #{tpu_custom_call.1} parent=11 // pred_check
          %p885 = pneg %p209
        $region14: #{tpu_custom_call.1} parent=11 // pred_check_branch
          %887 = sbr.rel (%p885) target = $region16
        $region15: #{tpu_custom_call.1} parent=11 // pred_region
          _
        $region16: #{tpu_custom_call.1} parent=11 // pred_fallthru
          _
        // Predicated region
        $region17: #{tpu_custom_call.1} parent=11 // pred_check
          %p888 = pneg %p230
        $region18: #{tpu_custom_call.1} parent=11 // pred_check_branch
          %890 = sbr.rel (%p888) target = $region20
        $region19: #{tpu_custom_call.1} parent=11 // pred_region
          _
        $region20: #{tpu_custom_call.1} parent=11 // pred_fallthru
          _
        // Predicated region
        $region21: #{tpu_custom_call.1} parent=11 // pred_check
          %p891 = pneg %p251
        $region22: #{tpu_custom_call.1} parent=11 // pred_check_branch
          %893 = sbr.rel (%p891) target = $region24
        $region23: #{tpu_custom_call.1} parent=11 // pred_region
          _
        $region24: #{tpu_custom_call.1} parent=11 // pred_fallthru
          _
        // Predicated region
        $region25: #{tpu_custom_call.1} parent=11 // pred_check
          %p894 = pneg %p272
        $region26: #{tpu_custom_call.1} parent=11 // pred_check_branch
          %896 = sbr.rel (%p894) target = $region28
        $region27: #{tpu_custom_call.1} parent=11 // pred_region
          _
        $region28: #{tpu_custom_call.1} parent=11 // pred_fallthru
          _
        // Predicated region
        $region29: #{tpu_custom_call.1} parent=11 // pred_check
          %p897 = pneg %p293
        $region30: #{tpu_custom_call.1} parent=11 // pred_check_branch
          %899 = sbr.rel (%p897) target = $region32
        $region31: #{tpu_custom_call.1} parent=11 // pred_region
          _
        $region32: #{tpu_custom_call.1} parent=11 // pred_fallthru
          _
        // Predicated region
        $region33: #{tpu_custom_call.1} parent=11 // pred_check
          %p900 = pneg %p314
        $region34: #{tpu_custom_call.1} parent=11 // pred_check_branch
          %902 = sbr.rel (%p900) target = $region36
        $region35: #{tpu_custom_call.1} parent=11 // pred_region
          _
        $region36: #{tpu_custom_call.1} parent=11 // pred_fallthru
          _
        // Predicated region
        $region37: #{tpu_custom_call.1} parent=11 // pred_check
          %p903 = pneg %p335
        $region38: #{tpu_custom_call.1} parent=11 // pred_check_branch
          %905 = sbr.rel (%p903) target = $region40
        $region39: #{tpu_custom_call.1} parent=11 // pred_region
          _
        $region40: #{tpu_custom_call.1} parent=11 // pred_fallthru
          _
        // Predicated region
        $region41: #{tpu_custom_call.1} parent=11 // pred_check
          %p906 = pneg %p356
        $region42: #{tpu_custom_call.1} parent=11 // pred_check_branch
          %908 = sbr.rel (%p906) target = $region44
        $region43: #{tpu_custom_call.1} parent=11 // pred_region
          _
        $region44: #{tpu_custom_call.1} parent=11 // pred_fallthru
          _
        // Predicated region
        $region45: #{tpu_custom_call.1} parent=11 // pred_check
          %p909 = pneg %p377
        $region46: #{tpu_custom_call.1} parent=11 // pred_check_branch
          %911 = sbr.rel (%p909) target = $region48
        $region47: #{tpu_custom_call.1} parent=11 // pred_region
          _
        $region48: #{tpu_custom_call.1} parent=11 // pred_fallthru
          _
        // Predicated region
        $region49: #{tpu_custom_call.1} parent=11 // pred_check
          %p912 = pneg %p398
        $region50: #{tpu_custom_call.1} parent=11 // pred_check_branch
          %914 = sbr.rel (%p912) target = $region52
        $region51: #{tpu_custom_call.1} parent=11 // pred_region
          _
        $region52: #{tpu_custom_call.1} parent=11 // pred_fallthru
          _
        // Predicated region
        $region53: #{tpu_custom_call.1} parent=11 // pred_check
          %p915 = pneg %p419
        $region54: #{tpu_custom_call.1} parent=11 // pred_check_branch
          %917 = sbr.rel (%p915) target = $region56
        $region55: #{tpu_custom_call.1} parent=11 // pred_region
          _
        $region56: #{tpu_custom_call.1} parent=11 // pred_fallthru
          _
        // Predicated region
        $region57: #{tpu_custom_call.1} parent=11 // pred_check
          %p918 = pneg %p440
        $region58: #{tpu_custom_call.1} parent=11 // pred_check_branch
          %920 = sbr.rel (%p918) target = $region60
        $region59: #{tpu_custom_call.1} parent=11 // pred_region
          _
        $region60: #{tpu_custom_call.1} parent=11 // pred_fallthru
          _
        // Predicated region
        $region61: #{tpu_custom_call.1} parent=11 // pred_check
          %p921 = pneg %p461
        $region62: #{tpu_custom_call.1} parent=11 // pred_check_branch
          %923 = sbr.rel (%p921) target = $region64
        $region63: #{tpu_custom_call.1} parent=11 // pred_region
          _
        $region64: #{tpu_custom_call.1} parent=11 // pred_fallthru
          _
        // Predicated region
        $region65: #{tpu_custom_call.1} parent=11 // pred_check
          %p924 = pneg %p482
        $region66: #{tpu_custom_call.1} parent=11 // pred_check_branch
          %926 = sbr.rel (%p924) target = $region68
        $region67: #{tpu_custom_call.1} parent=11 // pred_region
          _
        $region68: #{tpu_custom_call.1} parent=11 // pred_fallthru
          _
        // Predicated region
        $region69: #{tpu_custom_call.1} parent=11 // pred_check
          %p927 = pneg %p503
        $region70: #{tpu_custom_call.1} parent=11 // pred_check_branch
          %929 = sbr.rel (%p927) target = $region72
        $region71: #{tpu_custom_call.1} parent=11 // pred_region
          _
        $region72: #{tpu_custom_call.1} parent=11 // pred_fallthru
          _
        // Predicated region
        $region73: #{tpu_custom_call.1} parent=11 // pred_check
          %p930 = pneg %p524
        $region74: #{tpu_custom_call.1} parent=11 // pred_check_branch
          %932 = sbr.rel (%p930) target = $region76
        $region75: #{tpu_custom_call.1} parent=11 // pred_region
          _
        $region76: #{tpu_custom_call.1} parent=11 // pred_fallthru
          _
        // Predicated region
        $region77: #{tpu_custom_call.1} parent=11 // pred_check
          %p933 = pneg %p545
        $region78: #{tpu_custom_call.1} parent=11 // pred_check_branch
          %935 = sbr.rel (%p933) target = $region80
        $region79: #{tpu_custom_call.1} parent=11 // pred_region
          _
        $region80: #{tpu_custom_call.1} parent=11 // pred_fallthru
          _
        // Predicated region
        $region81: #{tpu_custom_call.1} parent=11 // pred_check
          %p936 = pneg %p566
        $region82: #{tpu_custom_call.1} parent=11 // pred_check_branch
          %938 = sbr.rel (%p936) target = $region84
        $region83: #{tpu_custom_call.1} parent=11 // pred_region
          _
        $region84: #{tpu_custom_call.1} parent=11 // pred_fallthru
          _
        // Predicated region
        $region85: #{tpu_custom_call.1} parent=11 // pred_check
          %p939 = pneg %p587
        $region86: #{tpu_custom_call.1} parent=11 // pred_check_branch
          %941 = sbr.rel (%p939) target = $region88
        $region87: #{tpu_custom_call.1} parent=11 // pred_region
          _
        $region88: #{tpu_custom_call.1} parent=11 // pred_fallthru
          _
        // Predicated region
        $region89: #{tpu_custom_call.1} parent=11 // pred_check
          %p942 = pneg %p608
        $region90: #{tpu_custom_call.1} parent=11 // pred_check_branch
          %944 = sbr.rel (%p942) target = $region92
        $region91: #{tpu_custom_call.1} parent=11 // pred_region
          _
        $region92: #{tpu_custom_call.1} parent=11 // pred_fallthru
          _
        // Predicated region
        $region93: #{tpu_custom_call.1} parent=11 // pred_check
          %p945 = pneg %p629
        $region94: #{tpu_custom_call.1} parent=11 // pred_check_branch
          %947 = sbr.rel (%p945) target = $region96
        $region95: #{tpu_custom_call.1} parent=11 // pred_region
          _
        $region96: #{tpu_custom_call.1} parent=11 // pred_fallthru
          _
        // Predicated region
        $region97: #{tpu_custom_call.1} parent=11 // pred_check
          %p948 = pneg %p650
        $region98: #{tpu_custom_call.1} parent=11 // pred_check_branch
          %950 = sbr.rel (%p948) target = $region100
        $region99: #{tpu_custom_call.1} parent=11 // pred_region
          _
        $region100: #{tpu_custom_call.1} parent=11 // pred_fallthru
          _
        // Predicated region
        $region101: #{tpu_custom_call.1} parent=11 // pred_check
          %p951 = pneg %p671
        $region102: #{tpu_custom_call.1} parent=11 // pred_check_branch
          %953 = sbr.rel (%p951) target = $region104
        $region103: #{tpu_custom_call.1} parent=11 // pred_region
          _
        $region104: #{tpu_custom_call.1} parent=11 // pred_fallthru
          _
        // Predicated region
        $region105: #{tpu_custom_call.1} parent=11 // pred_check
          %p954 = pneg %p692
        $region106: #{tpu_custom_call.1} parent=11 // pred_check_branch
          %956 = sbr.rel (%p954) target = $region108
        $region107: #{tpu_custom_call.1} parent=11 // pred_region
          _
        $region108: #{tpu_custom_call.1} parent=11 // pred_fallthru
          _
        // Predicated region
        $region109: #{tpu_custom_call.1} parent=11 // pred_check
          %p957 = pneg %p713
        $region110: #{tpu_custom_call.1} parent=11 // pred_check_branch
          %959 = sbr.rel (%p957) target = $region112
        $region111: #{tpu_custom_call.1} parent=11 // pred_region
          _
        $region112: #{tpu_custom_call.1} parent=11 // pred_fallthru
          _
        // Predicated region
        $region113: #{tpu_custom_call.1} parent=11 // pred_check
          %p960 = pneg %p734
        $region114: #{tpu_custom_call.1} parent=11 // pred_check_branch
          %962 = sbr.rel (%p960) target = $region116
        $region115: #{tpu_custom_call.1} parent=11 // pred_region
          _
        $region116: #{tpu_custom_call.1} parent=11 // pred_fallthru
          _
        // Predicated region
        $region117: #{tpu_custom_call.1} parent=11 // pred_check
          %p963 = pneg %p755
        $region118: #{tpu_custom_call.1} parent=11 // pred_check_branch
          %965 = sbr.rel (%p963) target = $region120
        $region119: #{tpu_custom_call.1} parent=11 // pred_region
          _
        $region120: #{tpu_custom_call.1} parent=11 // pred_fallthru
          _
        // Predicated region
        $region121: #{tpu_custom_call.1} parent=11 // pred_check
          %p966 = pneg %p776
        $region122: #{tpu_custom_call.1} parent=11 // pred_check_branch
          %968 = sbr.rel (%p966) target = $region124
        $region123: #{tpu_custom_call.1} parent=11 // pred_region
          _
        $region124: #{tpu_custom_call.1} parent=11 // pred_fallthru
          _
        // Predicated region
        $region125: #{tpu_custom_call.1} parent=11 // pred_check
          %p969 = pneg %p797
        $region126: #{tpu_custom_call.1} parent=11 // pred_check_branch
          %971 = sbr.rel (%p969) target = $region128
        $region127: #{tpu_custom_call.1} parent=11 // pred_region
          _
        $region128: #{tpu_custom_call.1} parent=11 // pred_fallthru
          _
        // Predicated region
        $region129: #{tpu_custom_call.1} parent=11 // pred_check
          %p972 = pneg %p818
        $region130: #{tpu_custom_call.1} parent=11 // pred_check_branch
          %974 = sbr.rel (%p972) target = $region132
        $region131: #{tpu_custom_call.1} parent=11 // pred_region
          _
        $region132: #{tpu_custom_call.1} parent=11 // pred_fallthru
          _
      $region12: #{tpu_custom_call.1} parent=5 // pred_fallthru
        _
      %p975 = scmp.lt.s32.totalorder %s84, 2
      // Predicated region
      $region133: #{tpu_custom_call.1} parent=5 // pred_check
        %p976 = pneg %p975
      $region134: #{tpu_custom_call.1} parent=5 // pred_check_branch
        %978 = sbr.rel (%p976) target = $region136
      $region135: #{tpu_custom_call.1} parent=5 // pred_region
        // Predicated region
        $region137: #{tpu_custom_call.1} parent=135 // pred_check
          %p979 = pneg %p104
        $region138: #{tpu_custom_call.1} parent=135 // pred_check_branch
          %981 = sbr.rel (%p979) target = $region140
        $region139: #{tpu_custom_call.1} parent=135 // pred_region
          %p982 = scmp.lt.s32.totalorder %s84, 1
          %s983 = scalar_select %p982, %s84, 1
          %s984 = smul.addr %s983, 2
          %s985 = smul.addr %s984, 8
          %s986 = scalar_lea.vmem %s1, %s985
        $region140: #{tpu_custom_call.1} parent=135 // pred_fallthru
          _
        // Predicated region
        $region141: #{tpu_custom_call.1} parent=135 // pred_check
          %p987 = pneg %p130
        $region142: #{tpu_custom_call.1} parent=135 // pred_check_branch
          %989 = sbr.rel (%p987) target = $region144
        $region143: #{tpu_custom_call.1} parent=135 // pred_region
          %p990 = scmp.lt.s32.totalorder %s84, 1
          %s991 = scalar_select %p990, %s84, 1
          %s992 = smul.addr %s991, 8
          %s993 = scalar_lea.vmem %s3, %s992
        $region144: #{tpu_custom_call.1} parent=135 // pred_fallthru
          _
        // Predicated region
        $region145: #{tpu_custom_call.1} parent=135 // pred_check
          %p994 = pneg %p156
        $region146: #{tpu_custom_call.1} parent=135 // pred_check_branch
          %996 = sbr.rel (%p994) target = $region148
        $region147: #{tpu_custom_call.1} parent=135 // pred_region
          %p997 = scmp.lt.s32.totalorder %s84, 1
          %s998 = scalar_select %p997, %s84, 1
          %s999 = smul.addr %s998, 8
          %s1000 = scalar_lea.vmem %s5, %s999
        $region148: #{tpu_custom_call.1} parent=135 // pred_fallthru
          _
        // Predicated region
        $region149: #{tpu_custom_call.1} parent=135 // pred_check
          %p1001 = pneg %p182
        $region150: #{tpu_custom_call.1} parent=135 // pred_check_branch
          %1003 = sbr.rel (%p1001) target = $region152
        $region151: #{tpu_custom_call.1} parent=135 // pred_region
          %p1004 = scmp.lt.s32.totalorder %s84, 1
          %s1005 = scalar_select %p1004, %s84, 1
          %s1006 = smul.addr %s1005, 8
          %s1007 = scalar_lea.vmem %s7, %s1006
        $region152: #{tpu_custom_call.1} parent=135 // pred_fallthru
          _
      $region136: #{tpu_custom_call.1} parent=5 // pred_fallthru
        _
      %p1008 = scmp.le.s32.totalorder 1, %s84
      %p1009 = scmp.lt.s32.totalorder %s84, 3
      %p1010 = pnand %p1008, %p1009
      %p1011 = pneg %p1010
      // Predicated region
      $region153: #{tpu_custom_call.1} parent=5 // pred_check
        _
      $region154: #{tpu_custom_call.1} parent=5 // pred_check_branch
        %1013 = sbr.rel (%p1010) target = $region156
      $region155: #{tpu_custom_call.1} parent=5 // pred_region
        %s1014 = ssub.s32 %s84, 1
        %p1015 = scmp.lt.s32.totalorder %s89, 1
        %s1016 = scalar_select %p1015, %s89, 1
        %s1017 = smul.addr %s1016, 2
        %s1018 = smul.addr %s1017, 8
        %s1019 = scalar_lea.vmem %s1, %s1018
        %p1020 = pneg %p110
        %p1021 = pneg %p107
        %p1022 = scmp.lt.s32.totalorder %s89, 1
        %s1023 = scalar_select %p1022, %s89, 1
        %s1024 = smul.addr %s1023, 8
        %s1025 = scalar_lea.vmem %s3, %s1024
        %p1026 = pneg %p136
        %p1027 = pneg %p133
        %p1028 = scmp.lt.s32.totalorder %s89, 1
        %s1029 = scalar_select %p1028, %s89, 1
        %s1030 = smul.addr %s1029, 8
        %s1031 = scalar_lea.vmem %s5, %s1030
        %p1032 = pneg %p162
        %p1033 = pneg %p159
        %p1034 = scmp.lt.s32.totalorder %s89, 1
        %s1035 = scalar_select %p1034, %s89, 1
        %s1036 = smul.addr %s1035, 8
        %s1037 = scalar_lea.vmem %s7, %s1036
        %p1038 = pneg %p188
        %p1039 = pneg %p185
        %p1040 = pneg %p209
        %p1041 = pneg %p206
        %p1042 = pneg %p230
        %p1043 = pneg %p227
        %p1044 = pneg %p251
        %p1045 = pneg %p248
        %p1046 = pneg %p272
        %p1047 = pneg %p269
        %p1048 = pneg %p293
        %p1049 = pneg %p290
        %p1050 = pneg %p314
        %p1051 = pneg %p311
        %p1052 = pneg %p335
        %p1053 = pneg %p332
        %p1054 = pneg %p356
        %p1055 = pneg %p353
        %p1056 = pneg %p377
        %p1057 = pneg %p374
        %p1058 = pneg %p398
        %p1059 = pneg %p395
        %p1060 = pneg %p419
        %p1061 = pneg %p416
        %p1062 = pneg %p440
        %p1063 = pneg %p437
        %p1064 = pneg %p461
        %p1065 = pneg %p458
        %p1066 = pneg %p482
        %p1067 = pneg %p479
        %p1068 = pneg %p503
        %p1069 = pneg %p500
        %p1070 = pneg %p524
        %p1071 = pneg %p521
        %p1072 = pneg %p545
        %p1073 = pneg %p542
        %p1074 = pneg %p566
        %p1075 = pneg %p563
        %p1076 = pneg %p587
        %p1077 = pneg %p584
        %p1078 = pneg %p608
        %p1079 = pneg %p605
        %p1080 = pneg %p629
        %p1081 = pneg %p626
        %p1082 = pneg %p650
        %p1083 = pneg %p647
        %p1084 = pneg %p671
        %p1085 = pneg %p668
        %p1086 = pneg %p692
        %p1087 = pneg %p689
        %p1088 = pneg %p713
        %p1089 = pneg %p710
        %p1090 = pneg %p734
        %p1091 = pneg %p731
        %p1092 = pneg %p755
        %p1093 = pneg %p752
        %p1094 = pneg %p776
        %p1095 = pneg %p773
        %p1096 = pneg %p797
        %p1097 = pneg %p794
        %p1098 = pneg %p818
        %p1099 = pneg %p815
        %p1100 = pneg %p844
        %p1101 = pneg %p841
        %s1102 = sand.u32 %s831, 1
        %s1103 = scalar_lea.sflag [#allocation7], %s1102
        %s1104 = sand.u32 %s831, 1
        %s1105 = smul.addr %s1104, 8
        %s1106 = scalar_lea.vmem [#allocation6], %s1105
        %p1107 = pneg %p870
        %p1108 = pneg %p867
        %s1109 = sand.u32 %s857, 1
        %s1110 = scalar_lea.sflag [#allocation9], %s1109
        %s1111 = sand.u32 %s857, 1
        %s1112 = smul.addr %s1111, 16
        %s1113 = scalar_lea.vmem [#allocation8], %s1112
        %p1114 = scmp.lt.s32.totalorder %s89, 1
        %s1115 = scalar_select %p1114, %s89, 1
        %s1116 = smul.addr %s1115, 2
        %s1117 = smul.addr %s1116, 8
        %s1118 = scalar_lea.vmem %s1, %s1117
        %p1119 = scmp.lt.s32.totalorder %s89, 1
        %s1120 = scalar_select %p1119, %s89, 1
        %s1121 = smul.addr %s1120, 8
        %s1122 = scalar_lea.vmem %s3, %s1121
        %p1123 = scmp.lt.s32.totalorder %s89, 1
        %s1124 = scalar_select %p1123, %s89, 1
        %s1125 = smul.addr %s1124, 8
        %s1126 = scalar_lea.vmem %s5, %s1125
        %p1127 = scmp.lt.s32.totalorder %s89, 1
        %s1128 = scalar_select %p1127, %s89, 1
        %s1129 = smul.addr %s1128, 8
        %s1130 = scalar_lea.vmem %s7, %s1129
        %v1132 = vld [vmem:[%s1118] sm:$0xff]
        %v1133 = vld [vmem:[%s1118 + $0x8] sm:$0xff]
        %v1134 = vld [vmem:[%s1122] sm:$0xff]
        %v1135 = vld [vmem:[%s1126] sm:$0x3f]
        %v1136 = vld [vmem:[%s1130] sm:$0x3f]
        %v1137 = vld [vmem:[%s9] sm:$0xff]
        %v1138 = vld [vmem:[%s9 + $0x8] sm:$0xff]
        %v1139 = vld [vmem:[%s9 + $0x10] sm:$0xff]
        %v1140 = vld [vmem:[%s11] sm:$0xff]
        %v1141 = vld [vmem:[%s11 + $0x8] sm:$0xff]
        %v1142 = vld [vmem:[%s11 + $0x10] sm:$0xff]
        %vm1143 = vcmask 261120
        %v1144 = vsel %vm1143, %v1132, 0.0
        %1145 = vadd.xlane.f32.xlu0 %v1144
        %v1146 = vpop.xlane.xlu0 %1145
        %v1147 = vsel %vm1143, %v1133, 0.0
        %1148 = vadd.xlane.f32.xlu0 %v1147
        %v1149 = vpop.xlane.xlu0 %1148
        %v1150 = vrcp.pop 32.0
        %v1151 = vmul.f32 32.0, %v1150
        %v1152 = vsub.f32 1.0, %v1151
        %v1153 = vmul.f32 %v1150, %v1152
        %v1154 = vadd.f32 %v1150, %v1153
        %vm1155 = vweird.f32 %v1150
        %v1156 = vsel %vm1155, %v1150, %v1154
        %v1157 = vmul.f32 %v1146, %v1156
        %v1158 = vmul.f32 %v1149, %v1156
        %v1159 = vsub.f32 %v1132, %v1157
        %v1160 = vsub.f32 %v1133, %v1158
        %v1161 = vmul.f32 %v1159, %v1159
        %v1162 = vmul.f32 %v1160, %v1160
        %v1163 = vsel %vm1143, %v1161, 0.0
        %1164 = vadd.xlane.f32.xlu0 %v1163
        %v1165 = vpop.xlane.xlu0 %1164
        %v1166 = vsel %vm1143, %v1162, 0.0
        %1167 = vadd.xlane.f32.xlu0 %v1166
        %v1168 = vpop.xlane.xlu0 %1167
        %v1169 = vmul.f32 %v1165, %v1156
        %v1170 = vmul.f32 %v1168, %v1156
        %v1171 = vadd.f32 %v1169, 1e-06
        %v1172 = vadd.f32 %v1170, 1e-06
        %v1173 = vrsqrt.pop %v1171
        %v1174 = vmul.f32 %v1173, %v1171
        %v1175 = vmul.f32 %v1174, %v1173
        %v1176 = vmul.f32 0.5, %v1175
        %v1177 = vsub.f32 1.5, %v1176
        %v1178 = vmul.f32 %v1173, %v1177
        %vm1179 = vweird.f32 %v1171
        %vm1180 = vweird.f32 %v1173
        %vm1181 = vmor %vm1179, %vm1180
        %v1182 = vsel %vm1181, %v1173, %v1178
        %v1183 = vrsqrt.pop %v1172
        %v1184 = vmul.f32 %v1183, %v1172
        %v1185 = vmul.f32 %v1184, %v1183
        %v1186 = vmul.f32 0.5, %v1185
        %v1187 = vsub.f32 1.5, %v1186
        %v1188 = vmul.f32 %v1183, %v1187
        %vm1189 = vweird.f32 %v1172
        %vm1190 = vweird.f32 %v1183
        %vm1191 = vmor %vm1189, %vm1190
        %v1192 = vsel %vm1191, %v1183, %v1188
        %v1193 = vmul.f32 %v1159, %v1182
        %v1194 = vmul.f32 %v1160, %v1192
        %v1195 = vadd.f32 %v1135, 1.0
        %v1196 = vperm.slane %v1195, 1
        %v1197 = vmul.f32 %v1193, %v1196
        %v1198 = vmul.f32 %v1194, %v1196
        %v1199 = vperm.slane %v1135, 0
        %v1200 = vadd.f32 %v1197, %v1199
        %v1201 = vadd.f32 %v1198, %v1199
        %v1202 = vsel %vm1143, %v1134, 0.0
        %1203 = vadd.xlane.f32.xlu0 %v1202
        %v1204 = vpop.xlane.xlu0 %1203
        %v1205 = vmul.f32 %v1204, %v1156
        %v1206 = vsub.f32 %v1134, %v1205
        %v1207 = vmul.f32 %v1206, %v1206
        %v1208 = vsel %vm1143, %v1207, 0.0
        %1209 = vadd.xlane.f32.xlu0 %v1208
        %v1210 = vpop.xlane.xlu0 %1209
        %v1211 = vmul.f32 %v1210, %v1156
        %v1212 = vadd.f32 %v1211, 1e-06
        %v1213 = vrsqrt.pop %v1212
        %v1214 = vmul.f32 %v1213, %v1212
        %v1215 = vmul.f32 %v1214, %v1213
        %v1216 = vmul.f32 0.5, %v1215
        %v1217 = vsub.f32 1.5, %v1216
        %v1218 = vmul.f32 %v1213, %v1217
        %vm1219 = vweird.f32 %v1212
        %vm1220 = vweird.f32 %v1213
        %vm1221 = vmor %vm1219, %vm1220
        %v1222 = vsel %vm1221, %v1213, %v1218
        %v1223 = vmul.f32 %v1206, %v1222
        %v1224 = vadd.f32 %v1136, 1.0
        %v1225 = vperm.slane %v1224, 1
        %v1226 = vmul.f32 %v1223, %v1225
        %v1227 = vperm.slane %v1136, 0
        %v1228 = vadd.f32 %v1226, %v1227
        %v1229 = vpack.c.bf16 %v1201, %v1200
        %v1230 = vpack.c.bf16 %v1228, %v1228
        %v1231 = vld [vmem:[%s13] sm:$0xf]
        %v1232 = vld [vmem:[%s13 + $0x4] sm:$0xf]
        %v1233 = vld [vmem:[%s13 + $0x8] sm:$0xf]
        %v1234 = vld [vmem:[%s13 + $0xc] sm:$0xf]
        %v1235 = vld [vmem:[%s15] sm:$0x1]
        %v1237 = vperm.slane %v1235, 0
        %v1243 = vunpack.c.l.b16 %v1231
        %v1244 = vunpack.c.l.b16 %v1232
        %v1245 = vunpack.c.l.b16 %v1233
        %v1246 = vunpack.c.l.b16 %v1234
        %v1247 = vpack.c.b16 %v1244, %v1243
        %v1248 = vpack.c.b16 %v1246, %v1245
        %v1252 = vsel %vm1143, %v1229, 0
        %1254 = vmatpush.bf16.msra.mxu0 0
        %1255 = vmatpush.bf16.msra.mxu0 0
        %1256 = vmatpush.bf16.msra.mxu0 0
        %1257 = vmatpush.bf16.msra.mxu0 0
        %1258 = vmatpush.bf16.msra.mxu0 0
        %1259 = vmatpush.bf16.msra.mxu0 0
        %1260 = vmatpush.bf16.msra.mxu0 %v1248
        %1261 = vmatpush.bf16.msra.mxu0 %v1247
        %1262 = vmatmul.bf16.gmra.mxu0 %v1252
        %v1263 = vpop.f32.mrf.mxu0
        %v1264 = vadd.f32 %v1237, %v1263
        %v1265 = vpop.f32.mrf.mxu0
        %v1266 = vadd.f32 %v1237, %v1265
        %1267 = vdwg.mxu0
        %v1268 = vld [vmem:[%s17] sm:$0xf]
        %v1269 = vld [vmem:[%s17 + $0x4] sm:$0xf]
        %v1270 = vld [vmem:[%s17 + $0x8] sm:$0xf]
        %v1271 = vld [vmem:[%s17 + $0xc] sm:$0xf]
        %v1272 = vld [vmem:[%s19] sm:$0x1]
        %v1274 = vperm.slane %v1272, 0
        %v1280 = vunpack.c.l.b16 %v1268
        %v1281 = vunpack.c.l.b16 %v1269
        %v1282 = vunpack.c.l.b16 %v1270
        %v1283 = vunpack.c.l.b16 %v1271
        %v1284 = vpack.c.b16 %v1281, %v1280
        %v1285 = vpack.c.b16 %v1283, %v1282
        %1288 = vmatpush.bf16.msra.mxu0 0
        %1289 = vmatpush.bf16.msra.mxu0 0
        %1290 = vmatpush.bf16.msra.mxu0 0
        %1291 = vmatpush.bf16.msra.mxu0 0
        %1292 = vmatpush.bf16.msra.mxu0 0
        %1293 = vmatpush.bf16.msra.mxu0 0
        %1294 = vmatpush.bf16.msra.mxu0 %v1285
        %1295 = vmatpush.bf16.msra.mxu0 %v1284
        %1296 = vmatmul.bf16.gmra.mxu0 %v1252
        %v1297 = vpop.f32.mrf.mxu0
        %v1298 = vadd.f32 %v1274, %v1297
        %v1299 = vpop.f32.mrf.mxu0
        %v1300 = vadd.f32 %v1274, %v1299
        %1301 = vdwg.mxu0
        %v1302 = vld [vmem:[%s21] sm:$0xf]
        %v1303 = vld [vmem:[%s21 + $0x4] sm:$0xf]
        %v1304 = vld [vmem:[%s21 + $0x8] sm:$0xf]
        %v1305 = vld [vmem:[%s21 + $0xc] sm:$0xf]
        %v1306 = vld [vmem:[%s23] sm:$0x1]
        %v1308 = vperm.slane %v1306, 0
        %v1314 = vunpack.c.l.b16 %v1302
        %v1315 = vunpack.c.l.b16 %v1303
        %v1316 = vunpack.c.l.b16 %v1304
        %v1317 = vunpack.c.l.b16 %v1305
        %v1318 = vpack.c.b16 %v1315, %v1314
        %v1319 = vpack.c.b16 %v1317, %v1316
        %1322 = vmatpush.bf16.msra.mxu0 0
        %1323 = vmatpush.bf16.msra.mxu0 0
        %1324 = vmatpush.bf16.msra.mxu0 0
        %1325 = vmatpush.bf16.msra.mxu0 0
        %1326 = vmatpush.bf16.msra.mxu0 0
        %1327 = vmatpush.bf16.msra.mxu0 0
        %1328 = vmatpush.bf16.msra.mxu0 %v1319
        %1329 = vmatpush.bf16.msra.mxu0 %v1318
        %1330 = vmatmul.bf16.gmra.mxu0 %v1252
        %v1331 = vpop.f32.mrf.mxu0
        %v1332 = vadd.f32 %v1308, %v1331
        %v1333 = vpop.f32.mrf.mxu0
        %v1334 = vadd.f32 %v1308, %v1333
        %1335 = vdwg.mxu0
        %v1336 = vld [vmem:[%s29] sm:$0xf]
        %v1337 = vld [vmem:[%s29 + $0x4] sm:$0xf]
        %v1338 = vld [vmem:[%s29 + $0x8] sm:$0xf]
        %v1339 = vld [vmem:[%s29 + $0xc] sm:$0xf]
        %v1340 = vld [vmem:[%s31] sm:$0x1]
        %v1342 = vperm.slane %v1340, 0
        %v1348 = vunpack.c.l.b16 %v1336
        %v1349 = vunpack.c.l.b16 %v1337
        %v1350 = vunpack.c.l.b16 %v1338
        %v1351 = vunpack.c.l.b16 %v1339
        %v1352 = vpack.c.b16 %v1349, %v1348
        %v1353 = vpack.c.b16 %v1351, %v1350
        %v1357 = vsel %vm1143, %v1230, 0
        %1359 = vmatpush.bf16.msra.mxu0 0
        %1360 = vmatpush.bf16.msra.mxu0 0
        %1361 = vmatpush.bf16.msra.mxu0 0
        %1362 = vmatpush.bf16.msra.mxu0 0
        %1363 = vmatpush.bf16.msra.mxu0 0
        %1364 = vmatpush.bf16.msra.mxu0 0
        %1365 = vmatpush.bf16.msra.mxu0 %v1353
        %1366 = vmatpush.bf16.msra.mxu0 %v1352
        %1367 = vmatmul.bf16.gmra.mxu0 %v1357
        %v1368 = vpop.f32.mrf.mxu0
        %v1369 = vadd.f32 %v1342, %v1368
        %v1370 = vpop.f32.mrf.mxu0
        %1371 = vdwg.mxu0
        %v1372 = vld [vmem:[%s33] sm:$0xf]
        %v1373 = vld [vmem:[%s33 + $0x4] sm:$0xf]
        %v1374 = vld [vmem:[%s33 + $0x8] sm:$0xf]
        %v1375 = vld [vmem:[%s33 + $0xc] sm:$0xf]
        %v1376 = vld [vmem:[%s35] sm:$0x1]
        %v1378 = vperm.slane %v1376, 0
        %v1384 = vunpack.c.l.b16 %v1372
        %v1385 = vunpack.c.l.b16 %v1373
        %v1386 = vunpack.c.l.b16 %v1374
        %v1387 = vunpack.c.l.b16 %v1375
        %v1388 = vpack.c.b16 %v1385, %v1384
        %v1389 = vpack.c.b16 %v1387, %v1386
        %1392 = vmatpush.bf16.msra.mxu0 0
        %1393 = vmatpush.bf16.msra.mxu0 0
        %1394 = vmatpush.bf16.msra.mxu0 0
        %1395 = vmatpush.bf16.msra.mxu0 0
        %1396 = vmatpush.bf16.msra.mxu0 0
        %1397 = vmatpush.bf16.msra.mxu0 0
        %1398 = vmatpush.bf16.msra.mxu0 %v1389
        %1399 = vmatpush.bf16.msra.mxu0 %v1388
        %1400 = vmatmul.bf16.gmra.mxu0 %v1357
        %v1401 = vpop.f32.mrf.mxu0
        %v1402 = vadd.f32 %v1378, %v1401
        %v1403 = vpop.f32.mrf.mxu0
        %1404 = vdwg.mxu0
        %v1405 = vld [vmem:[%s37] sm:$0xf]
        %v1406 = vld [vmem:[%s37 + $0x4] sm:$0xf]
        %v1407 = vld [vmem:[%s37 + $0x8] sm:$0xf]
        %v1408 = vld [vmem:[%s37 + $0xc] sm:$0xf]
        %v1409 = vld [vmem:[%s39] sm:$0x1]
        %v1411 = vperm.slane %v1409, 0
        %v1417 = vunpack.c.l.b16 %v1405
        %v1418 = vunpack.c.l.b16 %v1406
        %v1419 = vunpack.c.l.b16 %v1407
        %v1420 = vunpack.c.l.b16 %v1408
        %v1421 = vpack.c.b16 %v1418, %v1417
        %v1422 = vpack.c.b16 %v1420, %v1419
        %1425 = vmatpush.bf16.msra.mxu0 0
        %1426 = vmatpush.bf16.msra.mxu0 0
        %1427 = vmatpush.bf16.msra.mxu0 0
        %1428 = vmatpush.bf16.msra.mxu0 0
        %1429 = vmatpush.bf16.msra.mxu0 0
        %1430 = vmatpush.bf16.msra.mxu0 0
        %1431 = vmatpush.bf16.msra.mxu0 %v1422
        %1432 = vmatpush.bf16.msra.mxu0 %v1421
        %1433 = vmatmul.bf16.gmra.mxu0 %v1357
        %v1434 = vpop.f32.mrf.mxu0
        %v1435 = vadd.f32 %v1411, %v1434
        %v1436 = vpop.f32.mrf.mxu0
        %1437 = vdwg.mxu0
        %v1438 = vld [vmem:[%s25] sm:$0x1]
        %v1439 = vld [vmem:[%s27] sm:$0x1]
        %v1440 = vld [vmem:[%s41] sm:$0x1]
        %v1441 = vld [vmem:[%s43] sm:$0x1]
        %v1442 = vmul.f32 %v1369, %v1369
        %vm1443 = vcmask 130048
        %v1444 = vsel %vm1443, %v1442, 0.0
        %1445 = vadd.xlane.f32.xlu0 %v1444
        %v1446 = vpop.xlane.xlu0 %1445
        %v1447 = vrcp.pop 16.0
        %v1448 = vmul.f32 16.0, %v1447
        %v1449 = vsub.f32 1.0, %v1448
        %v1450 = vmul.f32 %v1447, %v1449
        %v1451 = vadd.f32 %v1447, %v1450
        %vm1452 = vweird.f32 %v1447
        %v1453 = vsel %vm1452, %v1447, %v1451
        %v1454 = vmul.f32 %v1446, %v1453
        %v1455 = vadd.f32 %v1454, 1e-06
        %v1456 = vrsqrt.pop %v1455
        %v1457 = vmul.f32 %v1456, %v1455
        %v1458 = vmul.f32 %v1457, %v1456
        %v1459 = vmul.f32 0.5, %v1458
        %v1460 = vsub.f32 1.5, %v1459
        %v1461 = vmul.f32 %v1456, %v1460
        %vm1462 = vweird.f32 %v1455
        %vm1463 = vweird.f32 %v1456
        %vm1464 = vmor %vm1462, %vm1463
        %v1465 = vsel %vm1464, %v1456, %v1461
        %v1466 = vmul.f32 %v1369, %v1465
        %v1468 = vperm.slane %v1440, 0
        %v1470 = vmul.f32 %v1466, %v1468
        %v1471 = vsub.f32 0.0, %v1470
        %1473 = vrot.lane.b32.xlu0 %v1471, 120
        %v1474 = vpop.permute.xlu0 %1473
        %1477 = vrot.lane.b32.xlu0 %v1470, 8
        %v1478 = vpop.permute.xlu0 %1477
        %vm1480 = vcmask 64512
        %v1481 = vsel %vm1480, %v1474, %v1478
        %v1482 = vmul.f32 %v1470, %v1137
        %v1483 = vmul.f32 %v1481, %v1140
        %v1484 = vadd.f32 %v1482, %v1483
        %v1485 = vpack.c.bf16 %v1484, %v1484
        %vm1486 = vcmask 125952
        %1487 = vst.msk [vmem:[#allocation2] sm:$0xf] %vm1486, %v1485
        %v1488 = vmul.f32 %v1264, %v1264
        %v1489 = vmul.f32 %v1266, %v1266
        %v1490 = vsel %vm1443, %v1488, 0.0
        %1491 = vadd.xlane.f32.xlu0 %v1490
        %v1492 = vpop.xlane.xlu0 %1491
        %v1493 = vsel %vm1443, %v1489, 0.0
        %1494 = vadd.xlane.f32.xlu0 %v1493
        %v1495 = vpop.xlane.xlu0 %1494
        %v1496 = vmul.f32 %v1492, %v1453
        %v1497 = vmul.f32 %v1495, %v1453
        %v1498 = vadd.f32 %v1496, 1e-06
        %v1499 = vadd.f32 %v1497, 1e-06
        %v1500 = vrsqrt.pop %v1498
        %v1501 = vmul.f32 %v1500, %v1498
        %v1502 = vmul.f32 %v1501, %v1500
        %v1503 = vmul.f32 0.5, %v1502
        %v1504 = vsub.f32 1.5, %v1503
        %v1505 = vmul.f32 %v1500, %v1504
        %vm1506 = vweird.f32 %v1498
        %vm1507 = vweird.f32 %v1500
        %vm1508 = vmor %vm1506, %vm1507
        %v1509 = vsel %vm1508, %v1500, %v1505
        %v1510 = vrsqrt.pop %v1499
        %v1511 = vmul.f32 %v1510, %v1499
        %v1512 = vmul.f32 %v1511, %v1510
        %v1513 = vmul.f32 0.5, %v1512
        %v1514 = vsub.f32 1.5, %v1513
        %v1515 = vmul.f32 %v1510, %v1514
        %vm1516 = vweird.f32 %v1499
        %vm1517 = vweird.f32 %v1510
        %vm1518 = vmor %vm1516, %vm1517
        %v1519 = vsel %vm1518, %v1510, %v1515
        %v1520 = vmul.f32 %v1264, %v1509
        %v1521 = vmul.f32 %v1266, %v1519
        %v1523 = vperm.slane %v1438, 0
        %v1525 = vmul.f32 %v1520, %v1523
        %v1526 = vmul.f32 %v1521, %v1523
        %v1527 = vsub.f32 0.0, %v1525
        %v1528 = vsub.f32 0.0, %v1526
        %1531 = vrot.lane.b32.xlu0 %v1527, 120
        %v1532 = vpop.permute.xlu0 %1531
        %1533 = vrot.lane.b32.xlu0 %v1528, 120
        %v1534 = vpop.permute.xlu0 %1533
        %1539 = vrot.lane.b32.xlu0 %v1525, 8
        %v1540 = vpop.permute.xlu0 %1539
        %1541 = vrot.lane.b32.xlu0 %v1526, 8
        %v1542 = vpop.permute.xlu0 %1541
        %v1545 = vsel %vm1480, %v1532, %v1540
        %v1546 = vsel %vm1480, %v1534, %v1542
        %v1547 = vmul.f32 %v1525, %v1138
        %v1548 = vmul.f32 %v1526, %v1139
        %v1549 = vmul.f32 %v1545, %v1141
        %v1550 = vmul.f32 %v1546, %v1142
        %v1551 = vadd.f32 %v1547, %v1549
        %v1552 = vadd.f32 %v1548, %v1550
        %v1553 = vpack.c.bf16 %v1551, %v1551
        %v1554 = vpack.c.bf16 %v1552, %v1552
        %1555 = vst.msk [vmem:[#allocation2 + $0x4] sm:$0xf] %vm1486, %v1553
        %1556 = vst.msk [vmem:[#allocation2 + $0x8] sm:$0xf] %vm1486, %v1554
        %v1557 = vmul.f32 %v1402, %v1402
        %v1558 = vsel %vm1443, %v1557, 0.0
        %1559 = vadd.xlane.f32.xlu0 %v1558
        %v1560 = vpop.xlane.xlu0 %1559
        %v1561 = vmul.f32 %v1560, %v1453
        %v1562 = vadd.f32 %v1561, 1e-06
        %v1563 = vrsqrt.pop %v1562
        %v1564 = vmul.f32 %v1563, %v1562
        %v1565 = vmul.f32 %v1564, %v1563
        %v1566 = vmul.f32 0.5, %v1565
        %v1567 = vsub.f32 1.5, %v1566
        %v1568 = vmul.f32 %v1563, %v1567
        %vm1569 = vweird.f32 %v1562
        %vm1570 = vweird.f32 %v1563
        %vm1571 = vmor %vm1569, %vm1570
        %v1572 = vsel %vm1571, %v1563, %v1568
        %v1573 = vmul.f32 %v1402, %v1572
        %v1575 = vperm.slane %v1441, 0
        %v1577 = vmul.f32 %v1573, %v1575
        %v1578 = vsub.f32 0.0, %v1577
        %1580 = vrot.lane.b32.xlu0 %v1578, 120
        %v1581 = vpop.permute.xlu0 %1580
        %1584 = vrot.lane.b32.xlu0 %v1577, 8
        %v1585 = vpop.permute.xlu0 %1584
        %v1587 = vsel %vm1480, %v1581, %v1585
        %v1588 = vmul.f32 %v1577, %v1137
        %v1589 = vmul.f32 %v1587, %v1140
        %v1590 = vadd.f32 %v1588, %v1589
        %v1591 = vpack.c.bf16 %v1590, %v1590
        %1592 = vst.msk [vmem:[#allocation3] sm:$0xf] %vm1486, %v1591
        %v1593 = vmul.f32 %v1298, %v1298
        %v1594 = vmul.f32 %v1300, %v1300
        %v1595 = vsel %vm1443, %v1593, 0.0
        %1596 = vadd.xlane.f32.xlu0 %v1595
        %v1597 = vpop.xlane.xlu0 %1596
        %v1598 = vsel %vm1443, %v1594, 0.0
        %1599 = vadd.xlane.f32.xlu0 %v1598
        %v1600 = vpop.xlane.xlu0 %1599
        %v1601 = vmul.f32 %v1597, %v1453
        %v1602 = vmul.f32 %v1600, %v1453
        %v1603 = vadd.f32 %v1601, 1e-06
        %v1604 = vadd.f32 %v1602, 1e-06
        %v1605 = vrsqrt.pop %v1603
        %v1606 = vmul.f32 %v1605, %v1603
        %v1607 = vmul.f32 %v1606, %v1605
        %v1608 = vmul.f32 0.5, %v1607
        %v1609 = vsub.f32 1.5, %v1608
        %v1610 = vmul.f32 %v1605, %v1609
        %vm1611 = vweird.f32 %v1603
        %vm1612 = vweird.f32 %v1605
        %vm1613 = vmor %vm1611, %vm1612
        %v1614 = vsel %vm1613, %v1605, %v1610
        %v1615 = vrsqrt.pop %v1604
        %v1616 = vmul.f32 %v1615, %v1604
        %v1617 = vmul.f32 %v1616, %v1615
        %v1618 = vmul.f32 0.5, %v1617
        %v1619 = vsub.f32 1.5, %v1618
        %v1620 = vmul.f32 %v1615, %v1619
        %vm1621 = vweird.f32 %v1604
        %vm1622 = vweird.f32 %v1615
        %vm1623 = vmor %vm1621, %vm1622
        %v1624 = vsel %vm1623, %v1615, %v1620
        %v1625 = vmul.f32 %v1298, %v1614
        %v1626 = vmul.f32 %v1300, %v1624
        %v1628 = vperm.slane %v1439, 0
        %v1630 = vmul.f32 %v1625, %v1628
        %v1631 = vmul.f32 %v1626, %v1628
        %v1632 = vsub.f32 0.0, %v1630
        %v1633 = vsub.f32 0.0, %v1631
        %1636 = vrot.lane.b32.xlu0 %v1632, 120
        %v1637 = vpop.permute.xlu0 %1636
        %1638 = vrot.lane.b32.xlu0 %v1633, 120
        %v1639 = vpop.permute.xlu0 %1638
        %1644 = vrot.lane.b32.xlu0 %v1630, 8
        %v1645 = vpop.permute.xlu0 %1644
        %1646 = vrot.lane.b32.xlu0 %v1631, 8
        %v1647 = vpop.permute.xlu0 %1646
        %v1650 = vsel %vm1480, %v1637, %v1645
        %v1651 = vsel %vm1480, %v1639, %v1647
        %v1652 = vmul.f32 %v1630, %v1138
        %v1653 = vmul.f32 %v1631, %v1139
        %v1654 = vmul.f32 %v1650, %v1141
        %v1655 = vmul.f32 %v1651, %v1142
        %v1656 = vadd.f32 %v1652, %v1654
        %v1657 = vadd.f32 %v1653, %v1655
        %v1658 = vpack.c.bf16 %v1656, %v1656
        %v1659 = vpack.c.bf16 %v1657, %v1657
        %1660 = vst.msk [vmem:[#allocation3 + $0x4] sm:$0xf] %vm1486, %v1658
        %1661 = vst.msk [vmem:[#allocation3 + $0x8] sm:$0xf] %vm1486, %v1659
        %v1662 = vpack.c.bf16 %v1435, %v1435
        %1663 = vst.msk [vmem:[#allocation4] sm:$0xf] %vm1486, %v1662
        %v1664 = vpack.c.bf16 %v1332, %v1332
        %v1665 = vpack.c.bf16 %v1334, %v1334
        %1666 = vst.msk [vmem:[#allocation4 + $0x4] sm:$0xf] %vm1486, %v1664
        %1667 = vst.msk [vmem:[#allocation4 + $0x8] sm:$0xf] %vm1486, %v1665
        %v1668 = vld [vmem:[#allocation2] sm:$0xf]
        %v1669 = vld [vmem:[#allocation2 + $0x4] sm:$0xf]
        %v1670 = vld [vmem:[#allocation2 + $0x8] sm:$0xf]
        %v1671 = vld [vmem:[#allocation3] sm:$0xf]
        %v1672 = vld [vmem:[#allocation3 + $0x4] sm:$0xf]
        %v1673 = vld [vmem:[#allocation3 + $0x8] sm:$0xf]
        %v1674 = vld [vmem:[#allocation4] sm:$0xf]
        %v1675 = vld [vmem:[#allocation4 + $0x4] sm:$0xf]
        %v1676 = vld [vmem:[#allocation4 + $0x8] sm:$0xf]
        %v1680 = vunpack.c.l.b16 %v1668
        %v1681 = vunpack.c.l.b16 %v1669
        %v1682 = vunpack.c.l.b16 %v1670
        %v1683 = vpack.c.b16 %v1681, %v1680
        %v1684 = vpack.c.b16 %v1682, %v1682
        %v1688 = vunpack.c.l.b16 %v1671
        %v1689 = vunpack.c.l.b16 %v1672
        %v1690 = vunpack.c.l.b16 %v1673
        %v1691 = vpack.c.b16 %v1689, %v1688
        %v1692 = vpack.c.b16 %v1690, %v1690
        %v1694 = vsel %vm1443, %v1683, 0
        %v1697 = vsel %vm1443, %v1684, 0
        %v1700 = vsel %vm1443, %v1691, 0
        %v1703 = vsel %vm1443, %v1692, 0
        %1705 = vmatpush.bf16.xpose.msra.mxu0 0
        %1706 = vmatpush.bf16.xpose.msra.mxu0 0
        %1707 = vmatpush.bf16.xpose.msra.mxu0 0
        %1708 = vmatpush.bf16.xpose.msra.mxu0 0
        %1709 = vmatpush.bf16.xpose.msra.mxu0 0
        %1710 = vmatpush.bf16.xpose.msra.mxu0 0
        %1711 = vmatpush.bf16.xpose.msra.mxu0 %v1703
        %1712 = vmatpush.bf16.xpose.msra.mxu0 %v1700
        %1713 = vmatmul.bf16.gmra.mxu0 %v1694
        %v1714 = vpop.f32.mrf.mxu0
        %v1715 = vadd.f32 0.0, %v1714
        %v1716 = vpop.f32.mrf.mxu0
        %v1717 = vadd.f32 0.0, %v1716
        %1718 = vmatmul.bf16.gmra.mxu0 %v1697
        %v1719 = vpop.f32.mrf.mxu0
        %v1720 = vadd.f32 0.0, %v1719
        %v1721 = vpop.f32.mrf.mxu0
        %1722 = vdwg.mxu0
        %v1723 = vmul.f32 %v1715, 0.25
        %v1724 = vmul.f32 %v1717, 0.25
        %v1725 = vmul.f32 %v1720, 0.25
        %vm1726 = vcmask 195584
        %v1727 = vsel %vm1726, %v1723, -inf
        %1728 = vmax.xlane.f32.xlu0 %v1727
        %v1729 = vpop.xlane.xlu0 %1728
        %v1730 = vsel %vm1726, %v1724, -inf
        %1731 = vmax.xlane.f32.xlu0 %v1730
        %v1732 = vpop.xlane.xlu0 %1731
        %v1733 = vsel %vm1726, %v1725, -inf
        %1734 = vmax.xlane.f32.xlu0 %v1733
        %v1735 = vpop.xlane.xlu0 %1734
        %v1736 = vsub.f32 %v1723, %v1729
        %v1737 = vsub.f32 %v1724, %v1732
        %v1738 = vsub.f32 %v1725, %v1735
        %v1739 = vmul.f32 %v1736, 1.442695
        %v1740 = vpow.pop %v1739
        %v1741 = vmul.f32 %v1737, 1.442695
        %v1742 = vpow.pop %v1741
        %v1743 = vmul.f32 %v1738, 1.442695
        %v1744 = vpow.pop %v1743
        %v1745 = vsel %vm1726, %v1740, 0.0
        %1746 = vadd.xlane.f32.xlu0 %v1745
        %v1747 = vpop.xlane.xlu0 %1746
        %v1748 = vsel %vm1726, %v1742, 0.0
        %1749 = vadd.xlane.f32.xlu0 %v1748
        %v1750 = vpop.xlane.xlu0 %1749
        %v1751 = vsel %vm1726, %v1744, 0.0
        %1752 = vadd.xlane.f32.xlu0 %v1751
        %v1753 = vpop.xlane.xlu0 %1752
        %v1754 = vrcp.pop %v1747
        %v1755 = vrcp.pop %v1750
        %v1756 = vrcp.pop %v1753
        %v1757 = vmul.f32 %v1740, %v1754
        %v1758 = vmul.f32 %v1742, %v1755
        %v1759 = vmul.f32 %v1744, %v1756
        %v1760 = vpack.c.bf16 %v1758, %v1757
        %v1761 = vpack.c.bf16 %v1759, %v1759
        %v1765 = vunpack.c.l.b16 %v1674
        %v1766 = vunpack.c.l.b16 %v1675
        %v1767 = vunpack.c.l.b16 %v1676
        %v1768 = vpack.c.b16 %v1766, %v1765
        %v1769 = vpack.c.b16 %v1767, %v1767
        %v1772 = vsel %vm1726, %v1760, 0
        %v1775 = vsel %vm1726, %v1761, 0
        %vm1777 = vcmask 1043456
        %v1779 = vsel %vm1777, %v1769, 0
        %1781 = vmatpush.bf16.msra.mxu0 0
        %1782 = vmatpush.bf16.msra.mxu0 0
        %1783 = vmatpush.bf16.msra.mxu0 0
        %1784 = vmatpush.bf16.msra.mxu0 0
        %1785 = vmatpush.bf16.msra.mxu0 0
        %1786 = vmatpush.bf16.msra.mxu0 0
        %1787 = vmatpush.bf16.msra.mxu0 %v1779
        %1788 = vmatpush.bf16.msra.mxu0 %v1768
        %1789 = vmatmul.bf16.gmra.mxu0 %v1772
        %v1790 = vpop.f32.mrf.mxu0
        %v1791 = vadd.f32 0.0, %v1790
        %v1792 = vpop.f32.mrf.mxu0
        %v1793 = vadd.f32 0.0, %v1792
        %1794 = vmatmul.bf16.gmra.mxu0 %v1775
        %v1795 = vpop.f32.mrf.mxu0
        %v1796 = vadd.f32 0.0, %v1795
        %v1797 = vpop.f32.mrf.mxu0
        %1798 = vdwg.mxu0
        %v1799 = vpack.c.bf16 %v1791, %v1791
        %v1800 = vpack.c.bf16 %v1793, %v1793
        %v1801 = vpack.c.bf16 %v1796, %v1796
        %1802 = vst.msk [vmem:[#allocation5] sm:$0xf] %vm1486, %v1799
        %1803 = vst.msk [vmem:[#allocation5 + $0x4] sm:$0xf] %vm1486, %v1800
        %1804 = vst.msk [vmem:[#allocation5 + $0x8] sm:$0xf] %vm1486, %v1801
        %1806 = vrot.lane.b32.xlu0 %v1442, 112
        %v1807 = vpop.permute.xlu0 %1806
        %v1809 = vsel %vm1443, %v1807, 0.0
        %1810 = vadd.xlane.f32.xlu0 %v1809
        %v1811 = vpop.xlane.xlu0 %1810
        %v1812 = vmul.f32 %v1811, %v1453
        %v1813 = vadd.f32 %v1812, 1e-06
        %v1814 = vrsqrt.pop %v1813
        %v1815 = vmul.f32 %v1814, %v1813
        %v1816 = vmul.f32 %v1815, %v1814
        %v1817 = vmul.f32 0.5, %v1816
        %v1818 = vsub.f32 1.5, %v1817
        %v1819 = vmul.f32 %v1814, %v1818
        %vm1820 = vweird.f32 %v1813
        %vm1821 = vweird.f32 %v1814
        %vm1822 = vmor %vm1820, %vm1821
        %v1823 = vsel %vm1822, %v1814, %v1819
        %v1824 = vmul.f32 %v1369, %v1823
        %1825 = vrot.lane.b32.xlu0 %v1468, 16
        %v1826 = vpop.permute.xlu0 %1825
        %v1828 = vmul.f32 %v1824, %v1826
        %v1829 = vsub.f32 0.0, %v1828
        %1831 = vrot.lane.b32.xlu0 %v1829, 104
        %v1832 = vpop.permute.xlu0 %1831
        %1835 = vrot.lane.b32.xlu0 %v1828, 120
        %v1836 = vpop.permute.xlu0 %1835
        %v1838 = vsel %vm1480, %v1832, %v1836
        %1840 = vrot.lane.b32.xlu0 %v1137, 16
        %v1841 = vpop.permute.xlu0 %1840
        %v1843 = vmul.f32 %v1828, %v1841
        %v1844 = vmul.f32 %v1838, %v1140
        %1846 = vrot.lane.b32.xlu0 %v1844, 16
        %v1847 = vpop.permute.xlu0 %1846
        %v1849 = vadd.f32 %v1843, %v1847
        %v1850 = vpack.c.bf16 %v1849, %v1849
        %1852 = vrot.lane.b32.xlu0 %v1850, 112
        %v1853 = vpop.permute.xlu0 %1852
        %1855 = vst.msk [vmem:[#allocation2] sm:$0xf] %vm1486, %v1853
        %1858 = vrot.lane.b32.xlu0 %v1488, 112
        %v1859 = vpop.permute.xlu0 %1858
        %1860 = vrot.lane.b32.xlu0 %v1489, 112
        %v1861 = vpop.permute.xlu0 %1860
        %v1864 = vsel %vm1443, %v1859, 0.0
        %1865 = vadd.xlane.f32.xlu0 %v1864
        %v1866 = vpop.xlane.xlu0 %1865
        %v1867 = vsel %vm1443, %v1861, 0.0
        %1868 = vadd.xlane.f32.xlu0 %v1867
        %v1869 = vpop.xlane.xlu0 %1868
        %v1870 = vmul.f32 %v1866, %v1453
        %v1871 = vmul.f32 %v1869, %v1453
        %v1872 = vadd.f32 %v1870, 1e-06
        %v1873 = vadd.f32 %v1871, 1e-06
        %v1874 = vrsqrt.pop %v1872
        %v1875 = vmul.f32 %v1874, %v1872
        %v1876 = vmul.f32 %v1875, %v1874
        %v1877 = vmul.f32 0.5, %v1876
        %v1878 = vsub.f32 1.5, %v1877
        %v1879 = vmul.f32 %v1874, %v1878
        %vm1880 = vweird.f32 %v1872
        %vm1881 = vweird.f32 %v1874
        %vm1882 = vmor %vm1880, %vm1881
        %v1883 = vsel %vm1882, %v1874, %v1879
        %v1884 = vrsqrt.pop %v1873
        %v1885 = vmul.f32 %v1884, %v1873
        %v1886 = vmul.f32 %v1885, %v1884
        %v1887 = vmul.f32 0.5, %v1886
        %v1888 = vsub.f32 1.5, %v1887
        %v1889 = vmul.f32 %v1884, %v1888
        %vm1890 = vweird.f32 %v1873
        %vm1891 = vweird.f32 %v1884
        %vm1892 = vmor %vm1890, %vm1891
        %v1893 = vsel %vm1892, %v1884, %v1889
        %v1894 = vmul.f32 %v1264, %v1883
        %v1895 = vmul.f32 %v1266, %v1893
        %1896 = vrot.lane.b32.xlu0 %v1523, 16
        %v1897 = vpop.permute.xlu0 %1896
        %v1899 = vmul.f32 %v1894, %v1897
        %v1900 = vmul.f32 %v1895, %v1897
        %v1901 = vsub.f32 0.0, %v1899
        %v1902 = vsub.f32 0.0, %v1900
        %1905 = vrot.lane.b32.xlu0 %v1901, 104
        %v1906 = vpop.permute.xlu0 %1905
        %1907 = vrot.lane.b32.xlu0 %v1902, 104
        %v1908 = vpop.permute.xlu0 %1907
        %1913 = vrot.lane.b32.xlu0 %v1899, 120
        %v1914 = vpop.permute.xlu0 %1913
        %1915 = vrot.lane.b32.xlu0 %v1900, 120
        %v1916 = vpop.permute.xlu0 %1915
        %v1919 = vsel %vm1480, %v1906, %v1914
        %v1920 = vsel %vm1480, %v1908, %v1916
        %1923 = vrot.lane.b32.xlu0 %v1138, 16
        %v1924 = vpop.permute.xlu0 %1923
        %1925 = vrot.lane.b32.xlu0 %v1139, 16
        %v1926 = vpop.permute.xlu0 %1925
        %v1929 = vmul.f32 %v1899, %v1924
        %v1930 = vmul.f32 %v1900, %v1926
        %v1931 = vmul.f32 %v1919, %v1141
        %v1932 = vmul.f32 %v1920, %v1142
        %1935 = vrot.lane.b32.xlu0 %v1931, 16
        %v1936 = vpop.permute.xlu0 %1935
        %1937 = vrot.lane.b32.xlu0 %v1932, 16
        %v1938 = vpop.permute.xlu0 %1937
        %v1941 = vadd.f32 %v1929, %v1936
        %v1942 = vadd.f32 %v1930, %v1938
        %v1943 = vpack.c.bf16 %v1941, %v1941
        %v1944 = vpack.c.bf16 %v1942, %v1942
        %1947 = vrot.lane.b32.xlu0 %v1943, 112
        %v1948 = vpop.permute.xlu0 %1947
        %1949 = vrot.lane.b32.xlu0 %v1944, 112
        %v1950 = vpop.permute.xlu0 %1949
        %1953 = vst.msk [vmem:[#allocation2 + $0x4] sm:$0xf] %vm1486, %v1948
        %1954 = vst.msk [vmem:[#allocation2 + $0x8] sm:$0xf] %vm1486, %v1950
        %1956 = vrot.lane.b32.xlu0 %v1557, 112
        %v1957 = vpop.permute.xlu0 %1956
        %v1959 = vsel %vm1443, %v1957, 0.0
        %1960 = vadd.xlane.f32.xlu0 %v1959
        %v1961 = vpop.xlane.xlu0 %1960
        %v1962 = vmul.f32 %v1961, %v1453
        %v1963 = vadd.f32 %v1962, 1e-06
        %v1964 = vrsqrt.pop %v1963
        %v1965 = vmul.f32 %v1964, %v1963
        %v1966 = vmul.f32 %v1965, %v1964
        %v1967 = vmul.f32 0.5, %v1966
        %v1968 = vsub.f32 1.5, %v1967
        %v1969 = vmul.f32 %v1964, %v1968
        %vm1970 = vweird.f32 %v1963
        %vm1971 = vweird.f32 %v1964
        %vm1972 = vmor %vm1970, %vm1971
        %v1973 = vsel %vm1972, %v1964, %v1969
        %v1974 = vmul.f32 %v1402, %v1973
        %1975 = vrot.lane.b32.xlu0 %v1575, 16
        %v1976 = vpop.permute.xlu0 %1975
        %v1978 = vmul.f32 %v1974, %v1976
        %v1979 = vsub.f32 0.0, %v1978
        %1981 = vrot.lane.b32.xlu0 %v1979, 104
        %v1982 = vpop.permute.xlu0 %1981
        %1985 = vrot.lane.b32.xlu0 %v1978, 120
        %v1986 = vpop.permute.xlu0 %1985
        %v1988 = vsel %vm1480, %v1982, %v1986
        %v1989 = vmul.f32 %v1978, %v1841
        %v1990 = vmul.f32 %v1988, %v1140
        %1992 = vrot.lane.b32.xlu0 %v1990, 16
        %v1993 = vpop.permute.xlu0 %1992
        %v1995 = vadd.f32 %v1989, %v1993
        %v1996 = vpack.c.bf16 %v1995, %v1995
        %1998 = vrot.lane.b32.xlu0 %v1996, 112
        %v1999 = vpop.permute.xlu0 %1998
        %2001 = vst.msk [vmem:[#allocation3] sm:$0xf] %vm1486, %v1999
        %2004 = vrot.lane.b32.xlu0 %v1593, 112
        %v2005 = vpop.permute.xlu0 %2004
        %2006 = vrot.lane.b32.xlu0 %v1594, 112
        %v2007 = vpop.permute.xlu0 %2006
        %v2010 = vsel %vm1443, %v2005, 0.0
        %2011 = vadd.xlane.f32.xlu0 %v2010
        %v2012 = vpop.xlane.xlu0 %2011
        %v2013 = vsel %vm1443, %v2007, 0.0
        %2014 = vadd.xlane.f32.xlu0 %v2013
        %v2015 = vpop.xlane.xlu0 %2014
        %v2016 = vmul.f32 %v2012, %v1453
        %v2017 = vmul.f32 %v2015, %v1453
        %v2018 = vadd.f32 %v2016, 1e-06
        %v2019 = vadd.f32 %v2017, 1e-06
        %v2020 = vrsqrt.pop %v2018
        %v2021 = vmul.f32 %v2020, %v2018
        %v2022 = vmul.f32 %v2021, %v2020
        %v2023 = vmul.f32 0.5, %v2022
        %v2024 = vsub.f32 1.5, %v2023
        %v2025 = vmul.f32 %v2020, %v2024
        %vm2026 = vweird.f32 %v2018
        %vm2027 = vweird.f32 %v2020
        %vm2028 = vmor %vm2026, %vm2027
        %v2029 = vsel %vm2028, %v2020, %v2025
        %v2030 = vrsqrt.pop %v2019
        %v2031 = vmul.f32 %v2030, %v2019
        %v2032 = vmul.f32 %v2031, %v2030
        %v2033 = vmul.f32 0.5, %v2032
        %v2034 = vsub.f32 1.5, %v2033
        %v2035 = vmul.f32 %v2030, %v2034
        %vm2036 = vweird.f32 %v2019
        %vm2037 = vweird.f32 %v2030
        %vm2038 = vmor %vm2036, %vm2037
        %v2039 = vsel %vm2038, %v2030, %v2035
        %v2040 = vmul.f32 %v1298, %v2029
        %v2041 = vmul.f32 %v1300, %v2039
        %2042 = vrot.lane.b32.xlu0 %v1628, 16
        %v2043 = vpop.permute.xlu0 %2042
        %v2045 = vmul.f32 %v2040, %v2043
        %v2046 = vmul.f32 %v2041, %v2043
        %v2047 = vsub.f32 0.0, %v2045
        %v2048 = vsub.f32 0.0, %v2046
        %2051 = vrot.lane.b32.xlu0 %v2047, 104
        %v2052 = vpop.permute.xlu0 %2051
        %2053 = vrot.lane.b32.xlu0 %v2048, 104
        %v2054 = vpop.permute.xlu0 %2053
        %2059 = vrot.lane.b32.xlu0 %v2045, 120
        %v2060 = vpop.permute.xlu0 %2059
        %2061 = vrot.lane.b32.xlu0 %v2046, 120
        %v2062 = vpop.permute.xlu0 %2061
        %v2065 = vsel %vm1480, %v2052, %v2060
        %v2066 = vsel %vm1480, %v2054, %v2062
        %v2067 = vmul.f32 %v2045, %v1924
        %v2068 = vmul.f32 %v2046, %v1926
        %v2069 = vmul.f32 %v2065, %v1141
        %v2070 = vmul.f32 %v2066, %v1142
        %2073 = vrot.lane.b32.xlu0 %v2069, 16
        %v2074 = vpop.permute.xlu0 %2073
        %2075 = vrot.lane.b32.xlu0 %v2070, 16
        %v2076 = vpop.permute.xlu0 %2075
        %v2079 = vadd.f32 %v2067, %v2074
        %v2080 = vadd.f32 %v2068, %v2076
        %v2081 = vpack.c.bf16 %v2079, %v2079
        %v2082 = vpack.c.bf16 %v2080, %v2080
        %2085 = vrot.lane.b32.xlu0 %v2081, 112
        %v2086 = vpop.permute.xlu0 %2085
        %2087 = vrot.lane.b32.xlu0 %v2082, 112
        %v2088 = vpop.permute.xlu0 %2087
        %2091 = vst.msk [vmem:[#allocation3 + $0x4] sm:$0xf] %vm1486, %v2086
        %2092 = vst.msk [vmem:[#allocation3 + $0x8] sm:$0xf] %vm1486, %v2088
        %2094 = vrot.lane.b32.xlu0 %v1662, 112
        %v2095 = vpop.permute.xlu0 %2094
        %2097 = vst.msk [vmem:[#allocation4] sm:$0xf] %vm1486, %v2095
        %2100 = vrot.lane.b32.xlu0 %v1664, 112
        %v2101 = vpop.permute.xlu0 %2100
        %2102 = vrot.lane.b32.xlu0 %v1665, 112
        %v2103 = vpop.permute.xlu0 %2102
        %2106 = vst.msk [vmem:[#allocation4 + $0x4] sm:$0xf] %vm1486, %v2101
        %2107 = vst.msk [vmem:[#allocation4 + $0x8] sm:$0xf] %vm1486, %v2103
        %v2108 = vld [vmem:[#allocation2] sm:$0xf]
        %v2109 = vld [vmem:[#allocation2 + $0x4] sm:$0xf]
        %v2110 = vld [vmem:[#allocation2 + $0x8] sm:$0xf]
        %v2111 = vld [vmem:[#allocation3] sm:$0xf]
        %v2112 = vld [vmem:[#allocation3 + $0x4] sm:$0xf]
        %v2113 = vld [vmem:[#allocation3 + $0x8] sm:$0xf]
        %v2114 = vld [vmem:[#allocation4] sm:$0xf]
        %v2115 = vld [vmem:[#allocation4 + $0x4] sm:$0xf]
        %v2116 = vld [vmem:[#allocation4 + $0x8] sm:$0xf]
        %v2120 = vunpack.c.l.b16 %v2108
        %v2121 = vunpack.c.l.b16 %v2109
        %v2122 = vunpack.c.l.b16 %v2110
        %v2123 = vpack.c.b16 %v2121, %v2120
        %v2124 = vpack.c.b16 %v2122, %v2122
        %v2128 = vunpack.c.l.b16 %v2111
        %v2129 = vunpack.c.l.b16 %v2112
        %v2130 = vunpack.c.l.b16 %v2113
        %v2131 = vpack.c.b16 %v2129, %v2128
        %v2132 = vpack.c.b16 %v2130, %v2130
        %v2134 = vsel %vm1443, %v2123, 0
        %v2137 = vsel %vm1443, %v2124, 0
        %v2140 = vsel %vm1443, %v2131, 0
        %v2143 = vsel %vm1443, %v2132, 0
        %2145 = vmatpush.bf16.xpose.msra.mxu0 0
        %2146 = vmatpush.bf16.xpose.msra.mxu0 0
        %2147 = vmatpush.bf16.xpose.msra.mxu0 0
        %2148 = vmatpush.bf16.xpose.msra.mxu0 0
        %2149 = vmatpush.bf16.xpose.msra.mxu0 0
        %2150 = vmatpush.bf16.xpose.msra.mxu0 0
        %2151 = vmatpush.bf16.xpose.msra.mxu0 %v2143
        %2152 = vmatpush.bf16.xpose.msra.mxu0 %v2140
        %2153 = vmatmul.bf16.gmra.mxu0 %v2134
        %v2154 = vpop.f32.mrf.mxu0
        %v2155 = vadd.f32 0.0, %v2154
        %v2156 = vpop.f32.mrf.mxu0
        %v2157 = vadd.f32 0.0, %v2156
        %2158 = vmatmul.bf16.gmra.mxu0 %v2137
        %v2159 = vpop.f32.mrf.mxu0
        %v2160 = vadd.f32 0.0, %v2159
        %v2161 = vpop.f32.mrf.mxu0
        %2162 = vdwg.mxu0
        %v2163 = vmul.f32 %v2155, 0.25
        %v2164 = vmul.f32 %v2157, 0.25
        %v2165 = vmul.f32 %v2160, 0.25
        %v2166 = vsel %vm1726, %v2163, -inf
        %2167 = vmax.xlane.f32.xlu0 %v2166
        %v2168 = vpop.xlane.xlu0 %2167
        %v2169 = vsel %vm1726, %v2164, -inf
        %2170 = vmax.xlane.f32.xlu0 %v2169
        %v2171 = vpop.xlane.xlu0 %2170
        %v2172 = vsel %vm1726, %v2165, -inf
        %2173 = vmax.xlane.f32.xlu0 %v2172
        %v2174 = vpop.xlane.xlu0 %2173
        %v2175 = vsub.f32 %v2163, %v2168
        %v2176 = vsub.f32 %v2164, %v2171
        %v2177 = vsub.f32 %v2165, %v2174
        %v2178 = vmul.f32 %v2175, 1.442695
        %v2179 = vpow.pop %v2178
        %v2180 = vmul.f32 %v2176, 1.442695
        %v2181 = vpow.pop %v2180
        %v2182 = vmul.f32 %v2177, 1.442695
        %v2183 = vpow.pop %v2182
        %v2184 = vsel %vm1726, %v2179, 0.0
        %2185 = vadd.xlane.f32.xlu0 %v2184
        %v2186 = vpop.xlane.xlu0 %2185
        %v2187 = vsel %vm1726, %v2181, 0.0
        %2188 = vadd.xlane.f32.xlu0 %v2187
        %v2189 = vpop.xlane.xlu0 %2188
        %v2190 = vsel %vm1726, %v2183, 0.0
        %2191 = vadd.xlane.f32.xlu0 %v2190
        %v2192 = vpop.xlane.xlu0 %2191
        %v2193 = vrcp.pop %v2186
        %v2194 = vrcp.pop %v2189
        %v2195 = vrcp.pop %v2192
        %v2196 = vmul.f32 %v2179, %v2193
        %v2197 = vmul.f32 %v2181, %v2194
        %v2198 = vmul.f32 %v2183, %v2195
        %v2199 = vpack.c.bf16 %v2197, %v2196
        %v2200 = vpack.c.bf16 %v2198, %v2198
        %v2204 = vunpack.c.l.b16 %v2114
        %v2205 = vunpack.c.l.b16 %v2115
        %v2206 = vunpack.c.l.b16 %v2116
        %v2207 = vpack.c.b16 %v2205, %v2204
        %v2208 = vpack.c.b16 %v2206, %v2206
        %v2211 = vsel %vm1726, %v2199, 0
        %v2214 = vsel %vm1726, %v2200, 0
        %v2217 = vsel %vm1777, %v2208, 0
        %2219 = vmatpush.bf16.msra.mxu0 0
        %2220 = vmatpush.bf16.msra.mxu0 0
        %2221 = vmatpush.bf16.msra.mxu0 0
        %2222 = vmatpush.bf16.msra.mxu0 0
        %2223 = vmatpush.bf16.msra.mxu0 0
        %2224 = vmatpush.bf16.msra.mxu0 0
        %2225 = vmatpush.bf16.msra.mxu0 %v2217
        %2226 = vmatpush.bf16.msra.mxu0 %v2207
        %2227 = vmatmul.bf16.gmra.mxu0 %v2211
        %v2228 = vpop.f32.mrf.mxu0
        %v2229 = vadd.f32 0.0, %v2228
        %v2230 = vpop.f32.mrf.mxu0
        %v2231 = vadd.f32 0.0, %v2230
        %2232 = vmatmul.bf16.gmra.mxu0 %v2214
        %v2233 = vpop.f32.mrf.mxu0
        %v2234 = vadd.f32 0.0, %v2233
        %v2235 = vpop.f32.mrf.mxu0
        %2236 = vdwg.mxu0
        %v2237 = vpack.c.bf16 %v2229, %v2229
        %v2238 = vpack.c.bf16 %v2231, %v2231
        %v2239 = vpack.c.bf16 %v2234, %v2234
        %2243 = vrot.lane.b32.xlu0 %v2237, 16
        %v2244 = vpop.permute.xlu0 %2243
        %2245 = vrot.lane.b32.xlu0 %v2238, 16
        %v2246 = vpop.permute.xlu0 %2245
        %2247 = vrot.lane.b32.xlu0 %v2239, 16
        %v2248 = vpop.permute.xlu0 %2247
        %vm2252 = vcmask 257152
        %2253 = vst.msk [vmem:[#allocation5] sm:$0xf] %vm2252, %v2244
        %2254 = vst.msk [vmem:[#allocation5 + $0x4] sm:$0xf] %vm2252, %v2246
        %2255 = vst.msk [vmem:[#allocation5 + $0x8] sm:$0xf] %vm2252, %v2248
        %v2256 = vld [vmem:[#allocation5] sm:$0xf]
        %v2257 = vld [vmem:[#allocation5 + $0x4] sm:$0xf]
        %v2258 = vld [vmem:[#allocation5 + $0x8] sm:$0xf]
        %v2259 = vld [vmem:[%s45] sm:$0xf]
        %v2260 = vld [vmem:[%s45 + $0x4] sm:$0xf]
        %v2261 = vld [vmem:[%s45 + $0x8] sm:$0xf]
        %v2262 = vld [vmem:[%s45 + $0xc] sm:$0xf]
        %v2263 = vld [vmem:[%s47] sm:$0x1]
        %v2265 = vperm.slane %v2263, 0
        %v2269 = vunpack.c.l.b16 %v2257
        %v2270 = vunpack.c.l.b16 %v2258
        %v2271 = vpack.c.b16 %v2270, %v2269
        %v2276 = vunpack.c.l.b16 %v2259
        %v2277 = vunpack.c.l.b16 %v2260
        %v2278 = vunpack.c.l.b16 %v2261
        %v2279 = vunpack.c.l.b16 %v2262
        %v2280 = vpack.c.b16 %v2277, %v2276
        %v2281 = vpack.c.b16 %v2279, %v2278
        %v2285 = vsel %vm1143, %v2271, 0
        %2287 = vmatpush.bf16.msra.mxu0 0
        %2288 = vmatpush.bf16.msra.mxu0 0
        %2289 = vmatpush.bf16.msra.mxu0 0
        %2290 = vmatpush.bf16.msra.mxu0 0
        %2291 = vmatpush.bf16.msra.mxu0 0
        %2292 = vmatpush.bf16.msra.mxu0 0
        %2293 = vmatpush.bf16.msra.mxu0 %v2281
        %2294 = vmatpush.bf16.msra.mxu0 %v2280
        %2295 = vmatmul.bf16.gmra.mxu0 %v2285
        %v2296 = vpop.f32.mrf.mxu0
        %v2297 = vadd.f32 %v2265, %v2296
        %v2298 = vpop.f32.mrf.mxu0
        %v2299 = vadd.f32 %v2265, %v2298
        %2300 = vdwg.mxu0
        %v2301 = vld [vmem:[%s49] sm:$0xf]
        %v2302 = vld [vmem:[%s49 + $0x4] sm:$0xf]
        %v2303 = vld [vmem:[%s49 + $0x8] sm:$0xf]
        %v2304 = vld [vmem:[%s49 + $0xc] sm:$0xf]
        %v2305 = vld [vmem:[%s51] sm:$0x1]
        %v2307 = vperm.slane %v2305, 0
        %v2313 = vunpack.c.l.b16 %v2301
        %v2314 = vunpack.c.l.b16 %v2302
        %v2315 = vunpack.c.l.b16 %v2303
        %v2316 = vunpack.c.l.b16 %v2304
        %v2317 = vpack.c.b16 %v2314, %v2313
        %v2318 = vpack.c.b16 %v2316, %v2315
        %v2322 = vsel %vm1143, %v2256, 0
        %2324 = vmatpush.bf16.msra.mxu0 0
        %2325 = vmatpush.bf16.msra.mxu0 0
        %2326 = vmatpush.bf16.msra.mxu0 0
        %2327 = vmatpush.bf16.msra.mxu0 0
        %2328 = vmatpush.bf16.msra.mxu0 0
        %2329 = vmatpush.bf16.msra.mxu0 0
        %2330 = vmatpush.bf16.msra.mxu0 %v2318
        %2331 = vmatpush.bf16.msra.mxu0 %v2317
        %2332 = vmatmul.bf16.gmra.mxu0 %v2322
        %v2333 = vpop.f32.mrf.mxu0
        %v2334 = vadd.f32 %v2307, %v2333
        %v2335 = vpop.f32.mrf.mxu0
        %2336 = vdwg.mxu0
        %v2337 = vperm.slane %v1135, 2
        %v2338 = vmul.f32 %v2337, %v2297
        %v2339 = vmul.f32 %v2337, %v2299
        %v2340 = vadd.f32 %v1132, %v2338
        %v2341 = vadd.f32 %v1133, %v2339
        %v2342 = vsel %vm1143, %v2340, 0.0
        %2343 = vadd.xlane.f32.xlu0 %v2342
        %v2344 = vpop.xlane.xlu0 %2343
        %v2345 = vsel %vm1143, %v2341, 0.0
        %2346 = vadd.xlane.f32.xlu0 %v2345
        %v2347 = vpop.xlane.xlu0 %2346
        %v2348 = vmul.f32 %v2344, %v1156
        %v2349 = vmul.f32 %v2347, %v1156
        %v2350 = vsub.f32 %v2340, %v2348
        %v2351 = vsub.f32 %v2341, %v2349
        %v2352 = vmul.f32 %v2350, %v2350
        %v2353 = vmul.f32 %v2351, %v2351
        %v2354 = vsel %vm1143, %v2352, 0.0
        %2355 = vadd.xlane.f32.xlu0 %v2354
        %v2356 = vpop.xlane.xlu0 %2355
        %v2357 = vsel %vm1143, %v2353, 0.0
        %2358 = vadd.xlane.f32.xlu0 %v2357
        %v2359 = vpop.xlane.xlu0 %2358
        %v2360 = vmul.f32 %v2356, %v1156
        %v2361 = vmul.f32 %v2359, %v1156
        %v2362 = vadd.f32 %v2360, 1e-06
        %v2363 = vadd.f32 %v2361, 1e-06
        %v2364 = vrsqrt.pop %v2362
        %v2365 = vmul.f32 %v2364, %v2362
        %v2366 = vmul.f32 %v2365, %v2364
        %v2367 = vmul.f32 0.5, %v2366
        %v2368 = vsub.f32 1.5, %v2367
        %v2369 = vmul.f32 %v2364, %v2368
        %vm2370 = vweird.f32 %v2362
        %vm2371 = vweird.f32 %v2364
        %vm2372 = vmor %vm2370, %vm2371
        %v2373 = vsel %vm2372, %v2364, %v2369
        %v2374 = vrsqrt.pop %v2363
        %v2375 = vmul.f32 %v2374, %v2363
        %v2376 = vmul.f32 %v2375, %v2374
        %v2377 = vmul.f32 0.5, %v2376
        %v2378 = vsub.f32 1.5, %v2377
        %v2379 = vmul.f32 %v2374, %v2378
        %vm2380 = vweird.f32 %v2363
        %vm2381 = vweird.f32 %v2374
        %vm2382 = vmor %vm2380, %vm2381
        %v2383 = vsel %vm2382, %v2374, %v2379
        %v2384 = vmul.f32 %v2350, %v2373
        %v2385 = vmul.f32 %v2351, %v2383
        %v2386 = vperm.slane %v1195, 4
        %v2387 = vmul.f32 %v2384, %v2386
        %v2388 = vmul.f32 %v2385, %v2386
        %v2389 = vperm.slane %v1135, 3
        %v2390 = vadd.f32 %v2387, %v2389
        %v2391 = vadd.f32 %v2388, %v2389
        %v2392 = vpack.c.bf16 %v2391, %v2390
        %v2393 = vld [vmem:[%s53] sm:$0xf]
        %v2394 = vld [vmem:[%s53 + $0x4] sm:$0xf]
        %v2395 = vld [vmem:[%s53 + $0x8] sm:$0xf]
        %v2396 = vld [vmem:[%s53 + $0xc] sm:$0xf]
        %v2397 = vld [vmem:[%s55] sm:$0x1]
        %v2399 = vperm.slane %v2397, 0
        %v2405 = vunpack.c.l.b16 %v2393
        %v2406 = vunpack.c.l.b16 %v2394
        %v2407 = vunpack.c.l.b16 %v2395
        %v2408 = vunpack.c.l.b16 %v2396
        %v2409 = vpack.c.b16 %v2406, %v2405
        %v2410 = vpack.c.b16 %v2408, %v2407
        %v2414 = vsel %vm1143, %v2392, 0
        %2416 = vmatpush.bf16.msra.mxu0 0
        %2417 = vmatpush.bf16.msra.mxu0 0
        %2418 = vmatpush.bf16.msra.mxu0 0
        %2419 = vmatpush.bf16.msra.mxu0 0
        %2420 = vmatpush.bf16.msra.mxu0 0
        %2421 = vmatpush.bf16.msra.mxu0 0
        %2422 = vmatpush.bf16.msra.mxu0 %v2410
        %2423 = vmatpush.bf16.msra.mxu0 %v2409
        %2424 = vmatmul.bf16.gmra.mxu0 %v2414
        %v2425 = vpop.f32.mrf.mxu0
        %v2426 = vadd.f32 %v2399, %v2425
        %v2427 = vpop.f32.mrf.mxu0
        %v2428 = vadd.f32 %v2399, %v2427
        %2429 = vdwg.mxu0
        %v2430 = vmul.f32 %v2426, 0.5
        %v2431 = vmul.f32 %v2428, 0.5
        %v2432 = vmul.f32 %v2426, 0.044715
        %v2433 = vmul.f32 %v2428, 0.044715
        %v2434 = vmul.f32 %v2432, %v2426
        %v2435 = vmul.f32 %v2433, %v2428
        %v2436 = vmul.f32 %v2434, %v2426
        %v2437 = vmul.f32 %v2435, %v2428
        %v2438 = vadd.f32 %v2426, %v2436
        %v2439 = vadd.f32 %v2428, %v2437
        %v2440 = vmul.f32 %v2438, 0.7978846
        %v2441 = vmul.f32 %v2439, 0.7978846
        %v2442 = vtanh.pop %v2440
        %v2443 = vtanh.pop %v2441
        %v2444 = vadd.f32 %v2442, 1.0
        %v2445 = vadd.f32 %v2443, 1.0
        %v2446 = vmul.f32 %v2430, %v2444
        %v2447 = vmul.f32 %v2431, %v2445
        %v2448 = vpack.c.bf16 %v2447, %v2446
        %v2449 = vld [vmem:[%s57] sm:$0xf]
        %v2450 = vld [vmem:[%s57 + $0x4] sm:$0xf]
        %v2451 = vld [vmem:[%s57 + $0x8] sm:$0xf]
        %v2452 = vld [vmem:[%s57 + $0xc] sm:$0xf]
        %v2453 = vld [vmem:[%s57 + $0x10] sm:$0xf]
        %v2454 = vld [vmem:[%s57 + $0x14] sm:$0xf]
        %v2455 = vld [vmem:[%s57 + $0x18] sm:$0xf]
        %v2456 = vld [vmem:[%s57 + $0x1c] sm:$0xf]
        %v2457 = vld [vmem:[%s57 + $0x20] sm:$0xf]
        %v2458 = vld [vmem:[%s57 + $0x24] sm:$0xf]
        %v2459 = vld [vmem:[%s57 + $0x28] sm:$0xf]
        %v2460 = vld [vmem:[%s57 + $0x2c] sm:$0xf]
        %v2461 = vld [vmem:[%s57 + $0x30] sm:$0xf]
        %v2462 = vld [vmem:[%s57 + $0x34] sm:$0xf]
        %v2463 = vld [vmem:[%s57 + $0x38] sm:$0xf]
        %v2464 = vld [vmem:[%s57 + $0x3c] sm:$0xf]
        %v2465 = vld [vmem:[%s59] sm:$0x1]
        %v2467 = vperm.slane %v2465, 0
        %v2485 = vunpack.c.l.b16 %v2449
        %v2486 = vunpack.c.l.b16 %v2450
        %v2487 = vunpack.c.l.b16 %v2451
        %v2488 = vunpack.c.l.b16 %v2452
        %v2489 = vunpack.c.l.b16 %v2453
        %v2490 = vunpack.c.l.b16 %v2454
        %v2491 = vunpack.c.l.b16 %v2455
        %v2492 = vunpack.c.l.b16 %v2456
        %v2493 = vunpack.c.l.b16 %v2457
        %v2494 = vunpack.c.l.b16 %v2458
        %v2495 = vunpack.c.l.b16 %v2459
        %v2496 = vunpack.c.l.b16 %v2460
        %v2497 = vunpack.c.l.b16 %v2461
        %v2498 = vunpack.c.l.b16 %v2462
        %v2499 = vunpack.c.l.b16 %v2463
        %v2500 = vunpack.c.l.b16 %v2464
        %v2501 = vpack.c.b16 %v2486, %v2485
        %v2502 = vpack.c.b16 %v2488, %v2487
        %v2503 = vpack.c.b16 %v2490, %v2489
        %v2504 = vpack.c.b16 %v2492, %v2491
        %v2505 = vpack.c.b16 %v2494, %v2493
        %v2506 = vpack.c.b16 %v2496, %v2495
        %v2507 = vpack.c.b16 %v2498, %v2497
        %v2508 = vpack.c.b16 %v2500, %v2499
        %2517 = vmatpush.bf16.msra.mxu0 %v2508
        %2518 = vmatpush.bf16.msra.mxu0 %v2507
        %2519 = vmatpush.bf16.msra.mxu0 %v2506
        %2520 = vmatpush.bf16.msra.mxu0 %v2505
        %2521 = vmatpush.bf16.msra.mxu0 %v2504
        %2522 = vmatpush.bf16.msra.mxu0 %v2503
        %2523 = vmatpush.bf16.msra.mxu0 %v2502
        %2524 = vmatpush.bf16.msra.mxu0 %v2501
        %2525 = vmatmul.bf16.gmra.mxu0 %v2448
        %v2526 = vpop.f32.mrf.mxu0
        %v2527 = vadd.f32 %v2467, %v2526
        %v2528 = vpop.f32.mrf.mxu0
        %v2529 = vadd.f32 %v2467, %v2528
        %2530 = vdwg.mxu0
        %v2531 = vperm.slane %v1135, 5
        %v2532 = vmul.f32 %v2531, %v2527
        %v2533 = vmul.f32 %v2531, %v2529
        %v2534 = vadd.f32 %v2340, %v2532
        %v2535 = vadd.f32 %v2341, %v2533
        %2536 = vst.msk [vmem:[%s1113] sm:$0xff] %vm1143, %v2534
        %2537 = vst.msk [vmem:[%s1113 + $0x8] sm:$0xff] %vm1143, %v2535
        %v2538 = vperm.slane %v1136, 2
        %v2539 = vmul.f32 %v2538, %v2334
        %v2540 = vadd.f32 %v1134, %v2539
        %v2541 = vsel %vm1143, %v2540, 0.0
        %2542 = vadd.xlane.f32.xlu0 %v2541
        %v2543 = vpop.xlane.xlu0 %2542
        %v2544 = vmul.f32 %v2543, %v1156
        %v2545 = vsub.f32 %v2540, %v2544
        %v2546 = vmul.f32 %v2545, %v2545
        %v2547 = vsel %vm1143, %v2546, 0.0
        %2548 = vadd.xlane.f32.xlu0 %v2547
        %v2549 = vpop.xlane.xlu0 %2548
        %v2550 = vmul.f32 %v2549, %v1156
        %v2551 = vadd.f32 %v2550, 1e-06
        %v2552 = vrsqrt.pop %v2551
        %v2553 = vmul.f32 %v2552, %v2551
        %v2554 = vmul.f32 %v2553, %v2552
        %v2555 = vmul.f32 0.5, %v2554
        %v2556 = vsub.f32 1.5, %v2555
        %v2557 = vmul.f32 %v2552, %v2556
        %vm2558 = vweird.f32 %v2551
        %vm2559 = vweird.f32 %v2552
        %vm2560 = vmor %vm2558, %vm2559
        %v2561 = vsel %vm2560, %v2552, %v2557
        %v2562 = vmul.f32 %v2545, %v2561
        %v2563 = vperm.slane %v1224, 4
        %v2564 = vmul.f32 %v2562, %v2563
        %v2565 = vperm.slane %v1136, 3
        %v2566 = vadd.f32 %v2564, %v2565
        %v2567 = vpack.c.bf16 %v2566, %v2566
        %v2568 = vld [vmem:[%s61] sm:$0xf]
        %v2569 = vld [vmem:[%s61 + $0x4] sm:$0xf]
        %v2570 = vld [vmem:[%s61 + $0x8] sm:$0xf]
        %v2571 = vld [vmem:[%s61 + $0xc] sm:$0xf]
        %v2572 = vld [vmem:[%s63] sm:$0x1]
        %v2574 = vperm.slane %v2572, 0
        %v2580 = vunpack.c.l.b16 %v2568
        %v2581 = vunpack.c.l.b16 %v2569
        %v2582 = vunpack.c.l.b16 %v2570
        %v2583 = vunpack.c.l.b16 %v2571
        %v2584 = vpack.c.b16 %v2581, %v2580
        %v2585 = vpack.c.b16 %v2583, %v2582
        %v2589 = vsel %vm1143, %v2567, 0
        %2591 = vmatpush.bf16.msra.mxu0 0
        %2592 = vmatpush.bf16.msra.mxu0 0
        %2593 = vmatpush.bf16.msra.mxu0 0
        %2594 = vmatpush.bf16.msra.mxu0 0
        %2595 = vmatpush.bf16.msra.mxu0 0
        %2596 = vmatpush.bf16.msra.mxu0 0
        %2597 = vmatpush.bf16.msra.mxu0 %v2585
        %2598 = vmatpush.bf16.msra.mxu0 %v2584
        %2599 = vmatmul.bf16.gmra.mxu0 %v2589
        %v2600 = vpop.f32.mrf.mxu0
        %v2601 = vadd.f32 %v2574, %v2600
        %v2602 = vpop.f32.mrf.mxu0
        %2603 = vdwg.mxu0
        %v2604 = vmul.f32 %v2601, 0.5
        %v2605 = vmul.f32 %v2601, 0.044715
        %v2606 = vmul.f32 %v2605, %v2601
        %v2607 = vmul.f32 %v2606, %v2601
        %v2608 = vadd.f32 %v2601, %v2607
        %v2609 = vmul.f32 %v2608, 0.7978846
        %v2610 = vtanh.pop %v2609
        %v2611 = vadd.f32 %v2610, 1.0
        %v2612 = vmul.f32 %v2604, %v2611
        %v2613 = vpack.c.bf16 %v2612, %v2612
        %v2614 = vld [vmem:[%s65] sm:$0xf]
        %v2615 = vld [vmem:[%s65 + $0x4] sm:$0xf]
        %v2616 = vld [vmem:[%s65 + $0x8] sm:$0xf]
        %v2617 = vld [vmem:[%s65 + $0xc] sm:$0xf]
        %v2618 = vld [vmem:[%s65 + $0x10] sm:$0xf]
        %v2619 = vld [vmem:[%s65 + $0x14] sm:$0xf]
        %v2620 = vld [vmem:[%s65 + $0x18] sm:$0xf]
        %v2621 = vld [vmem:[%s65 + $0x1c] sm:$0xf]
        %v2622 = vld [vmem:[%s65 + $0x20] sm:$0xf]
        %v2623 = vld [vmem:[%s65 + $0x24] sm:$0xf]
        %v2624 = vld [vmem:[%s65 + $0x28] sm:$0xf]
        %v2625 = vld [vmem:[%s65 + $0x2c] sm:$0xf]
        %v2626 = vld [vmem:[%s65 + $0x30] sm:$0xf]
        %v2627 = vld [vmem:[%s65 + $0x34] sm:$0xf]
        %v2628 = vld [vmem:[%s65 + $0x38] sm:$0xf]
        %v2629 = vld [vmem:[%s65 + $0x3c] sm:$0xf]
        %v2630 = vld [vmem:[%s67] sm:$0x1]
        %v2632 = vperm.slane %v2630, 0
        %v2650 = vunpack.c.l.b16 %v2614
        %v2651 = vunpack.c.l.b16 %v2615
        %v2652 = vunpack.c.l.b16 %v2616
        %v2653 = vunpack.c.l.b16 %v2617
        %v2654 = vunpack.c.l.b16 %v2618
        %v2655 = vunpack.c.l.b16 %v2619
        %v2656 = vunpack.c.l.b16 %v2620
        %v2657 = vunpack.c.l.b16 %v2621
        %v2658 = vunpack.c.l.b16 %v2622
        %v2659 = vunpack.c.l.b16 %v2623
        %v2660 = vunpack.c.l.b16 %v2624
        %v2661 = vunpack.c.l.b16 %v2625
        %v2662 = vunpack.c.l.b16 %v2626
        %v2663 = vunpack.c.l.b16 %v2627
        %v2664 = vunpack.c.l.b16 %v2628
        %v2665 = vunpack.c.l.b16 %v2629
        %v2666 = vpack.c.b16 %v2651, %v2650
        %v2667 = vpack.c.b16 %v2653, %v2652
        %v2668 = vpack.c.b16 %v2655, %v2654
        %v2669 = vpack.c.b16 %v2657, %v2656
        %v2670 = vpack.c.b16 %v2659, %v2658
        %v2671 = vpack.c.b16 %v2661, %v2660
        %v2672 = vpack.c.b16 %v2663, %v2662
        %v2673 = vpack.c.b16 %v2665, %v2664
        %2682 = vmatpush.bf16.msra.mxu0 %v2673
        %2683 = vmatpush.bf16.msra.mxu0 %v2672
        %2684 = vmatpush.bf16.msra.mxu0 %v2671
        %2685 = vmatpush.bf16.msra.mxu0 %v2670
        %2686 = vmatpush.bf16.msra.mxu0 %v2669
        %2687 = vmatpush.bf16.msra.mxu0 %v2668
        %2688 = vmatpush.bf16.msra.mxu0 %v2667
        %2689 = vmatpush.bf16.msra.mxu0 %v2666
        %2690 = vmatmul.bf16.gmra.mxu0 %v2613
        %v2691 = vpop.f32.mrf.mxu0
        %v2692 = vadd.f32 %v2632, %v2691
        %v2693 = vpop.f32.mrf.mxu0
        %2694 = vdwg.mxu0
        %v2695 = vperm.slane %v1136, 5
        %v2696 = vmul.f32 %v2695, %v2692
        %v2697 = vadd.f32 %v2540, %v2696
        %2698 = vst.msk [vmem:[%s1106] sm:$0xff] %vm1143, %v2697
        %s2699 = sand.u32 %s831, 1
        %s2700 = scalar_lea.sflag [#allocation7], %s2699
        %s2701 = sand.u32 %s831, 1
        %s2702 = smul.addr %s2701, 8
        %s2703 = scalar_lea.vmem [#allocation6], %s2702
        %s2704 = sand.u32 %s857, 1
        %s2705 = scalar_lea.sflag [#allocation9], %s2704
        %s2706 = sand.u32 %s857, 1
        %s2707 = smul.addr %s2706, 16
        %s2708 = scalar_lea.vmem [#allocation8], %s2707
        // Predicated region
        $region157: #{tpu_custom_call.1} parent=155 // pred_check
          %p2709 = pneg %p841
        $region158: #{tpu_custom_call.1} parent=155 // pred_check_branch
          %2711 = sbr.rel (%p2709) target = $region160
        $region159: #{tpu_custom_call.1} parent=155 // pred_region
          %2713 = vsyncadd %s2700, 0
          %s2714 = smul.addr %s89, 8
          %s2715 = scalar_lea.hbm %s69, %s2714
          %s2717 = sshll.u32 %s2703, 4
          %s2718 = int_to_ptr.vmem [resolvable:$true] %s2717
          %s2719 = sshll.u32 %s2715, 4
          %s2720 = int_to_ptr.hbm [resolvable:$true] %s2719
          %2722 = dma.vmem_to_hbm [thread:$0]  %s2718, 128, %s2720, %s2700
        $region160: #{tpu_custom_call.1} parent=155 // pred_fallthru
          _
        // Predicated region
        $region161: #{tpu_custom_call.1} parent=155 // pred_check
          %p2723 = pneg %p867
        $region162: #{tpu_custom_call.1} parent=155 // pred_check_branch
          %2725 = sbr.rel (%p2723) target = $region164
        $region163: #{tpu_custom_call.1} parent=155 // pred_region
          %2727 = vsyncadd %s2705, 0
          %s2728 = smul.addr %s89, 2
          %s2729 = smul.addr %s2728, 8
          %s2730 = scalar_lea.hbm %s71, %s2729
          %s2731 = sshll.u32 %s2708, 4
          %s2732 = int_to_ptr.vmem [resolvable:$true] %s2731
          %s2733 = sshll.u32 %s2730, 4
          %s2734 = int_to_ptr.hbm [resolvable:$true] %s2733
          %2739 = dma.vmem_to_hbm [thread:$0]  %s2732, 256, %s2734, %s2705, 128, 128, 8
        $region164: #{tpu_custom_call.1} parent=155 // pred_fallthru
          _
      $region156: #{tpu_custom_call.1} parent=5 // pred_fallthru
        _
      %p2740 = scmp.le.s32.totalorder 2, %s84
      // Predicated region
      $region165: #{tpu_custom_call.1} parent=5 // pred_check
        %p2741 = pneg %p2740
      $region166: #{tpu_custom_call.1} parent=5 // pred_check_branch
        %2743 = sbr.rel (%p2741) target = $region168
      $region167: #{tpu_custom_call.1} parent=5 // pred_region
        %s2744 = ssub.s32 %s84, 2
        // Predicated region
        $region169: #{tpu_custom_call.1} parent=167 // pred_check
          %p2745 = pneg %p847
        $region170: #{tpu_custom_call.1} parent=167 // pred_check_branch
          %2747 = sbr.rel (%p2745) target = $region172
        $region171: #{tpu_custom_call.1} parent=167 // pred_region
          %s2748 = sand.u32 %s832, 1
          %s2749 = scalar_lea.sflag [#allocation7], %s2748
          %s2750 = sand.u32 %s832, 1
          %s2751 = smul.addr %s2750, 8
          %s2752 = scalar_lea.vmem [#allocation6], %s2751
          %2754 = dma.done %s2749, 128
        $region172: #{tpu_custom_call.1} parent=167 // pred_fallthru
          _
        // Predicated region
        $region173: #{tpu_custom_call.1} parent=167 // pred_check
          %p2755 = pneg %p873
        $region174: #{tpu_custom_call.1} parent=167 // pred_check_branch
          %2757 = sbr.rel (%p2755) target = $region176
        $region175: #{tpu_custom_call.1} parent=167 // pred_region
          %s2758 = sand.u32 %s858, 1
          %s2759 = scalar_lea.sflag [#allocation9], %s2758
          %s2760 = sand.u32 %s858, 1
          %s2761 = smul.addr %s2760, 16
          %s2762 = scalar_lea.vmem [#allocation8], %s2761
          %2764 = dma.done %s2759, 256
        $region176: #{tpu_custom_call.1} parent=167 // pred_fallthru
          _
      $region168: #{tpu_custom_call.1} parent=5 // pred_fallthru
        _
    $region6: #{tpu_custom_call.1} parent=1 // loop_footer
      %s88 = sadd.s32 1, %s84
    $region7: #{tpu_custom_call.1} parent=1 // loop_footer_branch
      %83 = sbr.rel target = $region3
    $region8: #{tpu_custom_call.1} parent=1 // loop_exit
      _
    %2765 = vsyncpa [#allocation7], 1
    %s2766 = scalar_lea.sflag [#allocation7], 1
    %2767 = vsyncpa %s2766, 1
    %2768 = vsyncpa [#allocation9], 1
    %s2769 = scalar_lea.sflag [#allocation9], 1
    %2770 = vsyncpa %s2769, 1

</llo_original>
